<compile_context>
chip_gen: v5e
topology: v5e:2x2
jax: 0.10.0
libtpu: 0.0.40
codegen_flags: <defaults>
</compile_context>

<pallas_src>
import jax
import jax.numpy as jnp
from jax import lax
from jax.experimental import pallas as pl
from jax.experimental.pallas import tpu as pltpu

# Geometry implied by the module (x.view(-1, 192) with 16 channels -> conv4
# output 2x6 -> input must be (N, 1, 30, 45)).
_IN_H, _IN_W = 30, 45
_C1_H, _C1_W2 = 14, 11        # conv1: 14 rows, 22 cols stored as 11 even + 11 odd
_C2_H, _C2_W = 6, 10
_C3_H, _C3_W = 4, 8
_C4_H, _C4_W = 2, 6
_EPS = 1e-5


# ---------------------------------------------------------------------------
# Fused Pallas kernel (one image per grid step, everything VMEM resident)
# ---------------------------------------------------------------------------

def _duelq_kernel(xph_ref, w1_ref, b1_ref, w2_ref, b2_ref, w3_ref, b3_ref,
                  w4_ref, b4_ref, wfc1_ref, bfc1_ref, wfc2_ref, bfc2_ref,
                  o_ref,
                  a1e_ref, a1o_ref, a2_ref, a3_ref):
    f32 = jnp.float32
    xin = xph_ref[0]                                  # (15, 12, 8) phase-packed input

    # ---- conv1: 1->8, k=3, stride 2 (all output rows at once, VPU FMAs).
    # Even / odd output columns are kept separate so conv2's stride-2 column
    # accesses become contiguous slices.
    def conv1(parity):
        acc = jnp.zeros((_C1_H, _C1_W2, 8), f32)
        for kh in range(3):
            rp, r0 = kh % 2, kh // 2
            for kw in range(3):
                if parity == 0:            # out col 2m   <- in col 4m + kw
                    cp, c0 = kw, 0
                elif kw < 2:               # out col 2m+1 <- in col 4m + 2 + kw
                    cp, c0 = kw + 2, 0
                else:                      #               <- in col 4(m+1)
                    cp, c0 = 0, 1
                p = rp * 4 + cp
                tap = xin[r0:r0 + _C1_H, c0:c0 + _C1_W2, p:p + 1]   # (14,11,1)
                acc = acc + tap * w1_ref[kh * 3 + kw]               # (1,1,8)
        return jnp.maximum(acc + b1_ref[...], 0.0)

    a1e_ref[...] = conv1(0)
    a1o_ref[...] = conv1(1)

    # ---- conv2: 8->8, k=3, stride 2 (one output row per step, MXU matmuls).
    for oh in range(_C2_H):
        acc = jnp.zeros((_C2_W, 8), f32)
        for kh in range(3):
            r = 2 * oh + kh
            for kw in range(3):
                if kw == 0:
                    tap = a1e_ref[r, 0:_C2_W, :]
                elif kw == 1:
                    tap = a1o_ref[r, 0:_C2_W, :]
                else:
                    tap = a1e_ref[r, 1:_C2_W + 1, :]
                acc = acc + jnp.dot(tap, w2_ref[kh * 3 + kw],
                                    preferred_element_type=f32)
        a2_ref[oh] = jnp.maximum(acc + b2_ref[...], 0.0)

    # ---- conv3: 8->8, k=3, stride 1.
    for oh in range(_C3_H):
        acc = jnp.zeros((_C3_W, 8), f32)
        for kh in range(3):
            for kw in range(3):
                tap = a3tap = a2_ref[oh + kh, kw:kw + _C3_W, :]
                acc = acc + jnp.dot(tap, w3_ref[kh * 3 + kw],
                                    preferred_element_type=f32)
        a3_ref[oh] = jnp.maximum(acc + b3_ref[...], 0.0)

    # ---- conv4: 8->16, k=3, stride 1, fused with the dueling-head hidden
    # layer (lane-dense (192,128) weight in (h, w, c) row order).
    hidden = bfc1_ref[...]                            # (1, 128)
    for h in range(_C4_H):
        acc = jnp.zeros((_C4_W, 16), f32)
        for kh in range(3):
            for kw in range(3):
                tap = a3_ref[h + kh, kw:kw + _C4_W, :]
                acc = acc + jnp.dot(tap, w4_ref[kh * 3 + kw],
                                    preferred_element_type=f32)
        row = jnp.maximum(acc + b4_ref[...], 0.0)     # (6, 16)
        for w in range(_C4_W):
            r0 = (h * _C4_W + w) * 16
            hidden = hidden + jnp.dot(row[w:w + 1, :], wfc1_ref[r0:r0 + 16, :],
                                      preferred_element_type=f32)
    hidden = jnp.maximum(hidden, 0.0)

    # ---- second head layer: block-diag (128, 1+A) -> [state | advantages].
    sva = jnp.dot(hidden, wfc2_ref[...], preferred_element_type=f32) + bfc2_ref[...]
    sv = sva[:, 0:1]
    adv = sva[:, 1:]
    o_ref[0] = sv + (adv - jnp.mean(adv, axis=1, keepdims=True))


# ---------------------------------------------------------------------------
# One-time parameter preparation (BN folding, weight reshuffles)
# ---------------------------------------------------------------------------

def prepare_params(params, eps=_EPS):
    def fold_conv(w_pt, gamma, beta, mean, var):
        cout, cin = w_pt.shape[0], w_pt.shape[1]
        inv = gamma / jnp.sqrt(var + eps)                        # (Cout,)
        w = jnp.transpose(w_pt, (2, 3, 1, 0)).reshape(9, cin, cout)
        w = (w * inv[None, None, :]).astype(jnp.float32)         # fold BN scale
        b = (beta - mean * inv).astype(jnp.float32)
        return w, b

    w1, b1 = fold_conv(params["w1"], *params["bn1"])
    w2, b2 = fold_conv(params["w2"], *params["bn2"])
    w3, b3 = fold_conv(params["w3"], *params["bn3"])
    w4, b4 = fold_conv(params["w4"], *params["bn4"])

    # Head layer 1: rows reordered from torch's (c, h, w) flatten to the
    # kernel's (h, w, c) order; state/advantage branches side by side (192,128).
    ws1 = params["ws1"].reshape(8, 12, 64).transpose(1, 0, 2)    # (p, c, j)
    wa1 = params["wa1"].reshape(8, 12, 64).transpose(1, 0, 2)
    zeros = jnp.zeros((12, 8, 64), jnp.float32)
    wfc1 = jnp.concatenate(
        [jnp.concatenate([ws1, zeros], axis=1),      # state uses channels 0..7
         jnp.concatenate([zeros, wa1], axis=1)],     # advantage uses 8..15
        axis=2).reshape(192, 128)
    bfc1 = jnp.concatenate([params["bs1"], params["ba1"]], axis=1)       # (1,128)

    n_actions = params["wa2"].shape[1]
    wfc2 = jnp.concatenate(
        [jnp.concatenate([params["ws2"],
                          jnp.zeros((64, n_actions), jnp.float32)], axis=1),
         jnp.concatenate([jnp.zeros((64, 1), jnp.float32),
                          params["wa2"]], axis=1)], axis=0)              # (128,1+A)
    bfc2 = jnp.concatenate([params["bs2"], params["ba2"]], axis=1)       # (1,1+A)

    return {
        "w1": w1.reshape(9, 1, 1, 8), "b1": b1.reshape(1, 1, 8),
        "w2": w2, "b2": b2.reshape(1, 8),
        "w3": w3, "b3": b3.reshape(1, 8),
        "w4": w4, "b4": b4.reshape(1, 16),
        "wfc1": wfc1.astype(jnp.float32), "bfc1": bfc1.astype(jnp.float32),
        "wfc2": wfc2.astype(jnp.float32), "bfc2": bfc2.astype(jnp.float32),
    }


# ---------------------------------------------------------------------------
# Forward wrapper (single pallas_call)
# ---------------------------------------------------------------------------

def duel_qnet_forward(x_nchw, prepped):
    N, C, H, W = x_nchw.shape
    assert (C, H, W) == (1, _IN_H, _IN_W), "DuelQNet expects (N, 1, 30, 45)"
    A = prepped["wfc2"].shape[1] - 1

    x = x_nchw.reshape(N, H, W).astype(jnp.float32)

    # One-time relayout of the tiny input: rows split by parity (mod 2) and
    # columns by phase (mod 4) so every stride-2 access inside the kernel is a
    # contiguous static slice.  This is the only XLA glue in the forward pass.
    phases = []
    for rp in range(2):
        for cp in range(4):
            sl = x[:, rp::2, cp::4]
            pad = 12 - sl.shape[2]
            if pad:
                sl = jnp.pad(sl, ((0, 0), (0, 0), (0, pad)))
            phases.append(sl)
    xph = jnp.stack(phases, axis=-1)                    # (N, 15, 12, 8)

    def _full(arr):
        shp = arr.shape
        return pl.BlockSpec(shp, lambda n: (0,) * len(shp))

    param_order = ("w1", "b1", "w2", "b2", "w3", "b3", "w4", "b4",
                   "wfc1", "bfc1", "wfc2", "bfc2")
    param_args = [prepped[k] for k in param_order]

    flops = 2 * N * (_C1_H * 2 * _C1_W2 * 9 * 8
                     + _C2_H * _C2_W * 9 * 8 * 8
                     + _C3_H * _C3_W * 9 * 8 * 8
                     + _C4_H * _C4_W * 9 * 8 * 16
                     + 192 * 128 + 128 * (1 + A))
    bytes_accessed = 4 * (xph.size + sum(p.size for p in param_args) + N * A)

    out = pl.pallas_call(
        _duelq_kernel,
        out_shape=jax.ShapeDtypeStruct((N, 1, A), jnp.float32),
        grid=(N,),
        in_specs=[pl.BlockSpec((1, 15, 12, 8), lambda n: (n, 0, 0, 0))]
                 + [_full(p) for p in param_args],
        out_specs=pl.BlockSpec((1, 1, A), lambda n: (n, 0, 0)),
        scratch_shapes=[
            pltpu.VMEM((_C1_H, _C1_W2, 8), jnp.float32),   # conv1 out (even cols)
            pltpu.VMEM((_C1_H, _C1_W2, 8), jnp.float32),   # conv1 out (odd cols)
            pltpu.VMEM((_C2_H, _C2_W, 8), jnp.float32),    # conv2 out
            pltpu.VMEM((_C3_H, _C3_W, 8), jnp.float32),    # conv3 out
        ],
        compiler_params=pltpu.CompilerParams(
            dimension_semantics=("parallel",)),
        cost_estimate=pl.CostEstimate(
            flops=flops, transcendentals=0, bytes_accessed=bytes_accessed),
    )(xph, *param_args)
    return out.reshape(N, A)


# ---------------------------------------------------------------------------
# Pure-JAX reference (matches the PyTorch module) + deterministic params
# ---------------------------------------------------------------------------

def duel_qnet_reference(x_nchw, params, eps=_EPS):
    hi = lax.Precision.HIGHEST

    def conv_bn_relu(x, w, bn, stride):
        gamma, beta, mean, var = bn
        y = lax.conv_general_dilated(
            x, w, window_strides=(stride, stride), padding="VALID",
            dimension_numbers=("NCHW", "OIHW", "NCHW"), precision=hi)
        y = ((y - mean[None, :, None, None])
             * (gamma[None, :, None, None] / jnp.sqrt(var[None, :, None, None] + eps))
             + beta[None, :, None, None])
        return jnp.maximum(y, 0.0)

    y = conv_bn_relu(x_nchw, params["w1"], params["bn1"], 2)
    y = conv_bn_relu(y, params["w2"], params["bn2"], 2)
    y = conv_bn_relu(y, params["w3"], params["bn3"], 1)
    y = conv_bn_relu(y, params["w4"], params["bn4"], 1)
    f = y.reshape(y.shape[0], -1)                       # torch x.view(-1, 192)
    x1, x2 = f[:, :96], f[:, 96:]
    h1 = jnp.maximum(jnp.dot(x1, params["ws1"], precision=hi) + params["bs1"], 0.0)
    sv = jnp.dot(h1, params["ws2"], precision=hi) + params["bs2"]
    h2 = jnp.maximum(jnp.dot(x2, params["wa1"], precision=hi) + params["ba1"], 0.0)
    adv = jnp.dot(h2, params["wa2"], precision=hi) + params["ba2"]
    return sv + (adv - jnp.mean(adv, axis=1, keepdims=True))


def make_params(key, n_actions):
    ks = jax.random.split(key, 16)

    def nrm(k, shape, s=0.1):
        return (jax.random.normal(k, shape) * s).astype(jnp.float32)

    def bn(k, c):
        kg, kb, km, kv = jax.random.split(k, 4)
        gamma = (1.0 + 0.1 * jax.random.normal(kg, (c,))).astype(jnp.float32)
        beta = (0.05 * jax.random.normal(kb, (c,))).astype(jnp.float32)
        mean = (0.05 * jax.random.normal(km, (c,))).astype(jnp.float32)
        var = (0.5 + jnp.abs(jax.random.normal(kv, (c,)))).astype(jnp.float32)
        return (gamma, beta, mean, var)

    return {
        "w1": nrm(ks[0], (8, 1, 3, 3)), "w2": nrm(ks[1], (8, 8, 3, 3)),
        "w3": nrm(ks[2], (8, 8, 3, 3)), "w4": nrm(ks[3], (16, 8, 3, 3)),
        "bn1": bn(ks[4], 8), "bn2": bn(ks[5], 8),
        "bn3": bn(ks[6], 8), "bn4": bn(ks[7], 16),
        "ws1": nrm(ks[8], (96, 64)), "bs1": nrm(ks[9], (1, 64)),
        "ws2": nrm(ks[10], (64, 1)), "bs2": nrm(ks[11], (1, 1)),
        "wa1": nrm(ks[12], (96, 64)), "ba1": nrm(ks[13], (1, 64)),
        "wa2": nrm(ks[14], (64, n_actions)), "ba2": nrm(ks[15], (1, n_actions)),
    }


if __name__ == "__main__":
    N_ACTIONS = 7
    key = jax.random.PRNGKey(0)
    kp, kx = jax.random.split(key)

    params = make_params(kp, N_ACTIONS)
    prepped = prepare_params(params)
    x = jax.random.normal(kx, (2, 1, _IN_H, _IN_W), dtype=jnp.float32)

    fwd = jax.jit(lambda inp: duel_qnet_forward(inp, prepped))
    out = jax.block_until_ready(fwd(x))

    ref = jax.block_until_ready(
        jax.jit(lambda inp: duel_qnet_reference(inp, params))(x))

    assert out.shape == (2, N_ACTIONS)
    assert out.dtype == jnp.float32
    err = float(jnp.max(jnp.abs(out - ref)))
    assert err < 5e-3, f"Pallas output mismatch vs reference (max abs err {err})"
    print("KERNEL_OK")
</pallas_src>

<mosaic_0001>
module attributes {stable_mosaic.version = 11 : i64} {
  func.func @_duelq_kernel(%arg0: i32, %arg1: memref<1x15x12x8xf32, #tpu.memory_space<vmem>>, %arg2: memref<9x1x1x8xf32, #tpu.memory_space<vmem>>, %arg3: memref<1x1x8xf32, #tpu.memory_space<vmem>>, %arg4: memref<9x8x8xf32, #tpu.memory_space<vmem>>, %arg5: memref<1x8xf32, #tpu.memory_space<vmem>>, %arg6: memref<9x8x8xf32, #tpu.memory_space<vmem>>, %arg7: memref<1x8xf32, #tpu.memory_space<vmem>>, %arg8: memref<9x8x16xf32, #tpu.memory_space<vmem>>, %arg9: memref<1x16xf32, #tpu.memory_space<vmem>>, %arg10: memref<192x128xf32, #tpu.memory_space<vmem>>, %arg11: memref<1x128xf32, #tpu.memory_space<vmem>>, %arg12: memref<128x8xf32, #tpu.memory_space<vmem>>, %arg13: memref<1x8xf32, #tpu.memory_space<vmem>>, %arg14: memref<1x1x7xf32, #tpu.memory_space<vmem>>, %arg15: memref<14x11x8xf32, #tpu.memory_space<vmem>>, %arg16: memref<14x11x8xf32, #tpu.memory_space<vmem>>, %arg17: memref<6x10x8xf32, #tpu.memory_space<vmem>>, %arg18: memref<4x8x8xf32, #tpu.memory_space<vmem>>) attributes {dimension_semantics = [#tpu.dimension_semantics<parallel>], iteration_bounds = array<i64: 2>, scalar_prefetch = 0 : i64, scratch_operands = 4 : i64, tpu.core_type = #tpu.core_type<tc>, window_params = [{transform_indices = @transform_0, window_bounds = array<i64: 1, 15, 12, 8>}, {pipeline_mode = #tpu.pipeline_mode<synchronous>, transform_indices = @transform_1, window_bounds = array<i64: 9, 1, 1, 8>}, {pipeline_mode = #tpu.pipeline_mode<synchronous>, transform_indices = @transform_2, window_bounds = array<i64: 1, 1, 8>}, {pipeline_mode = #tpu.pipeline_mode<synchronous>, transform_indices = @transform_3, window_bounds = array<i64: 9, 8, 8>}, {pipeline_mode = #tpu.pipeline_mode<synchronous>, transform_indices = @transform_4, window_bounds = array<i64: 1, 8>}, {pipeline_mode = #tpu.pipeline_mode<synchronous>, transform_indices = @transform_5, window_bounds = array<i64: 9, 8, 8>}, {pipeline_mode = #tpu.pipeline_mode<synchronous>, transform_indices = @transform_6, window_bounds = array<i64: 1, 8>}, {pipeline_mode = #tpu.pipeline_mode<synchronous>, transform_indices = @transform_7, window_bounds = array<i64: 9, 8, 16>}, {pipeline_mode = #tpu.pipeline_mode<synchronous>, transform_indices = @transform_8, window_bounds = array<i64: 1, 16>}, {pipeline_mode = #tpu.pipeline_mode<synchronous>, transform_indices = @transform_9, window_bounds = array<i64: 192, 128>}, {pipeline_mode = #tpu.pipeline_mode<synchronous>, transform_indices = @transform_10, window_bounds = array<i64: 1, 128>}, {pipeline_mode = #tpu.pipeline_mode<synchronous>, transform_indices = @transform_11, window_bounds = array<i64: 128, 8>}, {pipeline_mode = #tpu.pipeline_mode<synchronous>, transform_indices = @transform_12, window_bounds = array<i64: 1, 8>}, {transform_indices = @transform_13, window_bounds = array<i64: 1, 1, 7>}]} {
    %c0 = arith.constant 0 : index
    %c0_0 = arith.constant 0 : index
    %c0_1 = arith.constant 0 : index
    %c0_2 = arith.constant 0 : index
    %0 = vector.load %arg1[%c0, %c0_0, %c0_1, %c0_2] : memref<1x15x12x8xf32, #tpu.memory_space<vmem>>, vector<1x15x12x8xf32>
    %1 = vector.shape_cast %0 : vector<1x15x12x8xf32> to vector<15x12x8xf32>
    %cst = arith.constant 0.000000e+00 : f32
    %2 = vector.broadcast %cst : f32 to vector<14x11x8xf32>
    %3 = vector.extract_strided_slice %1 {offsets = [0, 0, 0], sizes = [14, 11, 1], strides = [1, 1, 1]} : vector<15x12x8xf32> to vector<14x11x1xf32>
    %c0_3 = arith.constant 0 : index
    %c0_4 = arith.constant 0 : index
    %c0_5 = arith.constant 0 : index
    %c0_6 = arith.constant 0 : index
    %4 = vector.load %arg2[%c0_3, %c0_4, %c0_5, %c0_6] : memref<9x1x1x8xf32, #tpu.memory_space<vmem>>, vector<1x1x1x8xf32>
    %5 = vector.shape_cast %4 : vector<1x1x1x8xf32> to vector<1x1x8xf32>
    %6 = vector.broadcast %3 : vector<14x11x1xf32> to vector<14x11x8xf32>
    %7 = vector.broadcast %5 : vector<1x1x8xf32> to vector<14x11x8xf32>
    %8 = arith.mulf %6, %7 : vector<14x11x8xf32>
    %9 = arith.addf %2, %8 : vector<14x11x8xf32>
    %10 = vector.extract_strided_slice %1 {offsets = [0, 0, 1], sizes = [14, 11, 1], strides = [1, 1, 1]} : vector<15x12x8xf32> to vector<14x11x1xf32>
    %c1 = arith.constant 1 : index
    %c0_7 = arith.constant 0 : index
    %c0_8 = arith.constant 0 : index
    %c0_9 = arith.constant 0 : index
    %11 = vector.load %arg2[%c1, %c0_7, %c0_8, %c0_9] : memref<9x1x1x8xf32, #tpu.memory_space<vmem>>, vector<1x1x1x8xf32>
    %12 = vector.shape_cast %11 : vector<1x1x1x8xf32> to vector<1x1x8xf32>
    %13 = vector.broadcast %10 : vector<14x11x1xf32> to vector<14x11x8xf32>
    %14 = vector.broadcast %12 : vector<1x1x8xf32> to vector<14x11x8xf32>
    %15 = arith.mulf %13, %14 : vector<14x11x8xf32>
    %16 = arith.addf %9, %15 : vector<14x11x8xf32>
    %17 = vector.extract_strided_slice %1 {offsets = [0, 0, 2], sizes = [14, 11, 1], strides = [1, 1, 1]} : vector<15x12x8xf32> to vector<14x11x1xf32>
    %c2 = arith.constant 2 : index
    %c0_10 = arith.constant 0 : index
    %c0_11 = arith.constant 0 : index
    %c0_12 = arith.constant 0 : index
    %18 = vector.load %arg2[%c2, %c0_10, %c0_11, %c0_12] : memref<9x1x1x8xf32, #tpu.memory_space<vmem>>, vector<1x1x1x8xf32>
    %19 = vector.shape_cast %18 : vector<1x1x1x8xf32> to vector<1x1x8xf32>
    %20 = vector.broadcast %17 : vector<14x11x1xf32> to vector<14x11x8xf32>
    %21 = vector.broadcast %19 : vector<1x1x8xf32> to vector<14x11x8xf32>
    %22 = arith.mulf %20, %21 : vector<14x11x8xf32>
    %23 = arith.addf %16, %22 : vector<14x11x8xf32>
    %24 = vector.extract_strided_slice %1 {offsets = [0, 0, 4], sizes = [14, 11, 1], strides = [1, 1, 1]} : vector<15x12x8xf32> to vector<14x11x1xf32>
    %c3 = arith.constant 3 : index
    %c0_13 = arith.constant 0 : index
    %c0_14 = arith.constant 0 : index
    %c0_15 = arith.constant 0 : index
    %25 = vector.load %arg2[%c3, %c0_13, %c0_14, %c0_15] : memref<9x1x1x8xf32, #tpu.memory_space<vmem>>, vector<1x1x1x8xf32>
    %26 = vector.shape_cast %25 : vector<1x1x1x8xf32> to vector<1x1x8xf32>
    %27 = vector.broadcast %24 : vector<14x11x1xf32> to vector<14x11x8xf32>
    %28 = vector.broadcast %26 : vector<1x1x8xf32> to vector<14x11x8xf32>
    %29 = arith.mulf %27, %28 : vector<14x11x8xf32>
    %30 = arith.addf %23, %29 : vector<14x11x8xf32>
    %31 = vector.extract_strided_slice %1 {offsets = [0, 0, 5], sizes = [14, 11, 1], strides = [1, 1, 1]} : vector<15x12x8xf32> to vector<14x11x1xf32>
    %c4 = arith.constant 4 : index
    %c0_16 = arith.constant 0 : index
    %c0_17 = arith.constant 0 : index
    %c0_18 = arith.constant 0 : index
    %32 = vector.load %arg2[%c4, %c0_16, %c0_17, %c0_18] : memref<9x1x1x8xf32, #tpu.memory_space<vmem>>, vector<1x1x1x8xf32>
    %33 = vector.shape_cast %32 : vector<1x1x1x8xf32> to vector<1x1x8xf32>
    %34 = vector.broadcast %31 : vector<14x11x1xf32> to vector<14x11x8xf32>
    %35 = vector.broadcast %33 : vector<1x1x8xf32> to vector<14x11x8xf32>
    %36 = arith.mulf %34, %35 : vector<14x11x8xf32>
    %37 = arith.addf %30, %36 : vector<14x11x8xf32>
    %38 = vector.extract_strided_slice %1 {offsets = [0, 0, 6], sizes = [14, 11, 1], strides = [1, 1, 1]} : vector<15x12x8xf32> to vector<14x11x1xf32>
    %c5 = arith.constant 5 : index
    %c0_19 = arith.constant 0 : index
    %c0_20 = arith.constant 0 : index
    %c0_21 = arith.constant 0 : index
    %39 = vector.load %arg2[%c5, %c0_19, %c0_20, %c0_21] : memref<9x1x1x8xf32, #tpu.memory_space<vmem>>, vector<1x1x1x8xf32>
    %40 = vector.shape_cast %39 : vector<1x1x1x8xf32> to vector<1x1x8xf32>
    %41 = vector.broadcast %38 : vector<14x11x1xf32> to vector<14x11x8xf32>
    %42 = vector.broadcast %40 : vector<1x1x8xf32> to vector<14x11x8xf32>
    %43 = arith.mulf %41, %42 : vector<14x11x8xf32>
    %44 = arith.addf %37, %43 : vector<14x11x8xf32>
    %45 = vector.extract_strided_slice %1 {offsets = [1, 0, 0], sizes = [14, 11, 1], strides = [1, 1, 1]} : vector<15x12x8xf32> to vector<14x11x1xf32>
    %c6 = arith.constant 6 : index
    %c0_22 = arith.constant 0 : index
    %c0_23 = arith.constant 0 : index
    %c0_24 = arith.constant 0 : index
    %46 = vector.load %arg2[%c6, %c0_22, %c0_23, %c0_24] : memref<9x1x1x8xf32, #tpu.memory_space<vmem>>, vector<1x1x1x8xf32>
    %47 = vector.shape_cast %46 : vector<1x1x1x8xf32> to vector<1x1x8xf32>
    %48 = vector.broadcast %45 : vector<14x11x1xf32> to vector<14x11x8xf32>
    %49 = vector.broadcast %47 : vector<1x1x8xf32> to vector<14x11x8xf32>
    %50 = arith.mulf %48, %49 : vector<14x11x8xf32>
    %51 = arith.addf %44, %50 : vector<14x11x8xf32>
    %52 = vector.extract_strided_slice %1 {offsets = [1, 0, 1], sizes = [14, 11, 1], strides = [1, 1, 1]} : vector<15x12x8xf32> to vector<14x11x1xf32>
    %c7 = arith.constant 7 : index
    %c0_25 = arith.constant 0 : index
    %c0_26 = arith.constant 0 : index
    %c0_27 = arith.constant 0 : index
    %53 = vector.load %arg2[%c7, %c0_25, %c0_26, %c0_27] : memref<9x1x1x8xf32, #tpu.memory_space<vmem>>, vector<1x1x1x8xf32>
    %54 = vector.shape_cast %53 : vector<1x1x1x8xf32> to vector<1x1x8xf32>
    %55 = vector.broadcast %52 : vector<14x11x1xf32> to vector<14x11x8xf32>
    %56 = vector.broadcast %54 : vector<1x1x8xf32> to vector<14x11x8xf32>
    %57 = arith.mulf %55, %56 : vector<14x11x8xf32>
    %58 = arith.addf %51, %57 : vector<14x11x8xf32>
    %59 = vector.extract_strided_slice %1 {offsets = [1, 0, 2], sizes = [14, 11, 1], strides = [1, 1, 1]} : vector<15x12x8xf32> to vector<14x11x1xf32>
    %c8 = arith.constant 8 : index
    %c0_28 = arith.constant 0 : index
    %c0_29 = arith.constant 0 : index
    %c0_30 = arith.constant 0 : index
    %60 = vector.load %arg2[%c8, %c0_28, %c0_29, %c0_30] : memref<9x1x1x8xf32, #tpu.memory_space<vmem>>, vector<1x1x1x8xf32>
    %61 = vector.shape_cast %60 : vector<1x1x1x8xf32> to vector<1x1x8xf32>
    %62 = vector.broadcast %59 : vector<14x11x1xf32> to vector<14x11x8xf32>
    %63 = vector.broadcast %61 : vector<1x1x8xf32> to vector<14x11x8xf32>
    %64 = arith.mulf %62, %63 : vector<14x11x8xf32>
    %65 = arith.addf %58, %64 : vector<14x11x8xf32>
    %c0_31 = arith.constant 0 : index
    %c0_32 = arith.constant 0 : index
    %c0_33 = arith.constant 0 : index
    %66 = vector.load %arg3[%c0_31, %c0_32, %c0_33] : memref<1x1x8xf32, #tpu.memory_space<vmem>>, vector<1x1x8xf32>
    %67 = vector.broadcast %66 : vector<1x1x8xf32> to vector<14x11x8xf32>
    %68 = arith.addf %65, %67 : vector<14x11x8xf32>
    %cst_34 = arith.constant 0.000000e+00 : f32
    %69 = vector.broadcast %cst_34 : f32 to vector<14x11x8xf32>
    %70 = arith.maximumf %68, %69 : vector<14x11x8xf32>
    %c0_35 = arith.constant 0 : index
    %c0_36 = arith.constant 0 : index
    %c0_37 = arith.constant 0 : index
    %71 = vector.load %arg15[%c0_35, %c0_36, %c0_37] : memref<14x11x8xf32, #tpu.memory_space<vmem>>, vector<14x11x8xf32>
    tpu.vector_store %arg15[%c0_35, %c0_36, %c0_37], %70 {strides = array<i32>} : memref<14x11x8xf32, #tpu.memory_space<vmem>>, vector<14x11x8xf32>,
    %cst_38 = arith.constant 0.000000e+00 : f32
    %72 = vector.broadcast %cst_38 : f32 to vector<14x11x8xf32>
    %73 = vector.extract_strided_slice %1 {offsets = [0, 0, 2], sizes = [14, 11, 1], strides = [1, 1, 1]} : vector<15x12x8xf32> to vector<14x11x1xf32>
    %c0_39 = arith.constant 0 : index
    %c0_40 = arith.constant 0 : index
    %c0_41 = arith.constant 0 : index
    %c0_42 = arith.constant 0 : index
    %74 = vector.load %arg2[%c0_39, %c0_40, %c0_41, %c0_42] : memref<9x1x1x8xf32, #tpu.memory_space<vmem>>, vector<1x1x1x8xf32>
    %75 = vector.shape_cast %74 : vector<1x1x1x8xf32> to vector<1x1x8xf32>
    %76 = vector.broadcast %73 : vector<14x11x1xf32> to vector<14x11x8xf32>
    %77 = vector.broadcast %75 : vector<1x1x8xf32> to vector<14x11x8xf32>
    %78 = arith.mulf %76, %77 : vector<14x11x8xf32>
    %79 = arith.addf %72, %78 : vector<14x11x8xf32>
    %80 = vector.extract_strided_slice %1 {offsets = [0, 0, 3], sizes = [14, 11, 1], strides = [1, 1, 1]} : vector<15x12x8xf32> to vector<14x11x1xf32>
    %c1_43 = arith.constant 1 : index
    %c0_44 = arith.constant 0 : index
    %c0_45 = arith.constant 0 : index
    %c0_46 = arith.constant 0 : index
    %81 = vector.load %arg2[%c1_43, %c0_44, %c0_45, %c0_46] : memref<9x1x1x8xf32, #tpu.memory_space<vmem>>, vector<1x1x1x8xf32>
    %82 = vector.shape_cast %81 : vector<1x1x1x8xf32> to vector<1x1x8xf32>
    %83 = vector.broadcast %80 : vector<14x11x1xf32> to vector<14x11x8xf32>
    %84 = vector.broadcast %82 : vector<1x1x8xf32> to vector<14x11x8xf32>
    %85 = arith.mulf %83, %84 : vector<14x11x8xf32>
    %86 = arith.addf %79, %85 : vector<14x11x8xf32>
    %87 = vector.extract_strided_slice %1 {offsets = [0, 1, 0], sizes = [14, 11, 1], strides = [1, 1, 1]} : vector<15x12x8xf32> to vector<14x11x1xf32>
    %c2_47 = arith.constant 2 : index
    %c0_48 = arith.constant 0 : index
    %c0_49 = arith.constant 0 : index
    %c0_50 = arith.constant 0 : index
    %88 = vector.load %arg2[%c2_47, %c0_48, %c0_49, %c0_50] : memref<9x1x1x8xf32, #tpu.memory_space<vmem>>, vector<1x1x1x8xf32>
    %89 = vector.shape_cast %88 : vector<1x1x1x8xf32> to vector<1x1x8xf32>
    %90 = vector.broadcast %87 : vector<14x11x1xf32> to vector<14x11x8xf32>
    %91 = vector.broadcast %89 : vector<1x1x8xf32> to vector<14x11x8xf32>
    %92 = arith.mulf %90, %91 : vector<14x11x8xf32>
    %93 = arith.addf %86, %92 : vector<14x11x8xf32>
    %94 = vector.extract_strided_slice %1 {offsets = [0, 0, 6], sizes = [14, 11, 1], strides = [1, 1, 1]} : vector<15x12x8xf32> to vector<14x11x1xf32>
    %c3_51 = arith.constant 3 : index
    %c0_52 = arith.constant 0 : index
    %c0_53 = arith.constant 0 : index
    %c0_54 = arith.constant 0 : index
    %95 = vector.load %arg2[%c3_51, %c0_52, %c0_53, %c0_54] : memref<9x1x1x8xf32, #tpu.memory_space<vmem>>, vector<1x1x1x8xf32>
    %96 = vector.shape_cast %95 : vector<1x1x1x8xf32> to vector<1x1x8xf32>
    %97 = vector.broadcast %94 : vector<14x11x1xf32> to vector<14x11x8xf32>
    %98 = vector.broadcast %96 : vector<1x1x8xf32> to vector<14x11x8xf32>
    %99 = arith.mulf %97, %98 : vector<14x11x8xf32>
    %100 = arith.addf %93, %99 : vector<14x11x8xf32>
    %101 = vector.extract_strided_slice %1 {offsets = [0, 0, 7], sizes = [14, 11, 1], strides = [1, 1, 1]} : vector<15x12x8xf32> to vector<14x11x1xf32>
    %c4_55 = arith.constant 4 : index
    %c0_56 = arith.constant 0 : index
    %c0_57 = arith.constant 0 : index
    %c0_58 = arith.constant 0 : index
    %102 = vector.load %arg2[%c4_55, %c0_56, %c0_57, %c0_58] : memref<9x1x1x8xf32, #tpu.memory_space<vmem>>, vector<1x1x1x8xf32>
    %103 = vector.shape_cast %102 : vector<1x1x1x8xf32> to vector<1x1x8xf32>
    %104 = vector.broadcast %101 : vector<14x11x1xf32> to vector<14x11x8xf32>
    %105 = vector.broadcast %103 : vector<1x1x8xf32> to vector<14x11x8xf32>
    %106 = arith.mulf %104, %105 : vector<14x11x8xf32>
    %107 = arith.addf %100, %106 : vector<14x11x8xf32>
    %108 = vector.extract_strided_slice %1 {offsets = [0, 1, 4], sizes = [14, 11, 1], strides = [1, 1, 1]} : vector<15x12x8xf32> to vector<14x11x1xf32>
    %c5_59 = arith.constant 5 : index
    %c0_60 = arith.constant 0 : index
    %c0_61 = arith.constant 0 : index
    %c0_62 = arith.constant 0 : index
    %109 = vector.load %arg2[%c5_59, %c0_60, %c0_61, %c0_62] : memref<9x1x1x8xf32, #tpu.memory_space<vmem>>, vector<1x1x1x8xf32>
    %110 = vector.shape_cast %109 : vector<1x1x1x8xf32> to vector<1x1x8xf32>
    %111 = vector.broadcast %108 : vector<14x11x1xf32> to vector<14x11x8xf32>
    %112 = vector.broadcast %110 : vector<1x1x8xf32> to vector<14x11x8xf32>
    %113 = arith.mulf %111, %112 : vector<14x11x8xf32>
    %114 = arith.addf %107, %113 : vector<14x11x8xf32>
    %115 = vector.extract_strided_slice %1 {offsets = [1, 0, 2], sizes = [14, 11, 1], strides = [1, 1, 1]} : vector<15x12x8xf32> to vector<14x11x1xf32>
    %c6_63 = arith.constant 6 : index
    %c0_64 = arith.constant 0 : index
    %c0_65 = arith.constant 0 : index
    %c0_66 = arith.constant 0 : index
    %116 = vector.load %arg2[%c6_63, %c0_64, %c0_65, %c0_66] : memref<9x1x1x8xf32, #tpu.memory_space<vmem>>, vector<1x1x1x8xf32>
    %117 = vector.shape_cast %116 : vector<1x1x1x8xf32> to vector<1x1x8xf32>
    %118 = vector.broadcast %115 : vector<14x11x1xf32> to vector<14x11x8xf32>
    %119 = vector.broadcast %117 : vector<1x1x8xf32> to vector<14x11x8xf32>
    %120 = arith.mulf %118, %119 : vector<14x11x8xf32>
    %121 = arith.addf %114, %120 : vector<14x11x8xf32>
    %122 = vector.extract_strided_slice %1 {offsets = [1, 0, 3], sizes = [14, 11, 1], strides = [1, 1, 1]} : vector<15x12x8xf32> to vector<14x11x1xf32>
    %c7_67 = arith.constant 7 : index
    %c0_68 = arith.constant 0 : index
    %c0_69 = arith.constant 0 : index
    %c0_70 = arith.constant 0 : index
    %123 = vector.load %arg2[%c7_67, %c0_68, %c0_69, %c0_70] : memref<9x1x1x8xf32, #tpu.memory_space<vmem>>, vector<1x1x1x8xf32>
    %124 = vector.shape_cast %123 : vector<1x1x1x8xf32> to vector<1x1x8xf32>
    %125 = vector.broadcast %122 : vector<14x11x1xf32> to vector<14x11x8xf32>
    %126 = vector.broadcast %124 : vector<1x1x8xf32> to vector<14x11x8xf32>
    %127 = arith.mulf %125, %126 : vector<14x11x8xf32>
    %128 = arith.addf %121, %127 : vector<14x11x8xf32>
    %129 = vector.extract_strided_slice %1 {offsets = [1, 1, 0], sizes = [14, 11, 1], strides = [1, 1, 1]} : vector<15x12x8xf32> to vector<14x11x1xf32>
    %c8_71 = arith.constant 8 : index
    %c0_72 = arith.constant 0 : index
    %c0_73 = arith.constant 0 : index
    %c0_74 = arith.constant 0 : index
    %130 = vector.load %arg2[%c8_71, %c0_72, %c0_73, %c0_74] : memref<9x1x1x8xf32, #tpu.memory_space<vmem>>, vector<1x1x1x8xf32>
    %131 = vector.shape_cast %130 : vector<1x1x1x8xf32> to vector<1x1x8xf32>
    %132 = vector.broadcast %129 : vector<14x11x1xf32> to vector<14x11x8xf32>
    %133 = vector.broadcast %131 : vector<1x1x8xf32> to vector<14x11x8xf32>
    %134 = arith.mulf %132, %133 : vector<14x11x8xf32>
    %135 = arith.addf %128, %134 : vector<14x11x8xf32>
    %c0_75 = arith.constant 0 : index
    %c0_76 = arith.constant 0 : index
    %c0_77 = arith.constant 0 : index
    %136 = vector.load %arg3[%c0_75, %c0_76, %c0_77] : memref<1x1x8xf32, #tpu.memory_space<vmem>>, vector<1x1x8xf32>
    %137 = vector.broadcast %136 : vector<1x1x8xf32> to vector<14x11x8xf32>
    %138 = arith.addf %135, %137 : vector<14x11x8xf32>
    %cst_78 = arith.constant 0.000000e+00 : f32
    %139 = vector.broadcast %cst_78 : f32 to vector<14x11x8xf32>
    %140 = arith.maximumf %138, %139 : vector<14x11x8xf32>
    %c0_79 = arith.constant 0 : index
    %c0_80 = arith.constant 0 : index
    %c0_81 = arith.constant 0 : index
    %141 = vector.load %arg16[%c0_79, %c0_80, %c0_81] : memref<14x11x8xf32, #tpu.memory_space<vmem>>, vector<14x11x8xf32>
    tpu.vector_store %arg16[%c0_79, %c0_80, %c0_81], %140 {strides = array<i32>} : memref<14x11x8xf32, #tpu.memory_space<vmem>>, vector<14x11x8xf32>,
    %cst_82 = arith.constant 0.000000e+00 : f32
    %142 = vector.broadcast %cst_82 : f32 to vector<10x8xf32>
    %c0_83 = arith.constant 0 : index
    %c0_84 = arith.constant 0 : index
    %c0_85 = arith.constant 0 : index
    %143 = vector.load %arg15[%c0_83, %c0_84, %c0_85] : memref<14x11x8xf32, #tpu.memory_space<vmem>>, vector<1x10x8xf32>
    %144 = vector.shape_cast %143 : vector<1x10x8xf32> to vector<10x8xf32>
    %c0_86 = arith.constant 0 : index
    %c0_87 = arith.constant 0 : index
    %c0_88 = arith.constant 0 : index
    %145 = vector.load %arg4[%c0_86, %c0_87, %c0_88] : memref<9x8x8xf32, #tpu.memory_space<vmem>>, vector<1x8x8xf32>
    %146 = vector.shape_cast %145 : vector<1x8x8xf32> to vector<8x8xf32>
    %cst_89 = arith.constant dense<0.000000e+00> : vector<10x8xf32>
    %147 = tpu.matmul %144, %146, %cst_89 {dimension_numbers = #tpu.dot_dimension_numbers<[1], [0], [0], [1], [0, 0, 1, 1], [], []>} : vector<10x8xf32>, vector<8x8xf32>, vector<10x8xf32> -> vector<10x8xf32>
    %148 = arith.addf %142, %147 : vector<10x8xf32>
    %c0_90 = arith.constant 0 : index
    %c0_91 = arith.constant 0 : index
    %c0_92 = arith.constant 0 : index
    %149 = vector.load %arg16[%c0_90, %c0_91, %c0_92] : memref<14x11x8xf32, #tpu.memory_space<vmem>>, vector<1x10x8xf32>
    %150 = vector.shape_cast %149 : vector<1x10x8xf32> to vector<10x8xf32>
    %c1_93 = arith.constant 1 : index
    %c0_94 = arith.constant 0 : index
    %c0_95 = arith.constant 0 : index
    %151 = vector.load %arg4[%c1_93, %c0_94, %c0_95] : memref<9x8x8xf32, #tpu.memory_space<vmem>>, vector<1x8x8xf32>
    %152 = vector.shape_cast %151 : vector<1x8x8xf32> to vector<8x8xf32>
    %cst_96 = arith.constant dense<0.000000e+00> : vector<10x8xf32>
    %153 = tpu.matmul %150, %152, %cst_96 {dimension_numbers = #tpu.dot_dimension_numbers<[1], [0], [0], [1], [0, 0, 1, 1], [], []>} : vector<10x8xf32>, vector<8x8xf32>, vector<10x8xf32> -> vector<10x8xf32>
    %154 = arith.addf %148, %153 : vector<10x8xf32>
    %c0_97 = arith.constant 0 : index
    %c1_98 = arith.constant 1 : index
    %c0_99 = arith.constant 0 : index
    %155 = vector.load %arg15[%c0_97, %c1_98, %c0_99] : memref<14x11x8xf32, #tpu.memory_space<vmem>>, vector<1x10x8xf32>
    %156 = vector.shape_cast %155 : vector<1x10x8xf32> to vector<10x8xf32>
    %c2_100 = arith.constant 2 : index
    %c0_101 = arith.constant 0 : index
    %c0_102 = arith.constant 0 : index
    %157 = vector.load %arg4[%c2_100, %c0_101, %c0_102] : memref<9x8x8xf32, #tpu.memory_space<vmem>>, vector<1x8x8xf32>
    %158 = vector.shape_cast %157 : vector<1x8x8xf32> to vector<8x8xf32>
    %cst_103 = arith.constant dense<0.000000e+00> : vector<10x8xf32>
    %159 = tpu.matmul %156, %158, %cst_103 {dimension_numbers = #tpu.dot_dimension_numbers<[1], [0], [0], [1], [0, 0, 1, 1], [], []>} : vector<10x8xf32>, vector<8x8xf32>, vector<10x8xf32> -> vector<10x8xf32>
    %160 = arith.addf %154, %159 : vector<10x8xf32>
    %c1_104 = arith.constant 1 : index
    %c0_105 = arith.constant 0 : index
    %c0_106 = arith.constant 0 : index
    %161 = vector.load %arg15[%c1_104, %c0_105, %c0_106] : memref<14x11x8xf32, #tpu.memory_space<vmem>>, vector<1x10x8xf32>
    %162 = vector.shape_cast %161 : vector<1x10x8xf32> to vector<10x8xf32>
    %c3_107 = arith.constant 3 : index
    %c0_108 = arith.constant 0 : index
    %c0_109 = arith.constant 0 : index
    %163 = vector.load %arg4[%c3_107, %c0_108, %c0_109] : memref<9x8x8xf32, #tpu.memory_space<vmem>>, vector<1x8x8xf32>
    %164 = vector.shape_cast %163 : vector<1x8x8xf32> to vector<8x8xf32>
    %cst_110 = arith.constant dense<0.000000e+00> : vector<10x8xf32>
    %165 = tpu.matmul %162, %164, %cst_110 {dimension_numbers = #tpu.dot_dimension_numbers<[1], [0], [0], [1], [0, 0, 1, 1], [], []>} : vector<10x8xf32>, vector<8x8xf32>, vector<10x8xf32> -> vector<10x8xf32>
    %166 = arith.addf %160, %165 : vector<10x8xf32>
    %c1_111 = arith.constant 1 : index
    %c0_112 = arith.constant 0 : index
    %c0_113 = arith.constant 0 : index
    %167 = vector.load %arg16[%c1_111, %c0_112, %c0_113] : memref<14x11x8xf32, #tpu.memory_space<vmem>>, vector<1x10x8xf32>
    %168 = vector.shape_cast %167 : vector<1x10x8xf32> to vector<10x8xf32>
    %c4_114 = arith.constant 4 : index
    %c0_115 = arith.constant 0 : index
    %c0_116 = arith.constant 0 : index
    %169 = vector.load %arg4[%c4_114, %c0_115, %c0_116] : memref<9x8x8xf32, #tpu.memory_space<vmem>>, vector<1x8x8xf32>
    %170 = vector.shape_cast %169 : vector<1x8x8xf32> to vector<8x8xf32>
    %cst_117 = arith.constant dense<0.000000e+00> : vector<10x8xf32>
    %171 = tpu.matmul %168, %170, %cst_117 {dimension_numbers = #tpu.dot_dimension_numbers<[1], [0], [0], [1], [0, 0, 1, 1], [], []>} : vector<10x8xf32>, vector<8x8xf32>, vector<10x8xf32> -> vector<10x8xf32>
    %172 = arith.addf %166, %171 : vector<10x8xf32>
    %c1_118 = arith.constant 1 : index
    %c1_119 = arith.constant 1 : index
    %c0_120 = arith.constant 0 : index
    %173 = vector.load %arg15[%c1_118, %c1_119, %c0_120] : memref<14x11x8xf32, #tpu.memory_space<vmem>>, vector<1x10x8xf32>
    %174 = vector.shape_cast %173 : vector<1x10x8xf32> to vector<10x8xf32>
    %c5_121 = arith.constant 5 : index
    %c0_122 = arith.constant 0 : index
    %c0_123 = arith.constant 0 : index
    %175 = vector.load %arg4[%c5_121, %c0_122, %c0_123] : memref<9x8x8xf32, #tpu.memory_space<vmem>>, vector<1x8x8xf32>
    %176 = vector.shape_cast %175 : vector<1x8x8xf32> to vector<8x8xf32>
    %cst_124 = arith.constant dense<0.000000e+00> : vector<10x8xf32>
    %177 = tpu.matmul %174, %176, %cst_124 {dimension_numbers = #tpu.dot_dimension_numbers<[1], [0], [0], [1], [0, 0, 1, 1], [], []>} : vector<10x8xf32>, vector<8x8xf32>, vector<10x8xf32> -> vector<10x8xf32>
    %178 = arith.addf %172, %177 : vector<10x8xf32>
    %c2_125 = arith.constant 2 : index
    %c0_126 = arith.constant 0 : index
    %c0_127 = arith.constant 0 : index
    %179 = vector.load %arg15[%c2_125, %c0_126, %c0_127] : memref<14x11x8xf32, #tpu.memory_space<vmem>>, vector<1x10x8xf32>
    %180 = vector.shape_cast %179 : vector<1x10x8xf32> to vector<10x8xf32>
    %c6_128 = arith.constant 6 : index
    %c0_129 = arith.constant 0 : index
    %c0_130 = arith.constant 0 : index
    %181 = vector.load %arg4[%c6_128, %c0_129, %c0_130] : memref<9x8x8xf32, #tpu.memory_space<vmem>>, vector<1x8x8xf32>
    %182 = vector.shape_cast %181 : vector<1x8x8xf32> to vector<8x8xf32>
    %cst_131 = arith.constant dense<0.000000e+00> : vector<10x8xf32>
    %183 = tpu.matmul %180, %182, %cst_131 {dimension_numbers = #tpu.dot_dimension_numbers<[1], [0], [0], [1], [0, 0, 1, 1], [], []>} : vector<10x8xf32>, vector<8x8xf32>, vector<10x8xf32> -> vector<10x8xf32>
    %184 = arith.addf %178, %183 : vector<10x8xf32>
    %c2_132 = arith.constant 2 : index
    %c0_133 = arith.constant 0 : index
    %c0_134 = arith.constant 0 : index
    %185 = vector.load %arg16[%c2_132, %c0_133, %c0_134] : memref<14x11x8xf32, #tpu.memory_space<vmem>>, vector<1x10x8xf32>
    %186 = vector.shape_cast %185 : vector<1x10x8xf32> to vector<10x8xf32>
    %c7_135 = arith.constant 7 : index
    %c0_136 = arith.constant 0 : index
    %c0_137 = arith.constant 0 : index
    %187 = vector.load %arg4[%c7_135, %c0_136, %c0_137] : memref<9x8x8xf32, #tpu.memory_space<vmem>>, vector<1x8x8xf32>
    %188 = vector.shape_cast %187 : vector<1x8x8xf32> to vector<8x8xf32>
    %cst_138 = arith.constant dense<0.000000e+00> : vector<10x8xf32>
    %189 = tpu.matmul %186, %188, %cst_138 {dimension_numbers = #tpu.dot_dimension_numbers<[1], [0], [0], [1], [0, 0, 1, 1], [], []>} : vector<10x8xf32>, vector<8x8xf32>, vector<10x8xf32> -> vector<10x8xf32>
    %190 = arith.addf %184, %189 : vector<10x8xf32>
    %c2_139 = arith.constant 2 : index
    %c1_140 = arith.constant 1 : index
    %c0_141 = arith.constant 0 : index
    %191 = vector.load %arg15[%c2_139, %c1_140, %c0_141] : memref<14x11x8xf32, #tpu.memory_space<vmem>>, vector<1x10x8xf32>
    %192 = vector.shape_cast %191 : vector<1x10x8xf32> to vector<10x8xf32>
    %c8_142 = arith.constant 8 : index
    %c0_143 = arith.constant 0 : index
    %c0_144 = arith.constant 0 : index
    %193 = vector.load %arg4[%c8_142, %c0_143, %c0_144] : memref<9x8x8xf32, #tpu.memory_space<vmem>>, vector<1x8x8xf32>
    %194 = vector.shape_cast %193 : vector<1x8x8xf32> to vector<8x8xf32>
    %cst_145 = arith.constant dense<0.000000e+00> : vector<10x8xf32>
    %195 = tpu.matmul %192, %194, %cst_145 {dimension_numbers = #tpu.dot_dimension_numbers<[1], [0], [0], [1], [0, 0, 1, 1], [], []>} : vector<10x8xf32>, vector<8x8xf32>, vector<10x8xf32> -> vector<10x8xf32>
    %196 = arith.addf %190, %195 : vector<10x8xf32>
    %c0_146 = arith.constant 0 : index
    %c0_147 = arith.constant 0 : index
    %197 = vector.load %arg5[%c0_146, %c0_147] : memref<1x8xf32, #tpu.memory_space<vmem>>, vector<1x8xf32>
    %198 = vector.broadcast %197 : vector<1x8xf32> to vector<10x8xf32>
    %199 = arith.addf %196, %198 : vector<10x8xf32>
    %cst_148 = arith.constant 0.000000e+00 : f32
    %200 = vector.broadcast %cst_148 : f32 to vector<10x8xf32>
    %201 = arith.maximumf %199, %200 : vector<10x8xf32>
    %c0_149 = arith.constant 0 : index
    %c0_150 = arith.constant 0 : index
    %c0_151 = arith.constant 0 : index
    %202 = vector.load %arg17[%c0_149, %c0_150, %c0_151] : memref<6x10x8xf32, #tpu.memory_space<vmem>>, vector<1x10x8xf32>
    %203 = vector.shape_cast %202 : vector<1x10x8xf32> to vector<10x8xf32>
    %204 = vector.shape_cast %201 : vector<10x8xf32> to vector<1x10x8xf32>
    tpu.vector_store %arg17[%c0_149, %c0_150, %c0_151], %204 {strides = array<i32>} : memref<6x10x8xf32, #tpu.memory_space<vmem>>, vector<1x10x8xf32>,
    %cst_152 = arith.constant 0.000000e+00 : f32
    %205 = vector.broadcast %cst_152 : f32 to vector<10x8xf32>
    %c2_153 = arith.constant 2 : index
    %c0_154 = arith.constant 0 : index
    %c0_155 = arith.constant 0 : index
    %206 = vector.load %arg15[%c2_153, %c0_154, %c0_155] : memref<14x11x8xf32, #tpu.memory_space<vmem>>, vector<1x10x8xf32>
    %207 = vector.shape_cast %206 : vector<1x10x8xf32> to vector<10x8xf32>
    %c0_156 = arith.constant 0 : index
    %c0_157 = arith.constant 0 : index
    %c0_158 = arith.constant 0 : index
    %208 = vector.load %arg4[%c0_156, %c0_157, %c0_158] : memref<9x8x8xf32, #tpu.memory_space<vmem>>, vector<1x8x8xf32>
    %209 = vector.shape_cast %208 : vector<1x8x8xf32> to vector<8x8xf32>
    %cst_159 = arith.constant dense<0.000000e+00> : vector<10x8xf32>
    %210 = tpu.matmul %207, %209, %cst_159 {dimension_numbers = #tpu.dot_dimension_numbers<[1], [0], [0], [1], [0, 0, 1, 1], [], []>} : vector<10x8xf32>, vector<8x8xf32>, vector<10x8xf32> -> vector<10x8xf32>
    %211 = arith.addf %205, %210 : vector<10x8xf32>
    %c2_160 = arith.constant 2 : index
    %c0_161 = arith.constant 0 : index
    %c0_162 = arith.constant 0 : index
    %212 = vector.load %arg16[%c2_160, %c0_161, %c0_162] : memref<14x11x8xf32, #tpu.memory_space<vmem>>, vector<1x10x8xf32>
    %213 = vector.shape_cast %212 : vector<1x10x8xf32> to vector<10x8xf32>
    %c1_163 = arith.constant 1 : index
    %c0_164 = arith.constant 0 : index
    %c0_165 = arith.constant 0 : index
    %214 = vector.load %arg4[%c1_163, %c0_164, %c0_165] : memref<9x8x8xf32, #tpu.memory_space<vmem>>, vector<1x8x8xf32>
    %215 = vector.shape_cast %214 : vector<1x8x8xf32> to vector<8x8xf32>
    %cst_166 = arith.constant dense<0.000000e+00> : vector<10x8xf32>
    %216 = tpu.matmul %213, %215, %cst_166 {dimension_numbers = #tpu.dot_dimension_numbers<[1], [0], [0], [1], [0, 0, 1, 1], [], []>} : vector<10x8xf32>, vector<8x8xf32>, vector<10x8xf32> -> vector<10x8xf32>
    %217 = arith.addf %211, %216 : vector<10x8xf32>
    %c2_167 = arith.constant 2 : index
    %c1_168 = arith.constant 1 : index
    %c0_169 = arith.constant 0 : index
    %218 = vector.load %arg15[%c2_167, %c1_168, %c0_169] : memref<14x11x8xf32, #tpu.memory_space<vmem>>, vector<1x10x8xf32>
    %219 = vector.shape_cast %218 : vector<1x10x8xf32> to vector<10x8xf32>
    %c2_170 = arith.constant 2 : index
    %c0_171 = arith.constant 0 : index
    %c0_172 = arith.constant 0 : index
    %220 = vector.load %arg4[%c2_170, %c0_171, %c0_172] : memref<9x8x8xf32, #tpu.memory_space<vmem>>, vector<1x8x8xf32>
    %221 = vector.shape_cast %220 : vector<1x8x8xf32> to vector<8x8xf32>
    %cst_173 = arith.constant dense<0.000000e+00> : vector<10x8xf32>
    %222 = tpu.matmul %219, %221, %cst_173 {dimension_numbers = #tpu.dot_dimension_numbers<[1], [0], [0], [1], [0, 0, 1, 1], [], []>} : vector<10x8xf32>, vector<8x8xf32>, vector<10x8xf32> -> vector<10x8xf32>
    %223 = arith.addf %217, %222 : vector<10x8xf32>
    %c3_174 = arith.constant 3 : index
    %c0_175 = arith.constant 0 : index
    %c0_176 = arith.constant 0 : index
    %224 = vector.load %arg15[%c3_174, %c0_175, %c0_176] : memref<14x11x8xf32, #tpu.memory_space<vmem>>, vector<1x10x8xf32>
    %225 = vector.shape_cast %224 : vector<1x10x8xf32> to vector<10x8xf32>
    %c3_177 = arith.constant 3 : index
    %c0_178 = arith.constant 0 : index
    %c0_179 = arith.constant 0 : index
    %226 = vector.load %arg4[%c3_177, %c0_178, %c0_179] : memref<9x8x8xf32, #tpu.memory_space<vmem>>, vector<1x8x8xf32>
    %227 = vector.shape_cast %226 : vector<1x8x8xf32> to vector<8x8xf32>
    %cst_180 = arith.constant dense<0.000000e+00> : vector<10x8xf32>
    %228 = tpu.matmul %225, %227, %cst_180 {dimension_numbers = #tpu.dot_dimension_numbers<[1], [0], [0], [1], [0, 0, 1, 1], [], []>} : vector<10x8xf32>, vector<8x8xf32>, vector<10x8xf32> -> vector<10x8xf32>
    %229 = arith.addf %223, %228 : vector<10x8xf32>
    %c3_181 = arith.constant 3 : index
    %c0_182 = arith.constant 0 : index
    %c0_183 = arith.constant 0 : index
    %230 = vector.load %arg16[%c3_181, %c0_182, %c0_183] : memref<14x11x8xf32, #tpu.memory_space<vmem>>, vector<1x10x8xf32>
    %231 = vector.shape_cast %230 : vector<1x10x8xf32> to vector<10x8xf32>
    %c4_184 = arith.constant 4 : index
    %c0_185 = arith.constant 0 : index
    %c0_186 = arith.constant 0 : index
    %232 = vector.load %arg4[%c4_184, %c0_185, %c0_186] : memref<9x8x8xf32, #tpu.memory_space<vmem>>, vector<1x8x8xf32>
    %233 = vector.shape_cast %232 : vector<1x8x8xf32> to vector<8x8xf32>
    %cst_187 = arith.constant dense<0.000000e+00> : vector<10x8xf32>
    %234 = tpu.matmul %231, %233, %cst_187 {dimension_numbers = #tpu.dot_dimension_numbers<[1], [0], [0], [1], [0, 0, 1, 1], [], []>} : vector<10x8xf32>, vector<8x8xf32>, vector<10x8xf32> -> vector<10x8xf32>
    %235 = arith.addf %229, %234 : vector<10x8xf32>
    %c3_188 = arith.constant 3 : index
    %c1_189 = arith.constant 1 : index
    %c0_190 = arith.constant 0 : index
    %236 = vector.load %arg15[%c3_188, %c1_189, %c0_190] : memref<14x11x8xf32, #tpu.memory_space<vmem>>, vector<1x10x8xf32>
    %237 = vector.shape_cast %236 : vector<1x10x8xf32> to vector<10x8xf32>
    %c5_191 = arith.constant 5 : index
    %c0_192 = arith.constant 0 : index
    %c0_193 = arith.constant 0 : index
    %238 = vector.load %arg4[%c5_191, %c0_192, %c0_193] : memref<9x8x8xf32, #tpu.memory_space<vmem>>, vector<1x8x8xf32>
    %239 = vector.shape_cast %238 : vector<1x8x8xf32> to vector<8x8xf32>
    %cst_194 = arith.constant dense<0.000000e+00> : vector<10x8xf32>
    %240 = tpu.matmul %237, %239, %cst_194 {dimension_numbers = #tpu.dot_dimension_numbers<[1], [0], [0], [1], [0, 0, 1, 1], [], []>} : vector<10x8xf32>, vector<8x8xf32>, vector<10x8xf32> -> vector<10x8xf32>
    %241 = arith.addf %235, %240 : vector<10x8xf32>
    %c4_195 = arith.constant 4 : index
    %c0_196 = arith.constant 0 : index
    %c0_197 = arith.constant 0 : index
    %242 = vector.load %arg15[%c4_195, %c0_196, %c0_197] : memref<14x11x8xf32, #tpu.memory_space<vmem>>, vector<1x10x8xf32>
    %243 = vector.shape_cast %242 : vector<1x10x8xf32> to vector<10x8xf32>
    %c6_198 = arith.constant 6 : index
    %c0_199 = arith.constant 0 : index
    %c0_200 = arith.constant 0 : index
    %244 = vector.load %arg4[%c6_198, %c0_199, %c0_200] : memref<9x8x8xf32, #tpu.memory_space<vmem>>, vector<1x8x8xf32>
    %245 = vector.shape_cast %244 : vector<1x8x8xf32> to vector<8x8xf32>
    %cst_201 = arith.constant dense<0.000000e+00> : vector<10x8xf32>
    %246 = tpu.matmul %243, %245, %cst_201 {dimension_numbers = #tpu.dot_dimension_numbers<[1], [0], [0], [1], [0, 0, 1, 1], [], []>} : vector<10x8xf32>, vector<8x8xf32>, vector<10x8xf32> -> vector<10x8xf32>
    %247 = arith.addf %241, %246 : vector<10x8xf32>
    %c4_202 = arith.constant 4 : index
    %c0_203 = arith.constant 0 : index
    %c0_204 = arith.constant 0 : index
    %248 = vector.load %arg16[%c4_202, %c0_203, %c0_204] : memref<14x11x8xf32, #tpu.memory_space<vmem>>, vector<1x10x8xf32>
    %249 = vector.shape_cast %248 : vector<1x10x8xf32> to vector<10x8xf32>
    %c7_205 = arith.constant 7 : index
    %c0_206 = arith.constant 0 : index
    %c0_207 = arith.constant 0 : index
    %250 = vector.load %arg4[%c7_205, %c0_206, %c0_207] : memref<9x8x8xf32, #tpu.memory_space<vmem>>, vector<1x8x8xf32>
    %251 = vector.shape_cast %250 : vector<1x8x8xf32> to vector<8x8xf32>
    %cst_208 = arith.constant dense<0.000000e+00> : vector<10x8xf32>
    %252 = tpu.matmul %249, %251, %cst_208 {dimension_numbers = #tpu.dot_dimension_numbers<[1], [0], [0], [1], [0, 0, 1, 1], [], []>} : vector<10x8xf32>, vector<8x8xf32>, vector<10x8xf32> -> vector<10x8xf32>
    %253 = arith.addf %247, %252 : vector<10x8xf32>
    %c4_209 = arith.constant 4 : index
    %c1_210 = arith.constant 1 : index
    %c0_211 = arith.constant 0 : index
    %254 = vector.load %arg15[%c4_209, %c1_210, %c0_211] : memref<14x11x8xf32, #tpu.memory_space<vmem>>, vector<1x10x8xf32>
    %255 = vector.shape_cast %254 : vector<1x10x8xf32> to vector<10x8xf32>
    %c8_212 = arith.constant 8 : index
    %c0_213 = arith.constant 0 : index
    %c0_214 = arith.constant 0 : index
    %256 = vector.load %arg4[%c8_212, %c0_213, %c0_214] : memref<9x8x8xf32, #tpu.memory_space<vmem>>, vector<1x8x8xf32>
    %257 = vector.shape_cast %256 : vector<1x8x8xf32> to vector<8x8xf32>
    %cst_215 = arith.constant dense<0.000000e+00> : vector<10x8xf32>
    %258 = tpu.matmul %255, %257, %cst_215 {dimension_numbers = #tpu.dot_dimension_numbers<[1], [0], [0], [1], [0, 0, 1, 1], [], []>} : vector<10x8xf32>, vector<8x8xf32>, vector<10x8xf32> -> vector<10x8xf32>
    %259 = arith.addf %253, %258 : vector<10x8xf32>
    %c0_216 = arith.constant 0 : index
    %c0_217 = arith.constant 0 : index
    %260 = vector.load %arg5[%c0_216, %c0_217] : memref<1x8xf32, #tpu.memory_space<vmem>>, vector<1x8xf32>
    %261 = vector.broadcast %260 : vector<1x8xf32> to vector<10x8xf32>
    %262 = arith.addf %259, %261 : vector<10x8xf32>
    %cst_218 = arith.constant 0.000000e+00 : f32
    %263 = vector.broadcast %cst_218 : f32 to vector<10x8xf32>
    %264 = arith.maximumf %262, %263 : vector<10x8xf32>
    %c1_219 = arith.constant 1 : index
    %c0_220 = arith.constant 0 : index
    %c0_221 = arith.constant 0 : index
    %265 = vector.load %arg17[%c1_219, %c0_220, %c0_221] : memref<6x10x8xf32, #tpu.memory_space<vmem>>, vector<1x10x8xf32>
    %266 = vector.shape_cast %265 : vector<1x10x8xf32> to vector<10x8xf32>
    %267 = vector.shape_cast %264 : vector<10x8xf32> to vector<1x10x8xf32>
    tpu.vector_store %arg17[%c1_219, %c0_220, %c0_221], %267 {strides = array<i32>} : memref<6x10x8xf32, #tpu.memory_space<vmem>>, vector<1x10x8xf32>,
    %cst_222 = arith.constant 0.000000e+00 : f32
    %268 = vector.broadcast %cst_222 : f32 to vector<10x8xf32>
    %c4_223 = arith.constant 4 : index
    %c0_224 = arith.constant 0 : index
    %c0_225 = arith.constant 0 : index
    %269 = vector.load %arg15[%c4_223, %c0_224, %c0_225] : memref<14x11x8xf32, #tpu.memory_space<vmem>>, vector<1x10x8xf32>
    %270 = vector.shape_cast %269 : vector<1x10x8xf32> to vector<10x8xf32>
    %c0_226 = arith.constant 0 : index
    %c0_227 = arith.constant 0 : index
    %c0_228 = arith.constant 0 : index
    %271 = vector.load %arg4[%c0_226, %c0_227, %c0_228] : memref<9x8x8xf32, #tpu.memory_space<vmem>>, vector<1x8x8xf32>
    %272 = vector.shape_cast %271 : vector<1x8x8xf32> to vector<8x8xf32>
    %cst_229 = arith.constant dense<0.000000e+00> : vector<10x8xf32>
    %273 = tpu.matmul %270, %272, %cst_229 {dimension_numbers = #tpu.dot_dimension_numbers<[1], [0], [0], [1], [0, 0, 1, 1], [], []>} : vector<10x8xf32>, vector<8x8xf32>, vector<10x8xf32> -> vector<10x8xf32>
    %274 = arith.addf %268, %273 : vector<10x8xf32>
    %c4_230 = arith.constant 4 : index
    %c0_231 = arith.constant 0 : index
    %c0_232 = arith.constant 0 : index
    %275 = vector.load %arg16[%c4_230, %c0_231, %c0_232] : memref<14x11x8xf32, #tpu.memory_space<vmem>>, vector<1x10x8xf32>
    %276 = vector.shape_cast %275 : vector<1x10x8xf32> to vector<10x8xf32>
    %c1_233 = arith.constant 1 : index
    %c0_234 = arith.constant 0 : index
    %c0_235 = arith.constant 0 : index
    %277 = vector.load %arg4[%c1_233, %c0_234, %c0_235] : memref<9x8x8xf32, #tpu.memory_space<vmem>>, vector<1x8x8xf32>
    %278 = vector.shape_cast %277 : vector<1x8x8xf32> to vector<8x8xf32>
    %cst_236 = arith.constant dense<0.000000e+00> : vector<10x8xf32>
    %279 = tpu.matmul %276, %278, %cst_236 {dimension_numbers = #tpu.dot_dimension_numbers<[1], [0], [0], [1], [0, 0, 1, 1], [], []>} : vector<10x8xf32>, vector<8x8xf32>, vector<10x8xf32> -> vector<10x8xf32>
    %280 = arith.addf %274, %279 : vector<10x8xf32>
    %c4_237 = arith.constant 4 : index
    %c1_238 = arith.constant 1 : index
    %c0_239 = arith.constant 0 : index
    %281 = vector.load %arg15[%c4_237, %c1_238, %c0_239] : memref<14x11x8xf32, #tpu.memory_space<vmem>>, vector<1x10x8xf32>
    %282 = vector.shape_cast %281 : vector<1x10x8xf32> to vector<10x8xf32>
    %c2_240 = arith.constant 2 : index
    %c0_241 = arith.constant 0 : index
    %c0_242 = arith.constant 0 : index
    %283 = vector.load %arg4[%c2_240, %c0_241, %c0_242] : memref<9x8x8xf32, #tpu.memory_space<vmem>>, vector<1x8x8xf32>
    %284 = vector.shape_cast %283 : vector<1x8x8xf32> to vector<8x8xf32>
    %cst_243 = arith.constant dense<0.000000e+00> : vector<10x8xf32>
    %285 = tpu.matmul %282, %284, %cst_243 {dimension_numbers = #tpu.dot_dimension_numbers<[1], [0], [0], [1], [0, 0, 1, 1], [], []>} : vector<10x8xf32>, vector<8x8xf32>, vector<10x8xf32> -> vector<10x8xf32>
    %286 = arith.addf %280, %285 : vector<10x8xf32>
    %c5_244 = arith.constant 5 : index
    %c0_245 = arith.constant 0 : index
    %c0_246 = arith.constant 0 : index
    %287 = vector.load %arg15[%c5_244, %c0_245, %c0_246] : memref<14x11x8xf32, #tpu.memory_space<vmem>>, vector<1x10x8xf32>
    %288 = vector.shape_cast %287 : vector<1x10x8xf32> to vector<10x8xf32>
    %c3_247 = arith.constant 3 : index
    %c0_248 = arith.constant 0 : index
    %c0_249 = arith.constant 0 : index
    %289 = vector.load %arg4[%c3_247, %c0_248, %c0_249] : memref<9x8x8xf32, #tpu.memory_space<vmem>>, vector<1x8x8xf32>
    %290 = vector.shape_cast %289 : vector<1x8x8xf32> to vector<8x8xf32>
    %cst_250 = arith.constant dense<0.000000e+00> : vector<10x8xf32>
    %291 = tpu.matmul %288, %290, %cst_250 {dimension_numbers = #tpu.dot_dimension_numbers<[1], [0], [0], [1], [0, 0, 1, 1], [], []>} : vector<10x8xf32>, vector<8x8xf32>, vector<10x8xf32> -> vector<10x8xf32>
    %292 = arith.addf %286, %291 : vector<10x8xf32>
    %c5_251 = arith.constant 5 : index
    %c0_252 = arith.constant 0 : index
    %c0_253 = arith.constant 0 : index
    %293 = vector.load %arg16[%c5_251, %c0_252, %c0_253] : memref<14x11x8xf32, #tpu.memory_space<vmem>>, vector<1x10x8xf32>
    %294 = vector.shape_cast %293 : vector<1x10x8xf32> to vector<10x8xf32>
    %c4_254 = arith.constant 4 : index
    %c0_255 = arith.constant 0 : index
    %c0_256 = arith.constant 0 : index
    %295 = vector.load %arg4[%c4_254, %c0_255, %c0_256] : memref<9x8x8xf32, #tpu.memory_space<vmem>>, vector<1x8x8xf32>
    %296 = vector.shape_cast %295 : vector<1x8x8xf32> to vector<8x8xf32>
    %cst_257 = arith.constant dense<0.000000e+00> : vector<10x8xf32>
    %297 = tpu.matmul %294, %296, %cst_257 {dimension_numbers = #tpu.dot_dimension_numbers<[1], [0], [0], [1], [0, 0, 1, 1], [], []>} : vector<10x8xf32>, vector<8x8xf32>, vector<10x8xf32> -> vector<10x8xf32>
    %298 = arith.addf %292, %297 : vector<10x8xf32>
    %c5_258 = arith.constant 5 : index
    %c1_259 = arith.constant 1 : index
    %c0_260 = arith.constant 0 : index
    %299 = vector.load %arg15[%c5_258, %c1_259, %c0_260] : memref<14x11x8xf32, #tpu.memory_space<vmem>>, vector<1x10x8xf32>
    %300 = vector.shape_cast %299 : vector<1x10x8xf32> to vector<10x8xf32>
    %c5_261 = arith.constant 5 : index
    %c0_262 = arith.constant 0 : index
    %c0_263 = arith.constant 0 : index
    %301 = vector.load %arg4[%c5_261, %c0_262, %c0_263] : memref<9x8x8xf32, #tpu.memory_space<vmem>>, vector<1x8x8xf32>
    %302 = vector.shape_cast %301 : vector<1x8x8xf32> to vector<8x8xf32>
    %cst_264 = arith.constant dense<0.000000e+00> : vector<10x8xf32>
    %303 = tpu.matmul %300, %302, %cst_264 {dimension_numbers = #tpu.dot_dimension_numbers<[1], [0], [0], [1], [0, 0, 1, 1], [], []>} : vector<10x8xf32>, vector<8x8xf32>, vector<10x8xf32> -> vector<10x8xf32>
    %304 = arith.addf %298, %303 : vector<10x8xf32>
    %c6_265 = arith.constant 6 : index
    %c0_266 = arith.constant 0 : index
    %c0_267 = arith.constant 0 : index
    %305 = vector.load %arg15[%c6_265, %c0_266, %c0_267] : memref<14x11x8xf32, #tpu.memory_space<vmem>>, vector<1x10x8xf32>
    %306 = vector.shape_cast %305 : vector<1x10x8xf32> to vector<10x8xf32>
    %c6_268 = arith.constant 6 : index
    %c0_269 = arith.constant 0 : index
    %c0_270 = arith.constant 0 : index
    %307 = vector.load %arg4[%c6_268, %c0_269, %c0_270] : memref<9x8x8xf32, #tpu.memory_space<vmem>>, vector<1x8x8xf32>
    %308 = vector.shape_cast %307 : vector<1x8x8xf32> to vector<8x8xf32>
    %cst_271 = arith.constant dense<0.000000e+00> : vector<10x8xf32>
    %309 = tpu.matmul %306, %308, %cst_271 {dimension_numbers = #tpu.dot_dimension_numbers<[1], [0], [0], [1], [0, 0, 1, 1], [], []>} : vector<10x8xf32>, vector<8x8xf32>, vector<10x8xf32> -> vector<10x8xf32>
    %310 = arith.addf %304, %309 : vector<10x8xf32>
    %c6_272 = arith.constant 6 : index
    %c0_273 = arith.constant 0 : index
    %c0_274 = arith.constant 0 : index
    %311 = vector.load %arg16[%c6_272, %c0_273, %c0_274] : memref<14x11x8xf32, #tpu.memory_space<vmem>>, vector<1x10x8xf32>
    %312 = vector.shape_cast %311 : vector<1x10x8xf32> to vector<10x8xf32>
    %c7_275 = arith.constant 7 : index
    %c0_276 = arith.constant 0 : index
    %c0_277 = arith.constant 0 : index
    %313 = vector.load %arg4[%c7_275, %c0_276, %c0_277] : memref<9x8x8xf32, #tpu.memory_space<vmem>>, vector<1x8x8xf32>
    %314 = vector.shape_cast %313 : vector<1x8x8xf32> to vector<8x8xf32>
    %cst_278 = arith.constant dense<0.000000e+00> : vector<10x8xf32>
    %315 = tpu.matmul %312, %314, %cst_278 {dimension_numbers = #tpu.dot_dimension_numbers<[1], [0], [0], [1], [0, 0, 1, 1], [], []>} : vector<10x8xf32>, vector<8x8xf32>, vector<10x8xf32> -> vector<10x8xf32>
    %316 = arith.addf %310, %315 : vector<10x8xf32>
    %c6_279 = arith.constant 6 : index
    %c1_280 = arith.constant 1 : index
    %c0_281 = arith.constant 0 : index
    %317 = vector.load %arg15[%c6_279, %c1_280, %c0_281] : memref<14x11x8xf32, #tpu.memory_space<vmem>>, vector<1x10x8xf32>
    %318 = vector.shape_cast %317 : vector<1x10x8xf32> to vector<10x8xf32>
    %c8_282 = arith.constant 8 : index
    %c0_283 = arith.constant 0 : index
    %c0_284 = arith.constant 0 : index
    %319 = vector.load %arg4[%c8_282, %c0_283, %c0_284] : memref<9x8x8xf32, #tpu.memory_space<vmem>>, vector<1x8x8xf32>
    %320 = vector.shape_cast %319 : vector<1x8x8xf32> to vector<8x8xf32>
    %cst_285 = arith.constant dense<0.000000e+00> : vector<10x8xf32>
    %321 = tpu.matmul %318, %320, %cst_285 {dimension_numbers = #tpu.dot_dimension_numbers<[1], [0], [0], [1], [0, 0, 1, 1], [], []>} : vector<10x8xf32>, vector<8x8xf32>, vector<10x8xf32> -> vector<10x8xf32>
    %322 = arith.addf %316, %321 : vector<10x8xf32>
    %c0_286 = arith.constant 0 : index
    %c0_287 = arith.constant 0 : index
    %323 = vector.load %arg5[%c0_286, %c0_287] : memref<1x8xf32, #tpu.memory_space<vmem>>, vector<1x8xf32>
    %324 = vector.broadcast %323 : vector<1x8xf32> to vector<10x8xf32>
    %325 = arith.addf %322, %324 : vector<10x8xf32>
    %cst_288 = arith.constant 0.000000e+00 : f32
    %326 = vector.broadcast %cst_288 : f32 to vector<10x8xf32>
    %327 = arith.maximumf %325, %326 : vector<10x8xf32>
    %c2_289 = arith.constant 2 : index
    %c0_290 = arith.constant 0 : index
    %c0_291 = arith.constant 0 : index
    %328 = vector.load %arg17[%c2_289, %c0_290, %c0_291] : memref<6x10x8xf32, #tpu.memory_space<vmem>>, vector<1x10x8xf32>
    %329 = vector.shape_cast %328 : vector<1x10x8xf32> to vector<10x8xf32>
    %330 = vector.shape_cast %327 : vector<10x8xf32> to vector<1x10x8xf32>
    tpu.vector_store %arg17[%c2_289, %c0_290, %c0_291], %330 {strides = array<i32>} : memref<6x10x8xf32, #tpu.memory_space<vmem>>, vector<1x10x8xf32>,
    %cst_292 = arith.constant 0.000000e+00 : f32
    %331 = vector.broadcast %cst_292 : f32 to vector<10x8xf32>
    %c6_293 = arith.constant 6 : index
    %c0_294 = arith.constant 0 : index
    %c0_295 = arith.constant 0 : index
    %332 = vector.load %arg15[%c6_293, %c0_294, %c0_295] : memref<14x11x8xf32, #tpu.memory_space<vmem>>, vector<1x10x8xf32>
    %333 = vector.shape_cast %332 : vector<1x10x8xf32> to vector<10x8xf32>
    %c0_296 = arith.constant 0 : index
    %c0_297 = arith.constant 0 : index
    %c0_298 = arith.constant 0 : index
    %334 = vector.load %arg4[%c0_296, %c0_297, %c0_298] : memref<9x8x8xf32, #tpu.memory_space<vmem>>, vector<1x8x8xf32>
    %335 = vector.shape_cast %334 : vector<1x8x8xf32> to vector<8x8xf32>
    %cst_299 = arith.constant dense<0.000000e+00> : vector<10x8xf32>
    %336 = tpu.matmul %333, %335, %cst_299 {dimension_numbers = #tpu.dot_dimension_numbers<[1], [0], [0], [1], [0, 0, 1, 1], [], []>} : vector<10x8xf32>, vector<8x8xf32>, vector<10x8xf32> -> vector<10x8xf32>
    %337 = arith.addf %331, %336 : vector<10x8xf32>
    %c6_300 = arith.constant 6 : index
    %c0_301 = arith.constant 0 : index
    %c0_302 = arith.constant 0 : index
    %338 = vector.load %arg16[%c6_300, %c0_301, %c0_302] : memref<14x11x8xf32, #tpu.memory_space<vmem>>, vector<1x10x8xf32>
    %339 = vector.shape_cast %338 : vector<1x10x8xf32> to vector<10x8xf32>
    %c1_303 = arith.constant 1 : index
    %c0_304 = arith.constant 0 : index
    %c0_305 = arith.constant 0 : index
    %340 = vector.load %arg4[%c1_303, %c0_304, %c0_305] : memref<9x8x8xf32, #tpu.memory_space<vmem>>, vector<1x8x8xf32>
    %341 = vector.shape_cast %340 : vector<1x8x8xf32> to vector<8x8xf32>
    %cst_306 = arith.constant dense<0.000000e+00> : vector<10x8xf32>
    %342 = tpu.matmul %339, %341, %cst_306 {dimension_numbers = #tpu.dot_dimension_numbers<[1], [0], [0], [1], [0, 0, 1, 1], [], []>} : vector<10x8xf32>, vector<8x8xf32>, vector<10x8xf32> -> vector<10x8xf32>
    %343 = arith.addf %337, %342 : vector<10x8xf32>
    %c6_307 = arith.constant 6 : index
    %c1_308 = arith.constant 1 : index
    %c0_309 = arith.constant 0 : index
    %344 = vector.load %arg15[%c6_307, %c1_308, %c0_309] : memref<14x11x8xf32, #tpu.memory_space<vmem>>, vector<1x10x8xf32>
    %345 = vector.shape_cast %344 : vector<1x10x8xf32> to vector<10x8xf32>
    %c2_310 = arith.constant 2 : index
    %c0_311 = arith.constant 0 : index
    %c0_312 = arith.constant 0 : index
    %346 = vector.load %arg4[%c2_310, %c0_311, %c0_312] : memref<9x8x8xf32, #tpu.memory_space<vmem>>, vector<1x8x8xf32>
    %347 = vector.shape_cast %346 : vector<1x8x8xf32> to vector<8x8xf32>
    %cst_313 = arith.constant dense<0.000000e+00> : vector<10x8xf32>
    %348 = tpu.matmul %345, %347, %cst_313 {dimension_numbers = #tpu.dot_dimension_numbers<[1], [0], [0], [1], [0, 0, 1, 1], [], []>} : vector<10x8xf32>, vector<8x8xf32>, vector<10x8xf32> -> vector<10x8xf32>
    %349 = arith.addf %343, %348 : vector<10x8xf32>
    %c7_314 = arith.constant 7 : index
    %c0_315 = arith.constant 0 : index
    %c0_316 = arith.constant 0 : index
    %350 = vector.load %arg15[%c7_314, %c0_315, %c0_316] : memref<14x11x8xf32, #tpu.memory_space<vmem>>, vector<1x10x8xf32>
    %351 = vector.shape_cast %350 : vector<1x10x8xf32> to vector<10x8xf32>
    %c3_317 = arith.constant 3 : index
    %c0_318 = arith.constant 0 : index
    %c0_319 = arith.constant 0 : index
    %352 = vector.load %arg4[%c3_317, %c0_318, %c0_319] : memref<9x8x8xf32, #tpu.memory_space<vmem>>, vector<1x8x8xf32>
    %353 = vector.shape_cast %352 : vector<1x8x8xf32> to vector<8x8xf32>
    %cst_320 = arith.constant dense<0.000000e+00> : vector<10x8xf32>
    %354 = tpu.matmul %351, %353, %cst_320 {dimension_numbers = #tpu.dot_dimension_numbers<[1], [0], [0], [1], [0, 0, 1, 1], [], []>} : vector<10x8xf32>, vector<8x8xf32>, vector<10x8xf32> -> vector<10x8xf32>
    %355 = arith.addf %349, %354 : vector<10x8xf32>
    %c7_321 = arith.constant 7 : index
    %c0_322 = arith.constant 0 : index
    %c0_323 = arith.constant 0 : index
    %356 = vector.load %arg16[%c7_321, %c0_322, %c0_323] : memref<14x11x8xf32, #tpu.memory_space<vmem>>, vector<1x10x8xf32>
    %357 = vector.shape_cast %356 : vector<1x10x8xf32> to vector<10x8xf32>
    %c4_324 = arith.constant 4 : index
    %c0_325 = arith.constant 0 : index
    %c0_326 = arith.constant 0 : index
    %358 = vector.load %arg4[%c4_324, %c0_325, %c0_326] : memref<9x8x8xf32, #tpu.memory_space<vmem>>, vector<1x8x8xf32>
    %359 = vector.shape_cast %358 : vector<1x8x8xf32> to vector<8x8xf32>
    %cst_327 = arith.constant dense<0.000000e+00> : vector<10x8xf32>
    %360 = tpu.matmul %357, %359, %cst_327 {dimension_numbers = #tpu.dot_dimension_numbers<[1], [0], [0], [1], [0, 0, 1, 1], [], []>} : vector<10x8xf32>, vector<8x8xf32>, vector<10x8xf32> -> vector<10x8xf32>
    %361 = arith.addf %355, %360 : vector<10x8xf32>
    %c7_328 = arith.constant 7 : index
    %c1_329 = arith.constant 1 : index
    %c0_330 = arith.constant 0 : index
    %362 = vector.load %arg15[%c7_328, %c1_329, %c0_330] : memref<14x11x8xf32, #tpu.memory_space<vmem>>, vector<1x10x8xf32>
    %363 = vector.shape_cast %362 : vector<1x10x8xf32> to vector<10x8xf32>
    %c5_331 = arith.constant 5 : index
    %c0_332 = arith.constant 0 : index
    %c0_333 = arith.constant 0 : index
    %364 = vector.load %arg4[%c5_331, %c0_332, %c0_333] : memref<9x8x8xf32, #tpu.memory_space<vmem>>, vector<1x8x8xf32>
    %365 = vector.shape_cast %364 : vector<1x8x8xf32> to vector<8x8xf32>
    %cst_334 = arith.constant dense<0.000000e+00> : vector<10x8xf32>
    %366 = tpu.matmul %363, %365, %cst_334 {dimension_numbers = #tpu.dot_dimension_numbers<[1], [0], [0], [1], [0, 0, 1, 1], [], []>} : vector<10x8xf32>, vector<8x8xf32>, vector<10x8xf32> -> vector<10x8xf32>
    %367 = arith.addf %361, %366 : vector<10x8xf32>
    %c8_335 = arith.constant 8 : index
    %c0_336 = arith.constant 0 : index
    %c0_337 = arith.constant 0 : index
    %368 = vector.load %arg15[%c8_335, %c0_336, %c0_337] : memref<14x11x8xf32, #tpu.memory_space<vmem>>, vector<1x10x8xf32>
    %369 = vector.shape_cast %368 : vector<1x10x8xf32> to vector<10x8xf32>
    %c6_338 = arith.constant 6 : index
    %c0_339 = arith.constant 0 : index
    %c0_340 = arith.constant 0 : index
    %370 = vector.load %arg4[%c6_338, %c0_339, %c0_340] : memref<9x8x8xf32, #tpu.memory_space<vmem>>, vector<1x8x8xf32>
    %371 = vector.shape_cast %370 : vector<1x8x8xf32> to vector<8x8xf32>
    %cst_341 = arith.constant dense<0.000000e+00> : vector<10x8xf32>
    %372 = tpu.matmul %369, %371, %cst_341 {dimension_numbers = #tpu.dot_dimension_numbers<[1], [0], [0], [1], [0, 0, 1, 1], [], []>} : vector<10x8xf32>, vector<8x8xf32>, vector<10x8xf32> -> vector<10x8xf32>
    %373 = arith.addf %367, %372 : vector<10x8xf32>
    %c8_342 = arith.constant 8 : index
    %c0_343 = arith.constant 0 : index
    %c0_344 = arith.constant 0 : index
    %374 = vector.load %arg16[%c8_342, %c0_343, %c0_344] : memref<14x11x8xf32, #tpu.memory_space<vmem>>, vector<1x10x8xf32>
    %375 = vector.shape_cast %374 : vector<1x10x8xf32> to vector<10x8xf32>
    %c7_345 = arith.constant 7 : index
    %c0_346 = arith.constant 0 : index
    %c0_347 = arith.constant 0 : index
    %376 = vector.load %arg4[%c7_345, %c0_346, %c0_347] : memref<9x8x8xf32, #tpu.memory_space<vmem>>, vector<1x8x8xf32>
    %377 = vector.shape_cast %376 : vector<1x8x8xf32> to vector<8x8xf32>
    %cst_348 = arith.constant dense<0.000000e+00> : vector<10x8xf32>
    %378 = tpu.matmul %375, %377, %cst_348 {dimension_numbers = #tpu.dot_dimension_numbers<[1], [0], [0], [1], [0, 0, 1, 1], [], []>} : vector<10x8xf32>, vector<8x8xf32>, vector<10x8xf32> -> vector<10x8xf32>
    %379 = arith.addf %373, %378 : vector<10x8xf32>
    %c8_349 = arith.constant 8 : index
    %c1_350 = arith.constant 1 : index
    %c0_351 = arith.constant 0 : index
    %380 = vector.load %arg15[%c8_349, %c1_350, %c0_351] : memref<14x11x8xf32, #tpu.memory_space<vmem>>, vector<1x10x8xf32>
    %381 = vector.shape_cast %380 : vector<1x10x8xf32> to vector<10x8xf32>
    %c8_352 = arith.constant 8 : index
    %c0_353 = arith.constant 0 : index
    %c0_354 = arith.constant 0 : index
    %382 = vector.load %arg4[%c8_352, %c0_353, %c0_354] : memref<9x8x8xf32, #tpu.memory_space<vmem>>, vector<1x8x8xf32>
    %383 = vector.shape_cast %382 : vector<1x8x8xf32> to vector<8x8xf32>
    %cst_355 = arith.constant dense<0.000000e+00> : vector<10x8xf32>
    %384 = tpu.matmul %381, %383, %cst_355 {dimension_numbers = #tpu.dot_dimension_numbers<[1], [0], [0], [1], [0, 0, 1, 1], [], []>} : vector<10x8xf32>, vector<8x8xf32>, vector<10x8xf32> -> vector<10x8xf32>
    %385 = arith.addf %379, %384 : vector<10x8xf32>
    %c0_356 = arith.constant 0 : index
    %c0_357 = arith.constant 0 : index
    %386 = vector.load %arg5[%c0_356, %c0_357] : memref<1x8xf32, #tpu.memory_space<vmem>>, vector<1x8xf32>
    %387 = vector.broadcast %386 : vector<1x8xf32> to vector<10x8xf32>
    %388 = arith.addf %385, %387 : vector<10x8xf32>
    %cst_358 = arith.constant 0.000000e+00 : f32
    %389 = vector.broadcast %cst_358 : f32 to vector<10x8xf32>
    %390 = arith.maximumf %388, %389 : vector<10x8xf32>
    %c3_359 = arith.constant 3 : index
    %c0_360 = arith.constant 0 : index
    %c0_361 = arith.constant 0 : index
    %391 = vector.load %arg17[%c3_359, %c0_360, %c0_361] : memref<6x10x8xf32, #tpu.memory_space<vmem>>, vector<1x10x8xf32>
    %392 = vector.shape_cast %391 : vector<1x10x8xf32> to vector<10x8xf32>
    %393 = vector.shape_cast %390 : vector<10x8xf32> to vector<1x10x8xf32>
    tpu.vector_store %arg17[%c3_359, %c0_360, %c0_361], %393 {strides = array<i32>} : memref<6x10x8xf32, #tpu.memory_space<vmem>>, vector<1x10x8xf32>,
    %cst_362 = arith.constant 0.000000e+00 : f32
    %394 = vector.broadcast %cst_362 : f32 to vector<10x8xf32>
    %c8_363 = arith.constant 8 : index
    %c0_364 = arith.constant 0 : index
    %c0_365 = arith.constant 0 : index
    %395 = vector.load %arg15[%c8_363, %c0_364, %c0_365] : memref<14x11x8xf32, #tpu.memory_space<vmem>>, vector<1x10x8xf32>
    %396 = vector.shape_cast %395 : vector<1x10x8xf32> to vector<10x8xf32>
    %c0_366 = arith.constant 0 : index
    %c0_367 = arith.constant 0 : index
    %c0_368 = arith.constant 0 : index
    %397 = vector.load %arg4[%c0_366, %c0_367, %c0_368] : memref<9x8x8xf32, #tpu.memory_space<vmem>>, vector<1x8x8xf32>
    %398 = vector.shape_cast %397 : vector<1x8x8xf32> to vector<8x8xf32>
    %cst_369 = arith.constant dense<0.000000e+00> : vector<10x8xf32>
    %399 = tpu.matmul %396, %398, %cst_369 {dimension_numbers = #tpu.dot_dimension_numbers<[1], [0], [0], [1], [0, 0, 1, 1], [], []>} : vector<10x8xf32>, vector<8x8xf32>, vector<10x8xf32> -> vector<10x8xf32>
    %400 = arith.addf %394, %399 : vector<10x8xf32>
    %c8_370 = arith.constant 8 : index
    %c0_371 = arith.constant 0 : index
    %c0_372 = arith.constant 0 : index
    %401 = vector.load %arg16[%c8_370, %c0_371, %c0_372] : memref<14x11x8xf32, #tpu.memory_space<vmem>>, vector<1x10x8xf32>
    %402 = vector.shape_cast %401 : vector<1x10x8xf32> to vector<10x8xf32>
    %c1_373 = arith.constant 1 : index
    %c0_374 = arith.constant 0 : index
    %c0_375 = arith.constant 0 : index
    %403 = vector.load %arg4[%c1_373, %c0_374, %c0_375] : memref<9x8x8xf32, #tpu.memory_space<vmem>>, vector<1x8x8xf32>
    %404 = vector.shape_cast %403 : vector<1x8x8xf32> to vector<8x8xf32>
    %cst_376 = arith.constant dense<0.000000e+00> : vector<10x8xf32>
    %405 = tpu.matmul %402, %404, %cst_376 {dimension_numbers = #tpu.dot_dimension_numbers<[1], [0], [0], [1], [0, 0, 1, 1], [], []>} : vector<10x8xf32>, vector<8x8xf32>, vector<10x8xf32> -> vector<10x8xf32>
    %406 = arith.addf %400, %405 : vector<10x8xf32>
    %c8_377 = arith.constant 8 : index
    %c1_378 = arith.constant 1 : index
    %c0_379 = arith.constant 0 : index
    %407 = vector.load %arg15[%c8_377, %c1_378, %c0_379] : memref<14x11x8xf32, #tpu.memory_space<vmem>>, vector<1x10x8xf32>
    %408 = vector.shape_cast %407 : vector<1x10x8xf32> to vector<10x8xf32>
    %c2_380 = arith.constant 2 : index
    %c0_381 = arith.constant 0 : index
    %c0_382 = arith.constant 0 : index
    %409 = vector.load %arg4[%c2_380, %c0_381, %c0_382] : memref<9x8x8xf32, #tpu.memory_space<vmem>>, vector<1x8x8xf32>
    %410 = vector.shape_cast %409 : vector<1x8x8xf32> to vector<8x8xf32>
    %cst_383 = arith.constant dense<0.000000e+00> : vector<10x8xf32>
    %411 = tpu.matmul %408, %410, %cst_383 {dimension_numbers = #tpu.dot_dimension_numbers<[1], [0], [0], [1], [0, 0, 1, 1], [], []>} : vector<10x8xf32>, vector<8x8xf32>, vector<10x8xf32> -> vector<10x8xf32>
    %412 = arith.addf %406, %411 : vector<10x8xf32>
    %c9 = arith.constant 9 : index
    %c0_384 = arith.constant 0 : index
    %c0_385 = arith.constant 0 : index
    %413 = vector.load %arg15[%c9, %c0_384, %c0_385] : memref<14x11x8xf32, #tpu.memory_space<vmem>>, vector<1x10x8xf32>
    %414 = vector.shape_cast %413 : vector<1x10x8xf32> to vector<10x8xf32>
    %c3_386 = arith.constant 3 : index
    %c0_387 = arith.constant 0 : index
    %c0_388 = arith.constant 0 : index
    %415 = vector.load %arg4[%c3_386, %c0_387, %c0_388] : memref<9x8x8xf32, #tpu.memory_space<vmem>>, vector<1x8x8xf32>
    %416 = vector.shape_cast %415 : vector<1x8x8xf32> to vector<8x8xf32>
    %cst_389 = arith.constant dense<0.000000e+00> : vector<10x8xf32>
    %417 = tpu.matmul %414, %416, %cst_389 {dimension_numbers = #tpu.dot_dimension_numbers<[1], [0], [0], [1], [0, 0, 1, 1], [], []>} : vector<10x8xf32>, vector<8x8xf32>, vector<10x8xf32> -> vector<10x8xf32>
    %418 = arith.addf %412, %417 : vector<10x8xf32>
    %c9_390 = arith.constant 9 : index
    %c0_391 = arith.constant 0 : index
    %c0_392 = arith.constant 0 : index
    %419 = vector.load %arg16[%c9_390, %c0_391, %c0_392] : memref<14x11x8xf32, #tpu.memory_space<vmem>>, vector<1x10x8xf32>
    %420 = vector.shape_cast %419 : vector<1x10x8xf32> to vector<10x8xf32>
    %c4_393 = arith.constant 4 : index
    %c0_394 = arith.constant 0 : index
    %c0_395 = arith.constant 0 : index
    %421 = vector.load %arg4[%c4_393, %c0_394, %c0_395] : memref<9x8x8xf32, #tpu.memory_space<vmem>>, vector<1x8x8xf32>
    %422 = vector.shape_cast %421 : vector<1x8x8xf32> to vector<8x8xf32>
    %cst_396 = arith.constant dense<0.000000e+00> : vector<10x8xf32>
    %423 = tpu.matmul %420, %422, %cst_396 {dimension_numbers = #tpu.dot_dimension_numbers<[1], [0], [0], [1], [0, 0, 1, 1], [], []>} : vector<10x8xf32>, vector<8x8xf32>, vector<10x8xf32> -> vector<10x8xf32>
    %424 = arith.addf %418, %423 : vector<10x8xf32>
    %c9_397 = arith.constant 9 : index
    %c1_398 = arith.constant 1 : index
    %c0_399 = arith.constant 0 : index
    %425 = vector.load %arg15[%c9_397, %c1_398, %c0_399] : memref<14x11x8xf32, #tpu.memory_space<vmem>>, vector<1x10x8xf32>
    %426 = vector.shape_cast %425 : vector<1x10x8xf32> to vector<10x8xf32>
    %c5_400 = arith.constant 5 : index
    %c0_401 = arith.constant 0 : index
    %c0_402 = arith.constant 0 : index
    %427 = vector.load %arg4[%c5_400, %c0_401, %c0_402] : memref<9x8x8xf32, #tpu.memory_space<vmem>>, vector<1x8x8xf32>
    %428 = vector.shape_cast %427 : vector<1x8x8xf32> to vector<8x8xf32>
    %cst_403 = arith.constant dense<0.000000e+00> : vector<10x8xf32>
    %429 = tpu.matmul %426, %428, %cst_403 {dimension_numbers = #tpu.dot_dimension_numbers<[1], [0], [0], [1], [0, 0, 1, 1], [], []>} : vector<10x8xf32>, vector<8x8xf32>, vector<10x8xf32> -> vector<10x8xf32>
    %430 = arith.addf %424, %429 : vector<10x8xf32>
    %c10 = arith.constant 10 : index
    %c0_404 = arith.constant 0 : index
    %c0_405 = arith.constant 0 : index
    %431 = vector.load %arg15[%c10, %c0_404, %c0_405] : memref<14x11x8xf32, #tpu.memory_space<vmem>>, vector<1x10x8xf32>
    %432 = vector.shape_cast %431 : vector<1x10x8xf32> to vector<10x8xf32>
    %c6_406 = arith.constant 6 : index
    %c0_407 = arith.constant 0 : index
    %c0_408 = arith.constant 0 : index
    %433 = vector.load %arg4[%c6_406, %c0_407, %c0_408] : memref<9x8x8xf32, #tpu.memory_space<vmem>>, vector<1x8x8xf32>
    %434 = vector.shape_cast %433 : vector<1x8x8xf32> to vector<8x8xf32>
    %cst_409 = arith.constant dense<0.000000e+00> : vector<10x8xf32>
    %435 = tpu.matmul %432, %434, %cst_409 {dimension_numbers = #tpu.dot_dimension_numbers<[1], [0], [0], [1], [0, 0, 1, 1], [], []>} : vector<10x8xf32>, vector<8x8xf32>, vector<10x8xf32> -> vector<10x8xf32>
    %436 = arith.addf %430, %435 : vector<10x8xf32>
    %c10_410 = arith.constant 10 : index
    %c0_411 = arith.constant 0 : index
    %c0_412 = arith.constant 0 : index
    %437 = vector.load %arg16[%c10_410, %c0_411, %c0_412] : memref<14x11x8xf32, #tpu.memory_space<vmem>>, vector<1x10x8xf32>
    %438 = vector.shape_cast %437 : vector<1x10x8xf32> to vector<10x8xf32>
    %c7_413 = arith.constant 7 : index
    %c0_414 = arith.constant 0 : index
    %c0_415 = arith.constant 0 : index
    %439 = vector.load %arg4[%c7_413, %c0_414, %c0_415] : memref<9x8x8xf32, #tpu.memory_space<vmem>>, vector<1x8x8xf32>
    %440 = vector.shape_cast %439 : vector<1x8x8xf32> to vector<8x8xf32>
    %cst_416 = arith.constant dense<0.000000e+00> : vector<10x8xf32>
    %441 = tpu.matmul %438, %440, %cst_416 {dimension_numbers = #tpu.dot_dimension_numbers<[1], [0], [0], [1], [0, 0, 1, 1], [], []>} : vector<10x8xf32>, vector<8x8xf32>, vector<10x8xf32> -> vector<10x8xf32>
    %442 = arith.addf %436, %441 : vector<10x8xf32>
    %c10_417 = arith.constant 10 : index
    %c1_418 = arith.constant 1 : index
    %c0_419 = arith.constant 0 : index
    %443 = vector.load %arg15[%c10_417, %c1_418, %c0_419] : memref<14x11x8xf32, #tpu.memory_space<vmem>>, vector<1x10x8xf32>
    %444 = vector.shape_cast %443 : vector<1x10x8xf32> to vector<10x8xf32>
    %c8_420 = arith.constant 8 : index
    %c0_421 = arith.constant 0 : index
    %c0_422 = arith.constant 0 : index
    %445 = vector.load %arg4[%c8_420, %c0_421, %c0_422] : memref<9x8x8xf32, #tpu.memory_space<vmem>>, vector<1x8x8xf32>
    %446 = vector.shape_cast %445 : vector<1x8x8xf32> to vector<8x8xf32>
    %cst_423 = arith.constant dense<0.000000e+00> : vector<10x8xf32>
    %447 = tpu.matmul %444, %446, %cst_423 {dimension_numbers = #tpu.dot_dimension_numbers<[1], [0], [0], [1], [0, 0, 1, 1], [], []>} : vector<10x8xf32>, vector<8x8xf32>, vector<10x8xf32> -> vector<10x8xf32>
    %448 = arith.addf %442, %447 : vector<10x8xf32>
    %c0_424 = arith.constant 0 : index
    %c0_425 = arith.constant 0 : index
    %449 = vector.load %arg5[%c0_424, %c0_425] : memref<1x8xf32, #tpu.memory_space<vmem>>, vector<1x8xf32>
    %450 = vector.broadcast %449 : vector<1x8xf32> to vector<10x8xf32>
    %451 = arith.addf %448, %450 : vector<10x8xf32>
    %cst_426 = arith.constant 0.000000e+00 : f32
    %452 = vector.broadcast %cst_426 : f32 to vector<10x8xf32>
    %453 = arith.maximumf %451, %452 : vector<10x8xf32>
    %c4_427 = arith.constant 4 : index
    %c0_428 = arith.constant 0 : index
    %c0_429 = arith.constant 0 : index
    %454 = vector.load %arg17[%c4_427, %c0_428, %c0_429] : memref<6x10x8xf32, #tpu.memory_space<vmem>>, vector<1x10x8xf32>
    %455 = vector.shape_cast %454 : vector<1x10x8xf32> to vector<10x8xf32>
    %456 = vector.shape_cast %453 : vector<10x8xf32> to vector<1x10x8xf32>
    tpu.vector_store %arg17[%c4_427, %c0_428, %c0_429], %456 {strides = array<i32>} : memref<6x10x8xf32, #tpu.memory_space<vmem>>, vector<1x10x8xf32>,
    %cst_430 = arith.constant 0.000000e+00 : f32
    %457 = vector.broadcast %cst_430 : f32 to vector<10x8xf32>
    %c10_431 = arith.constant 10 : index
    %c0_432 = arith.constant 0 : index
    %c0_433 = arith.constant 0 : index
    %458 = vector.load %arg15[%c10_431, %c0_432, %c0_433] : memref<14x11x8xf32, #tpu.memory_space<vmem>>, vector<1x10x8xf32>
    %459 = vector.shape_cast %458 : vector<1x10x8xf32> to vector<10x8xf32>
    %c0_434 = arith.constant 0 : index
    %c0_435 = arith.constant 0 : index
    %c0_436 = arith.constant 0 : index
    %460 = vector.load %arg4[%c0_434, %c0_435, %c0_436] : memref<9x8x8xf32, #tpu.memory_space<vmem>>, vector<1x8x8xf32>
    %461 = vector.shape_cast %460 : vector<1x8x8xf32> to vector<8x8xf32>
    %cst_437 = arith.constant dense<0.000000e+00> : vector<10x8xf32>
    %462 = tpu.matmul %459, %461, %cst_437 {dimension_numbers = #tpu.dot_dimension_numbers<[1], [0], [0], [1], [0, 0, 1, 1], [], []>} : vector<10x8xf32>, vector<8x8xf32>, vector<10x8xf32> -> vector<10x8xf32>
    %463 = arith.addf %457, %462 : vector<10x8xf32>
    %c10_438 = arith.constant 10 : index
    %c0_439 = arith.constant 0 : index
    %c0_440 = arith.constant 0 : index
    %464 = vector.load %arg16[%c10_438, %c0_439, %c0_440] : memref<14x11x8xf32, #tpu.memory_space<vmem>>, vector<1x10x8xf32>
    %465 = vector.shape_cast %464 : vector<1x10x8xf32> to vector<10x8xf32>
    %c1_441 = arith.constant 1 : index
    %c0_442 = arith.constant 0 : index
    %c0_443 = arith.constant 0 : index
    %466 = vector.load %arg4[%c1_441, %c0_442, %c0_443] : memref<9x8x8xf32, #tpu.memory_space<vmem>>, vector<1x8x8xf32>
    %467 = vector.shape_cast %466 : vector<1x8x8xf32> to vector<8x8xf32>
    %cst_444 = arith.constant dense<0.000000e+00> : vector<10x8xf32>
    %468 = tpu.matmul %465, %467, %cst_444 {dimension_numbers = #tpu.dot_dimension_numbers<[1], [0], [0], [1], [0, 0, 1, 1], [], []>} : vector<10x8xf32>, vector<8x8xf32>, vector<10x8xf32> -> vector<10x8xf32>
    %469 = arith.addf %463, %468 : vector<10x8xf32>
    %c10_445 = arith.constant 10 : index
    %c1_446 = arith.constant 1 : index
    %c0_447 = arith.constant 0 : index
    %470 = vector.load %arg15[%c10_445, %c1_446, %c0_447] : memref<14x11x8xf32, #tpu.memory_space<vmem>>, vector<1x10x8xf32>
    %471 = vector.shape_cast %470 : vector<1x10x8xf32> to vector<10x8xf32>
    %c2_448 = arith.constant 2 : index
    %c0_449 = arith.constant 0 : index
    %c0_450 = arith.constant 0 : index
    %472 = vector.load %arg4[%c2_448, %c0_449, %c0_450] : memref<9x8x8xf32, #tpu.memory_space<vmem>>, vector<1x8x8xf32>
    %473 = vector.shape_cast %472 : vector<1x8x8xf32> to vector<8x8xf32>
    %cst_451 = arith.constant dense<0.000000e+00> : vector<10x8xf32>
    %474 = tpu.matmul %471, %473, %cst_451 {dimension_numbers = #tpu.dot_dimension_numbers<[1], [0], [0], [1], [0, 0, 1, 1], [], []>} : vector<10x8xf32>, vector<8x8xf32>, vector<10x8xf32> -> vector<10x8xf32>
    %475 = arith.addf %469, %474 : vector<10x8xf32>
    %c11 = arith.constant 11 : index
    %c0_452 = arith.constant 0 : index
    %c0_453 = arith.constant 0 : index
    %476 = vector.load %arg15[%c11, %c0_452, %c0_453] : memref<14x11x8xf32, #tpu.memory_space<vmem>>, vector<1x10x8xf32>
    %477 = vector.shape_cast %476 : vector<1x10x8xf32> to vector<10x8xf32>
    %c3_454 = arith.constant 3 : index
    %c0_455 = arith.constant 0 : index
    %c0_456 = arith.constant 0 : index
    %478 = vector.load %arg4[%c3_454, %c0_455, %c0_456] : memref<9x8x8xf32, #tpu.memory_space<vmem>>, vector<1x8x8xf32>
    %479 = vector.shape_cast %478 : vector<1x8x8xf32> to vector<8x8xf32>
    %cst_457 = arith.constant dense<0.000000e+00> : vector<10x8xf32>
    %480 = tpu.matmul %477, %479, %cst_457 {dimension_numbers = #tpu.dot_dimension_numbers<[1], [0], [0], [1], [0, 0, 1, 1], [], []>} : vector<10x8xf32>, vector<8x8xf32>, vector<10x8xf32> -> vector<10x8xf32>
    %481 = arith.addf %475, %480 : vector<10x8xf32>
    %c11_458 = arith.constant 11 : index
    %c0_459 = arith.constant 0 : index
    %c0_460 = arith.constant 0 : index
    %482 = vector.load %arg16[%c11_458, %c0_459, %c0_460] : memref<14x11x8xf32, #tpu.memory_space<vmem>>, vector<1x10x8xf32>
    %483 = vector.shape_cast %482 : vector<1x10x8xf32> to vector<10x8xf32>
    %c4_461 = arith.constant 4 : index
    %c0_462 = arith.constant 0 : index
    %c0_463 = arith.constant 0 : index
    %484 = vector.load %arg4[%c4_461, %c0_462, %c0_463] : memref<9x8x8xf32, #tpu.memory_space<vmem>>, vector<1x8x8xf32>
    %485 = vector.shape_cast %484 : vector<1x8x8xf32> to vector<8x8xf32>
    %cst_464 = arith.constant dense<0.000000e+00> : vector<10x8xf32>
    %486 = tpu.matmul %483, %485, %cst_464 {dimension_numbers = #tpu.dot_dimension_numbers<[1], [0], [0], [1], [0, 0, 1, 1], [], []>} : vector<10x8xf32>, vector<8x8xf32>, vector<10x8xf32> -> vector<10x8xf32>
    %487 = arith.addf %481, %486 : vector<10x8xf32>
    %c11_465 = arith.constant 11 : index
    %c1_466 = arith.constant 1 : index
    %c0_467 = arith.constant 0 : index
    %488 = vector.load %arg15[%c11_465, %c1_466, %c0_467] : memref<14x11x8xf32, #tpu.memory_space<vmem>>, vector<1x10x8xf32>
    %489 = vector.shape_cast %488 : vector<1x10x8xf32> to vector<10x8xf32>
    %c5_468 = arith.constant 5 : index
    %c0_469 = arith.constant 0 : index
    %c0_470 = arith.constant 0 : index
    %490 = vector.load %arg4[%c5_468, %c0_469, %c0_470] : memref<9x8x8xf32, #tpu.memory_space<vmem>>, vector<1x8x8xf32>
    %491 = vector.shape_cast %490 : vector<1x8x8xf32> to vector<8x8xf32>
    %cst_471 = arith.constant dense<0.000000e+00> : vector<10x8xf32>
    %492 = tpu.matmul %489, %491, %cst_471 {dimension_numbers = #tpu.dot_dimension_numbers<[1], [0], [0], [1], [0, 0, 1, 1], [], []>} : vector<10x8xf32>, vector<8x8xf32>, vector<10x8xf32> -> vector<10x8xf32>
    %493 = arith.addf %487, %492 : vector<10x8xf32>
    %c12 = arith.constant 12 : index
    %c0_472 = arith.constant 0 : index
    %c0_473 = arith.constant 0 : index
    %494 = vector.load %arg15[%c12, %c0_472, %c0_473] : memref<14x11x8xf32, #tpu.memory_space<vmem>>, vector<1x10x8xf32>
    %495 = vector.shape_cast %494 : vector<1x10x8xf32> to vector<10x8xf32>
    %c6_474 = arith.constant 6 : index
    %c0_475 = arith.constant 0 : index
    %c0_476 = arith.constant 0 : index
    %496 = vector.load %arg4[%c6_474, %c0_475, %c0_476] : memref<9x8x8xf32, #tpu.memory_space<vmem>>, vector<1x8x8xf32>
    %497 = vector.shape_cast %496 : vector<1x8x8xf32> to vector<8x8xf32>
    %cst_477 = arith.constant dense<0.000000e+00> : vector<10x8xf32>
    %498 = tpu.matmul %495, %497, %cst_477 {dimension_numbers = #tpu.dot_dimension_numbers<[1], [0], [0], [1], [0, 0, 1, 1], [], []>} : vector<10x8xf32>, vector<8x8xf32>, vector<10x8xf32> -> vector<10x8xf32>
    %499 = arith.addf %493, %498 : vector<10x8xf32>
    %c12_478 = arith.constant 12 : index
    %c0_479 = arith.constant 0 : index
    %c0_480 = arith.constant 0 : index
    %500 = vector.load %arg16[%c12_478, %c0_479, %c0_480] : memref<14x11x8xf32, #tpu.memory_space<vmem>>, vector<1x10x8xf32>
    %501 = vector.shape_cast %500 : vector<1x10x8xf32> to vector<10x8xf32>
    %c7_481 = arith.constant 7 : index
    %c0_482 = arith.constant 0 : index
    %c0_483 = arith.constant 0 : index
    %502 = vector.load %arg4[%c7_481, %c0_482, %c0_483] : memref<9x8x8xf32, #tpu.memory_space<vmem>>, vector<1x8x8xf32>
    %503 = vector.shape_cast %502 : vector<1x8x8xf32> to vector<8x8xf32>
    %cst_484 = arith.constant dense<0.000000e+00> : vector<10x8xf32>
    %504 = tpu.matmul %501, %503, %cst_484 {dimension_numbers = #tpu.dot_dimension_numbers<[1], [0], [0], [1], [0, 0, 1, 1], [], []>} : vector<10x8xf32>, vector<8x8xf32>, vector<10x8xf32> -> vector<10x8xf32>
    %505 = arith.addf %499, %504 : vector<10x8xf32>
    %c12_485 = arith.constant 12 : index
    %c1_486 = arith.constant 1 : index
    %c0_487 = arith.constant 0 : index
    %506 = vector.load %arg15[%c12_485, %c1_486, %c0_487] : memref<14x11x8xf32, #tpu.memory_space<vmem>>, vector<1x10x8xf32>
    %507 = vector.shape_cast %506 : vector<1x10x8xf32> to vector<10x8xf32>
    %c8_488 = arith.constant 8 : index
    %c0_489 = arith.constant 0 : index
    %c0_490 = arith.constant 0 : index
    %508 = vector.load %arg4[%c8_488, %c0_489, %c0_490] : memref<9x8x8xf32, #tpu.memory_space<vmem>>, vector<1x8x8xf32>
    %509 = vector.shape_cast %508 : vector<1x8x8xf32> to vector<8x8xf32>
    %cst_491 = arith.constant dense<0.000000e+00> : vector<10x8xf32>
    %510 = tpu.matmul %507, %509, %cst_491 {dimension_numbers = #tpu.dot_dimension_numbers<[1], [0], [0], [1], [0, 0, 1, 1], [], []>} : vector<10x8xf32>, vector<8x8xf32>, vector<10x8xf32> -> vector<10x8xf32>
    %511 = arith.addf %505, %510 : vector<10x8xf32>
    %c0_492 = arith.constant 0 : index
    %c0_493 = arith.constant 0 : index
    %512 = vector.load %arg5[%c0_492, %c0_493] : memref<1x8xf32, #tpu.memory_space<vmem>>, vector<1x8xf32>
    %513 = vector.broadcast %512 : vector<1x8xf32> to vector<10x8xf32>
    %514 = arith.addf %511, %513 : vector<10x8xf32>
    %cst_494 = arith.constant 0.000000e+00 : f32
    %515 = vector.broadcast %cst_494 : f32 to vector<10x8xf32>
    %516 = arith.maximumf %514, %515 : vector<10x8xf32>
    %c5_495 = arith.constant 5 : index
    %c0_496 = arith.constant 0 : index
    %c0_497 = arith.constant 0 : index
    %517 = vector.load %arg17[%c5_495, %c0_496, %c0_497] : memref<6x10x8xf32, #tpu.memory_space<vmem>>, vector<1x10x8xf32>
    %518 = vector.shape_cast %517 : vector<1x10x8xf32> to vector<10x8xf32>
    %519 = vector.shape_cast %516 : vector<10x8xf32> to vector<1x10x8xf32>
    tpu.vector_store %arg17[%c5_495, %c0_496, %c0_497], %519 {strides = array<i32>} : memref<6x10x8xf32, #tpu.memory_space<vmem>>, vector<1x10x8xf32>,
    %cst_498 = arith.constant 0.000000e+00 : f32
    %520 = vector.broadcast %cst_498 : f32 to vector<8x8xf32>
    %c0_499 = arith.constant 0 : index
    %c0_500 = arith.constant 0 : index
    %c0_501 = arith.constant 0 : index
    %521 = vector.load %arg17[%c0_499, %c0_500, %c0_501] : memref<6x10x8xf32, #tpu.memory_space<vmem>>, vector<1x8x8xf32>
    %522 = vector.shape_cast %521 : vector<1x8x8xf32> to vector<8x8xf32>
    %c0_502 = arith.constant 0 : index
    %c0_503 = arith.constant 0 : index
    %c0_504 = arith.constant 0 : index
    %523 = vector.load %arg6[%c0_502, %c0_503, %c0_504] : memref<9x8x8xf32, #tpu.memory_space<vmem>>, vector<1x8x8xf32>
    %524 = vector.shape_cast %523 : vector<1x8x8xf32> to vector<8x8xf32>
    %cst_505 = arith.constant dense<0.000000e+00> : vector<8x8xf32>
    %525 = tpu.matmul %522, %524, %cst_505 {dimension_numbers = #tpu.dot_dimension_numbers<[1], [0], [0], [1], [0, 0, 1, 1], [], []>} : vector<8x8xf32>, vector<8x8xf32>, vector<8x8xf32> -> vector<8x8xf32>
    %526 = arith.addf %520, %525 : vector<8x8xf32>
    %c0_506 = arith.constant 0 : index
    %c1_507 = arith.constant 1 : index
    %c0_508 = arith.constant 0 : index
    %527 = vector.load %arg17[%c0_506, %c1_507, %c0_508] : memref<6x10x8xf32, #tpu.memory_space<vmem>>, vector<1x8x8xf32>
    %528 = vector.shape_cast %527 : vector<1x8x8xf32> to vector<8x8xf32>
    %c1_509 = arith.constant 1 : index
    %c0_510 = arith.constant 0 : index
    %c0_511 = arith.constant 0 : index
    %529 = vector.load %arg6[%c1_509, %c0_510, %c0_511] : memref<9x8x8xf32, #tpu.memory_space<vmem>>, vector<1x8x8xf32>
    %530 = vector.shape_cast %529 : vector<1x8x8xf32> to vector<8x8xf32>
    %cst_512 = arith.constant dense<0.000000e+00> : vector<8x8xf32>
    %531 = tpu.matmul %528, %530, %cst_512 {dimension_numbers = #tpu.dot_dimension_numbers<[1], [0], [0], [1], [0, 0, 1, 1], [], []>} : vector<8x8xf32>, vector<8x8xf32>, vector<8x8xf32> -> vector<8x8xf32>
    %532 = arith.addf %526, %531 : vector<8x8xf32>
    %c0_513 = arith.constant 0 : index
    %c2_514 = arith.constant 2 : index
    %c0_515 = arith.constant 0 : index
    %533 = vector.load %arg17[%c0_513, %c2_514, %c0_515] : memref<6x10x8xf32, #tpu.memory_space<vmem>>, vector<1x8x8xf32>
    %534 = vector.shape_cast %533 : vector<1x8x8xf32> to vector<8x8xf32>
    %c2_516 = arith.constant 2 : index
    %c0_517 = arith.constant 0 : index
    %c0_518 = arith.constant 0 : index
    %535 = vector.load %arg6[%c2_516, %c0_517, %c0_518] : memref<9x8x8xf32, #tpu.memory_space<vmem>>, vector<1x8x8xf32>
    %536 = vector.shape_cast %535 : vector<1x8x8xf32> to vector<8x8xf32>
    %cst_519 = arith.constant dense<0.000000e+00> : vector<8x8xf32>
    %537 = tpu.matmul %534, %536, %cst_519 {dimension_numbers = #tpu.dot_dimension_numbers<[1], [0], [0], [1], [0, 0, 1, 1], [], []>} : vector<8x8xf32>, vector<8x8xf32>, vector<8x8xf32> -> vector<8x8xf32>
    %538 = arith.addf %532, %537 : vector<8x8xf32>
    %c1_520 = arith.constant 1 : index
    %c0_521 = arith.constant 0 : index
    %c0_522 = arith.constant 0 : index
    %539 = vector.load %arg17[%c1_520, %c0_521, %c0_522] : memref<6x10x8xf32, #tpu.memory_space<vmem>>, vector<1x8x8xf32>
    %540 = vector.shape_cast %539 : vector<1x8x8xf32> to vector<8x8xf32>
    %c3_523 = arith.constant 3 : index
    %c0_524 = arith.constant 0 : index
    %c0_525 = arith.constant 0 : index
    %541 = vector.load %arg6[%c3_523, %c0_524, %c0_525] : memref<9x8x8xf32, #tpu.memory_space<vmem>>, vector<1x8x8xf32>
    %542 = vector.shape_cast %541 : vector<1x8x8xf32> to vector<8x8xf32>
    %cst_526 = arith.constant dense<0.000000e+00> : vector<8x8xf32>
    %543 = tpu.matmul %540, %542, %cst_526 {dimension_numbers = #tpu.dot_dimension_numbers<[1], [0], [0], [1], [0, 0, 1, 1], [], []>} : vector<8x8xf32>, vector<8x8xf32>, vector<8x8xf32> -> vector<8x8xf32>
    %544 = arith.addf %538, %543 : vector<8x8xf32>
    %c1_527 = arith.constant 1 : index
    %c1_528 = arith.constant 1 : index
    %c0_529 = arith.constant 0 : index
    %545 = vector.load %arg17[%c1_527, %c1_528, %c0_529] : memref<6x10x8xf32, #tpu.memory_space<vmem>>, vector<1x8x8xf32>
    %546 = vector.shape_cast %545 : vector<1x8x8xf32> to vector<8x8xf32>
    %c4_530 = arith.constant 4 : index
    %c0_531 = arith.constant 0 : index
    %c0_532 = arith.constant 0 : index
    %547 = vector.load %arg6[%c4_530, %c0_531, %c0_532] : memref<9x8x8xf32, #tpu.memory_space<vmem>>, vector<1x8x8xf32>
    %548 = vector.shape_cast %547 : vector<1x8x8xf32> to vector<8x8xf32>
    %cst_533 = arith.constant dense<0.000000e+00> : vector<8x8xf32>
    %549 = tpu.matmul %546, %548, %cst_533 {dimension_numbers = #tpu.dot_dimension_numbers<[1], [0], [0], [1], [0, 0, 1, 1], [], []>} : vector<8x8xf32>, vector<8x8xf32>, vector<8x8xf32> -> vector<8x8xf32>
    %550 = arith.addf %544, %549 : vector<8x8xf32>
    %c1_534 = arith.constant 1 : index
    %c2_535 = arith.constant 2 : index
    %c0_536 = arith.constant 0 : index
    %551 = vector.load %arg17[%c1_534, %c2_535, %c0_536] : memref<6x10x8xf32, #tpu.memory_space<vmem>>, vector<1x8x8xf32>
    %552 = vector.shape_cast %551 : vector<1x8x8xf32> to vector<8x8xf32>
    %c5_537 = arith.constant 5 : index
    %c0_538 = arith.constant 0 : index
    %c0_539 = arith.constant 0 : index
    %553 = vector.load %arg6[%c5_537, %c0_538, %c0_539] : memref<9x8x8xf32, #tpu.memory_space<vmem>>, vector<1x8x8xf32>
    %554 = vector.shape_cast %553 : vector<1x8x8xf32> to vector<8x8xf32>
    %cst_540 = arith.constant dense<0.000000e+00> : vector<8x8xf32>
    %555 = tpu.matmul %552, %554, %cst_540 {dimension_numbers = #tpu.dot_dimension_numbers<[1], [0], [0], [1], [0, 0, 1, 1], [], []>} : vector<8x8xf32>, vector<8x8xf32>, vector<8x8xf32> -> vector<8x8xf32>
    %556 = arith.addf %550, %555 : vector<8x8xf32>
    %c2_541 = arith.constant 2 : index
    %c0_542 = arith.constant 0 : index
    %c0_543 = arith.constant 0 : index
    %557 = vector.load %arg17[%c2_541, %c0_542, %c0_543] : memref<6x10x8xf32, #tpu.memory_space<vmem>>, vector<1x8x8xf32>
    %558 = vector.shape_cast %557 : vector<1x8x8xf32> to vector<8x8xf32>
    %c6_544 = arith.constant 6 : index
    %c0_545 = arith.constant 0 : index
    %c0_546 = arith.constant 0 : index
    %559 = vector.load %arg6[%c6_544, %c0_545, %c0_546] : memref<9x8x8xf32, #tpu.memory_space<vmem>>, vector<1x8x8xf32>
    %560 = vector.shape_cast %559 : vector<1x8x8xf32> to vector<8x8xf32>
    %cst_547 = arith.constant dense<0.000000e+00> : vector<8x8xf32>
    %561 = tpu.matmul %558, %560, %cst_547 {dimension_numbers = #tpu.dot_dimension_numbers<[1], [0], [0], [1], [0, 0, 1, 1], [], []>} : vector<8x8xf32>, vector<8x8xf32>, vector<8x8xf32> -> vector<8x8xf32>
    %562 = arith.addf %556, %561 : vector<8x8xf32>
    %c2_548 = arith.constant 2 : index
    %c1_549 = arith.constant 1 : index
    %c0_550 = arith.constant 0 : index
    %563 = vector.load %arg17[%c2_548, %c1_549, %c0_550] : memref<6x10x8xf32, #tpu.memory_space<vmem>>, vector<1x8x8xf32>
    %564 = vector.shape_cast %563 : vector<1x8x8xf32> to vector<8x8xf32>
    %c7_551 = arith.constant 7 : index
    %c0_552 = arith.constant 0 : index
    %c0_553 = arith.constant 0 : index
    %565 = vector.load %arg6[%c7_551, %c0_552, %c0_553] : memref<9x8x8xf32, #tpu.memory_space<vmem>>, vector<1x8x8xf32>
    %566 = vector.shape_cast %565 : vector<1x8x8xf32> to vector<8x8xf32>
    %cst_554 = arith.constant dense<0.000000e+00> : vector<8x8xf32>
    %567 = tpu.matmul %564, %566, %cst_554 {dimension_numbers = #tpu.dot_dimension_numbers<[1], [0], [0], [1], [0, 0, 1, 1], [], []>} : vector<8x8xf32>, vector<8x8xf32>, vector<8x8xf32> -> vector<8x8xf32>
    %568 = arith.addf %562, %567 : vector<8x8xf32>
    %c2_555 = arith.constant 2 : index
    %c2_556 = arith.constant 2 : index
    %c0_557 = arith.constant 0 : index
    %569 = vector.load %arg17[%c2_555, %c2_556, %c0_557] : memref<6x10x8xf32, #tpu.memory_space<vmem>>, vector<1x8x8xf32>
    %570 = vector.shape_cast %569 : vector<1x8x8xf32> to vector<8x8xf32>
    %c8_558 = arith.constant 8 : index
    %c0_559 = arith.constant 0 : index
    %c0_560 = arith.constant 0 : index
    %571 = vector.load %arg6[%c8_558, %c0_559, %c0_560] : memref<9x8x8xf32, #tpu.memory_space<vmem>>, vector<1x8x8xf32>
    %572 = vector.shape_cast %571 : vector<1x8x8xf32> to vector<8x8xf32>
    %cst_561 = arith.constant dense<0.000000e+00> : vector<8x8xf32>
    %573 = tpu.matmul %570, %572, %cst_561 {dimension_numbers = #tpu.dot_dimension_numbers<[1], [0], [0], [1], [0, 0, 1, 1], [], []>} : vector<8x8xf32>, vector<8x8xf32>, vector<8x8xf32> -> vector<8x8xf32>
    %574 = arith.addf %568, %573 : vector<8x8xf32>
    %c0_562 = arith.constant 0 : index
    %c0_563 = arith.constant 0 : index
    %575 = vector.load %arg7[%c0_562, %c0_563] : memref<1x8xf32, #tpu.memory_space<vmem>>, vector<1x8xf32>
    %576 = vector.broadcast %575 : vector<1x8xf32> to vector<8x8xf32>
    %577 = arith.addf %574, %576 : vector<8x8xf32>
    %cst_564 = arith.constant 0.000000e+00 : f32
    %578 = vector.broadcast %cst_564 : f32 to vector<8x8xf32>
    %579 = arith.maximumf %577, %578 : vector<8x8xf32>
    %c0_565 = arith.constant 0 : index
    %c0_566 = arith.constant 0 : index
    %c0_567 = arith.constant 0 : index
    %580 = vector.load %arg18[%c0_565, %c0_566, %c0_567] : memref<4x8x8xf32, #tpu.memory_space<vmem>>, vector<1x8x8xf32>
    %581 = vector.shape_cast %580 : vector<1x8x8xf32> to vector<8x8xf32>
    %582 = vector.shape_cast %579 : vector<8x8xf32> to vector<1x8x8xf32>
    tpu.vector_store %arg18[%c0_565, %c0_566, %c0_567], %582 {strides = array<i32>} : memref<4x8x8xf32, #tpu.memory_space<vmem>>, vector<1x8x8xf32>,
    %cst_568 = arith.constant 0.000000e+00 : f32
    %583 = vector.broadcast %cst_568 : f32 to vector<8x8xf32>
    %c1_569 = arith.constant 1 : index
    %c0_570 = arith.constant 0 : index
    %c0_571 = arith.constant 0 : index
    %584 = vector.load %arg17[%c1_569, %c0_570, %c0_571] : memref<6x10x8xf32, #tpu.memory_space<vmem>>, vector<1x8x8xf32>
    %585 = vector.shape_cast %584 : vector<1x8x8xf32> to vector<8x8xf32>
    %c0_572 = arith.constant 0 : index
    %c0_573 = arith.constant 0 : index
    %c0_574 = arith.constant 0 : index
    %586 = vector.load %arg6[%c0_572, %c0_573, %c0_574] : memref<9x8x8xf32, #tpu.memory_space<vmem>>, vector<1x8x8xf32>
    %587 = vector.shape_cast %586 : vector<1x8x8xf32> to vector<8x8xf32>
    %cst_575 = arith.constant dense<0.000000e+00> : vector<8x8xf32>
    %588 = tpu.matmul %585, %587, %cst_575 {dimension_numbers = #tpu.dot_dimension_numbers<[1], [0], [0], [1], [0, 0, 1, 1], [], []>} : vector<8x8xf32>, vector<8x8xf32>, vector<8x8xf32> -> vector<8x8xf32>
    %589 = arith.addf %583, %588 : vector<8x8xf32>
    %c1_576 = arith.constant 1 : index
    %c1_577 = arith.constant 1 : index
    %c0_578 = arith.constant 0 : index
    %590 = vector.load %arg17[%c1_576, %c1_577, %c0_578] : memref<6x10x8xf32, #tpu.memory_space<vmem>>, vector<1x8x8xf32>
    %591 = vector.shape_cast %590 : vector<1x8x8xf32> to vector<8x8xf32>
    %c1_579 = arith.constant 1 : index
    %c0_580 = arith.constant 0 : index
    %c0_581 = arith.constant 0 : index
    %592 = vector.load %arg6[%c1_579, %c0_580, %c0_581] : memref<9x8x8xf32, #tpu.memory_space<vmem>>, vector<1x8x8xf32>
    %593 = vector.shape_cast %592 : vector<1x8x8xf32> to vector<8x8xf32>
    %cst_582 = arith.constant dense<0.000000e+00> : vector<8x8xf32>
    %594 = tpu.matmul %591, %593, %cst_582 {dimension_numbers = #tpu.dot_dimension_numbers<[1], [0], [0], [1], [0, 0, 1, 1], [], []>} : vector<8x8xf32>, vector<8x8xf32>, vector<8x8xf32> -> vector<8x8xf32>
    %595 = arith.addf %589, %594 : vector<8x8xf32>
    %c1_583 = arith.constant 1 : index
    %c2_584 = arith.constant 2 : index
    %c0_585 = arith.constant 0 : index
    %596 = vector.load %arg17[%c1_583, %c2_584, %c0_585] : memref<6x10x8xf32, #tpu.memory_space<vmem>>, vector<1x8x8xf32>
    %597 = vector.shape_cast %596 : vector<1x8x8xf32> to vector<8x8xf32>
    %c2_586 = arith.constant 2 : index
    %c0_587 = arith.constant 0 : index
    %c0_588 = arith.constant 0 : index
    %598 = vector.load %arg6[%c2_586, %c0_587, %c0_588] : memref<9x8x8xf32, #tpu.memory_space<vmem>>, vector<1x8x8xf32>
    %599 = vector.shape_cast %598 : vector<1x8x8xf32> to vector<8x8xf32>
    %cst_589 = arith.constant dense<0.000000e+00> : vector<8x8xf32>
    %600 = tpu.matmul %597, %599, %cst_589 {dimension_numbers = #tpu.dot_dimension_numbers<[1], [0], [0], [1], [0, 0, 1, 1], [], []>} : vector<8x8xf32>, vector<8x8xf32>, vector<8x8xf32> -> vector<8x8xf32>
    %601 = arith.addf %595, %600 : vector<8x8xf32>
    %c2_590 = arith.constant 2 : index
    %c0_591 = arith.constant 0 : index
    %c0_592 = arith.constant 0 : index
    %602 = vector.load %arg17[%c2_590, %c0_591, %c0_592] : memref<6x10x8xf32, #tpu.memory_space<vmem>>, vector<1x8x8xf32>
    %603 = vector.shape_cast %602 : vector<1x8x8xf32> to vector<8x8xf32>
    %c3_593 = arith.constant 3 : index
    %c0_594 = arith.constant 0 : index
    %c0_595 = arith.constant 0 : index
    %604 = vector.load %arg6[%c3_593, %c0_594, %c0_595] : memref<9x8x8xf32, #tpu.memory_space<vmem>>, vector<1x8x8xf32>
    %605 = vector.shape_cast %604 : vector<1x8x8xf32> to vector<8x8xf32>
    %cst_596 = arith.constant dense<0.000000e+00> : vector<8x8xf32>
    %606 = tpu.matmul %603, %605, %cst_596 {dimension_numbers = #tpu.dot_dimension_numbers<[1], [0], [0], [1], [0, 0, 1, 1], [], []>} : vector<8x8xf32>, vector<8x8xf32>, vector<8x8xf32> -> vector<8x8xf32>
    %607 = arith.addf %601, %606 : vector<8x8xf32>
    %c2_597 = arith.constant 2 : index
    %c1_598 = arith.constant 1 : index
    %c0_599 = arith.constant 0 : index
    %608 = vector.load %arg17[%c2_597, %c1_598, %c0_599] : memref<6x10x8xf32, #tpu.memory_space<vmem>>, vector<1x8x8xf32>
    %609 = vector.shape_cast %608 : vector<1x8x8xf32> to vector<8x8xf32>
    %c4_600 = arith.constant 4 : index
    %c0_601 = arith.constant 0 : index
    %c0_602 = arith.constant 0 : index
    %610 = vector.load %arg6[%c4_600, %c0_601, %c0_602] : memref<9x8x8xf32, #tpu.memory_space<vmem>>, vector<1x8x8xf32>
    %611 = vector.shape_cast %610 : vector<1x8x8xf32> to vector<8x8xf32>
    %cst_603 = arith.constant dense<0.000000e+00> : vector<8x8xf32>
    %612 = tpu.matmul %609, %611, %cst_603 {dimension_numbers = #tpu.dot_dimension_numbers<[1], [0], [0], [1], [0, 0, 1, 1], [], []>} : vector<8x8xf32>, vector<8x8xf32>, vector<8x8xf32> -> vector<8x8xf32>
    %613 = arith.addf %607, %612 : vector<8x8xf32>
    %c2_604 = arith.constant 2 : index
    %c2_605 = arith.constant 2 : index
    %c0_606 = arith.constant 0 : index
    %614 = vector.load %arg17[%c2_604, %c2_605, %c0_606] : memref<6x10x8xf32, #tpu.memory_space<vmem>>, vector<1x8x8xf32>
    %615 = vector.shape_cast %614 : vector<1x8x8xf32> to vector<8x8xf32>
    %c5_607 = arith.constant 5 : index
    %c0_608 = arith.constant 0 : index
    %c0_609 = arith.constant 0 : index
    %616 = vector.load %arg6[%c5_607, %c0_608, %c0_609] : memref<9x8x8xf32, #tpu.memory_space<vmem>>, vector<1x8x8xf32>
    %617 = vector.shape_cast %616 : vector<1x8x8xf32> to vector<8x8xf32>
    %cst_610 = arith.constant dense<0.000000e+00> : vector<8x8xf32>
    %618 = tpu.matmul %615, %617, %cst_610 {dimension_numbers = #tpu.dot_dimension_numbers<[1], [0], [0], [1], [0, 0, 1, 1], [], []>} : vector<8x8xf32>, vector<8x8xf32>, vector<8x8xf32> -> vector<8x8xf32>
    %619 = arith.addf %613, %618 : vector<8x8xf32>
    %c3_611 = arith.constant 3 : index
    %c0_612 = arith.constant 0 : index
    %c0_613 = arith.constant 0 : index
    %620 = vector.load %arg17[%c3_611, %c0_612, %c0_613] : memref<6x10x8xf32, #tpu.memory_space<vmem>>, vector<1x8x8xf32>
    %621 = vector.shape_cast %620 : vector<1x8x8xf32> to vector<8x8xf32>
    %c6_614 = arith.constant 6 : index
    %c0_615 = arith.constant 0 : index
    %c0_616 = arith.constant 0 : index
    %622 = vector.load %arg6[%c6_614, %c0_615, %c0_616] : memref<9x8x8xf32, #tpu.memory_space<vmem>>, vector<1x8x8xf32>
    %623 = vector.shape_cast %622 : vector<1x8x8xf32> to vector<8x8xf32>
    %cst_617 = arith.constant dense<0.000000e+00> : vector<8x8xf32>
    %624 = tpu.matmul %621, %623, %cst_617 {dimension_numbers = #tpu.dot_dimension_numbers<[1], [0], [0], [1], [0, 0, 1, 1], [], []>} : vector<8x8xf32>, vector<8x8xf32>, vector<8x8xf32> -> vector<8x8xf32>
    %625 = arith.addf %619, %624 : vector<8x8xf32>
    %c3_618 = arith.constant 3 : index
    %c1_619 = arith.constant 1 : index
    %c0_620 = arith.constant 0 : index
    %626 = vector.load %arg17[%c3_618, %c1_619, %c0_620] : memref<6x10x8xf32, #tpu.memory_space<vmem>>, vector<1x8x8xf32>
    %627 = vector.shape_cast %626 : vector<1x8x8xf32> to vector<8x8xf32>
    %c7_621 = arith.constant 7 : index
    %c0_622 = arith.constant 0 : index
    %c0_623 = arith.constant 0 : index
    %628 = vector.load %arg6[%c7_621, %c0_622, %c0_623] : memref<9x8x8xf32, #tpu.memory_space<vmem>>, vector<1x8x8xf32>
    %629 = vector.shape_cast %628 : vector<1x8x8xf32> to vector<8x8xf32>
    %cst_624 = arith.constant dense<0.000000e+00> : vector<8x8xf32>
    %630 = tpu.matmul %627, %629, %cst_624 {dimension_numbers = #tpu.dot_dimension_numbers<[1], [0], [0], [1], [0, 0, 1, 1], [], []>} : vector<8x8xf32>, vector<8x8xf32>, vector<8x8xf32> -> vector<8x8xf32>
    %631 = arith.addf %625, %630 : vector<8x8xf32>
    %c3_625 = arith.constant 3 : index
    %c2_626 = arith.constant 2 : index
    %c0_627 = arith.constant 0 : index
    %632 = vector.load %arg17[%c3_625, %c2_626, %c0_627] : memref<6x10x8xf32, #tpu.memory_space<vmem>>, vector<1x8x8xf32>
    %633 = vector.shape_cast %632 : vector<1x8x8xf32> to vector<8x8xf32>
    %c8_628 = arith.constant 8 : index
    %c0_629 = arith.constant 0 : index
    %c0_630 = arith.constant 0 : index
    %634 = vector.load %arg6[%c8_628, %c0_629, %c0_630] : memref<9x8x8xf32, #tpu.memory_space<vmem>>, vector<1x8x8xf32>
    %635 = vector.shape_cast %634 : vector<1x8x8xf32> to vector<8x8xf32>
    %cst_631 = arith.constant dense<0.000000e+00> : vector<8x8xf32>
    %636 = tpu.matmul %633, %635, %cst_631 {dimension_numbers = #tpu.dot_dimension_numbers<[1], [0], [0], [1], [0, 0, 1, 1], [], []>} : vector<8x8xf32>, vector<8x8xf32>, vector<8x8xf32> -> vector<8x8xf32>
    %637 = arith.addf %631, %636 : vector<8x8xf32>
    %c0_632 = arith.constant 0 : index
    %c0_633 = arith.constant 0 : index
    %638 = vector.load %arg7[%c0_632, %c0_633] : memref<1x8xf32, #tpu.memory_space<vmem>>, vector<1x8xf32>
    %639 = vector.broadcast %638 : vector<1x8xf32> to vector<8x8xf32>
    %640 = arith.addf %637, %639 : vector<8x8xf32>
    %cst_634 = arith.constant 0.000000e+00 : f32
    %641 = vector.broadcast %cst_634 : f32 to vector<8x8xf32>
    %642 = arith.maximumf %640, %641 : vector<8x8xf32>
    %c1_635 = arith.constant 1 : index
    %c0_636 = arith.constant 0 : index
    %c0_637 = arith.constant 0 : index
    %643 = vector.load %arg18[%c1_635, %c0_636, %c0_637] : memref<4x8x8xf32, #tpu.memory_space<vmem>>, vector<1x8x8xf32>
    %644 = vector.shape_cast %643 : vector<1x8x8xf32> to vector<8x8xf32>
    %645 = vector.shape_cast %642 : vector<8x8xf32> to vector<1x8x8xf32>
    tpu.vector_store %arg18[%c1_635, %c0_636, %c0_637], %645 {strides = array<i32>} : memref<4x8x8xf32, #tpu.memory_space<vmem>>, vector<1x8x8xf32>,
    %cst_638 = arith.constant 0.000000e+00 : f32
    %646 = vector.broadcast %cst_638 : f32 to vector<8x8xf32>
    %c2_639 = arith.constant 2 : index
    %c0_640 = arith.constant 0 : index
    %c0_641 = arith.constant 0 : index
    %647 = vector.load %arg17[%c2_639, %c0_640, %c0_641] : memref<6x10x8xf32, #tpu.memory_space<vmem>>, vector<1x8x8xf32>
    %648 = vector.shape_cast %647 : vector<1x8x8xf32> to vector<8x8xf32>
    %c0_642 = arith.constant 0 : index
    %c0_643 = arith.constant 0 : index
    %c0_644 = arith.constant 0 : index
    %649 = vector.load %arg6[%c0_642, %c0_643, %c0_644] : memref<9x8x8xf32, #tpu.memory_space<vmem>>, vector<1x8x8xf32>
    %650 = vector.shape_cast %649 : vector<1x8x8xf32> to vector<8x8xf32>
    %cst_645 = arith.constant dense<0.000000e+00> : vector<8x8xf32>
    %651 = tpu.matmul %648, %650, %cst_645 {dimension_numbers = #tpu.dot_dimension_numbers<[1], [0], [0], [1], [0, 0, 1, 1], [], []>} : vector<8x8xf32>, vector<8x8xf32>, vector<8x8xf32> -> vector<8x8xf32>
    %652 = arith.addf %646, %651 : vector<8x8xf32>
    %c2_646 = arith.constant 2 : index
    %c1_647 = arith.constant 1 : index
    %c0_648 = arith.constant 0 : index
    %653 = vector.load %arg17[%c2_646, %c1_647, %c0_648] : memref<6x10x8xf32, #tpu.memory_space<vmem>>, vector<1x8x8xf32>
    %654 = vector.shape_cast %653 : vector<1x8x8xf32> to vector<8x8xf32>
    %c1_649 = arith.constant 1 : index
    %c0_650 = arith.constant 0 : index
    %c0_651 = arith.constant 0 : index
    %655 = vector.load %arg6[%c1_649, %c0_650, %c0_651] : memref<9x8x8xf32, #tpu.memory_space<vmem>>, vector<1x8x8xf32>
    %656 = vector.shape_cast %655 : vector<1x8x8xf32> to vector<8x8xf32>
    %cst_652 = arith.constant dense<0.000000e+00> : vector<8x8xf32>
    %657 = tpu.matmul %654, %656, %cst_652 {dimension_numbers = #tpu.dot_dimension_numbers<[1], [0], [0], [1], [0, 0, 1, 1], [], []>} : vector<8x8xf32>, vector<8x8xf32>, vector<8x8xf32> -> vector<8x8xf32>
    %658 = arith.addf %652, %657 : vector<8x8xf32>
    %c2_653 = arith.constant 2 : index
    %c2_654 = arith.constant 2 : index
    %c0_655 = arith.constant 0 : index
    %659 = vector.load %arg17[%c2_653, %c2_654, %c0_655] : memref<6x10x8xf32, #tpu.memory_space<vmem>>, vector<1x8x8xf32>
    %660 = vector.shape_cast %659 : vector<1x8x8xf32> to vector<8x8xf32>
    %c2_656 = arith.constant 2 : index
    %c0_657 = arith.constant 0 : index
    %c0_658 = arith.constant 0 : index
    %661 = vector.load %arg6[%c2_656, %c0_657, %c0_658] : memref<9x8x8xf32, #tpu.memory_space<vmem>>, vector<1x8x8xf32>
    %662 = vector.shape_cast %661 : vector<1x8x8xf32> to vector<8x8xf32>
    %cst_659 = arith.constant dense<0.000000e+00> : vector<8x8xf32>
    %663 = tpu.matmul %660, %662, %cst_659 {dimension_numbers = #tpu.dot_dimension_numbers<[1], [0], [0], [1], [0, 0, 1, 1], [], []>} : vector<8x8xf32>, vector<8x8xf32>, vector<8x8xf32> -> vector<8x8xf32>
    %664 = arith.addf %658, %663 : vector<8x8xf32>
    %c3_660 = arith.constant 3 : index
    %c0_661 = arith.constant 0 : index
    %c0_662 = arith.constant 0 : index
    %665 = vector.load %arg17[%c3_660, %c0_661, %c0_662] : memref<6x10x8xf32, #tpu.memory_space<vmem>>, vector<1x8x8xf32>
    %666 = vector.shape_cast %665 : vector<1x8x8xf32> to vector<8x8xf32>
    %c3_663 = arith.constant 3 : index
    %c0_664 = arith.constant 0 : index
    %c0_665 = arith.constant 0 : index
    %667 = vector.load %arg6[%c3_663, %c0_664, %c0_665] : memref<9x8x8xf32, #tpu.memory_space<vmem>>, vector<1x8x8xf32>
    %668 = vector.shape_cast %667 : vector<1x8x8xf32> to vector<8x8xf32>
    %cst_666 = arith.constant dense<0.000000e+00> : vector<8x8xf32>
    %669 = tpu.matmul %666, %668, %cst_666 {dimension_numbers = #tpu.dot_dimension_numbers<[1], [0], [0], [1], [0, 0, 1, 1], [], []>} : vector<8x8xf32>, vector<8x8xf32>, vector<8x8xf32> -> vector<8x8xf32>
    %670 = arith.addf %664, %669 : vector<8x8xf32>
    %c3_667 = arith.constant 3 : index
    %c1_668 = arith.constant 1 : index
    %c0_669 = arith.constant 0 : index
    %671 = vector.load %arg17[%c3_667, %c1_668, %c0_669] : memref<6x10x8xf32, #tpu.memory_space<vmem>>, vector<1x8x8xf32>
    %672 = vector.shape_cast %671 : vector<1x8x8xf32> to vector<8x8xf32>
    %c4_670 = arith.constant 4 : index
    %c0_671 = arith.constant 0 : index
    %c0_672 = arith.constant 0 : index
    %673 = vector.load %arg6[%c4_670, %c0_671, %c0_672] : memref<9x8x8xf32, #tpu.memory_space<vmem>>, vector<1x8x8xf32>
    %674 = vector.shape_cast %673 : vector<1x8x8xf32> to vector<8x8xf32>
    %cst_673 = arith.constant dense<0.000000e+00> : vector<8x8xf32>
    %675 = tpu.matmul %672, %674, %cst_673 {dimension_numbers = #tpu.dot_dimension_numbers<[1], [0], [0], [1], [0, 0, 1, 1], [], []>} : vector<8x8xf32>, vector<8x8xf32>, vector<8x8xf32> -> vector<8x8xf32>
    %676 = arith.addf %670, %675 : vector<8x8xf32>
    %c3_674 = arith.constant 3 : index
    %c2_675 = arith.constant 2 : index
    %c0_676 = arith.constant 0 : index
    %677 = vector.load %arg17[%c3_674, %c2_675, %c0_676] : memref<6x10x8xf32, #tpu.memory_space<vmem>>, vector<1x8x8xf32>
    %678 = vector.shape_cast %677 : vector<1x8x8xf32> to vector<8x8xf32>
    %c5_677 = arith.constant 5 : index
    %c0_678 = arith.constant 0 : index
    %c0_679 = arith.constant 0 : index
    %679 = vector.load %arg6[%c5_677, %c0_678, %c0_679] : memref<9x8x8xf32, #tpu.memory_space<vmem>>, vector<1x8x8xf32>
    %680 = vector.shape_cast %679 : vector<1x8x8xf32> to vector<8x8xf32>
    %cst_680 = arith.constant dense<0.000000e+00> : vector<8x8xf32>
    %681 = tpu.matmul %678, %680, %cst_680 {dimension_numbers = #tpu.dot_dimension_numbers<[1], [0], [0], [1], [0, 0, 1, 1], [], []>} : vector<8x8xf32>, vector<8x8xf32>, vector<8x8xf32> -> vector<8x8xf32>
    %682 = arith.addf %676, %681 : vector<8x8xf32>
    %c4_681 = arith.constant 4 : index
    %c0_682 = arith.constant 0 : index
    %c0_683 = arith.constant 0 : index
    %683 = vector.load %arg17[%c4_681, %c0_682, %c0_683] : memref<6x10x8xf32, #tpu.memory_space<vmem>>, vector<1x8x8xf32>
    %684 = vector.shape_cast %683 : vector<1x8x8xf32> to vector<8x8xf32>
    %c6_684 = arith.constant 6 : index
    %c0_685 = arith.constant 0 : index
    %c0_686 = arith.constant 0 : index
    %685 = vector.load %arg6[%c6_684, %c0_685, %c0_686] : memref<9x8x8xf32, #tpu.memory_space<vmem>>, vector<1x8x8xf32>
    %686 = vector.shape_cast %685 : vector<1x8x8xf32> to vector<8x8xf32>
    %cst_687 = arith.constant dense<0.000000e+00> : vector<8x8xf32>
    %687 = tpu.matmul %684, %686, %cst_687 {dimension_numbers = #tpu.dot_dimension_numbers<[1], [0], [0], [1], [0, 0, 1, 1], [], []>} : vector<8x8xf32>, vector<8x8xf32>, vector<8x8xf32> -> vector<8x8xf32>
    %688 = arith.addf %682, %687 : vector<8x8xf32>
    %c4_688 = arith.constant 4 : index
    %c1_689 = arith.constant 1 : index
    %c0_690 = arith.constant 0 : index
    %689 = vector.load %arg17[%c4_688, %c1_689, %c0_690] : memref<6x10x8xf32, #tpu.memory_space<vmem>>, vector<1x8x8xf32>
    %690 = vector.shape_cast %689 : vector<1x8x8xf32> to vector<8x8xf32>
    %c7_691 = arith.constant 7 : index
    %c0_692 = arith.constant 0 : index
    %c0_693 = arith.constant 0 : index
    %691 = vector.load %arg6[%c7_691, %c0_692, %c0_693] : memref<9x8x8xf32, #tpu.memory_space<vmem>>, vector<1x8x8xf32>
    %692 = vector.shape_cast %691 : vector<1x8x8xf32> to vector<8x8xf32>
    %cst_694 = arith.constant dense<0.000000e+00> : vector<8x8xf32>
    %693 = tpu.matmul %690, %692, %cst_694 {dimension_numbers = #tpu.dot_dimension_numbers<[1], [0], [0], [1], [0, 0, 1, 1], [], []>} : vector<8x8xf32>, vector<8x8xf32>, vector<8x8xf32> -> vector<8x8xf32>
    %694 = arith.addf %688, %693 : vector<8x8xf32>
    %c4_695 = arith.constant 4 : index
    %c2_696 = arith.constant 2 : index
    %c0_697 = arith.constant 0 : index
    %695 = vector.load %arg17[%c4_695, %c2_696, %c0_697] : memref<6x10x8xf32, #tpu.memory_space<vmem>>, vector<1x8x8xf32>
    %696 = vector.shape_cast %695 : vector<1x8x8xf32> to vector<8x8xf32>
    %c8_698 = arith.constant 8 : index
    %c0_699 = arith.constant 0 : index
    %c0_700 = arith.constant 0 : index
    %697 = vector.load %arg6[%c8_698, %c0_699, %c0_700] : memref<9x8x8xf32, #tpu.memory_space<vmem>>, vector<1x8x8xf32>
    %698 = vector.shape_cast %697 : vector<1x8x8xf32> to vector<8x8xf32>
    %cst_701 = arith.constant dense<0.000000e+00> : vector<8x8xf32>
    %699 = tpu.matmul %696, %698, %cst_701 {dimension_numbers = #tpu.dot_dimension_numbers<[1], [0], [0], [1], [0, 0, 1, 1], [], []>} : vector<8x8xf32>, vector<8x8xf32>, vector<8x8xf32> -> vector<8x8xf32>
    %700 = arith.addf %694, %699 : vector<8x8xf32>
    %c0_702 = arith.constant 0 : index
    %c0_703 = arith.constant 0 : index
    %701 = vector.load %arg7[%c0_702, %c0_703] : memref<1x8xf32, #tpu.memory_space<vmem>>, vector<1x8xf32>
    %702 = vector.broadcast %701 : vector<1x8xf32> to vector<8x8xf32>
    %703 = arith.addf %700, %702 : vector<8x8xf32>
    %cst_704 = arith.constant 0.000000e+00 : f32
    %704 = vector.broadcast %cst_704 : f32 to vector<8x8xf32>
    %705 = arith.maximumf %703, %704 : vector<8x8xf32>
    %c2_705 = arith.constant 2 : index
    %c0_706 = arith.constant 0 : index
    %c0_707 = arith.constant 0 : index
    %706 = vector.load %arg18[%c2_705, %c0_706, %c0_707] : memref<4x8x8xf32, #tpu.memory_space<vmem>>, vector<1x8x8xf32>
    %707 = vector.shape_cast %706 : vector<1x8x8xf32> to vector<8x8xf32>
    %708 = vector.shape_cast %705 : vector<8x8xf32> to vector<1x8x8xf32>
    tpu.vector_store %arg18[%c2_705, %c0_706, %c0_707], %708 {strides = array<i32>} : memref<4x8x8xf32, #tpu.memory_space<vmem>>, vector<1x8x8xf32>,
    %cst_708 = arith.constant 0.000000e+00 : f32
    %709 = vector.broadcast %cst_708 : f32 to vector<8x8xf32>
    %c3_709 = arith.constant 3 : index
    %c0_710 = arith.constant 0 : index
    %c0_711 = arith.constant 0 : index
    %710 = vector.load %arg17[%c3_709, %c0_710, %c0_711] : memref<6x10x8xf32, #tpu.memory_space<vmem>>, vector<1x8x8xf32>
    %711 = vector.shape_cast %710 : vector<1x8x8xf32> to vector<8x8xf32>
    %c0_712 = arith.constant 0 : index
    %c0_713 = arith.constant 0 : index
    %c0_714 = arith.constant 0 : index
    %712 = vector.load %arg6[%c0_712, %c0_713, %c0_714] : memref<9x8x8xf32, #tpu.memory_space<vmem>>, vector<1x8x8xf32>
    %713 = vector.shape_cast %712 : vector<1x8x8xf32> to vector<8x8xf32>
    %cst_715 = arith.constant dense<0.000000e+00> : vector<8x8xf32>
    %714 = tpu.matmul %711, %713, %cst_715 {dimension_numbers = #tpu.dot_dimension_numbers<[1], [0], [0], [1], [0, 0, 1, 1], [], []>} : vector<8x8xf32>, vector<8x8xf32>, vector<8x8xf32> -> vector<8x8xf32>
    %715 = arith.addf %709, %714 : vector<8x8xf32>
    %c3_716 = arith.constant 3 : index
    %c1_717 = arith.constant 1 : index
    %c0_718 = arith.constant 0 : index
    %716 = vector.load %arg17[%c3_716, %c1_717, %c0_718] : memref<6x10x8xf32, #tpu.memory_space<vmem>>, vector<1x8x8xf32>
    %717 = vector.shape_cast %716 : vector<1x8x8xf32> to vector<8x8xf32>
    %c1_719 = arith.constant 1 : index
    %c0_720 = arith.constant 0 : index
    %c0_721 = arith.constant 0 : index
    %718 = vector.load %arg6[%c1_719, %c0_720, %c0_721] : memref<9x8x8xf32, #tpu.memory_space<vmem>>, vector<1x8x8xf32>
    %719 = vector.shape_cast %718 : vector<1x8x8xf32> to vector<8x8xf32>
    %cst_722 = arith.constant dense<0.000000e+00> : vector<8x8xf32>
    %720 = tpu.matmul %717, %719, %cst_722 {dimension_numbers = #tpu.dot_dimension_numbers<[1], [0], [0], [1], [0, 0, 1, 1], [], []>} : vector<8x8xf32>, vector<8x8xf32>, vector<8x8xf32> -> vector<8x8xf32>
    %721 = arith.addf %715, %720 : vector<8x8xf32>
    %c3_723 = arith.constant 3 : index
    %c2_724 = arith.constant 2 : index
    %c0_725 = arith.constant 0 : index
    %722 = vector.load %arg17[%c3_723, %c2_724, %c0_725] : memref<6x10x8xf32, #tpu.memory_space<vmem>>, vector<1x8x8xf32>
    %723 = vector.shape_cast %722 : vector<1x8x8xf32> to vector<8x8xf32>
    %c2_726 = arith.constant 2 : index
    %c0_727 = arith.constant 0 : index
    %c0_728 = arith.constant 0 : index
    %724 = vector.load %arg6[%c2_726, %c0_727, %c0_728] : memref<9x8x8xf32, #tpu.memory_space<vmem>>, vector<1x8x8xf32>
    %725 = vector.shape_cast %724 : vector<1x8x8xf32> to vector<8x8xf32>
    %cst_729 = arith.constant dense<0.000000e+00> : vector<8x8xf32>
    %726 = tpu.matmul %723, %725, %cst_729 {dimension_numbers = #tpu.dot_dimension_numbers<[1], [0], [0], [1], [0, 0, 1, 1], [], []>} : vector<8x8xf32>, vector<8x8xf32>, vector<8x8xf32> -> vector<8x8xf32>
    %727 = arith.addf %721, %726 : vector<8x8xf32>
    %c4_730 = arith.constant 4 : index
    %c0_731 = arith.constant 0 : index
    %c0_732 = arith.constant 0 : index
    %728 = vector.load %arg17[%c4_730, %c0_731, %c0_732] : memref<6x10x8xf32, #tpu.memory_space<vmem>>, vector<1x8x8xf32>
    %729 = vector.shape_cast %728 : vector<1x8x8xf32> to vector<8x8xf32>
    %c3_733 = arith.constant 3 : index
    %c0_734 = arith.constant 0 : index
    %c0_735 = arith.constant 0 : index
    %730 = vector.load %arg6[%c3_733, %c0_734, %c0_735] : memref<9x8x8xf32, #tpu.memory_space<vmem>>, vector<1x8x8xf32>
    %731 = vector.shape_cast %730 : vector<1x8x8xf32> to vector<8x8xf32>
    %cst_736 = arith.constant dense<0.000000e+00> : vector<8x8xf32>
    %732 = tpu.matmul %729, %731, %cst_736 {dimension_numbers = #tpu.dot_dimension_numbers<[1], [0], [0], [1], [0, 0, 1, 1], [], []>} : vector<8x8xf32>, vector<8x8xf32>, vector<8x8xf32> -> vector<8x8xf32>
    %733 = arith.addf %727, %732 : vector<8x8xf32>
    %c4_737 = arith.constant 4 : index
    %c1_738 = arith.constant 1 : index
    %c0_739 = arith.constant 0 : index
    %734 = vector.load %arg17[%c4_737, %c1_738, %c0_739] : memref<6x10x8xf32, #tpu.memory_space<vmem>>, vector<1x8x8xf32>
    %735 = vector.shape_cast %734 : vector<1x8x8xf32> to vector<8x8xf32>
    %c4_740 = arith.constant 4 : index
    %c0_741 = arith.constant 0 : index
    %c0_742 = arith.constant 0 : index
    %736 = vector.load %arg6[%c4_740, %c0_741, %c0_742] : memref<9x8x8xf32, #tpu.memory_space<vmem>>, vector<1x8x8xf32>
    %737 = vector.shape_cast %736 : vector<1x8x8xf32> to vector<8x8xf32>
    %cst_743 = arith.constant dense<0.000000e+00> : vector<8x8xf32>
    %738 = tpu.matmul %735, %737, %cst_743 {dimension_numbers = #tpu.dot_dimension_numbers<[1], [0], [0], [1], [0, 0, 1, 1], [], []>} : vector<8x8xf32>, vector<8x8xf32>, vector<8x8xf32> -> vector<8x8xf32>
    %739 = arith.addf %733, %738 : vector<8x8xf32>
    %c4_744 = arith.constant 4 : index
    %c2_745 = arith.constant 2 : index
    %c0_746 = arith.constant 0 : index
    %740 = vector.load %arg17[%c4_744, %c2_745, %c0_746] : memref<6x10x8xf32, #tpu.memory_space<vmem>>, vector<1x8x8xf32>
    %741 = vector.shape_cast %740 : vector<1x8x8xf32> to vector<8x8xf32>
    %c5_747 = arith.constant 5 : index
    %c0_748 = arith.constant 0 : index
    %c0_749 = arith.constant 0 : index
    %742 = vector.load %arg6[%c5_747, %c0_748, %c0_749] : memref<9x8x8xf32, #tpu.memory_space<vmem>>, vector<1x8x8xf32>
    %743 = vector.shape_cast %742 : vector<1x8x8xf32> to vector<8x8xf32>
    %cst_750 = arith.constant dense<0.000000e+00> : vector<8x8xf32>
    %744 = tpu.matmul %741, %743, %cst_750 {dimension_numbers = #tpu.dot_dimension_numbers<[1], [0], [0], [1], [0, 0, 1, 1], [], []>} : vector<8x8xf32>, vector<8x8xf32>, vector<8x8xf32> -> vector<8x8xf32>
    %745 = arith.addf %739, %744 : vector<8x8xf32>
    %c5_751 = arith.constant 5 : index
    %c0_752 = arith.constant 0 : index
    %c0_753 = arith.constant 0 : index
    %746 = vector.load %arg17[%c5_751, %c0_752, %c0_753] : memref<6x10x8xf32, #tpu.memory_space<vmem>>, vector<1x8x8xf32>
    %747 = vector.shape_cast %746 : vector<1x8x8xf32> to vector<8x8xf32>
    %c6_754 = arith.constant 6 : index
    %c0_755 = arith.constant 0 : index
    %c0_756 = arith.constant 0 : index
    %748 = vector.load %arg6[%c6_754, %c0_755, %c0_756] : memref<9x8x8xf32, #tpu.memory_space<vmem>>, vector<1x8x8xf32>
    %749 = vector.shape_cast %748 : vector<1x8x8xf32> to vector<8x8xf32>
    %cst_757 = arith.constant dense<0.000000e+00> : vector<8x8xf32>
    %750 = tpu.matmul %747, %749, %cst_757 {dimension_numbers = #tpu.dot_dimension_numbers<[1], [0], [0], [1], [0, 0, 1, 1], [], []>} : vector<8x8xf32>, vector<8x8xf32>, vector<8x8xf32> -> vector<8x8xf32>
    %751 = arith.addf %745, %750 : vector<8x8xf32>
    %c5_758 = arith.constant 5 : index
    %c1_759 = arith.constant 1 : index
    %c0_760 = arith.constant 0 : index
    %752 = vector.load %arg17[%c5_758, %c1_759, %c0_760] : memref<6x10x8xf32, #tpu.memory_space<vmem>>, vector<1x8x8xf32>
    %753 = vector.shape_cast %752 : vector<1x8x8xf32> to vector<8x8xf32>
    %c7_761 = arith.constant 7 : index
    %c0_762 = arith.constant 0 : index
    %c0_763 = arith.constant 0 : index
    %754 = vector.load %arg6[%c7_761, %c0_762, %c0_763] : memref<9x8x8xf32, #tpu.memory_space<vmem>>, vector<1x8x8xf32>
    %755 = vector.shape_cast %754 : vector<1x8x8xf32> to vector<8x8xf32>
    %cst_764 = arith.constant dense<0.000000e+00> : vector<8x8xf32>
    %756 = tpu.matmul %753, %755, %cst_764 {dimension_numbers = #tpu.dot_dimension_numbers<[1], [0], [0], [1], [0, 0, 1, 1], [], []>} : vector<8x8xf32>, vector<8x8xf32>, vector<8x8xf32> -> vector<8x8xf32>
    %757 = arith.addf %751, %756 : vector<8x8xf32>
    %c5_765 = arith.constant 5 : index
    %c2_766 = arith.constant 2 : index
    %c0_767 = arith.constant 0 : index
    %758 = vector.load %arg17[%c5_765, %c2_766, %c0_767] : memref<6x10x8xf32, #tpu.memory_space<vmem>>, vector<1x8x8xf32>
    %759 = vector.shape_cast %758 : vector<1x8x8xf32> to vector<8x8xf32>
    %c8_768 = arith.constant 8 : index
    %c0_769 = arith.constant 0 : index
    %c0_770 = arith.constant 0 : index
    %760 = vector.load %arg6[%c8_768, %c0_769, %c0_770] : memref<9x8x8xf32, #tpu.memory_space<vmem>>, vector<1x8x8xf32>
    %761 = vector.shape_cast %760 : vector<1x8x8xf32> to vector<8x8xf32>
    %cst_771 = arith.constant dense<0.000000e+00> : vector<8x8xf32>
    %762 = tpu.matmul %759, %761, %cst_771 {dimension_numbers = #tpu.dot_dimension_numbers<[1], [0], [0], [1], [0, 0, 1, 1], [], []>} : vector<8x8xf32>, vector<8x8xf32>, vector<8x8xf32> -> vector<8x8xf32>
    %763 = arith.addf %757, %762 : vector<8x8xf32>
    %c0_772 = arith.constant 0 : index
    %c0_773 = arith.constant 0 : index
    %764 = vector.load %arg7[%c0_772, %c0_773] : memref<1x8xf32, #tpu.memory_space<vmem>>, vector<1x8xf32>
    %765 = vector.broadcast %764 : vector<1x8xf32> to vector<8x8xf32>
    %766 = arith.addf %763, %765 : vector<8x8xf32>
    %cst_774 = arith.constant 0.000000e+00 : f32
    %767 = vector.broadcast %cst_774 : f32 to vector<8x8xf32>
    %768 = arith.maximumf %766, %767 : vector<8x8xf32>
    %c3_775 = arith.constant 3 : index
    %c0_776 = arith.constant 0 : index
    %c0_777 = arith.constant 0 : index
    %769 = vector.load %arg18[%c3_775, %c0_776, %c0_777] : memref<4x8x8xf32, #tpu.memory_space<vmem>>, vector<1x8x8xf32>
    %770 = vector.shape_cast %769 : vector<1x8x8xf32> to vector<8x8xf32>
    %771 = vector.shape_cast %768 : vector<8x8xf32> to vector<1x8x8xf32>
    tpu.vector_store %arg18[%c3_775, %c0_776, %c0_777], %771 {strides = array<i32>} : memref<4x8x8xf32, #tpu.memory_space<vmem>>, vector<1x8x8xf32>,
    %c0_778 = arith.constant 0 : index
    %c0_779 = arith.constant 0 : index
    %772 = vector.load %arg11[%c0_778, %c0_779] : memref<1x128xf32, #tpu.memory_space<vmem>>, vector<1x128xf32>
    %cst_780 = arith.constant 0.000000e+00 : f32
    %773 = vector.broadcast %cst_780 : f32 to vector<6x16xf32>
    %c0_781 = arith.constant 0 : index
    %c0_782 = arith.constant 0 : index
    %c0_783 = arith.constant 0 : index
    %774 = vector.load %arg18[%c0_781, %c0_782, %c0_783] : memref<4x8x8xf32, #tpu.memory_space<vmem>>, vector<1x6x8xf32>
    %775 = vector.shape_cast %774 : vector<1x6x8xf32> to vector<6x8xf32>
    %c0_784 = arith.constant 0 : index
    %c0_785 = arith.constant 0 : index
    %c0_786 = arith.constant 0 : index
    %776 = vector.load %arg8[%c0_784, %c0_785, %c0_786] : memref<9x8x16xf32, #tpu.memory_space<vmem>>, vector<1x8x16xf32>
    %777 = vector.shape_cast %776 : vector<1x8x16xf32> to vector<8x16xf32>
    %cst_787 = arith.constant dense<0.000000e+00> : vector<6x16xf32>
    %778 = tpu.matmul %775, %777, %cst_787 {dimension_numbers = #tpu.dot_dimension_numbers<[1], [0], [0], [1], [0, 0, 1, 1], [], []>} : vector<6x8xf32>, vector<8x16xf32>, vector<6x16xf32> -> vector<6x16xf32>
    %779 = arith.addf %773, %778 : vector<6x16xf32>
    %c0_788 = arith.constant 0 : index
    %c1_789 = arith.constant 1 : index
    %c0_790 = arith.constant 0 : index
    %780 = vector.load %arg18[%c0_788, %c1_789, %c0_790] : memref<4x8x8xf32, #tpu.memory_space<vmem>>, vector<1x6x8xf32>
    %781 = vector.shape_cast %780 : vector<1x6x8xf32> to vector<6x8xf32>
    %c1_791 = arith.constant 1 : index
    %c0_792 = arith.constant 0 : index
    %c0_793 = arith.constant 0 : index
    %782 = vector.load %arg8[%c1_791, %c0_792, %c0_793] : memref<9x8x16xf32, #tpu.memory_space<vmem>>, vector<1x8x16xf32>
    %783 = vector.shape_cast %782 : vector<1x8x16xf32> to vector<8x16xf32>
    %cst_794 = arith.constant dense<0.000000e+00> : vector<6x16xf32>
    %784 = tpu.matmul %781, %783, %cst_794 {dimension_numbers = #tpu.dot_dimension_numbers<[1], [0], [0], [1], [0, 0, 1, 1], [], []>} : vector<6x8xf32>, vector<8x16xf32>, vector<6x16xf32> -> vector<6x16xf32>
    %785 = arith.addf %779, %784 : vector<6x16xf32>
    %c0_795 = arith.constant 0 : index
    %c2_796 = arith.constant 2 : index
    %c0_797 = arith.constant 0 : index
    %786 = vector.load %arg18[%c0_795, %c2_796, %c0_797] : memref<4x8x8xf32, #tpu.memory_space<vmem>>, vector<1x6x8xf32>
    %787 = vector.shape_cast %786 : vector<1x6x8xf32> to vector<6x8xf32>
    %c2_798 = arith.constant 2 : index
    %c0_799 = arith.constant 0 : index
    %c0_800 = arith.constant 0 : index
    %788 = vector.load %arg8[%c2_798, %c0_799, %c0_800] : memref<9x8x16xf32, #tpu.memory_space<vmem>>, vector<1x8x16xf32>
    %789 = vector.shape_cast %788 : vector<1x8x16xf32> to vector<8x16xf32>
    %cst_801 = arith.constant dense<0.000000e+00> : vector<6x16xf32>
    %790 = tpu.matmul %787, %789, %cst_801 {dimension_numbers = #tpu.dot_dimension_numbers<[1], [0], [0], [1], [0, 0, 1, 1], [], []>} : vector<6x8xf32>, vector<8x16xf32>, vector<6x16xf32> -> vector<6x16xf32>
    %791 = arith.addf %785, %790 : vector<6x16xf32>
    %c1_802 = arith.constant 1 : index
    %c0_803 = arith.constant 0 : index
    %c0_804 = arith.constant 0 : index
    %792 = vector.load %arg18[%c1_802, %c0_803, %c0_804] : memref<4x8x8xf32, #tpu.memory_space<vmem>>, vector<1x6x8xf32>
    %793 = vector.shape_cast %792 : vector<1x6x8xf32> to vector<6x8xf32>
    %c3_805 = arith.constant 3 : index
    %c0_806 = arith.constant 0 : index
    %c0_807 = arith.constant 0 : index
    %794 = vector.load %arg8[%c3_805, %c0_806, %c0_807] : memref<9x8x16xf32, #tpu.memory_space<vmem>>, vector<1x8x16xf32>
    %795 = vector.shape_cast %794 : vector<1x8x16xf32> to vector<8x16xf32>
    %cst_808 = arith.constant dense<0.000000e+00> : vector<6x16xf32>
    %796 = tpu.matmul %793, %795, %cst_808 {dimension_numbers = #tpu.dot_dimension_numbers<[1], [0], [0], [1], [0, 0, 1, 1], [], []>} : vector<6x8xf32>, vector<8x16xf32>, vector<6x16xf32> -> vector<6x16xf32>
    %797 = arith.addf %791, %796 : vector<6x16xf32>
    %c1_809 = arith.constant 1 : index
    %c1_810 = arith.constant 1 : index
    %c0_811 = arith.constant 0 : index
    %798 = vector.load %arg18[%c1_809, %c1_810, %c0_811] : memref<4x8x8xf32, #tpu.memory_space<vmem>>, vector<1x6x8xf32>
    %799 = vector.shape_cast %798 : vector<1x6x8xf32> to vector<6x8xf32>
    %c4_812 = arith.constant 4 : index
    %c0_813 = arith.constant 0 : index
    %c0_814 = arith.constant 0 : index
    %800 = vector.load %arg8[%c4_812, %c0_813, %c0_814] : memref<9x8x16xf32, #tpu.memory_space<vmem>>, vector<1x8x16xf32>
    %801 = vector.shape_cast %800 : vector<1x8x16xf32> to vector<8x16xf32>
    %cst_815 = arith.constant dense<0.000000e+00> : vector<6x16xf32>
    %802 = tpu.matmul %799, %801, %cst_815 {dimension_numbers = #tpu.dot_dimension_numbers<[1], [0], [0], [1], [0, 0, 1, 1], [], []>} : vector<6x8xf32>, vector<8x16xf32>, vector<6x16xf32> -> vector<6x16xf32>
    %803 = arith.addf %797, %802 : vector<6x16xf32>
    %c1_816 = arith.constant 1 : index
    %c2_817 = arith.constant 2 : index
    %c0_818 = arith.constant 0 : index
    %804 = vector.load %arg18[%c1_816, %c2_817, %c0_818] : memref<4x8x8xf32, #tpu.memory_space<vmem>>, vector<1x6x8xf32>
    %805 = vector.shape_cast %804 : vector<1x6x8xf32> to vector<6x8xf32>
    %c5_819 = arith.constant 5 : index
    %c0_820 = arith.constant 0 : index
    %c0_821 = arith.constant 0 : index
    %806 = vector.load %arg8[%c5_819, %c0_820, %c0_821] : memref<9x8x16xf32, #tpu.memory_space<vmem>>, vector<1x8x16xf32>
    %807 = vector.shape_cast %806 : vector<1x8x16xf32> to vector<8x16xf32>
    %cst_822 = arith.constant dense<0.000000e+00> : vector<6x16xf32>
    %808 = tpu.matmul %805, %807, %cst_822 {dimension_numbers = #tpu.dot_dimension_numbers<[1], [0], [0], [1], [0, 0, 1, 1], [], []>} : vector<6x8xf32>, vector<8x16xf32>, vector<6x16xf32> -> vector<6x16xf32>
    %809 = arith.addf %803, %808 : vector<6x16xf32>
    %c2_823 = arith.constant 2 : index
    %c0_824 = arith.constant 0 : index
    %c0_825 = arith.constant 0 : index
    %810 = vector.load %arg18[%c2_823, %c0_824, %c0_825] : memref<4x8x8xf32, #tpu.memory_space<vmem>>, vector<1x6x8xf32>
    %811 = vector.shape_cast %810 : vector<1x6x8xf32> to vector<6x8xf32>
    %c6_826 = arith.constant 6 : index
    %c0_827 = arith.constant 0 : index
    %c0_828 = arith.constant 0 : index
    %812 = vector.load %arg8[%c6_826, %c0_827, %c0_828] : memref<9x8x16xf32, #tpu.memory_space<vmem>>, vector<1x8x16xf32>
    %813 = vector.shape_cast %812 : vector<1x8x16xf32> to vector<8x16xf32>
    %cst_829 = arith.constant dense<0.000000e+00> : vector<6x16xf32>
    %814 = tpu.matmul %811, %813, %cst_829 {dimension_numbers = #tpu.dot_dimension_numbers<[1], [0], [0], [1], [0, 0, 1, 1], [], []>} : vector<6x8xf32>, vector<8x16xf32>, vector<6x16xf32> -> vector<6x16xf32>
    %815 = arith.addf %809, %814 : vector<6x16xf32>
    %c2_830 = arith.constant 2 : index
    %c1_831 = arith.constant 1 : index
    %c0_832 = arith.constant 0 : index
    %816 = vector.load %arg18[%c2_830, %c1_831, %c0_832] : memref<4x8x8xf32, #tpu.memory_space<vmem>>, vector<1x6x8xf32>
    %817 = vector.shape_cast %816 : vector<1x6x8xf32> to vector<6x8xf32>
    %c7_833 = arith.constant 7 : index
    %c0_834 = arith.constant 0 : index
    %c0_835 = arith.constant 0 : index
    %818 = vector.load %arg8[%c7_833, %c0_834, %c0_835] : memref<9x8x16xf32, #tpu.memory_space<vmem>>, vector<1x8x16xf32>
    %819 = vector.shape_cast %818 : vector<1x8x16xf32> to vector<8x16xf32>
    %cst_836 = arith.constant dense<0.000000e+00> : vector<6x16xf32>
    %820 = tpu.matmul %817, %819, %cst_836 {dimension_numbers = #tpu.dot_dimension_numbers<[1], [0], [0], [1], [0, 0, 1, 1], [], []>} : vector<6x8xf32>, vector<8x16xf32>, vector<6x16xf32> -> vector<6x16xf32>
    %821 = arith.addf %815, %820 : vector<6x16xf32>
    %c2_837 = arith.constant 2 : index
    %c2_838 = arith.constant 2 : index
    %c0_839 = arith.constant 0 : index
    %822 = vector.load %arg18[%c2_837, %c2_838, %c0_839] : memref<4x8x8xf32, #tpu.memory_space<vmem>>, vector<1x6x8xf32>
    %823 = vector.shape_cast %822 : vector<1x6x8xf32> to vector<6x8xf32>
    %c8_840 = arith.constant 8 : index
    %c0_841 = arith.constant 0 : index
    %c0_842 = arith.constant 0 : index
    %824 = vector.load %arg8[%c8_840, %c0_841, %c0_842] : memref<9x8x16xf32, #tpu.memory_space<vmem>>, vector<1x8x16xf32>
    %825 = vector.shape_cast %824 : vector<1x8x16xf32> to vector<8x16xf32>
    %cst_843 = arith.constant dense<0.000000e+00> : vector<6x16xf32>
    %826 = tpu.matmul %823, %825, %cst_843 {dimension_numbers = #tpu.dot_dimension_numbers<[1], [0], [0], [1], [0, 0, 1, 1], [], []>} : vector<6x8xf32>, vector<8x16xf32>, vector<6x16xf32> -> vector<6x16xf32>
    %827 = arith.addf %821, %826 : vector<6x16xf32>
    %c0_844 = arith.constant 0 : index
    %c0_845 = arith.constant 0 : index
    %828 = vector.load %arg9[%c0_844, %c0_845] : memref<1x16xf32, #tpu.memory_space<vmem>>, vector<1x16xf32>
    %829 = vector.broadcast %828 : vector<1x16xf32> to vector<6x16xf32>
    %830 = arith.addf %827, %829 : vector<6x16xf32>
    %cst_846 = arith.constant 0.000000e+00 : f32
    %831 = vector.broadcast %cst_846 : f32 to vector<6x16xf32>
    %832 = arith.maximumf %830, %831 : vector<6x16xf32>
    %833 = vector.extract_strided_slice %832 {offsets = [0, 0], sizes = [1, 16], strides = [1, 1]} : vector<6x16xf32> to vector<1x16xf32>
    %c0_847 = arith.constant 0 : index
    %c0_848 = arith.constant 0 : index
    %834 = vector.load %arg10[%c0_847, %c0_848] : memref<192x128xf32, #tpu.memory_space<vmem>>, vector<16x128xf32>
    %cst_849 = arith.constant dense<0.000000e+00> : vector<1x128xf32>
    %835 = tpu.matmul %833, %834, %cst_849 {dimension_numbers = #tpu.dot_dimension_numbers<[1], [0], [0], [1], [0, 0, 1, 1], [], []>} : vector<1x16xf32>, vector<16x128xf32>, vector<1x128xf32> -> vector<1x128xf32>
    %836 = arith.addf %772, %835 : vector<1x128xf32>
    %837 = vector.extract_strided_slice %832 {offsets = [1, 0], sizes = [1, 16], strides = [1, 1]} : vector<6x16xf32> to vector<1x16xf32>
    %c16 = arith.constant 16 : index
    %c0_850 = arith.constant 0 : index
    %838 = vector.load %arg10[%c16, %c0_850] : memref<192x128xf32, #tpu.memory_space<vmem>>, vector<16x128xf32>
    %cst_851 = arith.constant dense<0.000000e+00> : vector<1x128xf32>
    %839 = tpu.matmul %837, %838, %cst_851 {dimension_numbers = #tpu.dot_dimension_numbers<[1], [0], [0], [1], [0, 0, 1, 1], [], []>} : vector<1x16xf32>, vector<16x128xf32>, vector<1x128xf32> -> vector<1x128xf32>
    %840 = arith.addf %836, %839 : vector<1x128xf32>
    %841 = vector.extract_strided_slice %832 {offsets = [2, 0], sizes = [1, 16], strides = [1, 1]} : vector<6x16xf32> to vector<1x16xf32>
    %c32 = arith.constant 32 : index
    %c0_852 = arith.constant 0 : index
    %842 = vector.load %arg10[%c32, %c0_852] : memref<192x128xf32, #tpu.memory_space<vmem>>, vector<16x128xf32>
    %cst_853 = arith.constant dense<0.000000e+00> : vector<1x128xf32>
    %843 = tpu.matmul %841, %842, %cst_853 {dimension_numbers = #tpu.dot_dimension_numbers<[1], [0], [0], [1], [0, 0, 1, 1], [], []>} : vector<1x16xf32>, vector<16x128xf32>, vector<1x128xf32> -> vector<1x128xf32>
    %844 = arith.addf %840, %843 : vector<1x128xf32>
    %845 = vector.extract_strided_slice %832 {offsets = [3, 0], sizes = [1, 16], strides = [1, 1]} : vector<6x16xf32> to vector<1x16xf32>
    %c48 = arith.constant 48 : index
    %c0_854 = arith.constant 0 : index
    %846 = vector.load %arg10[%c48, %c0_854] : memref<192x128xf32, #tpu.memory_space<vmem>>, vector<16x128xf32>
    %cst_855 = arith.constant dense<0.000000e+00> : vector<1x128xf32>
    %847 = tpu.matmul %845, %846, %cst_855 {dimension_numbers = #tpu.dot_dimension_numbers<[1], [0], [0], [1], [0, 0, 1, 1], [], []>} : vector<1x16xf32>, vector<16x128xf32>, vector<1x128xf32> -> vector<1x128xf32>
    %848 = arith.addf %844, %847 : vector<1x128xf32>
    %849 = vector.extract_strided_slice %832 {offsets = [4, 0], sizes = [1, 16], strides = [1, 1]} : vector<6x16xf32> to vector<1x16xf32>
    %c64 = arith.constant 64 : index
    %c0_856 = arith.constant 0 : index
    %850 = vector.load %arg10[%c64, %c0_856] : memref<192x128xf32, #tpu.memory_space<vmem>>, vector<16x128xf32>
    %cst_857 = arith.constant dense<0.000000e+00> : vector<1x128xf32>
    %851 = tpu.matmul %849, %850, %cst_857 {dimension_numbers = #tpu.dot_dimension_numbers<[1], [0], [0], [1], [0, 0, 1, 1], [], []>} : vector<1x16xf32>, vector<16x128xf32>, vector<1x128xf32> -> vector<1x128xf32>
    %852 = arith.addf %848, %851 : vector<1x128xf32>
    %853 = vector.extract_strided_slice %832 {offsets = [5, 0], sizes = [1, 16], strides = [1, 1]} : vector<6x16xf32> to vector<1x16xf32>
    %c80 = arith.constant 80 : index
    %c0_858 = arith.constant 0 : index
    %854 = vector.load %arg10[%c80, %c0_858] : memref<192x128xf32, #tpu.memory_space<vmem>>, vector<16x128xf32>
    %cst_859 = arith.constant dense<0.000000e+00> : vector<1x128xf32>
    %855 = tpu.matmul %853, %854, %cst_859 {dimension_numbers = #tpu.dot_dimension_numbers<[1], [0], [0], [1], [0, 0, 1, 1], [], []>} : vector<1x16xf32>, vector<16x128xf32>, vector<1x128xf32> -> vector<1x128xf32>
    %856 = arith.addf %852, %855 : vector<1x128xf32>
    %cst_860 = arith.constant 0.000000e+00 : f32
    %857 = vector.broadcast %cst_860 : f32 to vector<6x16xf32>
    %c1_861 = arith.constant 1 : index
    %c0_862 = arith.constant 0 : index
    %c0_863 = arith.constant 0 : index
    %858 = vector.load %arg18[%c1_861, %c0_862, %c0_863] : memref<4x8x8xf32, #tpu.memory_space<vmem>>, vector<1x6x8xf32>
    %859 = vector.shape_cast %858 : vector<1x6x8xf32> to vector<6x8xf32>
    %c0_864 = arith.constant 0 : index
    %c0_865 = arith.constant 0 : index
    %c0_866 = arith.constant 0 : index
    %860 = vector.load %arg8[%c0_864, %c0_865, %c0_866] : memref<9x8x16xf32, #tpu.memory_space<vmem>>, vector<1x8x16xf32>
    %861 = vector.shape_cast %860 : vector<1x8x16xf32> to vector<8x16xf32>
    %cst_867 = arith.constant dense<0.000000e+00> : vector<6x16xf32>
    %862 = tpu.matmul %859, %861, %cst_867 {dimension_numbers = #tpu.dot_dimension_numbers<[1], [0], [0], [1], [0, 0, 1, 1], [], []>} : vector<6x8xf32>, vector<8x16xf32>, vector<6x16xf32> -> vector<6x16xf32>
    %863 = arith.addf %857, %862 : vector<6x16xf32>
    %c1_868 = arith.constant 1 : index
    %c1_869 = arith.constant 1 : index
    %c0_870 = arith.constant 0 : index
    %864 = vector.load %arg18[%c1_868, %c1_869, %c0_870] : memref<4x8x8xf32, #tpu.memory_space<vmem>>, vector<1x6x8xf32>
    %865 = vector.shape_cast %864 : vector<1x6x8xf32> to vector<6x8xf32>
    %c1_871 = arith.constant 1 : index
    %c0_872 = arith.constant 0 : index
    %c0_873 = arith.constant 0 : index
    %866 = vector.load %arg8[%c1_871, %c0_872, %c0_873] : memref<9x8x16xf32, #tpu.memory_space<vmem>>, vector<1x8x16xf32>
    %867 = vector.shape_cast %866 : vector<1x8x16xf32> to vector<8x16xf32>
    %cst_874 = arith.constant dense<0.000000e+00> : vector<6x16xf32>
    %868 = tpu.matmul %865, %867, %cst_874 {dimension_numbers = #tpu.dot_dimension_numbers<[1], [0], [0], [1], [0, 0, 1, 1], [], []>} : vector<6x8xf32>, vector<8x16xf32>, vector<6x16xf32> -> vector<6x16xf32>
    %869 = arith.addf %863, %868 : vector<6x16xf32>
    %c1_875 = arith.constant 1 : index
    %c2_876 = arith.constant 2 : index
    %c0_877 = arith.constant 0 : index
    %870 = vector.load %arg18[%c1_875, %c2_876, %c0_877] : memref<4x8x8xf32, #tpu.memory_space<vmem>>, vector<1x6x8xf32>
    %871 = vector.shape_cast %870 : vector<1x6x8xf32> to vector<6x8xf32>
    %c2_878 = arith.constant 2 : index
    %c0_879 = arith.constant 0 : index
    %c0_880 = arith.constant 0 : index
    %872 = vector.load %arg8[%c2_878, %c0_879, %c0_880] : memref<9x8x16xf32, #tpu.memory_space<vmem>>, vector<1x8x16xf32>
    %873 = vector.shape_cast %872 : vector<1x8x16xf32> to vector<8x16xf32>
    %cst_881 = arith.constant dense<0.000000e+00> : vector<6x16xf32>
    %874 = tpu.matmul %871, %873, %cst_881 {dimension_numbers = #tpu.dot_dimension_numbers<[1], [0], [0], [1], [0, 0, 1, 1], [], []>} : vector<6x8xf32>, vector<8x16xf32>, vector<6x16xf32> -> vector<6x16xf32>
    %875 = arith.addf %869, %874 : vector<6x16xf32>
    %c2_882 = arith.constant 2 : index
    %c0_883 = arith.constant 0 : index
    %c0_884 = arith.constant 0 : index
    %876 = vector.load %arg18[%c2_882, %c0_883, %c0_884] : memref<4x8x8xf32, #tpu.memory_space<vmem>>, vector<1x6x8xf32>
    %877 = vector.shape_cast %876 : vector<1x6x8xf32> to vector<6x8xf32>
    %c3_885 = arith.constant 3 : index
    %c0_886 = arith.constant 0 : index
    %c0_887 = arith.constant 0 : index
    %878 = vector.load %arg8[%c3_885, %c0_886, %c0_887] : memref<9x8x16xf32, #tpu.memory_space<vmem>>, vector<1x8x16xf32>
    %879 = vector.shape_cast %878 : vector<1x8x16xf32> to vector<8x16xf32>
    %cst_888 = arith.constant dense<0.000000e+00> : vector<6x16xf32>
    %880 = tpu.matmul %877, %879, %cst_888 {dimension_numbers = #tpu.dot_dimension_numbers<[1], [0], [0], [1], [0, 0, 1, 1], [], []>} : vector<6x8xf32>, vector<8x16xf32>, vector<6x16xf32> -> vector<6x16xf32>
    %881 = arith.addf %875, %880 : vector<6x16xf32>
    %c2_889 = arith.constant 2 : index
    %c1_890 = arith.constant 1 : index
    %c0_891 = arith.constant 0 : index
    %882 = vector.load %arg18[%c2_889, %c1_890, %c0_891] : memref<4x8x8xf32, #tpu.memory_space<vmem>>, vector<1x6x8xf32>
    %883 = vector.shape_cast %882 : vector<1x6x8xf32> to vector<6x8xf32>
    %c4_892 = arith.constant 4 : index
    %c0_893 = arith.constant 0 : index
    %c0_894 = arith.constant 0 : index
    %884 = vector.load %arg8[%c4_892, %c0_893, %c0_894] : memref<9x8x16xf32, #tpu.memory_space<vmem>>, vector<1x8x16xf32>
    %885 = vector.shape_cast %884 : vector<1x8x16xf32> to vector<8x16xf32>
    %cst_895 = arith.constant dense<0.000000e+00> : vector<6x16xf32>
    %886 = tpu.matmul %883, %885, %cst_895 {dimension_numbers = #tpu.dot_dimension_numbers<[1], [0], [0], [1], [0, 0, 1, 1], [], []>} : vector<6x8xf32>, vector<8x16xf32>, vector<6x16xf32> -> vector<6x16xf32>
    %887 = arith.addf %881, %886 : vector<6x16xf32>
    %c2_896 = arith.constant 2 : index
    %c2_897 = arith.constant 2 : index
    %c0_898 = arith.constant 0 : index
    %888 = vector.load %arg18[%c2_896, %c2_897, %c0_898] : memref<4x8x8xf32, #tpu.memory_space<vmem>>, vector<1x6x8xf32>
    %889 = vector.shape_cast %888 : vector<1x6x8xf32> to vector<6x8xf32>
    %c5_899 = arith.constant 5 : index
    %c0_900 = arith.constant 0 : index
    %c0_901 = arith.constant 0 : index
    %890 = vector.load %arg8[%c5_899, %c0_900, %c0_901] : memref<9x8x16xf32, #tpu.memory_space<vmem>>, vector<1x8x16xf32>
    %891 = vector.shape_cast %890 : vector<1x8x16xf32> to vector<8x16xf32>
    %cst_902 = arith.constant dense<0.000000e+00> : vector<6x16xf32>
    %892 = tpu.matmul %889, %891, %cst_902 {dimension_numbers = #tpu.dot_dimension_numbers<[1], [0], [0], [1], [0, 0, 1, 1], [], []>} : vector<6x8xf32>, vector<8x16xf32>, vector<6x16xf32> -> vector<6x16xf32>
    %893 = arith.addf %887, %892 : vector<6x16xf32>
    %c3_903 = arith.constant 3 : index
    %c0_904 = arith.constant 0 : index
    %c0_905 = arith.constant 0 : index
    %894 = vector.load %arg18[%c3_903, %c0_904, %c0_905] : memref<4x8x8xf32, #tpu.memory_space<vmem>>, vector<1x6x8xf32>
    %895 = vector.shape_cast %894 : vector<1x6x8xf32> to vector<6x8xf32>
    %c6_906 = arith.constant 6 : index
    %c0_907 = arith.constant 0 : index
    %c0_908 = arith.constant 0 : index
    %896 = vector.load %arg8[%c6_906, %c0_907, %c0_908] : memref<9x8x16xf32, #tpu.memory_space<vmem>>, vector<1x8x16xf32>
    %897 = vector.shape_cast %896 : vector<1x8x16xf32> to vector<8x16xf32>
    %cst_909 = arith.constant dense<0.000000e+00> : vector<6x16xf32>
    %898 = tpu.matmul %895, %897, %cst_909 {dimension_numbers = #tpu.dot_dimension_numbers<[1], [0], [0], [1], [0, 0, 1, 1], [], []>} : vector<6x8xf32>, vector<8x16xf32>, vector<6x16xf32> -> vector<6x16xf32>
    %899 = arith.addf %893, %898 : vector<6x16xf32>
    %c3_910 = arith.constant 3 : index
    %c1_911 = arith.constant 1 : index
    %c0_912 = arith.constant 0 : index
    %900 = vector.load %arg18[%c3_910, %c1_911, %c0_912] : memref<4x8x8xf32, #tpu.memory_space<vmem>>, vector<1x6x8xf32>
    %901 = vector.shape_cast %900 : vector<1x6x8xf32> to vector<6x8xf32>
    %c7_913 = arith.constant 7 : index
    %c0_914 = arith.constant 0 : index
    %c0_915 = arith.constant 0 : index
    %902 = vector.load %arg8[%c7_913, %c0_914, %c0_915] : memref<9x8x16xf32, #tpu.memory_space<vmem>>, vector<1x8x16xf32>
    %903 = vector.shape_cast %902 : vector<1x8x16xf32> to vector<8x16xf32>
    %cst_916 = arith.constant dense<0.000000e+00> : vector<6x16xf32>
    %904 = tpu.matmul %901, %903, %cst_916 {dimension_numbers = #tpu.dot_dimension_numbers<[1], [0], [0], [1], [0, 0, 1, 1], [], []>} : vector<6x8xf32>, vector<8x16xf32>, vector<6x16xf32> -> vector<6x16xf32>
    %905 = arith.addf %899, %904 : vector<6x16xf32>
    %c3_917 = arith.constant 3 : index
    %c2_918 = arith.constant 2 : index
    %c0_919 = arith.constant 0 : index
    %906 = vector.load %arg18[%c3_917, %c2_918, %c0_919] : memref<4x8x8xf32, #tpu.memory_space<vmem>>, vector<1x6x8xf32>
    %907 = vector.shape_cast %906 : vector<1x6x8xf32> to vector<6x8xf32>
    %c8_920 = arith.constant 8 : index
    %c0_921 = arith.constant 0 : index
    %c0_922 = arith.constant 0 : index
    %908 = vector.load %arg8[%c8_920, %c0_921, %c0_922] : memref<9x8x16xf32, #tpu.memory_space<vmem>>, vector<1x8x16xf32>
    %909 = vector.shape_cast %908 : vector<1x8x16xf32> to vector<8x16xf32>
    %cst_923 = arith.constant dense<0.000000e+00> : vector<6x16xf32>
    %910 = tpu.matmul %907, %909, %cst_923 {dimension_numbers = #tpu.dot_dimension_numbers<[1], [0], [0], [1], [0, 0, 1, 1], [], []>} : vector<6x8xf32>, vector<8x16xf32>, vector<6x16xf32> -> vector<6x16xf32>
    %911 = arith.addf %905, %910 : vector<6x16xf32>
    %c0_924 = arith.constant 0 : index
    %c0_925 = arith.constant 0 : index
    %912 = vector.load %arg9[%c0_924, %c0_925] : memref<1x16xf32, #tpu.memory_space<vmem>>, vector<1x16xf32>
    %913 = vector.broadcast %912 : vector<1x16xf32> to vector<6x16xf32>
    %914 = arith.addf %911, %913 : vector<6x16xf32>
    %cst_926 = arith.constant 0.000000e+00 : f32
    %915 = vector.broadcast %cst_926 : f32 to vector<6x16xf32>
    %916 = arith.maximumf %914, %915 : vector<6x16xf32>
    %917 = vector.extract_strided_slice %916 {offsets = [0, 0], sizes = [1, 16], strides = [1, 1]} : vector<6x16xf32> to vector<1x16xf32>
    %c96 = arith.constant 96 : index
    %c0_927 = arith.constant 0 : index
    %918 = vector.load %arg10[%c96, %c0_927] : memref<192x128xf32, #tpu.memory_space<vmem>>, vector<16x128xf32>
    %cst_928 = arith.constant dense<0.000000e+00> : vector<1x128xf32>
    %919 = tpu.matmul %917, %918, %cst_928 {dimension_numbers = #tpu.dot_dimension_numbers<[1], [0], [0], [1], [0, 0, 1, 1], [], []>} : vector<1x16xf32>, vector<16x128xf32>, vector<1x128xf32> -> vector<1x128xf32>
    %920 = arith.addf %856, %919 : vector<1x128xf32>
    %921 = vector.extract_strided_slice %916 {offsets = [1, 0], sizes = [1, 16], strides = [1, 1]} : vector<6x16xf32> to vector<1x16xf32>
    %c112 = arith.constant 112 : index
    %c0_929 = arith.constant 0 : index
    %922 = vector.load %arg10[%c112, %c0_929] : memref<192x128xf32, #tpu.memory_space<vmem>>, vector<16x128xf32>
    %cst_930 = arith.constant dense<0.000000e+00> : vector<1x128xf32>
    %923 = tpu.matmul %921, %922, %cst_930 {dimension_numbers = #tpu.dot_dimension_numbers<[1], [0], [0], [1], [0, 0, 1, 1], [], []>} : vector<1x16xf32>, vector<16x128xf32>, vector<1x128xf32> -> vector<1x128xf32>
    %924 = arith.addf %920, %923 : vector<1x128xf32>
    %925 = vector.extract_strided_slice %916 {offsets = [2, 0], sizes = [1, 16], strides = [1, 1]} : vector<6x16xf32> to vector<1x16xf32>
    %c128 = arith.constant 128 : index
    %c0_931 = arith.constant 0 : index
    %926 = vector.load %arg10[%c128, %c0_931] : memref<192x128xf32, #tpu.memory_space<vmem>>, vector<16x128xf32>
    %cst_932 = arith.constant dense<0.000000e+00> : vector<1x128xf32>
    %927 = tpu.matmul %925, %926, %cst_932 {dimension_numbers = #tpu.dot_dimension_numbers<[1], [0], [0], [1], [0, 0, 1, 1], [], []>} : vector<1x16xf32>, vector<16x128xf32>, vector<1x128xf32> -> vector<1x128xf32>
    %928 = arith.addf %924, %927 : vector<1x128xf32>
    %929 = vector.extract_strided_slice %916 {offsets = [3, 0], sizes = [1, 16], strides = [1, 1]} : vector<6x16xf32> to vector<1x16xf32>
    %c144 = arith.constant 144 : index
    %c0_933 = arith.constant 0 : index
    %930 = vector.load %arg10[%c144, %c0_933] : memref<192x128xf32, #tpu.memory_space<vmem>>, vector<16x128xf32>
    %cst_934 = arith.constant dense<0.000000e+00> : vector<1x128xf32>
    %931 = tpu.matmul %929, %930, %cst_934 {dimension_numbers = #tpu.dot_dimension_numbers<[1], [0], [0], [1], [0, 0, 1, 1], [], []>} : vector<1x16xf32>, vector<16x128xf32>, vector<1x128xf32> -> vector<1x128xf32>
    %932 = arith.addf %928, %931 : vector<1x128xf32>
    %933 = vector.extract_strided_slice %916 {offsets = [4, 0], sizes = [1, 16], strides = [1, 1]} : vector<6x16xf32> to vector<1x16xf32>
    %c160 = arith.constant 160 : index
    %c0_935 = arith.constant 0 : index
    %934 = vector.load %arg10[%c160, %c0_935] : memref<192x128xf32, #tpu.memory_space<vmem>>, vector<16x128xf32>
    %cst_936 = arith.constant dense<0.000000e+00> : vector<1x128xf32>
    %935 = tpu.matmul %933, %934, %cst_936 {dimension_numbers = #tpu.dot_dimension_numbers<[1], [0], [0], [1], [0, 0, 1, 1], [], []>} : vector<1x16xf32>, vector<16x128xf32>, vector<1x128xf32> -> vector<1x128xf32>
    %936 = arith.addf %932, %935 : vector<1x128xf32>
    %937 = vector.extract_strided_slice %916 {offsets = [5, 0], sizes = [1, 16], strides = [1, 1]} : vector<6x16xf32> to vector<1x16xf32>
    %c176 = arith.constant 176 : index
    %c0_937 = arith.constant 0 : index
    %938 = vector.load %arg10[%c176, %c0_937] : memref<192x128xf32, #tpu.memory_space<vmem>>, vector<16x128xf32>
    %cst_938 = arith.constant dense<0.000000e+00> : vector<1x128xf32>
    %939 = tpu.matmul %937, %938, %cst_938 {dimension_numbers = #tpu.dot_dimension_numbers<[1], [0], [0], [1], [0, 0, 1, 1], [], []>} : vector<1x16xf32>, vector<16x128xf32>, vector<1x128xf32> -> vector<1x128xf32>
    %940 = arith.addf %936, %939 : vector<1x128xf32>
    %cst_939 = arith.constant 0.000000e+00 : f32
    %941 = vector.broadcast %cst_939 : f32 to vector<1x128xf32>
    %942 = arith.maximumf %940, %941 : vector<1x128xf32>
    %c0_940 = arith.constant 0 : index
    %c0_941 = arith.constant 0 : index
    %943 = vector.load %arg12[%c0_940, %c0_941] : memref<128x8xf32, #tpu.memory_space<vmem>>, vector<128x8xf32>
    %cst_942 = arith.constant dense<0.000000e+00> : vector<1x8xf32>
    %944 = tpu.matmul %942, %943, %cst_942 {dimension_numbers = #tpu.dot_dimension_numbers<[1], [0], [0], [1], [0, 0, 1, 1], [], []>} : vector<1x128xf32>, vector<128x8xf32>, vector<1x8xf32> -> vector<1x8xf32>
    %c0_943 = arith.constant 0 : index
    %c0_944 = arith.constant 0 : index
    %945 = vector.load %arg13[%c0_943, %c0_944] : memref<1x8xf32, #tpu.memory_space<vmem>>, vector<1x8xf32>
    %946 = arith.addf %944, %945 : vector<1x8xf32>
    %947 = vector.extract_strided_slice %946 {offsets = [0, 0], sizes = [1, 1], strides = [1, 1]} : vector<1x8xf32> to vector<1x1xf32>
    %948 = vector.extract_strided_slice %946 {offsets = [0, 1], sizes = [1, 7], strides = [1, 1]} : vector<1x8xf32> to vector<1x7xf32>
    %cst_945 = arith.constant dense<0.000000e+00> : vector<1xf32>
    %949 = vector.multi_reduction <add>, %948, %cst_945 [1] : vector<1x7xf32> to vector<1xf32>
    %950 = vector.shape_cast %949 : vector<1xf32> to vector<1x1xf32>
    %cst_946 = arith.constant 7.000000e+00 : f32
    %951 = vector.broadcast %cst_946 : f32 to vector<1x1xf32>
    %952 = arith.divf %950, %951 : vector<1x1xf32>
    %953 = vector.broadcast %952 : vector<1x1xf32> to vector<1x7xf32>
    %954 = arith.subf %948, %953 : vector<1x7xf32>
    %955 = vector.broadcast %947 : vector<1x1xf32> to vector<1x7xf32>
    %956 = arith.addf %955, %954 : vector<1x7xf32>
    %c0_947 = arith.constant 0 : index
    %c0_948 = arith.constant 0 : index
    %c0_949 = arith.constant 0 : index
    %957 = vector.load %arg14[%c0_947, %c0_948, %c0_949] : memref<1x1x7xf32, #tpu.memory_space<vmem>>, vector<1x1x7xf32>
    %958 = vector.shape_cast %957 : vector<1x1x7xf32> to vector<1x7xf32>
    %959 = vector.shape_cast %956 : vector<1x7xf32> to vector<1x1x7xf32>
    tpu.vector_store %arg14[%c0_947, %c0_948, %c0_949], %959 {strides = array<i32>} : memref<1x1x7xf32, #tpu.memory_space<vmem>>, vector<1x1x7xf32>,
    return
  }
  func.func @transform_0(%arg0: i32) -> (i32, i32, i32, i32) {
    %c0_i32 = arith.constant 0 : i32
    %c0_i32_0 = arith.constant 0 : i32
    %c0_i32_1 = arith.constant 0 : i32
    %c0_i32_2 = arith.constant 0 : i32
    return %arg0, %c0_i32, %c0_i32_0, %c0_i32_1 : i32, i32, i32, i32
  }
  func.func @transform_1(%arg0: i32) -> (i32, i32, i32, i32) {
    %c0_i32 = arith.constant 0 : i32
    %c0_i32_0 = arith.constant 0 : i32
    %c0_i32_1 = arith.constant 0 : i32
    %c0_i32_2 = arith.constant 0 : i32
    %c0_i32_3 = arith.constant 0 : i32
    return %c0_i32, %c0_i32_0, %c0_i32_1, %c0_i32_2 : i32, i32, i32, i32
  }
  func.func @transform_2(%arg0: i32) -> (i32, i32, i32) {
    %c0_i32 = arith.constant 0 : i32
    %c0_i32_0 = arith.constant 0 : i32
    %c0_i32_1 = arith.constant 0 : i32
    %c0_i32_2 = arith.constant 0 : i32
    return %c0_i32, %c0_i32_0, %c0_i32_1 : i32, i32, i32
  }
  func.func @transform_3(%arg0: i32) -> (i32, i32, i32) {
    %c0_i32 = arith.constant 0 : i32
    %c0_i32_0 = arith.constant 0 : i32
    %c0_i32_1 = arith.constant 0 : i32
    %c0_i32_2 = arith.constant 0 : i32
    return %c0_i32, %c0_i32_0, %c0_i32_1 : i32, i32, i32
  }
  func.func @transform_4(%arg0: i32) -> (i32, i32) {
    %c0_i32 = arith.constant 0 : i32
    %c0_i32_0 = arith.constant 0 : i32
    %c0_i32_1 = arith.constant 0 : i32
    return %c0_i32, %c0_i32_0 : i32, i32
  }
  func.func @transform_5(%arg0: i32) -> (i32, i32, i32) {
    %c0_i32 = arith.constant 0 : i32
    %c0_i32_0 = arith.constant 0 : i32
    %c0_i32_1 = arith.constant 0 : i32
    %c0_i32_2 = arith.constant 0 : i32
    return %c0_i32, %c0_i32_0, %c0_i32_1 : i32, i32, i32
  }
  func.func @transform_6(%arg0: i32) -> (i32, i32) {
    %c0_i32 = arith.constant 0 : i32
    %c0_i32_0 = arith.constant 0 : i32
    %c0_i32_1 = arith.constant 0 : i32
    return %c0_i32, %c0_i32_0 : i32, i32
  }
  func.func @transform_7(%arg0: i32) -> (i32, i32, i32) {
    %c0_i32 = arith.constant 0 : i32
    %c0_i32_0 = arith.constant 0 : i32
    %c0_i32_1 = arith.constant 0 : i32
    %c0_i32_2 = arith.constant 0 : i32
    return %c0_i32, %c0_i32_0, %c0_i32_1 : i32, i32, i32
  }
  func.func @transform_8(%arg0: i32) -> (i32, i32) {
    %c0_i32 = arith.constant 0 : i32
    %c0_i32_0 = arith.constant 0 : i32
    %c0_i32_1 = arith.constant 0 : i32
    return %c0_i32, %c0_i32_0 : i32, i32
  }
  func.func @transform_9(%arg0: i32) -> (i32, i32) {
    %c0_i32 = arith.constant 0 : i32
    %c0_i32_0 = arith.constant 0 : i32
    %c0_i32_1 = arith.constant 0 : i32
    return %c0_i32, %c0_i32_0 : i32, i32
  }
  func.func @transform_10(%arg0: i32) -> (i32, i32) {
    %c0_i32 = arith.constant 0 : i32
    %c0_i32_0 = arith.constant 0 : i32
    %c0_i32_1 = arith.constant 0 : i32
    return %c0_i32, %c0_i32_0 : i32, i32
  }
  func.func @transform_11(%arg0: i32) -> (i32, i32) {
    %c0_i32 = arith.constant 0 : i32
    %c0_i32_0 = arith.constant 0 : i32
    %c0_i32_1 = arith.constant 0 : i32
    return %c0_i32, %c0_i32_0 : i32, i32
  }
  func.func @transform_12(%arg0: i32) -> (i32, i32) {
    %c0_i32 = arith.constant 0 : i32
    %c0_i32_0 = arith.constant 0 : i32
    %c0_i32_1 = arith.constant 0 : i32
    return %c0_i32, %c0_i32_0 : i32, i32
  }
  func.func @transform_13(%arg0: i32) -> (i32, i32, i32) {
    %c0_i32 = arith.constant 0 : i32
    %c0_i32_0 = arith.constant 0 : i32
    %c0_i32_1 = arith.constant 0 : i32
    return %arg0, %c0_i32, %c0_i32_0 : i32, i32, i32
  }
}

</mosaic_0001>

<llo_original>
// kernel: _lambda_.1
$region0: #{_lambda_.1}
  #allocation0 [shape = 'u32[]', space=smem, size = 0x4, offset = 0x4, fixed_abs, tag = 'smem constant byte address 0x4 - core index']
  #allocation1 [shape = 'u32[72,128]{1,0:T(1,128)}', space=vmem, size = 0x9000, scoped, tag = 'internal scratch']
  #allocation2 [shape = 'f32[14,11,8]{2,1,0:T(8,128)}', space=vmem, size = 0x1c000, scoped, tag = 'scratch operand']
  #allocation3 [shape = 'f32[14,11,8]{2,1,0:T(8,128)}', space=vmem, size = 0x1c000, scoped, tag = 'scratch operand']
  #allocation4 [shape = 'f32[6,10,8]{2,1,0:T(8,128)}', space=vmem, size = 0xc000, scoped, tag = 'scratch operand']
  #allocation5 [shape = 'f32[4,8,8]{2,1,0:T(8,128)}', space=vmem, size = 0x4000, scoped, tag = 'scratch operand']
  %s0 = inlined_call_operand.vmem [shape: f32[2,15,12,8], index: 0, kind: input, shape index: {}]
  %s1 = inlined_call_operand.vmem [shape: f32[9,1,1,8], index: 1, kind: input, shape index: {}]
  %s2 = inlined_call_operand.vmem [shape: f32[1,1,8], index: 2, kind: input, shape index: {}]
  %s3 = inlined_call_operand.vmem [shape: f32[9,8,8], index: 3, kind: input, shape index: {}]
  %s4 = inlined_call_operand.vmem [shape: f32[1,8], index: 4, kind: input, shape index: {}]
  %s5 = inlined_call_operand.vmem [shape: f32[9,8,8], index: 5, kind: input, shape index: {}]
  %s6 = inlined_call_operand.vmem [shape: f32[1,8], index: 6, kind: input, shape index: {}]
  %s7 = inlined_call_operand.vmem [shape: f32[9,8,16], index: 7, kind: input, shape index: {}]
  %s8 = inlined_call_operand.vmem [shape: f32[1,16], index: 8, kind: input, shape index: {}]
  %s9 = inlined_call_operand.vmem [shape: f32[192,128], index: 9, kind: input, shape index: {}]
  %s10 = inlined_call_operand.vmem [shape: f32[1,128], index: 10, kind: input, shape index: {}]
  %s11 = inlined_call_operand.vmem [shape: f32[128,8], index: 11, kind: input, shape index: {}]
  %s12 = inlined_call_operand.vmem [shape: f32[1,8], index: 12, kind: input, shape index: {}]
  %s13 = inlined_call_operand.hbm [shape: f32[2,1,7], index: 13, kind: output, shape index: {}]
  %s14 = sld [smem:[#allocation0]]
  $region85: #{_lambda_.1} parent=0
    _
  %s16 = ssub.s32 1, %s14
  %s17 = scalar_select 0, %s16, %s14
  $region1: #{_lambda_.1} parent=0
    #allocation6 [shape = 'u8[1024]{0}', space=vmem, size = 0x400, scoped, tag = 'output window, operand 0']
    #allocation7 [shape = 's32[2]{0}', space=sflag, size = 0x8, scoped, tag = 'scoped memory for _lambda_.1']
    %18 = vsyncpa [#allocation7], 0
    %s19 = scalar_lea.sflag [#allocation7], 1
    %20 = vsyncpa %s19, 0
    loop: start=0, step=1, limit=4
    $region2: #{_lambda_.1} parent=1 // loop_pre_header
      _
    $region3: #{_lambda_.1} parent=1 // loop_header
      %s22 = sphi 0, %s26
      %p23 = scmp.ge.s32.totalorder %s22, 4
      %s32 = sphi 0, %s34
      %s35 = sphi 0, %s32
      %s36 = sphi 0, %s35
      %s52 = sphi 0, %s36
      %s56 = sphi 0, %s56
      %s58 = sphi 0, %s56
      %s59 = sphi 0, %s58
      %s73 = sphi 0, %s59
      %s77 = sphi 0, %s77
      %s79 = sphi 0, %s77
      %s80 = sphi 0, %s79
      %s94 = sphi 0, %s80
      %s98 = sphi 0, %s98
      %s100 = sphi 0, %s98
      %s101 = sphi 0, %s100
      %s115 = sphi 0, %s101
      %s119 = sphi 0, %s119
      %s121 = sphi 0, %s119
      %s122 = sphi 0, %s121
      %s136 = sphi 0, %s122
      %s140 = sphi 0, %s140
      %s142 = sphi 0, %s140
      %s143 = sphi 0, %s142
      %s157 = sphi 0, %s143
      %s161 = sphi 0, %s161
      %s163 = sphi 0, %s161
      %s164 = sphi 0, %s163
      %s178 = sphi 0, %s164
      %s182 = sphi 0, %s182
      %s184 = sphi 0, %s182
      %s185 = sphi 0, %s184
      %s199 = sphi 0, %s185
      %s203 = sphi 0, %s203
      %s205 = sphi 0, %s203
      %s206 = sphi 0, %s205
      %s220 = sphi 0, %s206
      %s224 = sphi 0, %s224
      %s226 = sphi 0, %s224
      %s227 = sphi 0, %s226
      %s241 = sphi 0, %s227
      %s245 = sphi 0, %s245
      %s247 = sphi 0, %s245
      %s248 = sphi 0, %s247
      %s262 = sphi 0, %s248
      %s266 = sphi 0, %s266
      %s268 = sphi 0, %s266
      %s269 = sphi 0, %s268
      %s283 = sphi 0, %s269
      %s287 = sphi 0, %s287
      %s289 = sphi 0, %s287
      %s290 = sphi 0, %s289
      %s304 = sphi 0, %s290
      %s310 = sphi 0, %s312
      %s313 = sphi 0, %s310
      %s314 = sphi 0, %s313
      %s330 = sphi 0, %s314
    $region4: #{_lambda_.1} parent=1 // loop_header_branch
      %25 = sbr.rel (%p23) target = $region8
    $region5: #{_lambda_.1} parent=1 // loop_body
      %s27 = ssub.s32 %s22, 1
      %s28 = ssub.s32 %s22, 2
      %s29 = sadd.s32 %s22, 1
      %s30 = ssub.s32 %s22, %s29
      %p31 = scmp.eq.s32.totalorder %s30, 0
      %s33 = sadd.s32 %s32, 1
      %s34 = scalar_select %p31, %s32, %s33
      %p37 = pneg %p31
      %p38 = scmp.eq.s32.totalorder %s22, 1
      %p39 = por %p37, %p38
      %p40 = scmp.ne.s32.totalorder %s32, %s35
      %p41 = scmp.eq.s32.totalorder %s22, 0
      %p42 = por %p40, %p41
      %p43 = scmp.ne.s32.totalorder %s32, %s35
      %p44 = scmp.eq.s32.totalorder %s27, 1
      %p45 = por %p43, %p44
      %p46 = scmp.ne.s32.totalorder %s35, %s36
      %p47 = scmp.eq.s32.totalorder %s27, 0
      %p48 = por %p46, %p47
      %p49 = scmp.ne.s32.totalorder %s35, %s36
      %p50 = scmp.eq.s32.totalorder %s28, 1
      %p51 = por %p49, %p50
      %p53 = scmp.ne.s32.totalorder %s36, %s52
      %p54 = scmp.eq.s32.totalorder %s28, 0
      %p55 = por %p53, %p54
      %s57 = sadd.s32 %s56, 1
      %p60 = scmp.eq.s32.totalorder %s22, 1
      %p61 = scmp.ne.s32.totalorder %s56, %s58
      %p62 = scmp.eq.s32.totalorder %s22, 0
      %p63 = por %p61, %p62
      %p64 = scmp.ne.s32.totalorder %s56, %s58
      %p65 = scmp.eq.s32.totalorder %s27, 1
      %p66 = por %p64, %p65
      %p67 = scmp.ne.s32.totalorder %s58, %s59
      %p68 = scmp.eq.s32.totalorder %s27, 0
      %p69 = por %p67, %p68
      %p70 = scmp.ne.s32.totalorder %s58, %s59
      %p71 = scmp.eq.s32.totalorder %s28, 1
      %p72 = por %p70, %p71
      %p74 = scmp.ne.s32.totalorder %s59, %s73
      %p75 = scmp.eq.s32.totalorder %s28, 0
      %p76 = por %p74, %p75
      %s78 = sadd.s32 %s77, 1
      %p81 = scmp.eq.s32.totalorder %s22, 1
      %p82 = scmp.ne.s32.totalorder %s77, %s79
      %p83 = scmp.eq.s32.totalorder %s22, 0
      %p84 = por %p82, %p83
      %p85 = scmp.ne.s32.totalorder %s77, %s79
      %p86 = scmp.eq.s32.totalorder %s27, 1
      %p87 = por %p85, %p86
      %p88 = scmp.ne.s32.totalorder %s79, %s80
      %p89 = scmp.eq.s32.totalorder %s27, 0
      %p90 = por %p88, %p89
      %p91 = scmp.ne.s32.totalorder %s79, %s80
      %p92 = scmp.eq.s32.totalorder %s28, 1
      %p93 = por %p91, %p92
      %p95 = scmp.ne.s32.totalorder %s80, %s94
      %p96 = scmp.eq.s32.totalorder %s28, 0
      %p97 = por %p95, %p96
      %s99 = sadd.s32 %s98, 1
      %p102 = scmp.eq.s32.totalorder %s22, 1
      %p103 = scmp.ne.s32.totalorder %s98, %s100
      %p104 = scmp.eq.s32.totalorder %s22, 0
      %p105 = por %p103, %p104
      %p106 = scmp.ne.s32.totalorder %s98, %s100
      %p107 = scmp.eq.s32.totalorder %s27, 1
      %p108 = por %p106, %p107
      %p109 = scmp.ne.s32.totalorder %s100, %s101
      %p110 = scmp.eq.s32.totalorder %s27, 0
      %p111 = por %p109, %p110
      %p112 = scmp.ne.s32.totalorder %s100, %s101
      %p113 = scmp.eq.s32.totalorder %s28, 1
      %p114 = por %p112, %p113
      %p116 = scmp.ne.s32.totalorder %s101, %s115
      %p117 = scmp.eq.s32.totalorder %s28, 0
      %p118 = por %p116, %p117
      %s120 = sadd.s32 %s119, 1
      %p123 = scmp.eq.s32.totalorder %s22, 1
      %p124 = scmp.ne.s32.totalorder %s119, %s121
      %p125 = scmp.eq.s32.totalorder %s22, 0
      %p126 = por %p124, %p125
      %p127 = scmp.ne.s32.totalorder %s119, %s121
      %p128 = scmp.eq.s32.totalorder %s27, 1
      %p129 = por %p127, %p128
      %p130 = scmp.ne.s32.totalorder %s121, %s122
      %p131 = scmp.eq.s32.totalorder %s27, 0
      %p132 = por %p130, %p131
      %p133 = scmp.ne.s32.totalorder %s121, %s122
      %p134 = scmp.eq.s32.totalorder %s28, 1
      %p135 = por %p133, %p134
      %p137 = scmp.ne.s32.totalorder %s122, %s136
      %p138 = scmp.eq.s32.totalorder %s28, 0
      %p139 = por %p137, %p138
      %s141 = sadd.s32 %s140, 1
      %p144 = scmp.eq.s32.totalorder %s22, 1
      %p145 = scmp.ne.s32.totalorder %s140, %s142
      %p146 = scmp.eq.s32.totalorder %s22, 0
      %p147 = por %p145, %p146
      %p148 = scmp.ne.s32.totalorder %s140, %s142
      %p149 = scmp.eq.s32.totalorder %s27, 1
      %p150 = por %p148, %p149
      %p151 = scmp.ne.s32.totalorder %s142, %s143
      %p152 = scmp.eq.s32.totalorder %s27, 0
      %p153 = por %p151, %p152
      %p154 = scmp.ne.s32.totalorder %s142, %s143
      %p155 = scmp.eq.s32.totalorder %s28, 1
      %p156 = por %p154, %p155
      %p158 = scmp.ne.s32.totalorder %s143, %s157
      %p159 = scmp.eq.s32.totalorder %s28, 0
      %p160 = por %p158, %p159
      %s162 = sadd.s32 %s161, 1
      %p165 = scmp.eq.s32.totalorder %s22, 1
      %p166 = scmp.ne.s32.totalorder %s161, %s163
      %p167 = scmp.eq.s32.totalorder %s22, 0
      %p168 = por %p166, %p167
      %p169 = scmp.ne.s32.totalorder %s161, %s163
      %p170 = scmp.eq.s32.totalorder %s27, 1
      %p171 = por %p169, %p170
      %p172 = scmp.ne.s32.totalorder %s163, %s164
      %p173 = scmp.eq.s32.totalorder %s27, 0
      %p174 = por %p172, %p173
      %p175 = scmp.ne.s32.totalorder %s163, %s164
      %p176 = scmp.eq.s32.totalorder %s28, 1
      %p177 = por %p175, %p176
      %p179 = scmp.ne.s32.totalorder %s164, %s178
      %p180 = scmp.eq.s32.totalorder %s28, 0
      %p181 = por %p179, %p180
      %s183 = sadd.s32 %s182, 1
      %p186 = scmp.eq.s32.totalorder %s22, 1
      %p187 = scmp.ne.s32.totalorder %s182, %s184
      %p188 = scmp.eq.s32.totalorder %s22, 0
      %p189 = por %p187, %p188
      %p190 = scmp.ne.s32.totalorder %s182, %s184
      %p191 = scmp.eq.s32.totalorder %s27, 1
      %p192 = por %p190, %p191
      %p193 = scmp.ne.s32.totalorder %s184, %s185
      %p194 = scmp.eq.s32.totalorder %s27, 0
      %p195 = por %p193, %p194
      %p196 = scmp.ne.s32.totalorder %s184, %s185
      %p197 = scmp.eq.s32.totalorder %s28, 1
      %p198 = por %p196, %p197
      %p200 = scmp.ne.s32.totalorder %s185, %s199
      %p201 = scmp.eq.s32.totalorder %s28, 0
      %p202 = por %p200, %p201
      %s204 = sadd.s32 %s203, 1
      %p207 = scmp.eq.s32.totalorder %s22, 1
      %p208 = scmp.ne.s32.totalorder %s203, %s205
      %p209 = scmp.eq.s32.totalorder %s22, 0
      %p210 = por %p208, %p209
      %p211 = scmp.ne.s32.totalorder %s203, %s205
      %p212 = scmp.eq.s32.totalorder %s27, 1
      %p213 = por %p211, %p212
      %p214 = scmp.ne.s32.totalorder %s205, %s206
      %p215 = scmp.eq.s32.totalorder %s27, 0
      %p216 = por %p214, %p215
      %p217 = scmp.ne.s32.totalorder %s205, %s206
      %p218 = scmp.eq.s32.totalorder %s28, 1
      %p219 = por %p217, %p218
      %p221 = scmp.ne.s32.totalorder %s206, %s220
      %p222 = scmp.eq.s32.totalorder %s28, 0
      %p223 = por %p221, %p222
      %s225 = sadd.s32 %s224, 1
      %p228 = scmp.eq.s32.totalorder %s22, 1
      %p229 = scmp.ne.s32.totalorder %s224, %s226
      %p230 = scmp.eq.s32.totalorder %s22, 0
      %p231 = por %p229, %p230
      %p232 = scmp.ne.s32.totalorder %s224, %s226
      %p233 = scmp.eq.s32.totalorder %s27, 1
      %p234 = por %p232, %p233
      %p235 = scmp.ne.s32.totalorder %s226, %s227
      %p236 = scmp.eq.s32.totalorder %s27, 0
      %p237 = por %p235, %p236
      %p238 = scmp.ne.s32.totalorder %s226, %s227
      %p239 = scmp.eq.s32.totalorder %s28, 1
      %p240 = por %p238, %p239
      %p242 = scmp.ne.s32.totalorder %s227, %s241
      %p243 = scmp.eq.s32.totalorder %s28, 0
      %p244 = por %p242, %p243
      %s246 = sadd.s32 %s245, 1
      %p249 = scmp.eq.s32.totalorder %s22, 1
      %p250 = scmp.ne.s32.totalorder %s245, %s247
      %p251 = scmp.eq.s32.totalorder %s22, 0
      %p252 = por %p250, %p251
      %p253 = scmp.ne.s32.totalorder %s245, %s247
      %p254 = scmp.eq.s32.totalorder %s27, 1
      %p255 = por %p253, %p254
      %p256 = scmp.ne.s32.totalorder %s247, %s248
      %p257 = scmp.eq.s32.totalorder %s27, 0
      %p258 = por %p256, %p257
      %p259 = scmp.ne.s32.totalorder %s247, %s248
      %p260 = scmp.eq.s32.totalorder %s28, 1
      %p261 = por %p259, %p260
      %p263 = scmp.ne.s32.totalorder %s248, %s262
      %p264 = scmp.eq.s32.totalorder %s28, 0
      %p265 = por %p263, %p264
      %s267 = sadd.s32 %s266, 1
      %p270 = scmp.eq.s32.totalorder %s22, 1
      %p271 = scmp.ne.s32.totalorder %s266, %s268
      %p272 = scmp.eq.s32.totalorder %s22, 0
      %p273 = por %p271, %p272
      %p274 = scmp.ne.s32.totalorder %s266, %s268
      %p275 = scmp.eq.s32.totalorder %s27, 1
      %p276 = por %p274, %p275
      %p277 = scmp.ne.s32.totalorder %s268, %s269
      %p278 = scmp.eq.s32.totalorder %s27, 0
      %p279 = por %p277, %p278
      %p280 = scmp.ne.s32.totalorder %s268, %s269
      %p281 = scmp.eq.s32.totalorder %s28, 1
      %p282 = por %p280, %p281
      %p284 = scmp.ne.s32.totalorder %s269, %s283
      %p285 = scmp.eq.s32.totalorder %s28, 0
      %p286 = por %p284, %p285
      %s288 = sadd.s32 %s287, 1
      %p291 = scmp.eq.s32.totalorder %s22, 1
      %p292 = scmp.ne.s32.totalorder %s287, %s289
      %p293 = scmp.eq.s32.totalorder %s22, 0
      %p294 = por %p292, %p293
      %p295 = scmp.ne.s32.totalorder %s287, %s289
      %p296 = scmp.eq.s32.totalorder %s27, 1
      %p297 = por %p295, %p296
      %p298 = scmp.ne.s32.totalorder %s289, %s290
      %p299 = scmp.eq.s32.totalorder %s27, 0
      %p300 = por %p298, %p299
      %p301 = scmp.ne.s32.totalorder %s289, %s290
      %p302 = scmp.eq.s32.totalorder %s28, 1
      %p303 = por %p301, %p302
      %p305 = scmp.ne.s32.totalorder %s290, %s304
      %p306 = scmp.eq.s32.totalorder %s28, 0
      %p307 = por %p305, %p306
      %s308 = ssub.s32 %s22, %s29
      %p309 = scmp.eq.s32.totalorder %s308, 0
      %s311 = sadd.s32 %s310, 1
      %s312 = scalar_select %p309, %s310, %s311
      %p315 = pneg %p309
      %p316 = scmp.eq.s32.totalorder %s22, 1
      %p317 = por %p315, %p316
      %p318 = scmp.ne.s32.totalorder %s310, %s313
      %p319 = scmp.eq.s32.totalorder %s22, 0
      %p320 = por %p318, %p319
      %p321 = scmp.ne.s32.totalorder %s310, %s313
      %p322 = scmp.eq.s32.totalorder %s27, 1
      %p323 = por %p321, %p322
      %p324 = scmp.ne.s32.totalorder %s313, %s314
      %p325 = scmp.eq.s32.totalorder %s27, 0
      %p326 = por %p324, %p325
      %p327 = scmp.ne.s32.totalorder %s313, %s314
      %p328 = scmp.eq.s32.totalorder %s28, 1
      %p329 = por %p327, %p328
      %p331 = scmp.ne.s32.totalorder %s314, %s330
      %p332 = scmp.eq.s32.totalorder %s28, 0
      %p333 = por %p331, %p332
      %p334 = scmp.le.s32.totalorder 1, %s22
      %p335 = scmp.lt.s32.totalorder %s22, 3
      %p336 = pnand %p334, %p335
      %p337 = pneg %p336
      // Predicated region
      $region9: #{_lambda_.1} parent=5 // pred_check
        _
      $region10: #{_lambda_.1} parent=5 // pred_check_branch
        %339 = sbr.rel (%p336) target = $region12
      $region11: #{_lambda_.1} parent=5 // pred_region
        %s340 = ssub.s32 %s22, 1
        // Predicated region
        $region13: #{_lambda_.1} parent=11 // pred_check
          %p341 = pneg %p69
        $region14: #{_lambda_.1} parent=11 // pred_check_branch
          %343 = sbr.rel (%p341) target = $region16
        $region15: #{_lambda_.1} parent=11 // pred_region
          _
        $region16: #{_lambda_.1} parent=11 // pred_fallthru
          _
        // Predicated region
        $region17: #{_lambda_.1} parent=11 // pred_check
          %p344 = pneg %p90
        $region18: #{_lambda_.1} parent=11 // pred_check_branch
          %346 = sbr.rel (%p344) target = $region20
        $region19: #{_lambda_.1} parent=11 // pred_region
          _
        $region20: #{_lambda_.1} parent=11 // pred_fallthru
          _
        // Predicated region
        $region21: #{_lambda_.1} parent=11 // pred_check
          %p347 = pneg %p111
        $region22: #{_lambda_.1} parent=11 // pred_check_branch
          %349 = sbr.rel (%p347) target = $region24
        $region23: #{_lambda_.1} parent=11 // pred_region
          _
        $region24: #{_lambda_.1} parent=11 // pred_fallthru
          _
        // Predicated region
        $region25: #{_lambda_.1} parent=11 // pred_check
          %p350 = pneg %p132
        $region26: #{_lambda_.1} parent=11 // pred_check_branch
          %352 = sbr.rel (%p350) target = $region28
        $region27: #{_lambda_.1} parent=11 // pred_region
          _
        $region28: #{_lambda_.1} parent=11 // pred_fallthru
          _
        // Predicated region
        $region29: #{_lambda_.1} parent=11 // pred_check
          %p353 = pneg %p153
        $region30: #{_lambda_.1} parent=11 // pred_check_branch
          %355 = sbr.rel (%p353) target = $region32
        $region31: #{_lambda_.1} parent=11 // pred_region
          _
        $region32: #{_lambda_.1} parent=11 // pred_fallthru
          _
        // Predicated region
        $region33: #{_lambda_.1} parent=11 // pred_check
          %p356 = pneg %p174
        $region34: #{_lambda_.1} parent=11 // pred_check_branch
          %358 = sbr.rel (%p356) target = $region36
        $region35: #{_lambda_.1} parent=11 // pred_region
          _
        $region36: #{_lambda_.1} parent=11 // pred_fallthru
          _
        // Predicated region
        $region37: #{_lambda_.1} parent=11 // pred_check
          %p359 = pneg %p195
        $region38: #{_lambda_.1} parent=11 // pred_check_branch
          %361 = sbr.rel (%p359) target = $region40
        $region39: #{_lambda_.1} parent=11 // pred_region
          _
        $region40: #{_lambda_.1} parent=11 // pred_fallthru
          _
        // Predicated region
        $region41: #{_lambda_.1} parent=11 // pred_check
          %p362 = pneg %p216
        $region42: #{_lambda_.1} parent=11 // pred_check_branch
          %364 = sbr.rel (%p362) target = $region44
        $region43: #{_lambda_.1} parent=11 // pred_region
          _
        $region44: #{_lambda_.1} parent=11 // pred_fallthru
          _
        // Predicated region
        $region45: #{_lambda_.1} parent=11 // pred_check
          %p365 = pneg %p237
        $region46: #{_lambda_.1} parent=11 // pred_check_branch
          %367 = sbr.rel (%p365) target = $region48
        $region47: #{_lambda_.1} parent=11 // pred_region
          _
        $region48: #{_lambda_.1} parent=11 // pred_fallthru
          _
        // Predicated region
        $region49: #{_lambda_.1} parent=11 // pred_check
          %p368 = pneg %p258
        $region50: #{_lambda_.1} parent=11 // pred_check_branch
          %370 = sbr.rel (%p368) target = $region52
        $region51: #{_lambda_.1} parent=11 // pred_region
          _
        $region52: #{_lambda_.1} parent=11 // pred_fallthru
          _
        // Predicated region
        $region53: #{_lambda_.1} parent=11 // pred_check
          %p371 = pneg %p279
        $region54: #{_lambda_.1} parent=11 // pred_check_branch
          %373 = sbr.rel (%p371) target = $region56
        $region55: #{_lambda_.1} parent=11 // pred_region
          _
        $region56: #{_lambda_.1} parent=11 // pred_fallthru
          _
        // Predicated region
        $region57: #{_lambda_.1} parent=11 // pred_check
          %p374 = pneg %p300
        $region58: #{_lambda_.1} parent=11 // pred_check_branch
          %376 = sbr.rel (%p374) target = $region60
        $region59: #{_lambda_.1} parent=11 // pred_region
          _
        $region60: #{_lambda_.1} parent=11 // pred_fallthru
          _
      $region12: #{_lambda_.1} parent=5 // pred_fallthru
        _
      %p377 = scmp.lt.s32.totalorder %s22, 2
      // Predicated region
      $region61: #{_lambda_.1} parent=5 // pred_check
        %p378 = pneg %p377
      $region62: #{_lambda_.1} parent=5 // pred_check_branch
        %380 = sbr.rel (%p378) target = $region64
      $region63: #{_lambda_.1} parent=5 // pred_region
        // Predicated region
        $region65: #{_lambda_.1} parent=63 // pred_check
          %p381 = pneg %p42
        $region66: #{_lambda_.1} parent=63 // pred_check_branch
          %383 = sbr.rel (%p381) target = $region68
        $region67: #{_lambda_.1} parent=63 // pred_region
          %p384 = scmp.lt.s32.totalorder %s22, 1
          %s385 = scalar_select %p384, %s22, 1
          %s386 = smul.addr %s385, 30
          %s387 = smul.addr %s386, 8
          %s388 = scalar_lea.vmem %s0, %s387
        $region68: #{_lambda_.1} parent=63 // pred_fallthru
          _
      $region64: #{_lambda_.1} parent=5 // pred_fallthru
        _
      %p389 = scmp.le.s32.totalorder 1, %s22
      %p390 = scmp.lt.s32.totalorder %s22, 3
      %p391 = pnand %p389, %p390
      %p392 = pneg %p391
      // Predicated region
      $region69: #{_lambda_.1} parent=5 // pred_check
        _
      $region70: #{_lambda_.1} parent=5 // pred_check_branch
        %394 = sbr.rel (%p391) target = $region72
      $region71: #{_lambda_.1} parent=5 // pred_region
        %s395 = ssub.s32 %s22, 1
        %p396 = scmp.lt.s32.totalorder %s27, 1
        %s397 = scalar_select %p396, %s27, 1
        %s398 = smul.addr %s397, 30
        %s399 = smul.addr %s398, 8
        %s400 = scalar_lea.vmem %s0, %s399
        %p401 = pneg %p48
        %p402 = pneg %p45
        %p403 = pneg %p69
        %p404 = pneg %p66
        %p405 = pneg %p90
        %p406 = pneg %p87
        %p407 = pneg %p111
        %p408 = pneg %p108
        %p409 = pneg %p132
        %p410 = pneg %p129
        %p411 = pneg %p153
        %p412 = pneg %p150
        %p413 = pneg %p174
        %p414 = pneg %p171
        %p415 = pneg %p195
        %p416 = pneg %p192
        %p417 = pneg %p216
        %p418 = pneg %p213
        %p419 = pneg %p237
        %p420 = pneg %p234
        %p421 = pneg %p258
        %p422 = pneg %p255
        %p423 = pneg %p279
        %p424 = pneg %p276
        %p425 = pneg %p300
        %p426 = pneg %p297
        %p427 = pneg %p326
        %p428 = pneg %p323
        %s429 = sand.u32 %s313, 1
        %s430 = scalar_lea.sflag [#allocation7], %s429
        %s431 = sand.u32 %s313, 1
        %s432 = scalar_lea.vmem [#allocation6], %s431
        %p433 = scmp.lt.s32.totalorder %s27, 1
        %s434 = scalar_select %p433, %s27, 1
        %s435 = smul.addr %s434, 30
        %s436 = smul.addr %s435, 8
        %s437 = scalar_lea.vmem %s0, %s436
        %v438 = vld [vmem:[%s437] sm:$0xff]
        %v439 = vld [vmem:[%s437 + $0x8] sm:$0xf]
        %v440 = vld [vmem:[%s437 + $0x10] sm:$0xff]
        %v441 = vld [vmem:[%s437 + $0x18] sm:$0xf]
        %v442 = vld [vmem:[%s437 + $0x20] sm:$0xff]
        %v443 = vld [vmem:[%s437 + $0x28] sm:$0xf]
        %v444 = vld [vmem:[%s437 + $0x30] sm:$0xff]
        %v445 = vld [vmem:[%s437 + $0x38] sm:$0xf]
        %v446 = vld [vmem:[%s437 + $0x40] sm:$0xff]
        %v447 = vld [vmem:[%s437 + $0x48] sm:$0xf]
        %v448 = vld [vmem:[%s437 + $0x50] sm:$0xff]
        %v449 = vld [vmem:[%s437 + $0x58] sm:$0xf]
        %v450 = vld [vmem:[%s437 + $0x60] sm:$0xff]
        %v451 = vld [vmem:[%s437 + $0x68] sm:$0xf]
        %v452 = vld [vmem:[%s437 + $0x70] sm:$0xff]
        %v453 = vld [vmem:[%s437 + $0x78] sm:$0xf]
        %v454 = vld [vmem:[%s437 + $0x80] sm:$0xff]
        %v455 = vld [vmem:[%s437 + $0x88] sm:$0xf]
        %v456 = vld [vmem:[%s437 + $0x90] sm:$0xff]
        %v457 = vld [vmem:[%s437 + $0x98] sm:$0xf]
        %v458 = vld [vmem:[%s437 + $0xa0] sm:$0xff]
        %v459 = vld [vmem:[%s437 + $0xa8] sm:$0xf]
        %v460 = vld [vmem:[%s437 + $0xb0] sm:$0xff]
        %v461 = vld [vmem:[%s437 + $0xb8] sm:$0xf]
        %v462 = vld [vmem:[%s437 + $0xc0] sm:$0xff]
        %v463 = vld [vmem:[%s437 + $0xc8] sm:$0xf]
        %v464 = vld [vmem:[%s437 + $0xd0] sm:$0xff]
        %v465 = vld [vmem:[%s437 + $0xd8] sm:$0xf]
        %v466 = vld [vmem:[%s437 + $0xe0] sm:$0xff]
        %v467 = vld [vmem:[%s437 + $0xe8] sm:$0xf]
        %v468 = vld [vmem:[%s1] sm:$0x1]
        %470 = vset.pattern.permute.xlu0 0
        %471 = vperm.xlu0 %470, %v438
        %v472 = vpop.permute.xlu0 %471
        %475 = vset.pattern.permute.xlu0 0
        %476 = vperm.xlu0 %475, %v439
        %v477 = vpop.permute.xlu0 %476
        %480 = vset.pattern.permute.xlu0 0
        %481 = vperm.xlu0 %480, %v440
        %v482 = vpop.permute.xlu0 %481
        %485 = vset.pattern.permute.xlu0 0
        %486 = vperm.xlu0 %485, %v441
        %v487 = vpop.permute.xlu0 %486
        %490 = vset.pattern.permute.xlu0 0
        %491 = vperm.xlu0 %490, %v442
        %v492 = vpop.permute.xlu0 %491
        %495 = vset.pattern.permute.xlu0 0
        %496 = vperm.xlu0 %495, %v443
        %v497 = vpop.permute.xlu0 %496
        %500 = vset.pattern.permute.xlu0 0
        %501 = vperm.xlu0 %500, %v444
        %v502 = vpop.permute.xlu0 %501
        %505 = vset.pattern.permute.xlu0 0
        %506 = vperm.xlu0 %505, %v445
        %v507 = vpop.permute.xlu0 %506
        %510 = vset.pattern.permute.xlu0 0
        %511 = vperm.xlu0 %510, %v446
        %v512 = vpop.permute.xlu0 %511
        %515 = vset.pattern.permute.xlu0 0
        %516 = vperm.xlu0 %515, %v447
        %v517 = vpop.permute.xlu0 %516
        %520 = vset.pattern.permute.xlu0 0
        %521 = vperm.xlu0 %520, %v448
        %v522 = vpop.permute.xlu0 %521
        %525 = vset.pattern.permute.xlu0 0
        %526 = vperm.xlu0 %525, %v449
        %v527 = vpop.permute.xlu0 %526
        %530 = vset.pattern.permute.xlu0 0
        %531 = vperm.xlu0 %530, %v450
        %v532 = vpop.permute.xlu0 %531
        %535 = vset.pattern.permute.xlu0 0
        %536 = vperm.xlu0 %535, %v451
        %v537 = vpop.permute.xlu0 %536
        %540 = vset.pattern.permute.xlu0 0
        %541 = vperm.xlu0 %540, %v452
        %v542 = vpop.permute.xlu0 %541
        %545 = vset.pattern.permute.xlu0 0
        %546 = vperm.xlu0 %545, %v453
        %v547 = vpop.permute.xlu0 %546
        %550 = vset.pattern.permute.xlu0 0
        %551 = vperm.xlu0 %550, %v454
        %v552 = vpop.permute.xlu0 %551
        %555 = vset.pattern.permute.xlu0 0
        %556 = vperm.xlu0 %555, %v455
        %v557 = vpop.permute.xlu0 %556
        %560 = vset.pattern.permute.xlu0 0
        %561 = vperm.xlu0 %560, %v456
        %v562 = vpop.permute.xlu0 %561
        %565 = vset.pattern.permute.xlu0 0
        %566 = vperm.xlu0 %565, %v457
        %v567 = vpop.permute.xlu0 %566
        %570 = vset.pattern.permute.xlu0 0
        %571 = vperm.xlu0 %570, %v458
        %v572 = vpop.permute.xlu0 %571
        %575 = vset.pattern.permute.xlu0 0
        %576 = vperm.xlu0 %575, %v459
        %v577 = vpop.permute.xlu0 %576
        %580 = vset.pattern.permute.xlu0 0
        %581 = vperm.xlu0 %580, %v460
        %v582 = vpop.permute.xlu0 %581
        %585 = vset.pattern.permute.xlu0 0
        %586 = vperm.xlu0 %585, %v461
        %v587 = vpop.permute.xlu0 %586
        %590 = vset.pattern.permute.xlu0 0
        %591 = vperm.xlu0 %590, %v462
        %v592 = vpop.permute.xlu0 %591
        %595 = vset.pattern.permute.xlu0 0
        %596 = vperm.xlu0 %595, %v463
        %v597 = vpop.permute.xlu0 %596
        %600 = vset.pattern.permute.xlu0 0
        %601 = vperm.xlu0 %600, %v464
        %v602 = vpop.permute.xlu0 %601
        %605 = vset.pattern.permute.xlu0 0
        %606 = vperm.xlu0 %605, %v465
        %v607 = vpop.permute.xlu0 %606
        %v610 = vperm.slane %v468, 0
        %v612 = vmul.f32 %v472, %v610
        %v613 = vmul.f32 %v477, %v610
        %v614 = vmul.f32 %v482, %v610
        %v615 = vmul.f32 %v487, %v610
        %v616 = vmul.f32 %v492, %v610
        %v617 = vmul.f32 %v497, %v610
        %v618 = vmul.f32 %v502, %v610
        %v619 = vmul.f32 %v507, %v610
        %v620 = vmul.f32 %v512, %v610
        %v621 = vmul.f32 %v517, %v610
        %v622 = vmul.f32 %v522, %v610
        %v623 = vmul.f32 %v527, %v610
        %v624 = vmul.f32 %v532, %v610
        %v625 = vmul.f32 %v537, %v610
        %v626 = vmul.f32 %v542, %v610
        %v627 = vmul.f32 %v547, %v610
        %v628 = vmul.f32 %v552, %v610
        %v629 = vmul.f32 %v557, %v610
        %v630 = vmul.f32 %v562, %v610
        %v631 = vmul.f32 %v567, %v610
        %v632 = vmul.f32 %v572, %v610
        %v633 = vmul.f32 %v577, %v610
        %v634 = vmul.f32 %v582, %v610
        %v635 = vmul.f32 %v587, %v610
        %v636 = vmul.f32 %v592, %v610
        %v637 = vmul.f32 %v597, %v610
        %v638 = vmul.f32 %v602, %v610
        %v639 = vmul.f32 %v607, %v610
        %v640 = vadd.f32 %v612, 0.0
        %v641 = vadd.f32 %v613, 0.0
        %v642 = vadd.f32 %v614, 0.0
        %v643 = vadd.f32 %v615, 0.0
        %v644 = vadd.f32 %v616, 0.0
        %v645 = vadd.f32 %v617, 0.0
        %v646 = vadd.f32 %v618, 0.0
        %v647 = vadd.f32 %v619, 0.0
        %v648 = vadd.f32 %v620, 0.0
        %v649 = vadd.f32 %v621, 0.0
        %v650 = vadd.f32 %v622, 0.0
        %v651 = vadd.f32 %v623, 0.0
        %v652 = vadd.f32 %v624, 0.0
        %v653 = vadd.f32 %v625, 0.0
        %v654 = vadd.f32 %v626, 0.0
        %v655 = vadd.f32 %v627, 0.0
        %v656 = vadd.f32 %v628, 0.0
        %v657 = vadd.f32 %v629, 0.0
        %v658 = vadd.f32 %v630, 0.0
        %v659 = vadd.f32 %v631, 0.0
        %v660 = vadd.f32 %v632, 0.0
        %v661 = vadd.f32 %v633, 0.0
        %v662 = vadd.f32 %v634, 0.0
        %v663 = vadd.f32 %v635, 0.0
        %v664 = vadd.f32 %v636, 0.0
        %v665 = vadd.f32 %v637, 0.0
        %v666 = vadd.f32 %v638, 0.0
        %v667 = vadd.f32 %v639, 0.0
        %s668 = scalar_lea.vmem %s1, 1
        %v669 = vld [vmem:[%s668] sm:$0x1]
        %670 = vset.pattern.permute.xlu0 1
        %671 = vperm.xlu0 %670, %v438
        %v672 = vpop.permute.xlu0 %671
        %674 = vset.pattern.permute.xlu0 1
        %675 = vperm.xlu0 %674, %v439
        %v676 = vpop.permute.xlu0 %675
        %678 = vset.pattern.permute.xlu0 1
        %679 = vperm.xlu0 %678, %v440
        %v680 = vpop.permute.xlu0 %679
        %682 = vset.pattern.permute.xlu0 1
        %683 = vperm.xlu0 %682, %v441
        %v684 = vpop.permute.xlu0 %683
        %686 = vset.pattern.permute.xlu0 1
        %687 = vperm.xlu0 %686, %v442
        %v688 = vpop.permute.xlu0 %687
        %690 = vset.pattern.permute.xlu0 1
        %691 = vperm.xlu0 %690, %v443
        %v692 = vpop.permute.xlu0 %691
        %694 = vset.pattern.permute.xlu0 1
        %695 = vperm.xlu0 %694, %v444
        %v696 = vpop.permute.xlu0 %695
        %698 = vset.pattern.permute.xlu0 1
        %699 = vperm.xlu0 %698, %v445
        %v700 = vpop.permute.xlu0 %699
        %702 = vset.pattern.permute.xlu0 1
        %703 = vperm.xlu0 %702, %v446
        %v704 = vpop.permute.xlu0 %703
        %706 = vset.pattern.permute.xlu0 1
        %707 = vperm.xlu0 %706, %v447
        %v708 = vpop.permute.xlu0 %707
        %710 = vset.pattern.permute.xlu0 1
        %711 = vperm.xlu0 %710, %v448
        %v712 = vpop.permute.xlu0 %711
        %714 = vset.pattern.permute.xlu0 1
        %715 = vperm.xlu0 %714, %v449
        %v716 = vpop.permute.xlu0 %715
        %718 = vset.pattern.permute.xlu0 1
        %719 = vperm.xlu0 %718, %v450
        %v720 = vpop.permute.xlu0 %719
        %722 = vset.pattern.permute.xlu0 1
        %723 = vperm.xlu0 %722, %v451
        %v724 = vpop.permute.xlu0 %723
        %726 = vset.pattern.permute.xlu0 1
        %727 = vperm.xlu0 %726, %v452
        %v728 = vpop.permute.xlu0 %727
        %730 = vset.pattern.permute.xlu0 1
        %731 = vperm.xlu0 %730, %v453
        %v732 = vpop.permute.xlu0 %731
        %734 = vset.pattern.permute.xlu0 1
        %735 = vperm.xlu0 %734, %v454
        %v736 = vpop.permute.xlu0 %735
        %738 = vset.pattern.permute.xlu0 1
        %739 = vperm.xlu0 %738, %v455
        %v740 = vpop.permute.xlu0 %739
        %742 = vset.pattern.permute.xlu0 1
        %743 = vperm.xlu0 %742, %v456
        %v744 = vpop.permute.xlu0 %743
        %746 = vset.pattern.permute.xlu0 1
        %747 = vperm.xlu0 %746, %v457
        %v748 = vpop.permute.xlu0 %747
        %750 = vset.pattern.permute.xlu0 1
        %751 = vperm.xlu0 %750, %v458
        %v752 = vpop.permute.xlu0 %751
        %754 = vset.pattern.permute.xlu0 1
        %755 = vperm.xlu0 %754, %v459
        %v756 = vpop.permute.xlu0 %755
        %758 = vset.pattern.permute.xlu0 1
        %759 = vperm.xlu0 %758, %v460
        %v760 = vpop.permute.xlu0 %759
        %762 = vset.pattern.permute.xlu0 1
        %763 = vperm.xlu0 %762, %v461
        %v764 = vpop.permute.xlu0 %763
        %766 = vset.pattern.permute.xlu0 1
        %767 = vperm.xlu0 %766, %v462
        %v768 = vpop.permute.xlu0 %767
        %770 = vset.pattern.permute.xlu0 1
        %771 = vperm.xlu0 %770, %v463
        %v772 = vpop.permute.xlu0 %771
        %774 = vset.pattern.permute.xlu0 1
        %775 = vperm.xlu0 %774, %v464
        %v776 = vpop.permute.xlu0 %775
        %778 = vset.pattern.permute.xlu0 1
        %779 = vperm.xlu0 %778, %v465
        %v780 = vpop.permute.xlu0 %779
        %v783 = vperm.slane %v669, 0
        %v785 = vmul.f32 %v672, %v783
        %v786 = vmul.f32 %v676, %v783
        %v787 = vmul.f32 %v680, %v783
        %v788 = vmul.f32 %v684, %v783
        %v789 = vmul.f32 %v688, %v783
        %v790 = vmul.f32 %v692, %v783
        %v791 = vmul.f32 %v696, %v783
        %v792 = vmul.f32 %v700, %v783
        %v793 = vmul.f32 %v704, %v783
        %v794 = vmul.f32 %v708, %v783
        %v795 = vmul.f32 %v712, %v783
        %v796 = vmul.f32 %v716, %v783
        %v797 = vmul.f32 %v720, %v783
        %v798 = vmul.f32 %v724, %v783
        %v799 = vmul.f32 %v728, %v783
        %v800 = vmul.f32 %v732, %v783
        %v801 = vmul.f32 %v736, %v783
        %v802 = vmul.f32 %v740, %v783
        %v803 = vmul.f32 %v744, %v783
        %v804 = vmul.f32 %v748, %v783
        %v805 = vmul.f32 %v752, %v783
        %v806 = vmul.f32 %v756, %v783
        %v807 = vmul.f32 %v760, %v783
        %v808 = vmul.f32 %v764, %v783
        %v809 = vmul.f32 %v768, %v783
        %v810 = vmul.f32 %v772, %v783
        %v811 = vmul.f32 %v776, %v783
        %v812 = vmul.f32 %v780, %v783
        %v813 = vadd.f32 %v640, %v785
        %v814 = vadd.f32 %v641, %v786
        %v815 = vadd.f32 %v642, %v787
        %v816 = vadd.f32 %v643, %v788
        %v817 = vadd.f32 %v644, %v789
        %v818 = vadd.f32 %v645, %v790
        %v819 = vadd.f32 %v646, %v791
        %v820 = vadd.f32 %v647, %v792
        %v821 = vadd.f32 %v648, %v793
        %v822 = vadd.f32 %v649, %v794
        %v823 = vadd.f32 %v650, %v795
        %v824 = vadd.f32 %v651, %v796
        %v825 = vadd.f32 %v652, %v797
        %v826 = vadd.f32 %v653, %v798
        %v827 = vadd.f32 %v654, %v799
        %v828 = vadd.f32 %v655, %v800
        %v829 = vadd.f32 %v656, %v801
        %v830 = vadd.f32 %v657, %v802
        %v831 = vadd.f32 %v658, %v803
        %v832 = vadd.f32 %v659, %v804
        %v833 = vadd.f32 %v660, %v805
        %v834 = vadd.f32 %v661, %v806
        %v835 = vadd.f32 %v662, %v807
        %v836 = vadd.f32 %v663, %v808
        %v837 = vadd.f32 %v664, %v809
        %v838 = vadd.f32 %v665, %v810
        %v839 = vadd.f32 %v666, %v811
        %v840 = vadd.f32 %v667, %v812
        %s841 = scalar_lea.vmem %s1, 2
        %v842 = vld [vmem:[%s841] sm:$0x1]
        %843 = vset.pattern.permute.xlu0 2
        %844 = vperm.xlu0 %843, %v438
        %v845 = vpop.permute.xlu0 %844
        %847 = vset.pattern.permute.xlu0 2
        %848 = vperm.xlu0 %847, %v439
        %v849 = vpop.permute.xlu0 %848
        %851 = vset.pattern.permute.xlu0 2
        %852 = vperm.xlu0 %851, %v440
        %v853 = vpop.permute.xlu0 %852
        %855 = vset.pattern.permute.xlu0 2
        %856 = vperm.xlu0 %855, %v441
        %v857 = vpop.permute.xlu0 %856
        %859 = vset.pattern.permute.xlu0 2
        %860 = vperm.xlu0 %859, %v442
        %v861 = vpop.permute.xlu0 %860
        %863 = vset.pattern.permute.xlu0 2
        %864 = vperm.xlu0 %863, %v443
        %v865 = vpop.permute.xlu0 %864
        %867 = vset.pattern.permute.xlu0 2
        %868 = vperm.xlu0 %867, %v444
        %v869 = vpop.permute.xlu0 %868
        %871 = vset.pattern.permute.xlu0 2
        %872 = vperm.xlu0 %871, %v445
        %v873 = vpop.permute.xlu0 %872
        %875 = vset.pattern.permute.xlu0 2
        %876 = vperm.xlu0 %875, %v446
        %v877 = vpop.permute.xlu0 %876
        %879 = vset.pattern.permute.xlu0 2
        %880 = vperm.xlu0 %879, %v447
        %v881 = vpop.permute.xlu0 %880
        %883 = vset.pattern.permute.xlu0 2
        %884 = vperm.xlu0 %883, %v448
        %v885 = vpop.permute.xlu0 %884
        %887 = vset.pattern.permute.xlu0 2
        %888 = vperm.xlu0 %887, %v449
        %v889 = vpop.permute.xlu0 %888
        %891 = vset.pattern.permute.xlu0 2
        %892 = vperm.xlu0 %891, %v450
        %v893 = vpop.permute.xlu0 %892
        %895 = vset.pattern.permute.xlu0 2
        %896 = vperm.xlu0 %895, %v451
        %v897 = vpop.permute.xlu0 %896
        %899 = vset.pattern.permute.xlu0 2
        %900 = vperm.xlu0 %899, %v452
        %v901 = vpop.permute.xlu0 %900
        %903 = vset.pattern.permute.xlu0 2
        %904 = vperm.xlu0 %903, %v453
        %v905 = vpop.permute.xlu0 %904
        %907 = vset.pattern.permute.xlu0 2
        %908 = vperm.xlu0 %907, %v454
        %v909 = vpop.permute.xlu0 %908
        %911 = vset.pattern.permute.xlu0 2
        %912 = vperm.xlu0 %911, %v455
        %v913 = vpop.permute.xlu0 %912
        %915 = vset.pattern.permute.xlu0 2
        %916 = vperm.xlu0 %915, %v456
        %v917 = vpop.permute.xlu0 %916
        %919 = vset.pattern.permute.xlu0 2
        %920 = vperm.xlu0 %919, %v457
        %v921 = vpop.permute.xlu0 %920
        %923 = vset.pattern.permute.xlu0 2
        %924 = vperm.xlu0 %923, %v458
        %v925 = vpop.permute.xlu0 %924
        %927 = vset.pattern.permute.xlu0 2
        %928 = vperm.xlu0 %927, %v459
        %v929 = vpop.permute.xlu0 %928
        %931 = vset.pattern.permute.xlu0 2
        %932 = vperm.xlu0 %931, %v460
        %v933 = vpop.permute.xlu0 %932
        %935 = vset.pattern.permute.xlu0 2
        %936 = vperm.xlu0 %935, %v461
        %v937 = vpop.permute.xlu0 %936
        %939 = vset.pattern.permute.xlu0 2
        %940 = vperm.xlu0 %939, %v462
        %v941 = vpop.permute.xlu0 %940
        %943 = vset.pattern.permute.xlu0 2
        %944 = vperm.xlu0 %943, %v463
        %v945 = vpop.permute.xlu0 %944
        %947 = vset.pattern.permute.xlu0 2
        %948 = vperm.xlu0 %947, %v464
        %v949 = vpop.permute.xlu0 %948
        %951 = vset.pattern.permute.xlu0 2
        %952 = vperm.xlu0 %951, %v465
        %v953 = vpop.permute.xlu0 %952
        %v956 = vperm.slane %v842, 0
        %v958 = vmul.f32 %v845, %v956
        %v959 = vmul.f32 %v849, %v956
        %v960 = vmul.f32 %v853, %v956
        %v961 = vmul.f32 %v857, %v956
        %v962 = vmul.f32 %v861, %v956
        %v963 = vmul.f32 %v865, %v956
        %v964 = vmul.f32 %v869, %v956
        %v965 = vmul.f32 %v873, %v956
        %v966 = vmul.f32 %v877, %v956
        %v967 = vmul.f32 %v881, %v956
        %v968 = vmul.f32 %v885, %v956
        %v969 = vmul.f32 %v889, %v956
        %v970 = vmul.f32 %v893, %v956
        %v971 = vmul.f32 %v897, %v956
        %v972 = vmul.f32 %v901, %v956
        %v973 = vmul.f32 %v905, %v956
        %v974 = vmul.f32 %v909, %v956
        %v975 = vmul.f32 %v913, %v956
        %v976 = vmul.f32 %v917, %v956
        %v977 = vmul.f32 %v921, %v956
        %v978 = vmul.f32 %v925, %v956
        %v979 = vmul.f32 %v929, %v956
        %v980 = vmul.f32 %v933, %v956
        %v981 = vmul.f32 %v937, %v956
        %v982 = vmul.f32 %v941, %v956
        %v983 = vmul.f32 %v945, %v956
        %v984 = vmul.f32 %v949, %v956
        %v985 = vmul.f32 %v953, %v956
        %v986 = vadd.f32 %v813, %v958
        %v987 = vadd.f32 %v814, %v959
        %v988 = vadd.f32 %v815, %v960
        %v989 = vadd.f32 %v816, %v961
        %v990 = vadd.f32 %v817, %v962
        %v991 = vadd.f32 %v818, %v963
        %v992 = vadd.f32 %v819, %v964
        %v993 = vadd.f32 %v820, %v965
        %v994 = vadd.f32 %v821, %v966
        %v995 = vadd.f32 %v822, %v967
        %v996 = vadd.f32 %v823, %v968
        %v997 = vadd.f32 %v824, %v969
        %v998 = vadd.f32 %v825, %v970
        %v999 = vadd.f32 %v826, %v971
        %v1000 = vadd.f32 %v827, %v972
        %v1001 = vadd.f32 %v828, %v973
        %v1002 = vadd.f32 %v829, %v974
        %v1003 = vadd.f32 %v830, %v975
        %v1004 = vadd.f32 %v831, %v976
        %v1005 = vadd.f32 %v832, %v977
        %v1006 = vadd.f32 %v833, %v978
        %v1007 = vadd.f32 %v834, %v979
        %v1008 = vadd.f32 %v835, %v980
        %v1009 = vadd.f32 %v836, %v981
        %v1010 = vadd.f32 %v837, %v982
        %v1011 = vadd.f32 %v838, %v983
        %v1012 = vadd.f32 %v839, %v984
        %v1013 = vadd.f32 %v840, %v985
        %s1014 = scalar_lea.vmem %s1, 3
        %v1015 = vld [vmem:[%s1014] sm:$0x1]
        %1016 = vset.pattern.permute.xlu0 4
        %1017 = vperm.xlu0 %1016, %v438
        %v1018 = vpop.permute.xlu0 %1017
        %1020 = vset.pattern.permute.xlu0 4
        %1021 = vperm.xlu0 %1020, %v439
        %v1022 = vpop.permute.xlu0 %1021
        %1024 = vset.pattern.permute.xlu0 4
        %1025 = vperm.xlu0 %1024, %v440
        %v1026 = vpop.permute.xlu0 %1025
        %1028 = vset.pattern.permute.xlu0 4
        %1029 = vperm.xlu0 %1028, %v441
        %v1030 = vpop.permute.xlu0 %1029
        %1032 = vset.pattern.permute.xlu0 4
        %1033 = vperm.xlu0 %1032, %v442
        %v1034 = vpop.permute.xlu0 %1033
        %1036 = vset.pattern.permute.xlu0 4
        %1037 = vperm.xlu0 %1036, %v443
        %v1038 = vpop.permute.xlu0 %1037
        %1040 = vset.pattern.permute.xlu0 4
        %1041 = vperm.xlu0 %1040, %v444
        %v1042 = vpop.permute.xlu0 %1041
        %1044 = vset.pattern.permute.xlu0 4
        %1045 = vperm.xlu0 %1044, %v445
        %v1046 = vpop.permute.xlu0 %1045
        %1048 = vset.pattern.permute.xlu0 4
        %1049 = vperm.xlu0 %1048, %v446
        %v1050 = vpop.permute.xlu0 %1049
        %1052 = vset.pattern.permute.xlu0 4
        %1053 = vperm.xlu0 %1052, %v447
        %v1054 = vpop.permute.xlu0 %1053
        %1056 = vset.pattern.permute.xlu0 4
        %1057 = vperm.xlu0 %1056, %v448
        %v1058 = vpop.permute.xlu0 %1057
        %1060 = vset.pattern.permute.xlu0 4
        %1061 = vperm.xlu0 %1060, %v449
        %v1062 = vpop.permute.xlu0 %1061
        %1064 = vset.pattern.permute.xlu0 4
        %1065 = vperm.xlu0 %1064, %v450
        %v1066 = vpop.permute.xlu0 %1065
        %1068 = vset.pattern.permute.xlu0 4
        %1069 = vperm.xlu0 %1068, %v451
        %v1070 = vpop.permute.xlu0 %1069
        %1072 = vset.pattern.permute.xlu0 4
        %1073 = vperm.xlu0 %1072, %v452
        %v1074 = vpop.permute.xlu0 %1073
        %1076 = vset.pattern.permute.xlu0 4
        %1077 = vperm.xlu0 %1076, %v453
        %v1078 = vpop.permute.xlu0 %1077
        %1080 = vset.pattern.permute.xlu0 4
        %1081 = vperm.xlu0 %1080, %v454
        %v1082 = vpop.permute.xlu0 %1081
        %1084 = vset.pattern.permute.xlu0 4
        %1085 = vperm.xlu0 %1084, %v455
        %v1086 = vpop.permute.xlu0 %1085
        %1088 = vset.pattern.permute.xlu0 4
        %1089 = vperm.xlu0 %1088, %v456
        %v1090 = vpop.permute.xlu0 %1089
        %1092 = vset.pattern.permute.xlu0 4
        %1093 = vperm.xlu0 %1092, %v457
        %v1094 = vpop.permute.xlu0 %1093
        %1096 = vset.pattern.permute.xlu0 4
        %1097 = vperm.xlu0 %1096, %v458
        %v1098 = vpop.permute.xlu0 %1097
        %1100 = vset.pattern.permute.xlu0 4
        %1101 = vperm.xlu0 %1100, %v459
        %v1102 = vpop.permute.xlu0 %1101
        %1104 = vset.pattern.permute.xlu0 4
        %1105 = vperm.xlu0 %1104, %v460
        %v1106 = vpop.permute.xlu0 %1105
        %1108 = vset.pattern.permute.xlu0 4
        %1109 = vperm.xlu0 %1108, %v461
        %v1110 = vpop.permute.xlu0 %1109
        %1112 = vset.pattern.permute.xlu0 4
        %1113 = vperm.xlu0 %1112, %v462
        %v1114 = vpop.permute.xlu0 %1113
        %1116 = vset.pattern.permute.xlu0 4
        %1117 = vperm.xlu0 %1116, %v463
        %v1118 = vpop.permute.xlu0 %1117
        %1120 = vset.pattern.permute.xlu0 4
        %1121 = vperm.xlu0 %1120, %v464
        %v1122 = vpop.permute.xlu0 %1121
        %1124 = vset.pattern.permute.xlu0 4
        %1125 = vperm.xlu0 %1124, %v465
        %v1126 = vpop.permute.xlu0 %1125
        %v1129 = vperm.slane %v1015, 0
        %v1131 = vmul.f32 %v1018, %v1129
        %v1132 = vmul.f32 %v1022, %v1129
        %v1133 = vmul.f32 %v1026, %v1129
        %v1134 = vmul.f32 %v1030, %v1129
        %v1135 = vmul.f32 %v1034, %v1129
        %v1136 = vmul.f32 %v1038, %v1129
        %v1137 = vmul.f32 %v1042, %v1129
        %v1138 = vmul.f32 %v1046, %v1129
        %v1139 = vmul.f32 %v1050, %v1129
        %v1140 = vmul.f32 %v1054, %v1129
        %v1141 = vmul.f32 %v1058, %v1129
        %v1142 = vmul.f32 %v1062, %v1129
        %v1143 = vmul.f32 %v1066, %v1129
        %v1144 = vmul.f32 %v1070, %v1129
        %v1145 = vmul.f32 %v1074, %v1129
        %v1146 = vmul.f32 %v1078, %v1129
        %v1147 = vmul.f32 %v1082, %v1129
        %v1148 = vmul.f32 %v1086, %v1129
        %v1149 = vmul.f32 %v1090, %v1129
        %v1150 = vmul.f32 %v1094, %v1129
        %v1151 = vmul.f32 %v1098, %v1129
        %v1152 = vmul.f32 %v1102, %v1129
        %v1153 = vmul.f32 %v1106, %v1129
        %v1154 = vmul.f32 %v1110, %v1129
        %v1155 = vmul.f32 %v1114, %v1129
        %v1156 = vmul.f32 %v1118, %v1129
        %v1157 = vmul.f32 %v1122, %v1129
        %v1158 = vmul.f32 %v1126, %v1129
        %v1159 = vadd.f32 %v986, %v1131
        %v1160 = vadd.f32 %v987, %v1132
        %v1161 = vadd.f32 %v988, %v1133
        %v1162 = vadd.f32 %v989, %v1134
        %v1163 = vadd.f32 %v990, %v1135
        %v1164 = vadd.f32 %v991, %v1136
        %v1165 = vadd.f32 %v992, %v1137
        %v1166 = vadd.f32 %v993, %v1138
        %v1167 = vadd.f32 %v994, %v1139
        %v1168 = vadd.f32 %v995, %v1140
        %v1169 = vadd.f32 %v996, %v1141
        %v1170 = vadd.f32 %v997, %v1142
        %v1171 = vadd.f32 %v998, %v1143
        %v1172 = vadd.f32 %v999, %v1144
        %v1173 = vadd.f32 %v1000, %v1145
        %v1174 = vadd.f32 %v1001, %v1146
        %v1175 = vadd.f32 %v1002, %v1147
        %v1176 = vadd.f32 %v1003, %v1148
        %v1177 = vadd.f32 %v1004, %v1149
        %v1178 = vadd.f32 %v1005, %v1150
        %v1179 = vadd.f32 %v1006, %v1151
        %v1180 = vadd.f32 %v1007, %v1152
        %v1181 = vadd.f32 %v1008, %v1153
        %v1182 = vadd.f32 %v1009, %v1154
        %v1183 = vadd.f32 %v1010, %v1155
        %v1184 = vadd.f32 %v1011, %v1156
        %v1185 = vadd.f32 %v1012, %v1157
        %v1186 = vadd.f32 %v1013, %v1158
        %s1187 = scalar_lea.vmem %s1, 4
        %v1188 = vld [vmem:[%s1187] sm:$0x1]
        %1189 = vset.pattern.permute.xlu0 5
        %1190 = vperm.xlu0 %1189, %v438
        %v1191 = vpop.permute.xlu0 %1190
        %1193 = vset.pattern.permute.xlu0 5
        %1194 = vperm.xlu0 %1193, %v439
        %v1195 = vpop.permute.xlu0 %1194
        %1197 = vset.pattern.permute.xlu0 5
        %1198 = vperm.xlu0 %1197, %v440
        %v1199 = vpop.permute.xlu0 %1198
        %1201 = vset.pattern.permute.xlu0 5
        %1202 = vperm.xlu0 %1201, %v441
        %v1203 = vpop.permute.xlu0 %1202
        %1205 = vset.pattern.permute.xlu0 5
        %1206 = vperm.xlu0 %1205, %v442
        %v1207 = vpop.permute.xlu0 %1206
        %1209 = vset.pattern.permute.xlu0 5
        %1210 = vperm.xlu0 %1209, %v443
        %v1211 = vpop.permute.xlu0 %1210
        %1213 = vset.pattern.permute.xlu0 5
        %1214 = vperm.xlu0 %1213, %v444
        %v1215 = vpop.permute.xlu0 %1214
        %1217 = vset.pattern.permute.xlu0 5
        %1218 = vperm.xlu0 %1217, %v445
        %v1219 = vpop.permute.xlu0 %1218
        %1221 = vset.pattern.permute.xlu0 5
        %1222 = vperm.xlu0 %1221, %v446
        %v1223 = vpop.permute.xlu0 %1222
        %1225 = vset.pattern.permute.xlu0 5
        %1226 = vperm.xlu0 %1225, %v447
        %v1227 = vpop.permute.xlu0 %1226
        %1229 = vset.pattern.permute.xlu0 5
        %1230 = vperm.xlu0 %1229, %v448
        %v1231 = vpop.permute.xlu0 %1230
        %1233 = vset.pattern.permute.xlu0 5
        %1234 = vperm.xlu0 %1233, %v449
        %v1235 = vpop.permute.xlu0 %1234
        %1237 = vset.pattern.permute.xlu0 5
        %1238 = vperm.xlu0 %1237, %v450
        %v1239 = vpop.permute.xlu0 %1238
        %1241 = vset.pattern.permute.xlu0 5
        %1242 = vperm.xlu0 %1241, %v451
        %v1243 = vpop.permute.xlu0 %1242
        %1245 = vset.pattern.permute.xlu0 5
        %1246 = vperm.xlu0 %1245, %v452
        %v1247 = vpop.permute.xlu0 %1246
        %1249 = vset.pattern.permute.xlu0 5
        %1250 = vperm.xlu0 %1249, %v453
        %v1251 = vpop.permute.xlu0 %1250
        %1253 = vset.pattern.permute.xlu0 5
        %1254 = vperm.xlu0 %1253, %v454
        %v1255 = vpop.permute.xlu0 %1254
        %1257 = vset.pattern.permute.xlu0 5
        %1258 = vperm.xlu0 %1257, %v455
        %v1259 = vpop.permute.xlu0 %1258
        %1261 = vset.pattern.permute.xlu0 5
        %1262 = vperm.xlu0 %1261, %v456
        %v1263 = vpop.permute.xlu0 %1262
        %1265 = vset.pattern.permute.xlu0 5
        %1266 = vperm.xlu0 %1265, %v457
        %v1267 = vpop.permute.xlu0 %1266
        %1269 = vset.pattern.permute.xlu0 5
        %1270 = vperm.xlu0 %1269, %v458
        %v1271 = vpop.permute.xlu0 %1270
        %1273 = vset.pattern.permute.xlu0 5
        %1274 = vperm.xlu0 %1273, %v459
        %v1275 = vpop.permute.xlu0 %1274
        %1277 = vset.pattern.permute.xlu0 5
        %1278 = vperm.xlu0 %1277, %v460
        %v1279 = vpop.permute.xlu0 %1278
        %1281 = vset.pattern.permute.xlu0 5
        %1282 = vperm.xlu0 %1281, %v461
        %v1283 = vpop.permute.xlu0 %1282
        %1285 = vset.pattern.permute.xlu0 5
        %1286 = vperm.xlu0 %1285, %v462
        %v1287 = vpop.permute.xlu0 %1286
        %1289 = vset.pattern.permute.xlu0 5
        %1290 = vperm.xlu0 %1289, %v463
        %v1291 = vpop.permute.xlu0 %1290
        %1293 = vset.pattern.permute.xlu0 5
        %1294 = vperm.xlu0 %1293, %v464
        %v1295 = vpop.permute.xlu0 %1294
        %1297 = vset.pattern.permute.xlu0 5
        %1298 = vperm.xlu0 %1297, %v465
        %v1299 = vpop.permute.xlu0 %1298
        %v1302 = vperm.slane %v1188, 0
        %v1304 = vmul.f32 %v1191, %v1302
        %v1305 = vmul.f32 %v1195, %v1302
        %v1306 = vmul.f32 %v1199, %v1302
        %v1307 = vmul.f32 %v1203, %v1302
        %v1308 = vmul.f32 %v1207, %v1302
        %v1309 = vmul.f32 %v1211, %v1302
        %v1310 = vmul.f32 %v1215, %v1302
        %v1311 = vmul.f32 %v1219, %v1302
        %v1312 = vmul.f32 %v1223, %v1302
        %v1313 = vmul.f32 %v1227, %v1302
        %v1314 = vmul.f32 %v1231, %v1302
        %v1315 = vmul.f32 %v1235, %v1302
        %v1316 = vmul.f32 %v1239, %v1302
        %v1317 = vmul.f32 %v1243, %v1302
        %v1318 = vmul.f32 %v1247, %v1302
        %v1319 = vmul.f32 %v1251, %v1302
        %v1320 = vmul.f32 %v1255, %v1302
        %v1321 = vmul.f32 %v1259, %v1302
        %v1322 = vmul.f32 %v1263, %v1302
        %v1323 = vmul.f32 %v1267, %v1302
        %v1324 = vmul.f32 %v1271, %v1302
        %v1325 = vmul.f32 %v1275, %v1302
        %v1326 = vmul.f32 %v1279, %v1302
        %v1327 = vmul.f32 %v1283, %v1302
        %v1328 = vmul.f32 %v1287, %v1302
        %v1329 = vmul.f32 %v1291, %v1302
        %v1330 = vmul.f32 %v1295, %v1302
        %v1331 = vmul.f32 %v1299, %v1302
        %v1332 = vadd.f32 %v1159, %v1304
        %v1333 = vadd.f32 %v1160, %v1305
        %v1334 = vadd.f32 %v1161, %v1306
        %v1335 = vadd.f32 %v1162, %v1307
        %v1336 = vadd.f32 %v1163, %v1308
        %v1337 = vadd.f32 %v1164, %v1309
        %v1338 = vadd.f32 %v1165, %v1310
        %v1339 = vadd.f32 %v1166, %v1311
        %v1340 = vadd.f32 %v1167, %v1312
        %v1341 = vadd.f32 %v1168, %v1313
        %v1342 = vadd.f32 %v1169, %v1314
        %v1343 = vadd.f32 %v1170, %v1315
        %v1344 = vadd.f32 %v1171, %v1316
        %v1345 = vadd.f32 %v1172, %v1317
        %v1346 = vadd.f32 %v1173, %v1318
        %v1347 = vadd.f32 %v1174, %v1319
        %v1348 = vadd.f32 %v1175, %v1320
        %v1349 = vadd.f32 %v1176, %v1321
        %v1350 = vadd.f32 %v1177, %v1322
        %v1351 = vadd.f32 %v1178, %v1323
        %v1352 = vadd.f32 %v1179, %v1324
        %v1353 = vadd.f32 %v1180, %v1325
        %v1354 = vadd.f32 %v1181, %v1326
        %v1355 = vadd.f32 %v1182, %v1327
        %v1356 = vadd.f32 %v1183, %v1328
        %v1357 = vadd.f32 %v1184, %v1329
        %v1358 = vadd.f32 %v1185, %v1330
        %v1359 = vadd.f32 %v1186, %v1331
        %s1360 = scalar_lea.vmem %s1, 5
        %v1361 = vld [vmem:[%s1360] sm:$0x1]
        %1362 = vset.pattern.permute.xlu0 6
        %1363 = vperm.xlu0 %1362, %v438
        %v1364 = vpop.permute.xlu0 %1363
        %1366 = vset.pattern.permute.xlu0 6
        %1367 = vperm.xlu0 %1366, %v439
        %v1368 = vpop.permute.xlu0 %1367
        %1370 = vset.pattern.permute.xlu0 6
        %1371 = vperm.xlu0 %1370, %v440
        %v1372 = vpop.permute.xlu0 %1371
        %1374 = vset.pattern.permute.xlu0 6
        %1375 = vperm.xlu0 %1374, %v441
        %v1376 = vpop.permute.xlu0 %1375
        %1378 = vset.pattern.permute.xlu0 6
        %1379 = vperm.xlu0 %1378, %v442
        %v1380 = vpop.permute.xlu0 %1379
        %1382 = vset.pattern.permute.xlu0 6
        %1383 = vperm.xlu0 %1382, %v443
        %v1384 = vpop.permute.xlu0 %1383
        %1386 = vset.pattern.permute.xlu0 6
        %1387 = vperm.xlu0 %1386, %v444
        %v1388 = vpop.permute.xlu0 %1387
        %1390 = vset.pattern.permute.xlu0 6
        %1391 = vperm.xlu0 %1390, %v445
        %v1392 = vpop.permute.xlu0 %1391
        %1394 = vset.pattern.permute.xlu0 6
        %1395 = vperm.xlu0 %1394, %v446
        %v1396 = vpop.permute.xlu0 %1395
        %1398 = vset.pattern.permute.xlu0 6
        %1399 = vperm.xlu0 %1398, %v447
        %v1400 = vpop.permute.xlu0 %1399
        %1402 = vset.pattern.permute.xlu0 6
        %1403 = vperm.xlu0 %1402, %v448
        %v1404 = vpop.permute.xlu0 %1403
        %1406 = vset.pattern.permute.xlu0 6
        %1407 = vperm.xlu0 %1406, %v449
        %v1408 = vpop.permute.xlu0 %1407
        %1410 = vset.pattern.permute.xlu0 6
        %1411 = vperm.xlu0 %1410, %v450
        %v1412 = vpop.permute.xlu0 %1411
        %1414 = vset.pattern.permute.xlu0 6
        %1415 = vperm.xlu0 %1414, %v451
        %v1416 = vpop.permute.xlu0 %1415
        %1418 = vset.pattern.permute.xlu0 6
        %1419 = vperm.xlu0 %1418, %v452
        %v1420 = vpop.permute.xlu0 %1419
        %1422 = vset.pattern.permute.xlu0 6
        %1423 = vperm.xlu0 %1422, %v453
        %v1424 = vpop.permute.xlu0 %1423
        %1426 = vset.pattern.permute.xlu0 6
        %1427 = vperm.xlu0 %1426, %v454
        %v1428 = vpop.permute.xlu0 %1427
        %1430 = vset.pattern.permute.xlu0 6
        %1431 = vperm.xlu0 %1430, %v455
        %v1432 = vpop.permute.xlu0 %1431
        %1434 = vset.pattern.permute.xlu0 6
        %1435 = vperm.xlu0 %1434, %v456
        %v1436 = vpop.permute.xlu0 %1435
        %1438 = vset.pattern.permute.xlu0 6
        %1439 = vperm.xlu0 %1438, %v457
        %v1440 = vpop.permute.xlu0 %1439
        %1442 = vset.pattern.permute.xlu0 6
        %1443 = vperm.xlu0 %1442, %v458
        %v1444 = vpop.permute.xlu0 %1443
        %1446 = vset.pattern.permute.xlu0 6
        %1447 = vperm.xlu0 %1446, %v459
        %v1448 = vpop.permute.xlu0 %1447
        %1450 = vset.pattern.permute.xlu0 6
        %1451 = vperm.xlu0 %1450, %v460
        %v1452 = vpop.permute.xlu0 %1451
        %1454 = vset.pattern.permute.xlu0 6
        %1455 = vperm.xlu0 %1454, %v461
        %v1456 = vpop.permute.xlu0 %1455
        %1458 = vset.pattern.permute.xlu0 6
        %1459 = vperm.xlu0 %1458, %v462
        %v1460 = vpop.permute.xlu0 %1459
        %1462 = vset.pattern.permute.xlu0 6
        %1463 = vperm.xlu0 %1462, %v463
        %v1464 = vpop.permute.xlu0 %1463
        %1466 = vset.pattern.permute.xlu0 6
        %1467 = vperm.xlu0 %1466, %v464
        %v1468 = vpop.permute.xlu0 %1467
        %1470 = vset.pattern.permute.xlu0 6
        %1471 = vperm.xlu0 %1470, %v465
        %v1472 = vpop.permute.xlu0 %1471
        %v1475 = vperm.slane %v1361, 0
        %v1477 = vmul.f32 %v1364, %v1475
        %v1478 = vmul.f32 %v1368, %v1475
        %v1479 = vmul.f32 %v1372, %v1475
        %v1480 = vmul.f32 %v1376, %v1475
        %v1481 = vmul.f32 %v1380, %v1475
        %v1482 = vmul.f32 %v1384, %v1475
        %v1483 = vmul.f32 %v1388, %v1475
        %v1484 = vmul.f32 %v1392, %v1475
        %v1485 = vmul.f32 %v1396, %v1475
        %v1486 = vmul.f32 %v1400, %v1475
        %v1487 = vmul.f32 %v1404, %v1475
        %v1488 = vmul.f32 %v1408, %v1475
        %v1489 = vmul.f32 %v1412, %v1475
        %v1490 = vmul.f32 %v1416, %v1475
        %v1491 = vmul.f32 %v1420, %v1475
        %v1492 = vmul.f32 %v1424, %v1475
        %v1493 = vmul.f32 %v1428, %v1475
        %v1494 = vmul.f32 %v1432, %v1475
        %v1495 = vmul.f32 %v1436, %v1475
        %v1496 = vmul.f32 %v1440, %v1475
        %v1497 = vmul.f32 %v1444, %v1475
        %v1498 = vmul.f32 %v1448, %v1475
        %v1499 = vmul.f32 %v1452, %v1475
        %v1500 = vmul.f32 %v1456, %v1475
        %v1501 = vmul.f32 %v1460, %v1475
        %v1502 = vmul.f32 %v1464, %v1475
        %v1503 = vmul.f32 %v1468, %v1475
        %v1504 = vmul.f32 %v1472, %v1475
        %v1505 = vadd.f32 %v1332, %v1477
        %v1506 = vadd.f32 %v1333, %v1478
        %v1507 = vadd.f32 %v1334, %v1479
        %v1508 = vadd.f32 %v1335, %v1480
        %v1509 = vadd.f32 %v1336, %v1481
        %v1510 = vadd.f32 %v1337, %v1482
        %v1511 = vadd.f32 %v1338, %v1483
        %v1512 = vadd.f32 %v1339, %v1484
        %v1513 = vadd.f32 %v1340, %v1485
        %v1514 = vadd.f32 %v1341, %v1486
        %v1515 = vadd.f32 %v1342, %v1487
        %v1516 = vadd.f32 %v1343, %v1488
        %v1517 = vadd.f32 %v1344, %v1489
        %v1518 = vadd.f32 %v1345, %v1490
        %v1519 = vadd.f32 %v1346, %v1491
        %v1520 = vadd.f32 %v1347, %v1492
        %v1521 = vadd.f32 %v1348, %v1493
        %v1522 = vadd.f32 %v1349, %v1494
        %v1523 = vadd.f32 %v1350, %v1495
        %v1524 = vadd.f32 %v1351, %v1496
        %v1525 = vadd.f32 %v1352, %v1497
        %v1526 = vadd.f32 %v1353, %v1498
        %v1527 = vadd.f32 %v1354, %v1499
        %v1528 = vadd.f32 %v1355, %v1500
        %v1529 = vadd.f32 %v1356, %v1501
        %v1530 = vadd.f32 %v1357, %v1502
        %v1531 = vadd.f32 %v1358, %v1503
        %v1532 = vadd.f32 %v1359, %v1504
        %s1533 = scalar_lea.vmem %s1, 6
        %v1534 = vld [vmem:[%s1533] sm:$0x1]
        %1536 = vset.pattern.permute.xlu0 0
        %1537 = vperm.xlu0 %1536, %v466
        %v1538 = vpop.permute.xlu0 %1537
        %1541 = vset.pattern.permute.xlu0 0
        %1542 = vperm.xlu0 %1541, %v467
        %v1543 = vpop.permute.xlu0 %1542
        %v1546 = vperm.slane %v1534, 0
        %v1548 = vmul.f32 %v482, %v1546
        %v1549 = vmul.f32 %v487, %v1546
        %v1550 = vmul.f32 %v492, %v1546
        %v1551 = vmul.f32 %v497, %v1546
        %v1552 = vmul.f32 %v502, %v1546
        %v1553 = vmul.f32 %v507, %v1546
        %v1554 = vmul.f32 %v512, %v1546
        %v1555 = vmul.f32 %v517, %v1546
        %v1556 = vmul.f32 %v522, %v1546
        %v1557 = vmul.f32 %v527, %v1546
        %v1558 = vmul.f32 %v532, %v1546
        %v1559 = vmul.f32 %v537, %v1546
        %v1560 = vmul.f32 %v542, %v1546
        %v1561 = vmul.f32 %v547, %v1546
        %v1562 = vmul.f32 %v552, %v1546
        %v1563 = vmul.f32 %v557, %v1546
        %v1564 = vmul.f32 %v562, %v1546
        %v1565 = vmul.f32 %v567, %v1546
        %v1566 = vmul.f32 %v572, %v1546
        %v1567 = vmul.f32 %v577, %v1546
        %v1568 = vmul.f32 %v582, %v1546
        %v1569 = vmul.f32 %v587, %v1546
        %v1570 = vmul.f32 %v592, %v1546
        %v1571 = vmul.f32 %v597, %v1546
        %v1572 = vmul.f32 %v602, %v1546
        %v1573 = vmul.f32 %v607, %v1546
        %v1574 = vmul.f32 %v1538, %v1546
        %v1575 = vmul.f32 %v1543, %v1546
        %v1576 = vadd.f32 %v1505, %v1548
        %v1577 = vadd.f32 %v1506, %v1549
        %v1578 = vadd.f32 %v1507, %v1550
        %v1579 = vadd.f32 %v1508, %v1551
        %v1580 = vadd.f32 %v1509, %v1552
        %v1581 = vadd.f32 %v1510, %v1553
        %v1582 = vadd.f32 %v1511, %v1554
        %v1583 = vadd.f32 %v1512, %v1555
        %v1584 = vadd.f32 %v1513, %v1556
        %v1585 = vadd.f32 %v1514, %v1557
        %v1586 = vadd.f32 %v1515, %v1558
        %v1587 = vadd.f32 %v1516, %v1559
        %v1588 = vadd.f32 %v1517, %v1560
        %v1589 = vadd.f32 %v1518, %v1561
        %v1590 = vadd.f32 %v1519, %v1562
        %v1591 = vadd.f32 %v1520, %v1563
        %v1592 = vadd.f32 %v1521, %v1564
        %v1593 = vadd.f32 %v1522, %v1565
        %v1594 = vadd.f32 %v1523, %v1566
        %v1595 = vadd.f32 %v1524, %v1567
        %v1596 = vadd.f32 %v1525, %v1568
        %v1597 = vadd.f32 %v1526, %v1569
        %v1598 = vadd.f32 %v1527, %v1570
        %v1599 = vadd.f32 %v1528, %v1571
        %v1600 = vadd.f32 %v1529, %v1572
        %v1601 = vadd.f32 %v1530, %v1573
        %v1602 = vadd.f32 %v1531, %v1574
        %v1603 = vadd.f32 %v1532, %v1575
        %s1604 = scalar_lea.vmem %s1, 7
        %v1605 = vld [vmem:[%s1604] sm:$0x1]
        %1606 = vset.pattern.permute.xlu0 1
        %1607 = vperm.xlu0 %1606, %v466
        %v1608 = vpop.permute.xlu0 %1607
        %1610 = vset.pattern.permute.xlu0 1
        %1611 = vperm.xlu0 %1610, %v467
        %v1612 = vpop.permute.xlu0 %1611
        %v1615 = vperm.slane %v1605, 0
        %v1617 = vmul.f32 %v680, %v1615
        %v1618 = vmul.f32 %v684, %v1615
        %v1619 = vmul.f32 %v688, %v1615
        %v1620 = vmul.f32 %v692, %v1615
        %v1621 = vmul.f32 %v696, %v1615
        %v1622 = vmul.f32 %v700, %v1615
        %v1623 = vmul.f32 %v704, %v1615
        %v1624 = vmul.f32 %v708, %v1615
        %v1625 = vmul.f32 %v712, %v1615
        %v1626 = vmul.f32 %v716, %v1615
        %v1627 = vmul.f32 %v720, %v1615
        %v1628 = vmul.f32 %v724, %v1615
        %v1629 = vmul.f32 %v728, %v1615
        %v1630 = vmul.f32 %v732, %v1615
        %v1631 = vmul.f32 %v736, %v1615
        %v1632 = vmul.f32 %v740, %v1615
        %v1633 = vmul.f32 %v744, %v1615
        %v1634 = vmul.f32 %v748, %v1615
        %v1635 = vmul.f32 %v752, %v1615
        %v1636 = vmul.f32 %v756, %v1615
        %v1637 = vmul.f32 %v760, %v1615
        %v1638 = vmul.f32 %v764, %v1615
        %v1639 = vmul.f32 %v768, %v1615
        %v1640 = vmul.f32 %v772, %v1615
        %v1641 = vmul.f32 %v776, %v1615
        %v1642 = vmul.f32 %v780, %v1615
        %v1643 = vmul.f32 %v1608, %v1615
        %v1644 = vmul.f32 %v1612, %v1615
        %v1645 = vadd.f32 %v1576, %v1617
        %v1646 = vadd.f32 %v1577, %v1618
        %v1647 = vadd.f32 %v1578, %v1619
        %v1648 = vadd.f32 %v1579, %v1620
        %v1649 = vadd.f32 %v1580, %v1621
        %v1650 = vadd.f32 %v1581, %v1622
        %v1651 = vadd.f32 %v1582, %v1623
        %v1652 = vadd.f32 %v1583, %v1624
        %v1653 = vadd.f32 %v1584, %v1625
        %v1654 = vadd.f32 %v1585, %v1626
        %v1655 = vadd.f32 %v1586, %v1627
        %v1656 = vadd.f32 %v1587, %v1628
        %v1657 = vadd.f32 %v1588, %v1629
        %v1658 = vadd.f32 %v1589, %v1630
        %v1659 = vadd.f32 %v1590, %v1631
        %v1660 = vadd.f32 %v1591, %v1632
        %v1661 = vadd.f32 %v1592, %v1633
        %v1662 = vadd.f32 %v1593, %v1634
        %v1663 = vadd.f32 %v1594, %v1635
        %v1664 = vadd.f32 %v1595, %v1636
        %v1665 = vadd.f32 %v1596, %v1637
        %v1666 = vadd.f32 %v1597, %v1638
        %v1667 = vadd.f32 %v1598, %v1639
        %v1668 = vadd.f32 %v1599, %v1640
        %v1669 = vadd.f32 %v1600, %v1641
        %v1670 = vadd.f32 %v1601, %v1642
        %v1671 = vadd.f32 %v1602, %v1643
        %v1672 = vadd.f32 %v1603, %v1644
        %s1673 = scalar_lea.vmem %s1, 8
        %v1674 = vld [vmem:[%s1673] sm:$0x1]
        %1675 = vset.pattern.permute.xlu0 2
        %1676 = vperm.xlu0 %1675, %v466
        %v1677 = vpop.permute.xlu0 %1676
        %1679 = vset.pattern.permute.xlu0 2
        %1680 = vperm.xlu0 %1679, %v467
        %v1681 = vpop.permute.xlu0 %1680
        %v1684 = vperm.slane %v1674, 0
        %v1686 = vmul.f32 %v853, %v1684
        %v1687 = vmul.f32 %v857, %v1684
        %v1688 = vmul.f32 %v861, %v1684
        %v1689 = vmul.f32 %v865, %v1684
        %v1690 = vmul.f32 %v869, %v1684
        %v1691 = vmul.f32 %v873, %v1684
        %v1692 = vmul.f32 %v877, %v1684
        %v1693 = vmul.f32 %v881, %v1684
        %v1694 = vmul.f32 %v885, %v1684
        %v1695 = vmul.f32 %v889, %v1684
        %v1696 = vmul.f32 %v893, %v1684
        %v1697 = vmul.f32 %v897, %v1684
        %v1698 = vmul.f32 %v901, %v1684
        %v1699 = vmul.f32 %v905, %v1684
        %v1700 = vmul.f32 %v909, %v1684
        %v1701 = vmul.f32 %v913, %v1684
        %v1702 = vmul.f32 %v917, %v1684
        %v1703 = vmul.f32 %v921, %v1684
        %v1704 = vmul.f32 %v925, %v1684
        %v1705 = vmul.f32 %v929, %v1684
        %v1706 = vmul.f32 %v933, %v1684
        %v1707 = vmul.f32 %v937, %v1684
        %v1708 = vmul.f32 %v941, %v1684
        %v1709 = vmul.f32 %v945, %v1684
        %v1710 = vmul.f32 %v949, %v1684
        %v1711 = vmul.f32 %v953, %v1684
        %v1712 = vmul.f32 %v1677, %v1684
        %v1713 = vmul.f32 %v1681, %v1684
        %v1714 = vadd.f32 %v1645, %v1686
        %v1715 = vadd.f32 %v1646, %v1687
        %v1716 = vadd.f32 %v1647, %v1688
        %v1717 = vadd.f32 %v1648, %v1689
        %v1718 = vadd.f32 %v1649, %v1690
        %v1719 = vadd.f32 %v1650, %v1691
        %v1720 = vadd.f32 %v1651, %v1692
        %v1721 = vadd.f32 %v1652, %v1693
        %v1722 = vadd.f32 %v1653, %v1694
        %v1723 = vadd.f32 %v1654, %v1695
        %v1724 = vadd.f32 %v1655, %v1696
        %v1725 = vadd.f32 %v1656, %v1697
        %v1726 = vadd.f32 %v1657, %v1698
        %v1727 = vadd.f32 %v1658, %v1699
        %v1728 = vadd.f32 %v1659, %v1700
        %v1729 = vadd.f32 %v1660, %v1701
        %v1730 = vadd.f32 %v1661, %v1702
        %v1731 = vadd.f32 %v1662, %v1703
        %v1732 = vadd.f32 %v1663, %v1704
        %v1733 = vadd.f32 %v1664, %v1705
        %v1734 = vadd.f32 %v1665, %v1706
        %v1735 = vadd.f32 %v1666, %v1707
        %v1736 = vadd.f32 %v1667, %v1708
        %v1737 = vadd.f32 %v1668, %v1709
        %v1738 = vadd.f32 %v1669, %v1710
        %v1739 = vadd.f32 %v1670, %v1711
        %v1740 = vadd.f32 %v1671, %v1712
        %v1741 = vadd.f32 %v1672, %v1713
        %v1742 = vld [vmem:[%s2] sm:$0x1]
        %v1744 = vperm.slane %v1742, 0
        %v1746 = vadd.f32 %v1714, %v1744
        %v1747 = vadd.f32 %v1715, %v1744
        %v1748 = vadd.f32 %v1716, %v1744
        %v1749 = vadd.f32 %v1717, %v1744
        %v1750 = vadd.f32 %v1718, %v1744
        %v1751 = vadd.f32 %v1719, %v1744
        %v1752 = vadd.f32 %v1720, %v1744
        %v1753 = vadd.f32 %v1721, %v1744
        %v1754 = vadd.f32 %v1722, %v1744
        %v1755 = vadd.f32 %v1723, %v1744
        %v1756 = vadd.f32 %v1724, %v1744
        %v1757 = vadd.f32 %v1725, %v1744
        %v1758 = vadd.f32 %v1726, %v1744
        %v1759 = vadd.f32 %v1727, %v1744
        %v1760 = vadd.f32 %v1728, %v1744
        %v1761 = vadd.f32 %v1729, %v1744
        %v1762 = vadd.f32 %v1730, %v1744
        %v1763 = vadd.f32 %v1731, %v1744
        %v1764 = vadd.f32 %v1732, %v1744
        %v1765 = vadd.f32 %v1733, %v1744
        %v1766 = vadd.f32 %v1734, %v1744
        %v1767 = vadd.f32 %v1735, %v1744
        %v1768 = vadd.f32 %v1736, %v1744
        %v1769 = vadd.f32 %v1737, %v1744
        %v1770 = vadd.f32 %v1738, %v1744
        %v1771 = vadd.f32 %v1739, %v1744
        %v1772 = vadd.f32 %v1740, %v1744
        %v1773 = vadd.f32 %v1741, %v1744
        %v1774 = vmax.f32 %v1746, 0.0
        %v1775 = vmax.f32 %v1747, 0.0
        %v1776 = vmax.f32 %v1748, 0.0
        %v1777 = vmax.f32 %v1749, 0.0
        %v1778 = vmax.f32 %v1750, 0.0
        %v1779 = vmax.f32 %v1751, 0.0
        %v1780 = vmax.f32 %v1752, 0.0
        %v1781 = vmax.f32 %v1753, 0.0
        %v1782 = vmax.f32 %v1754, 0.0
        %v1783 = vmax.f32 %v1755, 0.0
        %v1784 = vmax.f32 %v1756, 0.0
        %v1785 = vmax.f32 %v1757, 0.0
        %v1786 = vmax.f32 %v1758, 0.0
        %v1787 = vmax.f32 %v1759, 0.0
        %v1788 = vmax.f32 %v1760, 0.0
        %v1789 = vmax.f32 %v1761, 0.0
        %v1790 = vmax.f32 %v1762, 0.0
        %v1791 = vmax.f32 %v1763, 0.0
        %v1792 = vmax.f32 %v1764, 0.0
        %v1793 = vmax.f32 %v1765, 0.0
        %v1794 = vmax.f32 %v1766, 0.0
        %v1795 = vmax.f32 %v1767, 0.0
        %v1796 = vmax.f32 %v1768, 0.0
        %v1797 = vmax.f32 %v1769, 0.0
        %v1798 = vmax.f32 %v1770, 0.0
        %v1799 = vmax.f32 %v1771, 0.0
        %v1800 = vmax.f32 %v1772, 0.0
        %v1801 = vmax.f32 %v1773, 0.0
        %vm1802 = vcmask 64512
        %1803 = vst.msk [vmem:[#allocation2] sm:$0xff] %vm1802, %v1774
        %vm1804 = vcmask 59392
        %1805 = vst.msk [vmem:[#allocation2 + $0x8] sm:$0x7] %vm1804, %v1775
        %1806 = vst.msk [vmem:[#allocation2 + $0x10] sm:$0xff] %vm1802, %v1776
        %1807 = vst.msk [vmem:[#allocation2 + $0x18] sm:$0x7] %vm1804, %v1777
        %1808 = vst.msk [vmem:[#allocation2 + $0x20] sm:$0xff] %vm1802, %v1778
        %1809 = vst.msk [vmem:[#allocation2 + $0x28] sm:$0x7] %vm1804, %v1779
        %1810 = vst.msk [vmem:[#allocation2 + $0x30] sm:$0xff] %vm1802, %v1780
        %1811 = vst.msk [vmem:[#allocation2 + $0x38] sm:$0x7] %vm1804, %v1781
        %1812 = vst.msk [vmem:[#allocation2 + $0x40] sm:$0xff] %vm1802, %v1782
        %1813 = vst.msk [vmem:[#allocation2 + $0x48] sm:$0x7] %vm1804, %v1783
        %1814 = vst.msk [vmem:[#allocation2 + $0x50] sm:$0xff] %vm1802, %v1784
        %1815 = vst.msk [vmem:[#allocation2 + $0x58] sm:$0x7] %vm1804, %v1785
        %1816 = vst.msk [vmem:[#allocation2 + $0x60] sm:$0xff] %vm1802, %v1786
        %1817 = vst.msk [vmem:[#allocation2 + $0x68] sm:$0x7] %vm1804, %v1787
        %1818 = vst.msk [vmem:[#allocation2 + $0x70] sm:$0xff] %vm1802, %v1788
        %1819 = vst.msk [vmem:[#allocation2 + $0x78] sm:$0x7] %vm1804, %v1789
        %1820 = vst.msk [vmem:[#allocation2 + $0x80] sm:$0xff] %vm1802, %v1790
        %1821 = vst.msk [vmem:[#allocation2 + $0x88] sm:$0x7] %vm1804, %v1791
        %1822 = vst.msk [vmem:[#allocation2 + $0x90] sm:$0xff] %vm1802, %v1792
        %1823 = vst.msk [vmem:[#allocation2 + $0x98] sm:$0x7] %vm1804, %v1793
        %1824 = vst.msk [vmem:[#allocation2 + $0xa0] sm:$0xff] %vm1802, %v1794
        %1825 = vst.msk [vmem:[#allocation2 + $0xa8] sm:$0x7] %vm1804, %v1795
        %1826 = vst.msk [vmem:[#allocation2 + $0xb0] sm:$0xff] %vm1802, %v1796
        %1827 = vst.msk [vmem:[#allocation2 + $0xb8] sm:$0x7] %vm1804, %v1797
        %1828 = vst.msk [vmem:[#allocation2 + $0xc0] sm:$0xff] %vm1802, %v1798
        %1829 = vst.msk [vmem:[#allocation2 + $0xc8] sm:$0x7] %vm1804, %v1799
        %1830 = vst.msk [vmem:[#allocation2 + $0xd0] sm:$0xff] %vm1802, %v1800
        %1831 = vst.msk [vmem:[#allocation2 + $0xd8] sm:$0x7] %vm1804, %v1801
        %v1832 = vld [vmem:[%s1] sm:$0x1]
        %v1834 = vperm.slane %v1832, 0
        %v1836 = vmul.f32 %v845, %v1834
        %v1837 = vmul.f32 %v849, %v1834
        %v1838 = vmul.f32 %v853, %v1834
        %v1839 = vmul.f32 %v857, %v1834
        %v1840 = vmul.f32 %v861, %v1834
        %v1841 = vmul.f32 %v865, %v1834
        %v1842 = vmul.f32 %v869, %v1834
        %v1843 = vmul.f32 %v873, %v1834
        %v1844 = vmul.f32 %v877, %v1834
        %v1845 = vmul.f32 %v881, %v1834
        %v1846 = vmul.f32 %v885, %v1834
        %v1847 = vmul.f32 %v889, %v1834
        %v1848 = vmul.f32 %v893, %v1834
        %v1849 = vmul.f32 %v897, %v1834
        %v1850 = vmul.f32 %v901, %v1834
        %v1851 = vmul.f32 %v905, %v1834
        %v1852 = vmul.f32 %v909, %v1834
        %v1853 = vmul.f32 %v913, %v1834
        %v1854 = vmul.f32 %v917, %v1834
        %v1855 = vmul.f32 %v921, %v1834
        %v1856 = vmul.f32 %v925, %v1834
        %v1857 = vmul.f32 %v929, %v1834
        %v1858 = vmul.f32 %v933, %v1834
        %v1859 = vmul.f32 %v937, %v1834
        %v1860 = vmul.f32 %v941, %v1834
        %v1861 = vmul.f32 %v945, %v1834
        %v1862 = vmul.f32 %v949, %v1834
        %v1863 = vmul.f32 %v953, %v1834
        %v1864 = vadd.f32 %v1836, 0.0
        %v1865 = vadd.f32 %v1837, 0.0
        %v1866 = vadd.f32 %v1838, 0.0
        %v1867 = vadd.f32 %v1839, 0.0
        %v1868 = vadd.f32 %v1840, 0.0
        %v1869 = vadd.f32 %v1841, 0.0
        %v1870 = vadd.f32 %v1842, 0.0
        %v1871 = vadd.f32 %v1843, 0.0
        %v1872 = vadd.f32 %v1844, 0.0
        %v1873 = vadd.f32 %v1845, 0.0
        %v1874 = vadd.f32 %v1846, 0.0
        %v1875 = vadd.f32 %v1847, 0.0
        %v1876 = vadd.f32 %v1848, 0.0
        %v1877 = vadd.f32 %v1849, 0.0
        %v1878 = vadd.f32 %v1850, 0.0
        %v1879 = vadd.f32 %v1851, 0.0
        %v1880 = vadd.f32 %v1852, 0.0
        %v1881 = vadd.f32 %v1853, 0.0
        %v1882 = vadd.f32 %v1854, 0.0
        %v1883 = vadd.f32 %v1855, 0.0
        %v1884 = vadd.f32 %v1856, 0.0
        %v1885 = vadd.f32 %v1857, 0.0
        %v1886 = vadd.f32 %v1858, 0.0
        %v1887 = vadd.f32 %v1859, 0.0
        %v1888 = vadd.f32 %v1860, 0.0
        %v1889 = vadd.f32 %v1861, 0.0
        %v1890 = vadd.f32 %v1862, 0.0
        %v1891 = vadd.f32 %v1863, 0.0
        %v1892 = vld [vmem:[%s668] sm:$0x1]
        %1893 = vset.pattern.permute.xlu0 3
        %1894 = vperm.xlu0 %1893, %v438
        %v1895 = vpop.permute.xlu0 %1894
        %1897 = vset.pattern.permute.xlu0 3
        %1898 = vperm.xlu0 %1897, %v439
        %v1899 = vpop.permute.xlu0 %1898
        %1901 = vset.pattern.permute.xlu0 3
        %1902 = vperm.xlu0 %1901, %v440
        %v1903 = vpop.permute.xlu0 %1902
        %1905 = vset.pattern.permute.xlu0 3
        %1906 = vperm.xlu0 %1905, %v441
        %v1907 = vpop.permute.xlu0 %1906
        %1909 = vset.pattern.permute.xlu0 3
        %1910 = vperm.xlu0 %1909, %v442
        %v1911 = vpop.permute.xlu0 %1910
        %1913 = vset.pattern.permute.xlu0 3
        %1914 = vperm.xlu0 %1913, %v443
        %v1915 = vpop.permute.xlu0 %1914
        %1917 = vset.pattern.permute.xlu0 3
        %1918 = vperm.xlu0 %1917, %v444
        %v1919 = vpop.permute.xlu0 %1918
        %1921 = vset.pattern.permute.xlu0 3
        %1922 = vperm.xlu0 %1921, %v445
        %v1923 = vpop.permute.xlu0 %1922
        %1925 = vset.pattern.permute.xlu0 3
        %1926 = vperm.xlu0 %1925, %v446
        %v1927 = vpop.permute.xlu0 %1926
        %1929 = vset.pattern.permute.xlu0 3
        %1930 = vperm.xlu0 %1929, %v447
        %v1931 = vpop.permute.xlu0 %1930
        %1933 = vset.pattern.permute.xlu0 3
        %1934 = vperm.xlu0 %1933, %v448
        %v1935 = vpop.permute.xlu0 %1934
        %1937 = vset.pattern.permute.xlu0 3
        %1938 = vperm.xlu0 %1937, %v449
        %v1939 = vpop.permute.xlu0 %1938
        %1941 = vset.pattern.permute.xlu0 3
        %1942 = vperm.xlu0 %1941, %v450
        %v1943 = vpop.permute.xlu0 %1942
        %1945 = vset.pattern.permute.xlu0 3
        %1946 = vperm.xlu0 %1945, %v451
        %v1947 = vpop.permute.xlu0 %1946
        %1949 = vset.pattern.permute.xlu0 3
        %1950 = vperm.xlu0 %1949, %v452
        %v1951 = vpop.permute.xlu0 %1950
        %1953 = vset.pattern.permute.xlu0 3
        %1954 = vperm.xlu0 %1953, %v453
        %v1955 = vpop.permute.xlu0 %1954
        %1957 = vset.pattern.permute.xlu0 3
        %1958 = vperm.xlu0 %1957, %v454
        %v1959 = vpop.permute.xlu0 %1958
        %1961 = vset.pattern.permute.xlu0 3
        %1962 = vperm.xlu0 %1961, %v455
        %v1963 = vpop.permute.xlu0 %1962
        %1965 = vset.pattern.permute.xlu0 3
        %1966 = vperm.xlu0 %1965, %v456
        %v1967 = vpop.permute.xlu0 %1966
        %1969 = vset.pattern.permute.xlu0 3
        %1970 = vperm.xlu0 %1969, %v457
        %v1971 = vpop.permute.xlu0 %1970
        %1973 = vset.pattern.permute.xlu0 3
        %1974 = vperm.xlu0 %1973, %v458
        %v1975 = vpop.permute.xlu0 %1974
        %1977 = vset.pattern.permute.xlu0 3
        %1978 = vperm.xlu0 %1977, %v459
        %v1979 = vpop.permute.xlu0 %1978
        %1981 = vset.pattern.permute.xlu0 3
        %1982 = vperm.xlu0 %1981, %v460
        %v1983 = vpop.permute.xlu0 %1982
        %1985 = vset.pattern.permute.xlu0 3
        %1986 = vperm.xlu0 %1985, %v461
        %v1987 = vpop.permute.xlu0 %1986
        %1989 = vset.pattern.permute.xlu0 3
        %1990 = vperm.xlu0 %1989, %v462
        %v1991 = vpop.permute.xlu0 %1990
        %1993 = vset.pattern.permute.xlu0 3
        %1994 = vperm.xlu0 %1993, %v463
        %v1995 = vpop.permute.xlu0 %1994
        %1997 = vset.pattern.permute.xlu0 3
        %1998 = vperm.xlu0 %1997, %v464
        %v1999 = vpop.permute.xlu0 %1998
        %2001 = vset.pattern.permute.xlu0 3
        %2002 = vperm.xlu0 %2001, %v465
        %v2003 = vpop.permute.xlu0 %2002
        %v2006 = vperm.slane %v1892, 0
        %v2008 = vmul.f32 %v1895, %v2006
        %v2009 = vmul.f32 %v1899, %v2006
        %v2010 = vmul.f32 %v1903, %v2006
        %v2011 = vmul.f32 %v1907, %v2006
        %v2012 = vmul.f32 %v1911, %v2006
        %v2013 = vmul.f32 %v1915, %v2006
        %v2014 = vmul.f32 %v1919, %v2006
        %v2015 = vmul.f32 %v1923, %v2006
        %v2016 = vmul.f32 %v1927, %v2006
        %v2017 = vmul.f32 %v1931, %v2006
        %v2018 = vmul.f32 %v1935, %v2006
        %v2019 = vmul.f32 %v1939, %v2006
        %v2020 = vmul.f32 %v1943, %v2006
        %v2021 = vmul.f32 %v1947, %v2006
        %v2022 = vmul.f32 %v1951, %v2006
        %v2023 = vmul.f32 %v1955, %v2006
        %v2024 = vmul.f32 %v1959, %v2006
        %v2025 = vmul.f32 %v1963, %v2006
        %v2026 = vmul.f32 %v1967, %v2006
        %v2027 = vmul.f32 %v1971, %v2006
        %v2028 = vmul.f32 %v1975, %v2006
        %v2029 = vmul.f32 %v1979, %v2006
        %v2030 = vmul.f32 %v1983, %v2006
        %v2031 = vmul.f32 %v1987, %v2006
        %v2032 = vmul.f32 %v1991, %v2006
        %v2033 = vmul.f32 %v1995, %v2006
        %v2034 = vmul.f32 %v1999, %v2006
        %v2035 = vmul.f32 %v2003, %v2006
        %v2036 = vadd.f32 %v1864, %v2008
        %v2037 = vadd.f32 %v1865, %v2009
        %v2038 = vadd.f32 %v1866, %v2010
        %v2039 = vadd.f32 %v1867, %v2011
        %v2040 = vadd.f32 %v1868, %v2012
        %v2041 = vadd.f32 %v1869, %v2013
        %v2042 = vadd.f32 %v1870, %v2014
        %v2043 = vadd.f32 %v1871, %v2015
        %v2044 = vadd.f32 %v1872, %v2016
        %v2045 = vadd.f32 %v1873, %v2017
        %v2046 = vadd.f32 %v1874, %v2018
        %v2047 = vadd.f32 %v1875, %v2019
        %v2048 = vadd.f32 %v1876, %v2020
        %v2049 = vadd.f32 %v1877, %v2021
        %v2050 = vadd.f32 %v1878, %v2022
        %v2051 = vadd.f32 %v1879, %v2023
        %v2052 = vadd.f32 %v1880, %v2024
        %v2053 = vadd.f32 %v1881, %v2025
        %v2054 = vadd.f32 %v1882, %v2026
        %v2055 = vadd.f32 %v1883, %v2027
        %v2056 = vadd.f32 %v1884, %v2028
        %v2057 = vadd.f32 %v1885, %v2029
        %v2058 = vadd.f32 %v1886, %v2030
        %v2059 = vadd.f32 %v1887, %v2031
        %v2060 = vadd.f32 %v1888, %v2032
        %v2061 = vadd.f32 %v1889, %v2033
        %v2062 = vadd.f32 %v1890, %v2034
        %v2063 = vadd.f32 %v1891, %v2035
        %v2064 = vld [vmem:[%s841] sm:$0x1]
        %v2066 = vperm.slane %v2064, 0
        %v2068 = vmul.f32 %v472, %v2066
        %v2069 = vmul.f32 %v477, %v2066
        %v2070 = vmul.f32 %v482, %v2066
        %v2071 = vmul.f32 %v487, %v2066
        %v2072 = vmul.f32 %v492, %v2066
        %v2073 = vmul.f32 %v497, %v2066
        %v2074 = vmul.f32 %v502, %v2066
        %v2075 = vmul.f32 %v507, %v2066
        %v2076 = vmul.f32 %v512, %v2066
        %v2077 = vmul.f32 %v517, %v2066
        %v2078 = vmul.f32 %v522, %v2066
        %v2079 = vmul.f32 %v527, %v2066
        %v2080 = vmul.f32 %v532, %v2066
        %v2081 = vmul.f32 %v537, %v2066
        %v2082 = vmul.f32 %v542, %v2066
        %v2083 = vmul.f32 %v547, %v2066
        %v2084 = vmul.f32 %v552, %v2066
        %v2085 = vmul.f32 %v557, %v2066
        %v2086 = vmul.f32 %v562, %v2066
        %v2087 = vmul.f32 %v567, %v2066
        %v2088 = vmul.f32 %v572, %v2066
        %v2089 = vmul.f32 %v577, %v2066
        %v2090 = vmul.f32 %v582, %v2066
        %v2091 = vmul.f32 %v587, %v2066
        %v2092 = vmul.f32 %v592, %v2066
        %v2093 = vmul.f32 %v597, %v2066
        %v2094 = vmul.f32 %v602, %v2066
        %v2095 = vmul.f32 %v607, %v2066
        %vm2124 = vcmask 1046528
        %v2125 = vrot.slane %v2068, 1
        %v2126 = vrot.slane %v2069, 1
        %v2127 = vsel %vm2124, %v2125, %v2126
        %v2128 = vrot.slane %v2070, 1
        %v2129 = vrot.slane %v2071, 1
        %v2130 = vsel %vm2124, %v2128, %v2129
        %v2131 = vrot.slane %v2072, 1
        %v2132 = vrot.slane %v2073, 1
        %v2133 = vsel %vm2124, %v2131, %v2132
        %v2134 = vrot.slane %v2074, 1
        %v2135 = vrot.slane %v2075, 1
        %v2136 = vsel %vm2124, %v2134, %v2135
        %v2137 = vrot.slane %v2076, 1
        %v2138 = vrot.slane %v2077, 1
        %v2139 = vsel %vm2124, %v2137, %v2138
        %v2140 = vrot.slane %v2078, 1
        %v2141 = vrot.slane %v2079, 1
        %v2142 = vsel %vm2124, %v2140, %v2141
        %v2143 = vrot.slane %v2080, 1
        %v2144 = vrot.slane %v2081, 1
        %v2145 = vsel %vm2124, %v2143, %v2144
        %v2146 = vrot.slane %v2082, 1
        %v2147 = vrot.slane %v2083, 1
        %v2148 = vsel %vm2124, %v2146, %v2147
        %v2149 = vrot.slane %v2084, 1
        %v2150 = vrot.slane %v2085, 1
        %v2151 = vsel %vm2124, %v2149, %v2150
        %v2152 = vrot.slane %v2086, 1
        %v2153 = vrot.slane %v2087, 1
        %v2154 = vsel %vm2124, %v2152, %v2153
        %v2155 = vrot.slane %v2088, 1
        %v2156 = vrot.slane %v2089, 1
        %v2157 = vsel %vm2124, %v2155, %v2156
        %v2158 = vrot.slane %v2090, 1
        %v2159 = vrot.slane %v2091, 1
        %v2160 = vsel %vm2124, %v2158, %v2159
        %v2161 = vrot.slane %v2092, 1
        %v2162 = vrot.slane %v2093, 1
        %v2163 = vsel %vm2124, %v2161, %v2162
        %v2164 = vrot.slane %v2094, 1
        %v2165 = vrot.slane %v2095, 1
        %v2166 = vsel %vm2124, %v2164, %v2165
        %v2195 = vadd.f32 %v2036, %v2127
        %v2196 = vadd.f32 %v2037, %v2126
        %v2197 = vadd.f32 %v2038, %v2130
        %v2198 = vadd.f32 %v2039, %v2129
        %v2199 = vadd.f32 %v2040, %v2133
        %v2200 = vadd.f32 %v2041, %v2132
        %v2201 = vadd.f32 %v2042, %v2136
        %v2202 = vadd.f32 %v2043, %v2135
        %v2203 = vadd.f32 %v2044, %v2139
        %v2204 = vadd.f32 %v2045, %v2138
        %v2205 = vadd.f32 %v2046, %v2142
        %v2206 = vadd.f32 %v2047, %v2141
        %v2207 = vadd.f32 %v2048, %v2145
        %v2208 = vadd.f32 %v2049, %v2144
        %v2209 = vadd.f32 %v2050, %v2148
        %v2210 = vadd.f32 %v2051, %v2147
        %v2211 = vadd.f32 %v2052, %v2151
        %v2212 = vadd.f32 %v2053, %v2150
        %v2213 = vadd.f32 %v2054, %v2154
        %v2214 = vadd.f32 %v2055, %v2153
        %v2215 = vadd.f32 %v2056, %v2157
        %v2216 = vadd.f32 %v2057, %v2156
        %v2217 = vadd.f32 %v2058, %v2160
        %v2218 = vadd.f32 %v2059, %v2159
        %v2219 = vadd.f32 %v2060, %v2163
        %v2220 = vadd.f32 %v2061, %v2162
        %v2221 = vadd.f32 %v2062, %v2166
        %v2222 = vadd.f32 %v2063, %v2165
        %v2223 = vld [vmem:[%s1014] sm:$0x1]
        %v2225 = vperm.slane %v2223, 0
        %v2227 = vmul.f32 %v1364, %v2225
        %v2228 = vmul.f32 %v1368, %v2225
        %v2229 = vmul.f32 %v1372, %v2225
        %v2230 = vmul.f32 %v1376, %v2225
        %v2231 = vmul.f32 %v1380, %v2225
        %v2232 = vmul.f32 %v1384, %v2225
        %v2233 = vmul.f32 %v1388, %v2225
        %v2234 = vmul.f32 %v1392, %v2225
        %v2235 = vmul.f32 %v1396, %v2225
        %v2236 = vmul.f32 %v1400, %v2225
        %v2237 = vmul.f32 %v1404, %v2225
        %v2238 = vmul.f32 %v1408, %v2225
        %v2239 = vmul.f32 %v1412, %v2225
        %v2240 = vmul.f32 %v1416, %v2225
        %v2241 = vmul.f32 %v1420, %v2225
        %v2242 = vmul.f32 %v1424, %v2225
        %v2243 = vmul.f32 %v1428, %v2225
        %v2244 = vmul.f32 %v1432, %v2225
        %v2245 = vmul.f32 %v1436, %v2225
        %v2246 = vmul.f32 %v1440, %v2225
        %v2247 = vmul.f32 %v1444, %v2225
        %v2248 = vmul.f32 %v1448, %v2225
        %v2249 = vmul.f32 %v1452, %v2225
        %v2250 = vmul.f32 %v1456, %v2225
        %v2251 = vmul.f32 %v1460, %v2225
        %v2252 = vmul.f32 %v1464, %v2225
        %v2253 = vmul.f32 %v1468, %v2225
        %v2254 = vmul.f32 %v1472, %v2225
        %v2255 = vadd.f32 %v2195, %v2227
        %v2256 = vadd.f32 %v2196, %v2228
        %v2257 = vadd.f32 %v2197, %v2229
        %v2258 = vadd.f32 %v2198, %v2230
        %v2259 = vadd.f32 %v2199, %v2231
        %v2260 = vadd.f32 %v2200, %v2232
        %v2261 = vadd.f32 %v2201, %v2233
        %v2262 = vadd.f32 %v2202, %v2234
        %v2263 = vadd.f32 %v2203, %v2235
        %v2264 = vadd.f32 %v2204, %v2236
        %v2265 = vadd.f32 %v2205, %v2237
        %v2266 = vadd.f32 %v2206, %v2238
        %v2267 = vadd.f32 %v2207, %v2239
        %v2268 = vadd.f32 %v2208, %v2240
        %v2269 = vadd.f32 %v2209, %v2241
        %v2270 = vadd.f32 %v2210, %v2242
        %v2271 = vadd.f32 %v2211, %v2243
        %v2272 = vadd.f32 %v2212, %v2244
        %v2273 = vadd.f32 %v2213, %v2245
        %v2274 = vadd.f32 %v2214, %v2246
        %v2275 = vadd.f32 %v2215, %v2247
        %v2276 = vadd.f32 %v2216, %v2248
        %v2277 = vadd.f32 %v2217, %v2249
        %v2278 = vadd.f32 %v2218, %v2250
        %v2279 = vadd.f32 %v2219, %v2251
        %v2280 = vadd.f32 %v2220, %v2252
        %v2281 = vadd.f32 %v2221, %v2253
        %v2282 = vadd.f32 %v2222, %v2254
        %v2283 = vld [vmem:[%s1187] sm:$0x1]
        %2284 = vset.pattern.permute.xlu0 7
        %2285 = vperm.xlu0 %2284, %v438
        %v2286 = vpop.permute.xlu0 %2285
        %2288 = vset.pattern.permute.xlu0 7
        %2289 = vperm.xlu0 %2288, %v439
        %v2290 = vpop.permute.xlu0 %2289
        %2292 = vset.pattern.permute.xlu0 7
        %2293 = vperm.xlu0 %2292, %v440
        %v2294 = vpop.permute.xlu0 %2293
        %2296 = vset.pattern.permute.xlu0 7
        %2297 = vperm.xlu0 %2296, %v441
        %v2298 = vpop.permute.xlu0 %2297
        %2300 = vset.pattern.permute.xlu0 7
        %2301 = vperm.xlu0 %2300, %v442
        %v2302 = vpop.permute.xlu0 %2301
        %2304 = vset.pattern.permute.xlu0 7
        %2305 = vperm.xlu0 %2304, %v443
        %v2306 = vpop.permute.xlu0 %2305
        %2308 = vset.pattern.permute.xlu0 7
        %2309 = vperm.xlu0 %2308, %v444
        %v2310 = vpop.permute.xlu0 %2309
        %2312 = vset.pattern.permute.xlu0 7
        %2313 = vperm.xlu0 %2312, %v445
        %v2314 = vpop.permute.xlu0 %2313
        %2316 = vset.pattern.permute.xlu0 7
        %2317 = vperm.xlu0 %2316, %v446
        %v2318 = vpop.permute.xlu0 %2317
        %2320 = vset.pattern.permute.xlu0 7
        %2321 = vperm.xlu0 %2320, %v447
        %v2322 = vpop.permute.xlu0 %2321
        %2324 = vset.pattern.permute.xlu0 7
        %2325 = vperm.xlu0 %2324, %v448
        %v2326 = vpop.permute.xlu0 %2325
        %2328 = vset.pattern.permute.xlu0 7
        %2329 = vperm.xlu0 %2328, %v449
        %v2330 = vpop.permute.xlu0 %2329
        %2332 = vset.pattern.permute.xlu0 7
        %2333 = vperm.xlu0 %2332, %v450
        %v2334 = vpop.permute.xlu0 %2333
        %2336 = vset.pattern.permute.xlu0 7
        %2337 = vperm.xlu0 %2336, %v451
        %v2338 = vpop.permute.xlu0 %2337
        %2340 = vset.pattern.permute.xlu0 7
        %2341 = vperm.xlu0 %2340, %v452
        %v2342 = vpop.permute.xlu0 %2341
        %2344 = vset.pattern.permute.xlu0 7
        %2345 = vperm.xlu0 %2344, %v453
        %v2346 = vpop.permute.xlu0 %2345
        %2348 = vset.pattern.permute.xlu0 7
        %2349 = vperm.xlu0 %2348, %v454
        %v2350 = vpop.permute.xlu0 %2349
        %2352 = vset.pattern.permute.xlu0 7
        %2353 = vperm.xlu0 %2352, %v455
        %v2354 = vpop.permute.xlu0 %2353
        %2356 = vset.pattern.permute.xlu0 7
        %2357 = vperm.xlu0 %2356, %v456
        %v2358 = vpop.permute.xlu0 %2357
        %2360 = vset.pattern.permute.xlu0 7
        %2361 = vperm.xlu0 %2360, %v457
        %v2362 = vpop.permute.xlu0 %2361
        %2364 = vset.pattern.permute.xlu0 7
        %2365 = vperm.xlu0 %2364, %v458
        %v2366 = vpop.permute.xlu0 %2365
        %2368 = vset.pattern.permute.xlu0 7
        %2369 = vperm.xlu0 %2368, %v459
        %v2370 = vpop.permute.xlu0 %2369
        %2372 = vset.pattern.permute.xlu0 7
        %2373 = vperm.xlu0 %2372, %v460
        %v2374 = vpop.permute.xlu0 %2373
        %2376 = vset.pattern.permute.xlu0 7
        %2377 = vperm.xlu0 %2376, %v461
        %v2378 = vpop.permute.xlu0 %2377
        %2380 = vset.pattern.permute.xlu0 7
        %2381 = vperm.xlu0 %2380, %v462
        %v2382 = vpop.permute.xlu0 %2381
        %2384 = vset.pattern.permute.xlu0 7
        %2385 = vperm.xlu0 %2384, %v463
        %v2386 = vpop.permute.xlu0 %2385
        %2388 = vset.pattern.permute.xlu0 7
        %2389 = vperm.xlu0 %2388, %v464
        %v2390 = vpop.permute.xlu0 %2389
        %2392 = vset.pattern.permute.xlu0 7
        %2393 = vperm.xlu0 %2392, %v465
        %v2394 = vpop.permute.xlu0 %2393
        %v2397 = vperm.slane %v2283, 0
        %v2399 = vmul.f32 %v2286, %v2397
        %v2400 = vmul.f32 %v2290, %v2397
        %v2401 = vmul.f32 %v2294, %v2397
        %v2402 = vmul.f32 %v2298, %v2397
        %v2403 = vmul.f32 %v2302, %v2397
        %v2404 = vmul.f32 %v2306, %v2397
        %v2405 = vmul.f32 %v2310, %v2397
        %v2406 = vmul.f32 %v2314, %v2397
        %v2407 = vmul.f32 %v2318, %v2397
        %v2408 = vmul.f32 %v2322, %v2397
        %v2409 = vmul.f32 %v2326, %v2397
        %v2410 = vmul.f32 %v2330, %v2397
        %v2411 = vmul.f32 %v2334, %v2397
        %v2412 = vmul.f32 %v2338, %v2397
        %v2413 = vmul.f32 %v2342, %v2397
        %v2414 = vmul.f32 %v2346, %v2397
        %v2415 = vmul.f32 %v2350, %v2397
        %v2416 = vmul.f32 %v2354, %v2397
        %v2417 = vmul.f32 %v2358, %v2397
        %v2418 = vmul.f32 %v2362, %v2397
        %v2419 = vmul.f32 %v2366, %v2397
        %v2420 = vmul.f32 %v2370, %v2397
        %v2421 = vmul.f32 %v2374, %v2397
        %v2422 = vmul.f32 %v2378, %v2397
        %v2423 = vmul.f32 %v2382, %v2397
        %v2424 = vmul.f32 %v2386, %v2397
        %v2425 = vmul.f32 %v2390, %v2397
        %v2426 = vmul.f32 %v2394, %v2397
        %v2427 = vadd.f32 %v2255, %v2399
        %v2428 = vadd.f32 %v2256, %v2400
        %v2429 = vadd.f32 %v2257, %v2401
        %v2430 = vadd.f32 %v2258, %v2402
        %v2431 = vadd.f32 %v2259, %v2403
        %v2432 = vadd.f32 %v2260, %v2404
        %v2433 = vadd.f32 %v2261, %v2405
        %v2434 = vadd.f32 %v2262, %v2406
        %v2435 = vadd.f32 %v2263, %v2407
        %v2436 = vadd.f32 %v2264, %v2408
        %v2437 = vadd.f32 %v2265, %v2409
        %v2438 = vadd.f32 %v2266, %v2410
        %v2439 = vadd.f32 %v2267, %v2411
        %v2440 = vadd.f32 %v2268, %v2412
        %v2441 = vadd.f32 %v2269, %v2413
        %v2442 = vadd.f32 %v2270, %v2414
        %v2443 = vadd.f32 %v2271, %v2415
        %v2444 = vadd.f32 %v2272, %v2416
        %v2445 = vadd.f32 %v2273, %v2417
        %v2446 = vadd.f32 %v2274, %v2418
        %v2447 = vadd.f32 %v2275, %v2419
        %v2448 = vadd.f32 %v2276, %v2420
        %v2449 = vadd.f32 %v2277, %v2421
        %v2450 = vadd.f32 %v2278, %v2422
        %v2451 = vadd.f32 %v2279, %v2423
        %v2452 = vadd.f32 %v2280, %v2424
        %v2453 = vadd.f32 %v2281, %v2425
        %v2454 = vadd.f32 %v2282, %v2426
        %v2455 = vld [vmem:[%s1360] sm:$0x1]
        %v2457 = vperm.slane %v2455, 0
        %v2459 = vmul.f32 %v1018, %v2457
        %v2460 = vmul.f32 %v1022, %v2457
        %v2461 = vmul.f32 %v1026, %v2457
        %v2462 = vmul.f32 %v1030, %v2457
        %v2463 = vmul.f32 %v1034, %v2457
        %v2464 = vmul.f32 %v1038, %v2457
        %v2465 = vmul.f32 %v1042, %v2457
        %v2466 = vmul.f32 %v1046, %v2457
        %v2467 = vmul.f32 %v1050, %v2457
        %v2468 = vmul.f32 %v1054, %v2457
        %v2469 = vmul.f32 %v1058, %v2457
        %v2470 = vmul.f32 %v1062, %v2457
        %v2471 = vmul.f32 %v1066, %v2457
        %v2472 = vmul.f32 %v1070, %v2457
        %v2473 = vmul.f32 %v1074, %v2457
        %v2474 = vmul.f32 %v1078, %v2457
        %v2475 = vmul.f32 %v1082, %v2457
        %v2476 = vmul.f32 %v1086, %v2457
        %v2477 = vmul.f32 %v1090, %v2457
        %v2478 = vmul.f32 %v1094, %v2457
        %v2479 = vmul.f32 %v1098, %v2457
        %v2480 = vmul.f32 %v1102, %v2457
        %v2481 = vmul.f32 %v1106, %v2457
        %v2482 = vmul.f32 %v1110, %v2457
        %v2483 = vmul.f32 %v1114, %v2457
        %v2484 = vmul.f32 %v1118, %v2457
        %v2485 = vmul.f32 %v1122, %v2457
        %v2486 = vmul.f32 %v1126, %v2457
        %v2515 = vrot.slane %v2459, 1
        %v2516 = vrot.slane %v2460, 1
        %v2517 = vsel %vm2124, %v2515, %v2516
        %v2518 = vrot.slane %v2461, 1
        %v2519 = vrot.slane %v2462, 1
        %v2520 = vsel %vm2124, %v2518, %v2519
        %v2521 = vrot.slane %v2463, 1
        %v2522 = vrot.slane %v2464, 1
        %v2523 = vsel %vm2124, %v2521, %v2522
        %v2524 = vrot.slane %v2465, 1
        %v2525 = vrot.slane %v2466, 1
        %v2526 = vsel %vm2124, %v2524, %v2525
        %v2527 = vrot.slane %v2467, 1
        %v2528 = vrot.slane %v2468, 1
        %v2529 = vsel %vm2124, %v2527, %v2528
        %v2530 = vrot.slane %v2469, 1
        %v2531 = vrot.slane %v2470, 1
        %v2532 = vsel %vm2124, %v2530, %v2531
        %v2533 = vrot.slane %v2471, 1
        %v2534 = vrot.slane %v2472, 1
        %v2535 = vsel %vm2124, %v2533, %v2534
        %v2536 = vrot.slane %v2473, 1
        %v2537 = vrot.slane %v2474, 1
        %v2538 = vsel %vm2124, %v2536, %v2537
        %v2539 = vrot.slane %v2475, 1
        %v2540 = vrot.slane %v2476, 1
        %v2541 = vsel %vm2124, %v2539, %v2540
        %v2542 = vrot.slane %v2477, 1
        %v2543 = vrot.slane %v2478, 1
        %v2544 = vsel %vm2124, %v2542, %v2543
        %v2545 = vrot.slane %v2479, 1
        %v2546 = vrot.slane %v2480, 1
        %v2547 = vsel %vm2124, %v2545, %v2546
        %v2548 = vrot.slane %v2481, 1
        %v2549 = vrot.slane %v2482, 1
        %v2550 = vsel %vm2124, %v2548, %v2549
        %v2551 = vrot.slane %v2483, 1
        %v2552 = vrot.slane %v2484, 1
        %v2553 = vsel %vm2124, %v2551, %v2552
        %v2554 = vrot.slane %v2485, 1
        %v2555 = vrot.slane %v2486, 1
        %v2556 = vsel %vm2124, %v2554, %v2555
        %v2585 = vadd.f32 %v2427, %v2517
        %v2586 = vadd.f32 %v2428, %v2516
        %v2587 = vadd.f32 %v2429, %v2520
        %v2588 = vadd.f32 %v2430, %v2519
        %v2589 = vadd.f32 %v2431, %v2523
        %v2590 = vadd.f32 %v2432, %v2522
        %v2591 = vadd.f32 %v2433, %v2526
        %v2592 = vadd.f32 %v2434, %v2525
        %v2593 = vadd.f32 %v2435, %v2529
        %v2594 = vadd.f32 %v2436, %v2528
        %v2595 = vadd.f32 %v2437, %v2532
        %v2596 = vadd.f32 %v2438, %v2531
        %v2597 = vadd.f32 %v2439, %v2535
        %v2598 = vadd.f32 %v2440, %v2534
        %v2599 = vadd.f32 %v2441, %v2538
        %v2600 = vadd.f32 %v2442, %v2537
        %v2601 = vadd.f32 %v2443, %v2541
        %v2602 = vadd.f32 %v2444, %v2540
        %v2603 = vadd.f32 %v2445, %v2544
        %v2604 = vadd.f32 %v2446, %v2543
        %v2605 = vadd.f32 %v2447, %v2547
        %v2606 = vadd.f32 %v2448, %v2546
        %v2607 = vadd.f32 %v2449, %v2550
        %v2608 = vadd.f32 %v2450, %v2549
        %v2609 = vadd.f32 %v2451, %v2553
        %v2610 = vadd.f32 %v2452, %v2552
        %v2611 = vadd.f32 %v2453, %v2556
        %v2612 = vadd.f32 %v2454, %v2555
        %v2613 = vld [vmem:[%s1533] sm:$0x1]
        %v2615 = vperm.slane %v2613, 0
        %v2617 = vmul.f32 %v853, %v2615
        %v2618 = vmul.f32 %v857, %v2615
        %v2619 = vmul.f32 %v861, %v2615
        %v2620 = vmul.f32 %v865, %v2615
        %v2621 = vmul.f32 %v869, %v2615
        %v2622 = vmul.f32 %v873, %v2615
        %v2623 = vmul.f32 %v877, %v2615
        %v2624 = vmul.f32 %v881, %v2615
        %v2625 = vmul.f32 %v885, %v2615
        %v2626 = vmul.f32 %v889, %v2615
        %v2627 = vmul.f32 %v893, %v2615
        %v2628 = vmul.f32 %v897, %v2615
        %v2629 = vmul.f32 %v901, %v2615
        %v2630 = vmul.f32 %v905, %v2615
        %v2631 = vmul.f32 %v909, %v2615
        %v2632 = vmul.f32 %v913, %v2615
        %v2633 = vmul.f32 %v917, %v2615
        %v2634 = vmul.f32 %v921, %v2615
        %v2635 = vmul.f32 %v925, %v2615
        %v2636 = vmul.f32 %v929, %v2615
        %v2637 = vmul.f32 %v933, %v2615
        %v2638 = vmul.f32 %v937, %v2615
        %v2639 = vmul.f32 %v941, %v2615
        %v2640 = vmul.f32 %v945, %v2615
        %v2641 = vmul.f32 %v949, %v2615
        %v2642 = vmul.f32 %v953, %v2615
        %v2643 = vmul.f32 %v1677, %v2615
        %v2644 = vmul.f32 %v1681, %v2615
        %v2645 = vadd.f32 %v2585, %v2617
        %v2646 = vadd.f32 %v2586, %v2618
        %v2647 = vadd.f32 %v2587, %v2619
        %v2648 = vadd.f32 %v2588, %v2620
        %v2649 = vadd.f32 %v2589, %v2621
        %v2650 = vadd.f32 %v2590, %v2622
        %v2651 = vadd.f32 %v2591, %v2623
        %v2652 = vadd.f32 %v2592, %v2624
        %v2653 = vadd.f32 %v2593, %v2625
        %v2654 = vadd.f32 %v2594, %v2626
        %v2655 = vadd.f32 %v2595, %v2627
        %v2656 = vadd.f32 %v2596, %v2628
        %v2657 = vadd.f32 %v2597, %v2629
        %v2658 = vadd.f32 %v2598, %v2630
        %v2659 = vadd.f32 %v2599, %v2631
        %v2660 = vadd.f32 %v2600, %v2632
        %v2661 = vadd.f32 %v2601, %v2633
        %v2662 = vadd.f32 %v2602, %v2634
        %v2663 = vadd.f32 %v2603, %v2635
        %v2664 = vadd.f32 %v2604, %v2636
        %v2665 = vadd.f32 %v2605, %v2637
        %v2666 = vadd.f32 %v2606, %v2638
        %v2667 = vadd.f32 %v2607, %v2639
        %v2668 = vadd.f32 %v2608, %v2640
        %v2669 = vadd.f32 %v2609, %v2641
        %v2670 = vadd.f32 %v2610, %v2642
        %v2671 = vadd.f32 %v2611, %v2643
        %v2672 = vadd.f32 %v2612, %v2644
        %v2673 = vld [vmem:[%s1604] sm:$0x1]
        %2674 = vset.pattern.permute.xlu0 3
        %2675 = vperm.xlu0 %2674, %v466
        %v2676 = vpop.permute.xlu0 %2675
        %2678 = vset.pattern.permute.xlu0 3
        %2679 = vperm.xlu0 %2678, %v467
        %v2680 = vpop.permute.xlu0 %2679
        %v2683 = vperm.slane %v2673, 0
        %v2685 = vmul.f32 %v1903, %v2683
        %v2686 = vmul.f32 %v1907, %v2683
        %v2687 = vmul.f32 %v1911, %v2683
        %v2688 = vmul.f32 %v1915, %v2683
        %v2689 = vmul.f32 %v1919, %v2683
        %v2690 = vmul.f32 %v1923, %v2683
        %v2691 = vmul.f32 %v1927, %v2683
        %v2692 = vmul.f32 %v1931, %v2683
        %v2693 = vmul.f32 %v1935, %v2683
        %v2694 = vmul.f32 %v1939, %v2683
        %v2695 = vmul.f32 %v1943, %v2683
        %v2696 = vmul.f32 %v1947, %v2683
        %v2697 = vmul.f32 %v1951, %v2683
        %v2698 = vmul.f32 %v1955, %v2683
        %v2699 = vmul.f32 %v1959, %v2683
        %v2700 = vmul.f32 %v1963, %v2683
        %v2701 = vmul.f32 %v1967, %v2683
        %v2702 = vmul.f32 %v1971, %v2683
        %v2703 = vmul.f32 %v1975, %v2683
        %v2704 = vmul.f32 %v1979, %v2683
        %v2705 = vmul.f32 %v1983, %v2683
        %v2706 = vmul.f32 %v1987, %v2683
        %v2707 = vmul.f32 %v1991, %v2683
        %v2708 = vmul.f32 %v1995, %v2683
        %v2709 = vmul.f32 %v1999, %v2683
        %v2710 = vmul.f32 %v2003, %v2683
        %v2711 = vmul.f32 %v2676, %v2683
        %v2712 = vmul.f32 %v2680, %v2683
        %v2713 = vadd.f32 %v2645, %v2685
        %v2714 = vadd.f32 %v2646, %v2686
        %v2715 = vadd.f32 %v2647, %v2687
        %v2716 = vadd.f32 %v2648, %v2688
        %v2717 = vadd.f32 %v2649, %v2689
        %v2718 = vadd.f32 %v2650, %v2690
        %v2719 = vadd.f32 %v2651, %v2691
        %v2720 = vadd.f32 %v2652, %v2692
        %v2721 = vadd.f32 %v2653, %v2693
        %v2722 = vadd.f32 %v2654, %v2694
        %v2723 = vadd.f32 %v2655, %v2695
        %v2724 = vadd.f32 %v2656, %v2696
        %v2725 = vadd.f32 %v2657, %v2697
        %v2726 = vadd.f32 %v2658, %v2698
        %v2727 = vadd.f32 %v2659, %v2699
        %v2728 = vadd.f32 %v2660, %v2700
        %v2729 = vadd.f32 %v2661, %v2701
        %v2730 = vadd.f32 %v2662, %v2702
        %v2731 = vadd.f32 %v2663, %v2703
        %v2732 = vadd.f32 %v2664, %v2704
        %v2733 = vadd.f32 %v2665, %v2705
        %v2734 = vadd.f32 %v2666, %v2706
        %v2735 = vadd.f32 %v2667, %v2707
        %v2736 = vadd.f32 %v2668, %v2708
        %v2737 = vadd.f32 %v2669, %v2709
        %v2738 = vadd.f32 %v2670, %v2710
        %v2739 = vadd.f32 %v2671, %v2711
        %v2740 = vadd.f32 %v2672, %v2712
        %v2741 = vld [vmem:[%s1673] sm:$0x1]
        %v2743 = vperm.slane %v2741, 0
        %v2745 = vmul.f32 %v482, %v2743
        %v2746 = vmul.f32 %v487, %v2743
        %v2747 = vmul.f32 %v492, %v2743
        %v2748 = vmul.f32 %v497, %v2743
        %v2749 = vmul.f32 %v502, %v2743
        %v2750 = vmul.f32 %v507, %v2743
        %v2751 = vmul.f32 %v512, %v2743
        %v2752 = vmul.f32 %v517, %v2743
        %v2753 = vmul.f32 %v522, %v2743
        %v2754 = vmul.f32 %v527, %v2743
        %v2755 = vmul.f32 %v532, %v2743
        %v2756 = vmul.f32 %v537, %v2743
        %v2757 = vmul.f32 %v542, %v2743
        %v2758 = vmul.f32 %v547, %v2743
        %v2759 = vmul.f32 %v552, %v2743
        %v2760 = vmul.f32 %v557, %v2743
        %v2761 = vmul.f32 %v562, %v2743
        %v2762 = vmul.f32 %v567, %v2743
        %v2763 = vmul.f32 %v572, %v2743
        %v2764 = vmul.f32 %v577, %v2743
        %v2765 = vmul.f32 %v582, %v2743
        %v2766 = vmul.f32 %v587, %v2743
        %v2767 = vmul.f32 %v592, %v2743
        %v2768 = vmul.f32 %v597, %v2743
        %v2769 = vmul.f32 %v602, %v2743
        %v2770 = vmul.f32 %v607, %v2743
        %v2771 = vmul.f32 %v1538, %v2743
        %v2772 = vmul.f32 %v1543, %v2743
        %v2801 = vrot.slane %v2745, 1
        %v2802 = vrot.slane %v2746, 1
        %v2803 = vsel %vm2124, %v2801, %v2802
        %v2804 = vrot.slane %v2747, 1
        %v2805 = vrot.slane %v2748, 1
        %v2806 = vsel %vm2124, %v2804, %v2805
        %v2807 = vrot.slane %v2749, 1
        %v2808 = vrot.slane %v2750, 1
        %v2809 = vsel %vm2124, %v2807, %v2808
        %v2810 = vrot.slane %v2751, 1
        %v2811 = vrot.slane %v2752, 1
        %v2812 = vsel %vm2124, %v2810, %v2811
        %v2813 = vrot.slane %v2753, 1
        %v2814 = vrot.slane %v2754, 1
        %v2815 = vsel %vm2124, %v2813, %v2814
        %v2816 = vrot.slane %v2755, 1
        %v2817 = vrot.slane %v2756, 1
        %v2818 = vsel %vm2124, %v2816, %v2817
        %v2819 = vrot.slane %v2757, 1
        %v2820 = vrot.slane %v2758, 1
        %v2821 = vsel %vm2124, %v2819, %v2820
        %v2822 = vrot.slane %v2759, 1
        %v2823 = vrot.slane %v2760, 1
        %v2824 = vsel %vm2124, %v2822, %v2823
        %v2825 = vrot.slane %v2761, 1
        %v2826 = vrot.slane %v2762, 1
        %v2827 = vsel %vm2124, %v2825, %v2826
        %v2828 = vrot.slane %v2763, 1
        %v2829 = vrot.slane %v2764, 1
        %v2830 = vsel %vm2124, %v2828, %v2829
        %v2831 = vrot.slane %v2765, 1
        %v2832 = vrot.slane %v2766, 1
        %v2833 = vsel %vm2124, %v2831, %v2832
        %v2834 = vrot.slane %v2767, 1
        %v2835 = vrot.slane %v2768, 1
        %v2836 = vsel %vm2124, %v2834, %v2835
        %v2837 = vrot.slane %v2769, 1
        %v2838 = vrot.slane %v2770, 1
        %v2839 = vsel %vm2124, %v2837, %v2838
        %v2840 = vrot.slane %v2771, 1
        %v2841 = vrot.slane %v2772, 1
        %v2842 = vsel %vm2124, %v2840, %v2841
        %v2871 = vadd.f32 %v2713, %v2803
        %v2872 = vadd.f32 %v2714, %v2802
        %v2873 = vadd.f32 %v2715, %v2806
        %v2874 = vadd.f32 %v2716, %v2805
        %v2875 = vadd.f32 %v2717, %v2809
        %v2876 = vadd.f32 %v2718, %v2808
        %v2877 = vadd.f32 %v2719, %v2812
        %v2878 = vadd.f32 %v2720, %v2811
        %v2879 = vadd.f32 %v2721, %v2815
        %v2880 = vadd.f32 %v2722, %v2814
        %v2881 = vadd.f32 %v2723, %v2818
        %v2882 = vadd.f32 %v2724, %v2817
        %v2883 = vadd.f32 %v2725, %v2821
        %v2884 = vadd.f32 %v2726, %v2820
        %v2885 = vadd.f32 %v2727, %v2824
        %v2886 = vadd.f32 %v2728, %v2823
        %v2887 = vadd.f32 %v2729, %v2827
        %v2888 = vadd.f32 %v2730, %v2826
        %v2889 = vadd.f32 %v2731, %v2830
        %v2890 = vadd.f32 %v2732, %v2829
        %v2891 = vadd.f32 %v2733, %v2833
        %v2892 = vadd.f32 %v2734, %v2832
        %v2893 = vadd.f32 %v2735, %v2836
        %v2894 = vadd.f32 %v2736, %v2835
        %v2895 = vadd.f32 %v2737, %v2839
        %v2896 = vadd.f32 %v2738, %v2838
        %v2897 = vadd.f32 %v2739, %v2842
        %v2898 = vadd.f32 %v2740, %v2841
        %v2899 = vld [vmem:[%s2] sm:$0x1]
        %v2901 = vperm.slane %v2899, 0
        %v2903 = vadd.f32 %v2871, %v2901
        %v2904 = vadd.f32 %v2872, %v2901
        %v2905 = vadd.f32 %v2873, %v2901
        %v2906 = vadd.f32 %v2874, %v2901
        %v2907 = vadd.f32 %v2875, %v2901
        %v2908 = vadd.f32 %v2876, %v2901
        %v2909 = vadd.f32 %v2877, %v2901
        %v2910 = vadd.f32 %v2878, %v2901
        %v2911 = vadd.f32 %v2879, %v2901
        %v2912 = vadd.f32 %v2880, %v2901
        %v2913 = vadd.f32 %v2881, %v2901
        %v2914 = vadd.f32 %v2882, %v2901
        %v2915 = vadd.f32 %v2883, %v2901
        %v2916 = vadd.f32 %v2884, %v2901
        %v2917 = vadd.f32 %v2885, %v2901
        %v2918 = vadd.f32 %v2886, %v2901
        %v2919 = vadd.f32 %v2887, %v2901
        %v2920 = vadd.f32 %v2888, %v2901
        %v2921 = vadd.f32 %v2889, %v2901
        %v2922 = vadd.f32 %v2890, %v2901
        %v2923 = vadd.f32 %v2891, %v2901
        %v2924 = vadd.f32 %v2892, %v2901
        %v2925 = vadd.f32 %v2893, %v2901
        %v2926 = vadd.f32 %v2894, %v2901
        %v2927 = vadd.f32 %v2895, %v2901
        %v2928 = vadd.f32 %v2896, %v2901
        %v2929 = vadd.f32 %v2897, %v2901
        %v2930 = vadd.f32 %v2898, %v2901
        %v2931 = vmax.f32 %v2903, 0.0
        %v2932 = vmax.f32 %v2904, 0.0
        %v2933 = vmax.f32 %v2905, 0.0
        %v2934 = vmax.f32 %v2906, 0.0
        %v2935 = vmax.f32 %v2907, 0.0
        %v2936 = vmax.f32 %v2908, 0.0
        %v2937 = vmax.f32 %v2909, 0.0
        %v2938 = vmax.f32 %v2910, 0.0
        %v2939 = vmax.f32 %v2911, 0.0
        %v2940 = vmax.f32 %v2912, 0.0
        %v2941 = vmax.f32 %v2913, 0.0
        %v2942 = vmax.f32 %v2914, 0.0
        %v2943 = vmax.f32 %v2915, 0.0
        %v2944 = vmax.f32 %v2916, 0.0
        %v2945 = vmax.f32 %v2917, 0.0
        %v2946 = vmax.f32 %v2918, 0.0
        %v2947 = vmax.f32 %v2919, 0.0
        %v2948 = vmax.f32 %v2920, 0.0
        %v2949 = vmax.f32 %v2921, 0.0
        %v2950 = vmax.f32 %v2922, 0.0
        %v2951 = vmax.f32 %v2923, 0.0
        %v2952 = vmax.f32 %v2924, 0.0
        %v2953 = vmax.f32 %v2925, 0.0
        %v2954 = vmax.f32 %v2926, 0.0
        %v2955 = vmax.f32 %v2927, 0.0
        %v2956 = vmax.f32 %v2928, 0.0
        %v2957 = vmax.f32 %v2929, 0.0
        %v2958 = vmax.f32 %v2930, 0.0
        %2959 = vst.msk [vmem:[#allocation3] sm:$0xff] %vm1802, %v2931
        %2960 = vst.msk [vmem:[#allocation3 + $0x8] sm:$0x7] %vm1804, %v2932
        %2961 = vst.msk [vmem:[#allocation3 + $0x10] sm:$0xff] %vm1802, %v2933
        %2962 = vst.msk [vmem:[#allocation3 + $0x18] sm:$0x7] %vm1804, %v2934
        %2963 = vst.msk [vmem:[#allocation3 + $0x20] sm:$0xff] %vm1802, %v2935
        %2964 = vst.msk [vmem:[#allocation3 + $0x28] sm:$0x7] %vm1804, %v2936
        %2965 = vst.msk [vmem:[#allocation3 + $0x30] sm:$0xff] %vm1802, %v2937
        %2966 = vst.msk [vmem:[#allocation3 + $0x38] sm:$0x7] %vm1804, %v2938
        %2967 = vst.msk [vmem:[#allocation3 + $0x40] sm:$0xff] %vm1802, %v2939
        %2968 = vst.msk [vmem:[#allocation3 + $0x48] sm:$0x7] %vm1804, %v2940
        %2969 = vst.msk [vmem:[#allocation3 + $0x50] sm:$0xff] %vm1802, %v2941
        %2970 = vst.msk [vmem:[#allocation3 + $0x58] sm:$0x7] %vm1804, %v2942
        %2971 = vst.msk [vmem:[#allocation3 + $0x60] sm:$0xff] %vm1802, %v2943
        %2972 = vst.msk [vmem:[#allocation3 + $0x68] sm:$0x7] %vm1804, %v2944
        %2973 = vst.msk [vmem:[#allocation3 + $0x70] sm:$0xff] %vm1802, %v2945
        %2974 = vst.msk [vmem:[#allocation3 + $0x78] sm:$0x7] %vm1804, %v2946
        %2975 = vst.msk [vmem:[#allocation3 + $0x80] sm:$0xff] %vm1802, %v2947
        %2976 = vst.msk [vmem:[#allocation3 + $0x88] sm:$0x7] %vm1804, %v2948
        %2977 = vst.msk [vmem:[#allocation3 + $0x90] sm:$0xff] %vm1802, %v2949
        %2978 = vst.msk [vmem:[#allocation3 + $0x98] sm:$0x7] %vm1804, %v2950
        %2979 = vst.msk [vmem:[#allocation3 + $0xa0] sm:$0xff] %vm1802, %v2951
        %2980 = vst.msk [vmem:[#allocation3 + $0xa8] sm:$0x7] %vm1804, %v2952
        %2981 = vst.msk [vmem:[#allocation3 + $0xb0] sm:$0xff] %vm1802, %v2953
        %2982 = vst.msk [vmem:[#allocation3 + $0xb8] sm:$0x7] %vm1804, %v2954
        %2983 = vst.msk [vmem:[#allocation3 + $0xc0] sm:$0xff] %vm1802, %v2955
        %2984 = vst.msk [vmem:[#allocation3 + $0xc8] sm:$0x7] %vm1804, %v2956
        %2985 = vst.msk [vmem:[#allocation3 + $0xd0] sm:$0xff] %vm1802, %v2957
        %2986 = vst.msk [vmem:[#allocation3 + $0xd8] sm:$0x7] %vm1804, %v2958
        %v2987 = vld [vmem:[#allocation2] sm:$0xff]
        %v2988 = vld [vmem:[#allocation2 + $0x8] sm:$0x3]
        %v2989 = vld [vmem:[%s3] sm:$0xff]
        %v2990 = vld [vmem:[#allocation3] sm:$0xff]
        %v2991 = vld [vmem:[#allocation3 + $0x8] sm:$0x3]
        %s2992 = scalar_lea.vmem %s3, 8
        %v2993 = vld [vmem:[%s2992] sm:$0xff]
        %v2995 = vsel %vm1802, %v2990, 0
        %v2998 = vsel %vm1802, %v2991, 0
        %3000 = vmatpush.msra.mxu0 0.0
        %3001 = vmatpush.msra.mxu0 0.0
        %3002 = vmatpush.msra.mxu0 0.0
        %3003 = vmatpush.msra.mxu0 0.0
        %3004 = vmatpush.msra.mxu0 0.0
        %3005 = vmatpush.msra.mxu0 0.0
        %3006 = vmatpush.msra.mxu0 0.0
        %3007 = vmatpush.msra.mxu0 0.0
        %3008 = vmatpush.msra.mxu0 0.0
        %3009 = vmatpush.msra.mxu0 0.0
        %3010 = vmatpush.msra.mxu0 0.0
        %3011 = vmatpush.msra.mxu0 0.0
        %3012 = vmatpush.msra.mxu0 0.0
        %3013 = vmatpush.msra.mxu0 0.0
        %3014 = vmatpush.msra.mxu0 0.0
        %3015 = vmatpush.msra.mxu0 %v2993
        %3016 = vmatmul.f32.gmra.mxu0 %v2995
        %v3017 = vpop.f32.mrf.mxu0
        %v3018 = vadd.f32 0.0, %v3017
        %3019 = vmatmul.f32.gmra.mxu0 %v2998
        %v3020 = vpop.f32.mrf.mxu0
        %v3021 = vadd.f32 0.0, %v3020
        %3022 = vdwg.mxu0
        %v3024 = vsel %vm1802, %v2987, 0
        %v3027 = vsel %vm1802, %v2988, 0
        %3029 = vmatpush.msra.mxu0 0.0
        %3030 = vmatpush.msra.mxu0 0.0
        %3031 = vmatpush.msra.mxu0 0.0
        %3032 = vmatpush.msra.mxu0 0.0
        %3033 = vmatpush.msra.mxu0 0.0
        %3034 = vmatpush.msra.mxu0 0.0
        %3035 = vmatpush.msra.mxu0 0.0
        %3036 = vmatpush.msra.mxu0 0.0
        %3037 = vmatpush.msra.mxu0 0.0
        %3038 = vmatpush.msra.mxu0 0.0
        %3039 = vmatpush.msra.mxu0 0.0
        %3040 = vmatpush.msra.mxu0 0.0
        %3041 = vmatpush.msra.mxu0 0.0
        %3042 = vmatpush.msra.mxu0 0.0
        %3043 = vmatpush.msra.mxu0 0.0
        %3044 = vmatpush.msra.mxu0 %v2989
        %3045 = vmatmul.f32.gmra.mxu0 %v3024
        %v3046 = vpop.f32.mrf.mxu0
        %v3047 = vadd.f32 %v3018, %v3046
        %3048 = vmatmul.f32.gmra.mxu0 %v3027
        %v3049 = vpop.f32.mrf.mxu0
        %v3050 = vadd.f32 %v3021, %v3049
        %3051 = vdwg.mxu0
        %v3052 = vld [vmem:[#allocation2 + $0x1] sm:$0xff]
        %v3053 = vld [vmem:[#allocation2 + $0x9] sm:$0x3]
        %s3054 = scalar_lea.vmem %s3, 16
        %v3055 = vld [vmem:[%s3054] sm:$0xff]
        %v3057 = vsel %vm1802, %v3052, 0
        %v3060 = vsel %vm1802, %v3053, 0
        %3062 = vmatpush.msra.mxu0 0.0
        %3063 = vmatpush.msra.mxu0 0.0
        %3064 = vmatpush.msra.mxu0 0.0
        %3065 = vmatpush.msra.mxu0 0.0
        %3066 = vmatpush.msra.mxu0 0.0
        %3067 = vmatpush.msra.mxu0 0.0
        %3068 = vmatpush.msra.mxu0 0.0
        %3069 = vmatpush.msra.mxu0 0.0
        %3070 = vmatpush.msra.mxu0 0.0
        %3071 = vmatpush.msra.mxu0 0.0
        %3072 = vmatpush.msra.mxu0 0.0
        %3073 = vmatpush.msra.mxu0 0.0
        %3074 = vmatpush.msra.mxu0 0.0
        %3075 = vmatpush.msra.mxu0 0.0
        %3076 = vmatpush.msra.mxu0 0.0
        %3077 = vmatpush.msra.mxu0 %v3055
        %3078 = vmatmul.f32.gmra.mxu0 %v3057
        %v3079 = vpop.f32.mrf.mxu0
        %v3080 = vadd.f32 0.0, %v3079
        %3081 = vmatmul.f32.gmra.mxu0 %v3060
        %v3082 = vpop.f32.mrf.mxu0
        %v3083 = vadd.f32 0.0, %v3082
        %3084 = vdwg.mxu0
        %v3085 = vadd.f32 %v3047, %v3080
        %v3086 = vadd.f32 %v3050, %v3083
        %s3087 = scalar_lea.vmem [#allocation2], 16
        %v3088 = vld [vmem:[%s3087] sm:$0xff]
        %v3089 = vld [vmem:[%s3087 + $0x8] sm:$0x3]
        %s3090 = scalar_lea.vmem %s3, 24
        %v3091 = vld [vmem:[%s3090] sm:$0xff]
        %v3093 = vsel %vm1802, %v3088, 0
        %v3096 = vsel %vm1802, %v3089, 0
        %3098 = vmatpush.msra.mxu0 0.0
        %3099 = vmatpush.msra.mxu0 0.0
        %3100 = vmatpush.msra.mxu0 0.0
        %3101 = vmatpush.msra.mxu0 0.0
        %3102 = vmatpush.msra.mxu0 0.0
        %3103 = vmatpush.msra.mxu0 0.0
        %3104 = vmatpush.msra.mxu0 0.0
        %3105 = vmatpush.msra.mxu0 0.0
        %3106 = vmatpush.msra.mxu0 0.0
        %3107 = vmatpush.msra.mxu0 0.0
        %3108 = vmatpush.msra.mxu0 0.0
        %3109 = vmatpush.msra.mxu0 0.0
        %3110 = vmatpush.msra.mxu0 0.0
        %3111 = vmatpush.msra.mxu0 0.0
        %3112 = vmatpush.msra.mxu0 0.0
        %3113 = vmatpush.msra.mxu0 %v3091
        %3114 = vmatmul.f32.gmra.mxu0 %v3093
        %v3115 = vpop.f32.mrf.mxu0
        %v3116 = vadd.f32 0.0, %v3115
        %3117 = vmatmul.f32.gmra.mxu0 %v3096
        %v3118 = vpop.f32.mrf.mxu0
        %v3119 = vadd.f32 0.0, %v3118
        %3120 = vdwg.mxu0
        %v3121 = vadd.f32 %v3085, %v3116
        %v3122 = vadd.f32 %v3086, %v3119
        %s3123 = scalar_lea.vmem [#allocation3], 16
        %v3124 = vld [vmem:[%s3123] sm:$0xff]
        %v3125 = vld [vmem:[%s3123 + $0x8] sm:$0x3]
        %s3126 = scalar_lea.vmem %s3, 32
        %v3127 = vld [vmem:[%s3126] sm:$0xff]
        %v3129 = vsel %vm1802, %v3124, 0
        %v3132 = vsel %vm1802, %v3125, 0
        %3134 = vmatpush.msra.mxu0 0.0
        %3135 = vmatpush.msra.mxu0 0.0
        %3136 = vmatpush.msra.mxu0 0.0
        %3137 = vmatpush.msra.mxu0 0.0
        %3138 = vmatpush.msra.mxu0 0.0
        %3139 = vmatpush.msra.mxu0 0.0
        %3140 = vmatpush.msra.mxu0 0.0
        %3141 = vmatpush.msra.mxu0 0.0
        %3142 = vmatpush.msra.mxu0 0.0
        %3143 = vmatpush.msra.mxu0 0.0
        %3144 = vmatpush.msra.mxu0 0.0
        %3145 = vmatpush.msra.mxu0 0.0
        %3146 = vmatpush.msra.mxu0 0.0
        %3147 = vmatpush.msra.mxu0 0.0
        %3148 = vmatpush.msra.mxu0 0.0
        %3149 = vmatpush.msra.mxu0 %v3127
        %3150 = vmatmul.f32.gmra.mxu0 %v3129
        %v3151 = vpop.f32.mrf.mxu0
        %v3152 = vadd.f32 0.0, %v3151
        %3153 = vmatmul.f32.gmra.mxu0 %v3132
        %v3154 = vpop.f32.mrf.mxu0
        %v3155 = vadd.f32 0.0, %v3154
        %3156 = vdwg.mxu0
        %v3157 = vadd.f32 %v3121, %v3152
        %v3158 = vadd.f32 %v3122, %v3155
        %v3159 = vld [vmem:[%s3087 + $0x1] sm:$0xff]
        %v3160 = vld [vmem:[%s3087 + $0x9] sm:$0x3]
        %s3161 = scalar_lea.vmem %s3, 40
        %v3162 = vld [vmem:[%s3161] sm:$0xff]
        %v3164 = vsel %vm1802, %v3159, 0
        %v3167 = vsel %vm1802, %v3160, 0
        %3169 = vmatpush.msra.mxu0 0.0
        %3170 = vmatpush.msra.mxu0 0.0
        %3171 = vmatpush.msra.mxu0 0.0
        %3172 = vmatpush.msra.mxu0 0.0
        %3173 = vmatpush.msra.mxu0 0.0
        %3174 = vmatpush.msra.mxu0 0.0
        %3175 = vmatpush.msra.mxu0 0.0
        %3176 = vmatpush.msra.mxu0 0.0
        %3177 = vmatpush.msra.mxu0 0.0
        %3178 = vmatpush.msra.mxu0 0.0
        %3179 = vmatpush.msra.mxu0 0.0
        %3180 = vmatpush.msra.mxu0 0.0
        %3181 = vmatpush.msra.mxu0 0.0
        %3182 = vmatpush.msra.mxu0 0.0
        %3183 = vmatpush.msra.mxu0 0.0
        %3184 = vmatpush.msra.mxu0 %v3162
        %3185 = vmatmul.f32.gmra.mxu0 %v3164
        %v3186 = vpop.f32.mrf.mxu0
        %v3187 = vadd.f32 0.0, %v3186
        %3188 = vmatmul.f32.gmra.mxu0 %v3167
        %v3189 = vpop.f32.mrf.mxu0
        %v3190 = vadd.f32 0.0, %v3189
        %3191 = vdwg.mxu0
        %v3192 = vadd.f32 %v3157, %v3187
        %v3193 = vadd.f32 %v3158, %v3190
        %s3194 = scalar_lea.vmem [#allocation2], 32
        %v3195 = vld [vmem:[%s3194] sm:$0xff]
        %v3196 = vld [vmem:[%s3194 + $0x8] sm:$0x3]
        %s3197 = scalar_lea.vmem %s3, 48
        %v3198 = vld [vmem:[%s3197] sm:$0xff]
        %v3200 = vsel %vm1802, %v3195, 0
        %v3203 = vsel %vm1802, %v3196, 0
        %3205 = vmatpush.msra.mxu0 0.0
        %3206 = vmatpush.msra.mxu0 0.0
        %3207 = vmatpush.msra.mxu0 0.0
        %3208 = vmatpush.msra.mxu0 0.0
        %3209 = vmatpush.msra.mxu0 0.0
        %3210 = vmatpush.msra.mxu0 0.0
        %3211 = vmatpush.msra.mxu0 0.0
        %3212 = vmatpush.msra.mxu0 0.0
        %3213 = vmatpush.msra.mxu0 0.0
        %3214 = vmatpush.msra.mxu0 0.0
        %3215 = vmatpush.msra.mxu0 0.0
        %3216 = vmatpush.msra.mxu0 0.0
        %3217 = vmatpush.msra.mxu0 0.0
        %3218 = vmatpush.msra.mxu0 0.0
        %3219 = vmatpush.msra.mxu0 0.0
        %3220 = vmatpush.msra.mxu0 %v3198
        %3221 = vmatmul.f32.gmra.mxu0 %v3200
        %v3222 = vpop.f32.mrf.mxu0
        %v3223 = vadd.f32 0.0, %v3222
        %3224 = vmatmul.f32.gmra.mxu0 %v3203
        %v3225 = vpop.f32.mrf.mxu0
        %v3226 = vadd.f32 0.0, %v3225
        %3227 = vdwg.mxu0
        %v3228 = vadd.f32 %v3192, %v3223
        %v3229 = vadd.f32 %v3193, %v3226
        %s3230 = scalar_lea.vmem [#allocation3], 32
        %v3231 = vld [vmem:[%s3230] sm:$0xff]
        %v3232 = vld [vmem:[%s3230 + $0x8] sm:$0x3]
        %s3233 = scalar_lea.vmem %s3, 56
        %v3234 = vld [vmem:[%s3233] sm:$0xff]
        %v3236 = vsel %vm1802, %v3231, 0
        %v3239 = vsel %vm1802, %v3232, 0
        %3241 = vmatpush.msra.mxu0 0.0
        %3242 = vmatpush.msra.mxu0 0.0
        %3243 = vmatpush.msra.mxu0 0.0
        %3244 = vmatpush.msra.mxu0 0.0
        %3245 = vmatpush.msra.mxu0 0.0
        %3246 = vmatpush.msra.mxu0 0.0
        %3247 = vmatpush.msra.mxu0 0.0
        %3248 = vmatpush.msra.mxu0 0.0
        %3249 = vmatpush.msra.mxu0 0.0
        %3250 = vmatpush.msra.mxu0 0.0
        %3251 = vmatpush.msra.mxu0 0.0
        %3252 = vmatpush.msra.mxu0 0.0
        %3253 = vmatpush.msra.mxu0 0.0
        %3254 = vmatpush.msra.mxu0 0.0
        %3255 = vmatpush.msra.mxu0 0.0
        %3256 = vmatpush.msra.mxu0 %v3234
        %3257 = vmatmul.f32.gmra.mxu0 %v3236
        %v3258 = vpop.f32.mrf.mxu0
        %v3259 = vadd.f32 0.0, %v3258
        %3260 = vmatmul.f32.gmra.mxu0 %v3239
        %v3261 = vpop.f32.mrf.mxu0
        %v3262 = vadd.f32 0.0, %v3261
        %3263 = vdwg.mxu0
        %v3264 = vadd.f32 %v3228, %v3259
        %v3265 = vadd.f32 %v3229, %v3262
        %v3266 = vld [vmem:[%s3194 + $0x1] sm:$0xff]
        %v3267 = vld [vmem:[%s3194 + $0x9] sm:$0x3]
        %s3268 = scalar_lea.vmem %s3, 64
        %v3269 = vld [vmem:[%s3268] sm:$0xff]
        %v3271 = vsel %vm1802, %v3266, 0
        %v3274 = vsel %vm1802, %v3267, 0
        %3276 = vmatpush.msra.mxu0 0.0
        %3277 = vmatpush.msra.mxu0 0.0
        %3278 = vmatpush.msra.mxu0 0.0
        %3279 = vmatpush.msra.mxu0 0.0
        %3280 = vmatpush.msra.mxu0 0.0
        %3281 = vmatpush.msra.mxu0 0.0
        %3282 = vmatpush.msra.mxu0 0.0
        %3283 = vmatpush.msra.mxu0 0.0
        %3284 = vmatpush.msra.mxu0 0.0
        %3285 = vmatpush.msra.mxu0 0.0
        %3286 = vmatpush.msra.mxu0 0.0
        %3287 = vmatpush.msra.mxu0 0.0
        %3288 = vmatpush.msra.mxu0 0.0
        %3289 = vmatpush.msra.mxu0 0.0
        %3290 = vmatpush.msra.mxu0 0.0
        %3291 = vmatpush.msra.mxu0 %v3269
        %3292 = vmatmul.f32.gmra.mxu0 %v3271
        %v3293 = vpop.f32.mrf.mxu0
        %v3294 = vadd.f32 0.0, %v3293
        %3295 = vmatmul.f32.gmra.mxu0 %v3274
        %v3296 = vpop.f32.mrf.mxu0
        %v3297 = vadd.f32 0.0, %v3296
        %3298 = vdwg.mxu0
        %v3299 = vadd.f32 %v3264, %v3294
        %v3300 = vadd.f32 %v3265, %v3297
        %v3301 = vld [vmem:[%s4] sm:$0x1]
        %v3303 = vperm.slane %v3301, 0
        %v3305 = vadd.f32 %v3299, %v3303
        %v3306 = vadd.f32 %v3300, %v3303
        %v3307 = vmax.f32 %v3305, 0.0
        %v3308 = vmax.f32 %v3306, 0.0
        %3309 = vst.msk [vmem:[#allocation4] sm:$0xff] %vm1802, %v3307
        %vm3310 = vcmask 58368
        %3311 = vst.msk [vmem:[#allocation4 + $0x8] sm:$0x3] %vm3310, %v3308
        %v3312 = vld [vmem:[%s3194] sm:$0xff]
        %v3313 = vld [vmem:[%s3194 + $0x8] sm:$0x3]
        %v3314 = vld [vmem:[%s3] sm:$0xff]
        %v3315 = vld [vmem:[%s3230] sm:$0xff]
        %v3316 = vld [vmem:[%s3230 + $0x8] sm:$0x3]
        %v3317 = vld [vmem:[%s2992] sm:$0xff]
        %v3319 = vsel %vm1802, %v3315, 0
        %v3322 = vsel %vm1802, %v3316, 0
        %3324 = vmatpush.msra.mxu0 0.0
        %3325 = vmatpush.msra.mxu0 0.0
        %3326 = vmatpush.msra.mxu0 0.0
        %3327 = vmatpush.msra.mxu0 0.0
        %3328 = vmatpush.msra.mxu0 0.0
        %3329 = vmatpush.msra.mxu0 0.0
        %3330 = vmatpush.msra.mxu0 0.0
        %3331 = vmatpush.msra.mxu0 0.0
        %3332 = vmatpush.msra.mxu0 0.0
        %3333 = vmatpush.msra.mxu0 0.0
        %3334 = vmatpush.msra.mxu0 0.0
        %3335 = vmatpush.msra.mxu0 0.0
        %3336 = vmatpush.msra.mxu0 0.0
        %3337 = vmatpush.msra.mxu0 0.0
        %3338 = vmatpush.msra.mxu0 0.0
        %3339 = vmatpush.msra.mxu0 %v3317
        %3340 = vmatmul.f32.gmra.mxu0 %v3319
        %v3341 = vpop.f32.mrf.mxu0
        %v3342 = vadd.f32 0.0, %v3341
        %3343 = vmatmul.f32.gmra.mxu0 %v3322
        %v3344 = vpop.f32.mrf.mxu0
        %v3345 = vadd.f32 0.0, %v3344
        %3346 = vdwg.mxu0
        %v3348 = vsel %vm1802, %v3312, 0
        %v3351 = vsel %vm1802, %v3313, 0
        %3353 = vmatpush.msra.mxu0 0.0
        %3354 = vmatpush.msra.mxu0 0.0
        %3355 = vmatpush.msra.mxu0 0.0
        %3356 = vmatpush.msra.mxu0 0.0
        %3357 = vmatpush.msra.mxu0 0.0
        %3358 = vmatpush.msra.mxu0 0.0
        %3359 = vmatpush.msra.mxu0 0.0
        %3360 = vmatpush.msra.mxu0 0.0
        %3361 = vmatpush.msra.mxu0 0.0
        %3362 = vmatpush.msra.mxu0 0.0
        %3363 = vmatpush.msra.mxu0 0.0
        %3364 = vmatpush.msra.mxu0 0.0
        %3365 = vmatpush.msra.mxu0 0.0
        %3366 = vmatpush.msra.mxu0 0.0
        %3367 = vmatpush.msra.mxu0 0.0
        %3368 = vmatpush.msra.mxu0 %v3314
        %3369 = vmatmul.f32.gmra.mxu0 %v3348
        %v3370 = vpop.f32.mrf.mxu0
        %v3371 = vadd.f32 %v3342, %v3370
        %3372 = vmatmul.f32.gmra.mxu0 %v3351
        %v3373 = vpop.f32.mrf.mxu0
        %v3374 = vadd.f32 %v3345, %v3373
        %3375 = vdwg.mxu0
        %v3376 = vld [vmem:[%s3194 + $0x1] sm:$0xff]
        %v3377 = vld [vmem:[%s3194 + $0x9] sm:$0x3]
        %v3378 = vld [vmem:[%s3054] sm:$0xff]
        %v3380 = vsel %vm1802, %v3376, 0
        %v3383 = vsel %vm1802, %v3377, 0
        %3385 = vmatpush.msra.mxu0 0.0
        %3386 = vmatpush.msra.mxu0 0.0
        %3387 = vmatpush.msra.mxu0 0.0
        %3388 = vmatpush.msra.mxu0 0.0
        %3389 = vmatpush.msra.mxu0 0.0
        %3390 = vmatpush.msra.mxu0 0.0
        %3391 = vmatpush.msra.mxu0 0.0
        %3392 = vmatpush.msra.mxu0 0.0
        %3393 = vmatpush.msra.mxu0 0.0
        %3394 = vmatpush.msra.mxu0 0.0
        %3395 = vmatpush.msra.mxu0 0.0
        %3396 = vmatpush.msra.mxu0 0.0
        %3397 = vmatpush.msra.mxu0 0.0
        %3398 = vmatpush.msra.mxu0 0.0
        %3399 = vmatpush.msra.mxu0 0.0
        %3400 = vmatpush.msra.mxu0 %v3378
        %3401 = vmatmul.f32.gmra.mxu0 %v3380
        %v3402 = vpop.f32.mrf.mxu0
        %v3403 = vadd.f32 0.0, %v3402
        %3404 = vmatmul.f32.gmra.mxu0 %v3383
        %v3405 = vpop.f32.mrf.mxu0
        %v3406 = vadd.f32 0.0, %v3405
        %3407 = vdwg.mxu0
        %v3408 = vadd.f32 %v3371, %v3403
        %v3409 = vadd.f32 %v3374, %v3406
        %s3410 = scalar_lea.vmem [#allocation2], 48
        %v3411 = vld [vmem:[%s3410] sm:$0xff]
        %v3412 = vld [vmem:[%s3410 + $0x8] sm:$0x3]
        %v3413 = vld [vmem:[%s3090] sm:$0xff]
        %v3415 = vsel %vm1802, %v3411, 0
        %v3418 = vsel %vm1802, %v3412, 0
        %3420 = vmatpush.msra.mxu0 0.0
        %3421 = vmatpush.msra.mxu0 0.0
        %3422 = vmatpush.msra.mxu0 0.0
        %3423 = vmatpush.msra.mxu0 0.0
        %3424 = vmatpush.msra.mxu0 0.0
        %3425 = vmatpush.msra.mxu0 0.0
        %3426 = vmatpush.msra.mxu0 0.0
        %3427 = vmatpush.msra.mxu0 0.0
        %3428 = vmatpush.msra.mxu0 0.0
        %3429 = vmatpush.msra.mxu0 0.0
        %3430 = vmatpush.msra.mxu0 0.0
        %3431 = vmatpush.msra.mxu0 0.0
        %3432 = vmatpush.msra.mxu0 0.0
        %3433 = vmatpush.msra.mxu0 0.0
        %3434 = vmatpush.msra.mxu0 0.0
        %3435 = vmatpush.msra.mxu0 %v3413
        %3436 = vmatmul.f32.gmra.mxu0 %v3415
        %v3437 = vpop.f32.mrf.mxu0
        %v3438 = vadd.f32 0.0, %v3437
        %3439 = vmatmul.f32.gmra.mxu0 %v3418
        %v3440 = vpop.f32.mrf.mxu0
        %v3441 = vadd.f32 0.0, %v3440
        %3442 = vdwg.mxu0
        %v3443 = vadd.f32 %v3408, %v3438
        %v3444 = vadd.f32 %v3409, %v3441
        %s3445 = scalar_lea.vmem [#allocation3], 48
        %v3446 = vld [vmem:[%s3445] sm:$0xff]
        %v3447 = vld [vmem:[%s3445 + $0x8] sm:$0x3]
        %v3448 = vld [vmem:[%s3126] sm:$0xff]
        %v3450 = vsel %vm1802, %v3446, 0
        %v3453 = vsel %vm1802, %v3447, 0
        %3455 = vmatpush.msra.mxu0 0.0
        %3456 = vmatpush.msra.mxu0 0.0
        %3457 = vmatpush.msra.mxu0 0.0
        %3458 = vmatpush.msra.mxu0 0.0
        %3459 = vmatpush.msra.mxu0 0.0
        %3460 = vmatpush.msra.mxu0 0.0
        %3461 = vmatpush.msra.mxu0 0.0
        %3462 = vmatpush.msra.mxu0 0.0
        %3463 = vmatpush.msra.mxu0 0.0
        %3464 = vmatpush.msra.mxu0 0.0
        %3465 = vmatpush.msra.mxu0 0.0
        %3466 = vmatpush.msra.mxu0 0.0
        %3467 = vmatpush.msra.mxu0 0.0
        %3468 = vmatpush.msra.mxu0 0.0
        %3469 = vmatpush.msra.mxu0 0.0
        %3470 = vmatpush.msra.mxu0 %v3448
        %3471 = vmatmul.f32.gmra.mxu0 %v3450
        %v3472 = vpop.f32.mrf.mxu0
        %v3473 = vadd.f32 0.0, %v3472
        %3474 = vmatmul.f32.gmra.mxu0 %v3453
        %v3475 = vpop.f32.mrf.mxu0
        %v3476 = vadd.f32 0.0, %v3475
        %3477 = vdwg.mxu0
        %v3478 = vadd.f32 %v3443, %v3473
        %v3479 = vadd.f32 %v3444, %v3476
        %v3480 = vld [vmem:[%s3410 + $0x1] sm:$0xff]
        %v3481 = vld [vmem:[%s3410 + $0x9] sm:$0x3]
        %v3482 = vld [vmem:[%s3161] sm:$0xff]
        %v3484 = vsel %vm1802, %v3480, 0
        %v3487 = vsel %vm1802, %v3481, 0
        %3489 = vmatpush.msra.mxu0 0.0
        %3490 = vmatpush.msra.mxu0 0.0
        %3491 = vmatpush.msra.mxu0 0.0
        %3492 = vmatpush.msra.mxu0 0.0
        %3493 = vmatpush.msra.mxu0 0.0
        %3494 = vmatpush.msra.mxu0 0.0
        %3495 = vmatpush.msra.mxu0 0.0
        %3496 = vmatpush.msra.mxu0 0.0
        %3497 = vmatpush.msra.mxu0 0.0
        %3498 = vmatpush.msra.mxu0 0.0
        %3499 = vmatpush.msra.mxu0 0.0
        %3500 = vmatpush.msra.mxu0 0.0
        %3501 = vmatpush.msra.mxu0 0.0
        %3502 = vmatpush.msra.mxu0 0.0
        %3503 = vmatpush.msra.mxu0 0.0
        %3504 = vmatpush.msra.mxu0 %v3482
        %3505 = vmatmul.f32.gmra.mxu0 %v3484
        %v3506 = vpop.f32.mrf.mxu0
        %v3507 = vadd.f32 0.0, %v3506
        %3508 = vmatmul.f32.gmra.mxu0 %v3487
        %v3509 = vpop.f32.mrf.mxu0
        %v3510 = vadd.f32 0.0, %v3509
        %3511 = vdwg.mxu0
        %v3512 = vadd.f32 %v3478, %v3507
        %v3513 = vadd.f32 %v3479, %v3510
        %s3514 = scalar_lea.vmem [#allocation2], 64
        %v3515 = vld [vmem:[%s3514] sm:$0xff]
        %v3516 = vld [vmem:[%s3514 + $0x8] sm:$0x3]
        %v3517 = vld [vmem:[%s3197] sm:$0xff]
        %v3519 = vsel %vm1802, %v3515, 0
        %v3522 = vsel %vm1802, %v3516, 0
        %3524 = vmatpush.msra.mxu0 0.0
        %3525 = vmatpush.msra.mxu0 0.0
        %3526 = vmatpush.msra.mxu0 0.0
        %3527 = vmatpush.msra.mxu0 0.0
        %3528 = vmatpush.msra.mxu0 0.0
        %3529 = vmatpush.msra.mxu0 0.0
        %3530 = vmatpush.msra.mxu0 0.0
        %3531 = vmatpush.msra.mxu0 0.0
        %3532 = vmatpush.msra.mxu0 0.0
        %3533 = vmatpush.msra.mxu0 0.0
        %3534 = vmatpush.msra.mxu0 0.0
        %3535 = vmatpush.msra.mxu0 0.0
        %3536 = vmatpush.msra.mxu0 0.0
        %3537 = vmatpush.msra.mxu0 0.0
        %3538 = vmatpush.msra.mxu0 0.0
        %3539 = vmatpush.msra.mxu0 %v3517
        %3540 = vmatmul.f32.gmra.mxu0 %v3519
        %v3541 = vpop.f32.mrf.mxu0
        %v3542 = vadd.f32 0.0, %v3541
        %3543 = vmatmul.f32.gmra.mxu0 %v3522
        %v3544 = vpop.f32.mrf.mxu0
        %v3545 = vadd.f32 0.0, %v3544
        %3546 = vdwg.mxu0
        %v3547 = vadd.f32 %v3512, %v3542
        %v3548 = vadd.f32 %v3513, %v3545
        %s3549 = scalar_lea.vmem [#allocation3], 64
        %v3550 = vld [vmem:[%s3549] sm:$0xff]
        %v3551 = vld [vmem:[%s3549 + $0x8] sm:$0x3]
        %v3552 = vld [vmem:[%s3233] sm:$0xff]
        %v3554 = vsel %vm1802, %v3550, 0
        %v3557 = vsel %vm1802, %v3551, 0
        %3559 = vmatpush.msra.mxu0 0.0
        %3560 = vmatpush.msra.mxu0 0.0
        %3561 = vmatpush.msra.mxu0 0.0
        %3562 = vmatpush.msra.mxu0 0.0
        %3563 = vmatpush.msra.mxu0 0.0
        %3564 = vmatpush.msra.mxu0 0.0
        %3565 = vmatpush.msra.mxu0 0.0
        %3566 = vmatpush.msra.mxu0 0.0
        %3567 = vmatpush.msra.mxu0 0.0
        %3568 = vmatpush.msra.mxu0 0.0
        %3569 = vmatpush.msra.mxu0 0.0
        %3570 = vmatpush.msra.mxu0 0.0
        %3571 = vmatpush.msra.mxu0 0.0
        %3572 = vmatpush.msra.mxu0 0.0
        %3573 = vmatpush.msra.mxu0 0.0
        %3574 = vmatpush.msra.mxu0 %v3552
        %3575 = vmatmul.f32.gmra.mxu0 %v3554
        %v3576 = vpop.f32.mrf.mxu0
        %v3577 = vadd.f32 0.0, %v3576
        %3578 = vmatmul.f32.gmra.mxu0 %v3557
        %v3579 = vpop.f32.mrf.mxu0
        %v3580 = vadd.f32 0.0, %v3579
        %3581 = vdwg.mxu0
        %v3582 = vadd.f32 %v3547, %v3577
        %v3583 = vadd.f32 %v3548, %v3580
        %v3584 = vld [vmem:[%s3514 + $0x1] sm:$0xff]
        %v3585 = vld [vmem:[%s3514 + $0x9] sm:$0x3]
        %v3586 = vld [vmem:[%s3268] sm:$0xff]
        %v3588 = vsel %vm1802, %v3584, 0
        %v3591 = vsel %vm1802, %v3585, 0
        %3593 = vmatpush.msra.mxu0 0.0
        %3594 = vmatpush.msra.mxu0 0.0
        %3595 = vmatpush.msra.mxu0 0.0
        %3596 = vmatpush.msra.mxu0 0.0
        %3597 = vmatpush.msra.mxu0 0.0
        %3598 = vmatpush.msra.mxu0 0.0
        %3599 = vmatpush.msra.mxu0 0.0
        %3600 = vmatpush.msra.mxu0 0.0
        %3601 = vmatpush.msra.mxu0 0.0
        %3602 = vmatpush.msra.mxu0 0.0
        %3603 = vmatpush.msra.mxu0 0.0
        %3604 = vmatpush.msra.mxu0 0.0
        %3605 = vmatpush.msra.mxu0 0.0
        %3606 = vmatpush.msra.mxu0 0.0
        %3607 = vmatpush.msra.mxu0 0.0
        %3608 = vmatpush.msra.mxu0 %v3586
        %3609 = vmatmul.f32.gmra.mxu0 %v3588
        %v3610 = vpop.f32.mrf.mxu0
        %v3611 = vadd.f32 0.0, %v3610
        %3612 = vmatmul.f32.gmra.mxu0 %v3591
        %v3613 = vpop.f32.mrf.mxu0
        %v3614 = vadd.f32 0.0, %v3613
        %3615 = vdwg.mxu0
        %v3616 = vadd.f32 %v3582, %v3611
        %v3617 = vadd.f32 %v3583, %v3614
        %v3618 = vld [vmem:[%s4] sm:$0x1]
        %v3620 = vperm.slane %v3618, 0
        %v3622 = vadd.f32 %v3616, %v3620
        %v3623 = vadd.f32 %v3617, %v3620
        %v3624 = vmax.f32 %v3622, 0.0
        %v3625 = vmax.f32 %v3623, 0.0
        %s3626 = scalar_lea.vmem [#allocation4], 16
        %3627 = vst.msk [vmem:[%s3626] sm:$0xff] %vm1802, %v3624
        %3628 = vst.msk [vmem:[%s3626 + $0x8] sm:$0x3] %vm3310, %v3625
        %v3629 = vld [vmem:[%s3514] sm:$0xff]
        %v3630 = vld [vmem:[%s3514 + $0x8] sm:$0x3]
        %v3631 = vld [vmem:[%s3] sm:$0xff]
        %v3632 = vld [vmem:[%s3549] sm:$0xff]
        %v3633 = vld [vmem:[%s3549 + $0x8] sm:$0x3]
        %v3634 = vld [vmem:[%s2992] sm:$0xff]
        %v3636 = vsel %vm1802, %v3632, 0
        %v3639 = vsel %vm1802, %v3633, 0
        %3641 = vmatpush.msra.mxu0 0.0
        %3642 = vmatpush.msra.mxu0 0.0
        %3643 = vmatpush.msra.mxu0 0.0
        %3644 = vmatpush.msra.mxu0 0.0
        %3645 = vmatpush.msra.mxu0 0.0
        %3646 = vmatpush.msra.mxu0 0.0
        %3647 = vmatpush.msra.mxu0 0.0
        %3648 = vmatpush.msra.mxu0 0.0
        %3649 = vmatpush.msra.mxu0 0.0
        %3650 = vmatpush.msra.mxu0 0.0
        %3651 = vmatpush.msra.mxu0 0.0
        %3652 = vmatpush.msra.mxu0 0.0
        %3653 = vmatpush.msra.mxu0 0.0
        %3654 = vmatpush.msra.mxu0 0.0
        %3655 = vmatpush.msra.mxu0 0.0
        %3656 = vmatpush.msra.mxu0 %v3634
        %3657 = vmatmul.f32.gmra.mxu0 %v3636
        %v3658 = vpop.f32.mrf.mxu0
        %v3659 = vadd.f32 0.0, %v3658
        %3660 = vmatmul.f32.gmra.mxu0 %v3639
        %v3661 = vpop.f32.mrf.mxu0
        %v3662 = vadd.f32 0.0, %v3661
        %3663 = vdwg.mxu0
        %v3665 = vsel %vm1802, %v3629, 0
        %v3668 = vsel %vm1802, %v3630, 0
        %3670 = vmatpush.msra.mxu0 0.0
        %3671 = vmatpush.msra.mxu0 0.0
        %3672 = vmatpush.msra.mxu0 0.0
        %3673 = vmatpush.msra.mxu0 0.0
        %3674 = vmatpush.msra.mxu0 0.0
        %3675 = vmatpush.msra.mxu0 0.0
        %3676 = vmatpush.msra.mxu0 0.0
        %3677 = vmatpush.msra.mxu0 0.0
        %3678 = vmatpush.msra.mxu0 0.0
        %3679 = vmatpush.msra.mxu0 0.0
        %3680 = vmatpush.msra.mxu0 0.0
        %3681 = vmatpush.msra.mxu0 0.0
        %3682 = vmatpush.msra.mxu0 0.0
        %3683 = vmatpush.msra.mxu0 0.0
        %3684 = vmatpush.msra.mxu0 0.0
        %3685 = vmatpush.msra.mxu0 %v3631
        %3686 = vmatmul.f32.gmra.mxu0 %v3665
        %v3687 = vpop.f32.mrf.mxu0
        %v3688 = vadd.f32 %v3659, %v3687
        %3689 = vmatmul.f32.gmra.mxu0 %v3668
        %v3690 = vpop.f32.mrf.mxu0
        %v3691 = vadd.f32 %v3662, %v3690
        %3692 = vdwg.mxu0
        %v3693 = vld [vmem:[%s3514 + $0x1] sm:$0xff]
        %v3694 = vld [vmem:[%s3514 + $0x9] sm:$0x3]
        %v3695 = vld [vmem:[%s3054] sm:$0xff]
        %v3697 = vsel %vm1802, %v3693, 0
        %v3700 = vsel %vm1802, %v3694, 0
        %3702 = vmatpush.msra.mxu0 0.0
        %3703 = vmatpush.msra.mxu0 0.0
        %3704 = vmatpush.msra.mxu0 0.0
        %3705 = vmatpush.msra.mxu0 0.0
        %3706 = vmatpush.msra.mxu0 0.0
        %3707 = vmatpush.msra.mxu0 0.0
        %3708 = vmatpush.msra.mxu0 0.0
        %3709 = vmatpush.msra.mxu0 0.0
        %3710 = vmatpush.msra.mxu0 0.0
        %3711 = vmatpush.msra.mxu0 0.0
        %3712 = vmatpush.msra.mxu0 0.0
        %3713 = vmatpush.msra.mxu0 0.0
        %3714 = vmatpush.msra.mxu0 0.0
        %3715 = vmatpush.msra.mxu0 0.0
        %3716 = vmatpush.msra.mxu0 0.0
        %3717 = vmatpush.msra.mxu0 %v3695
        %3718 = vmatmul.f32.gmra.mxu0 %v3697
        %v3719 = vpop.f32.mrf.mxu0
        %v3720 = vadd.f32 0.0, %v3719
        %3721 = vmatmul.f32.gmra.mxu0 %v3700
        %v3722 = vpop.f32.mrf.mxu0
        %v3723 = vadd.f32 0.0, %v3722
        %3724 = vdwg.mxu0
        %v3725 = vadd.f32 %v3688, %v3720
        %v3726 = vadd.f32 %v3691, %v3723
        %s3727 = scalar_lea.vmem [#allocation2], 80
        %v3728 = vld [vmem:[%s3727] sm:$0xff]
        %v3729 = vld [vmem:[%s3727 + $0x8] sm:$0x3]
        %v3730 = vld [vmem:[%s3090] sm:$0xff]
        %v3732 = vsel %vm1802, %v3728, 0
        %v3735 = vsel %vm1802, %v3729, 0
        %3737 = vmatpush.msra.mxu0 0.0
        %3738 = vmatpush.msra.mxu0 0.0
        %3739 = vmatpush.msra.mxu0 0.0
        %3740 = vmatpush.msra.mxu0 0.0
        %3741 = vmatpush.msra.mxu0 0.0
        %3742 = vmatpush.msra.mxu0 0.0
        %3743 = vmatpush.msra.mxu0 0.0
        %3744 = vmatpush.msra.mxu0 0.0
        %3745 = vmatpush.msra.mxu0 0.0
        %3746 = vmatpush.msra.mxu0 0.0
        %3747 = vmatpush.msra.mxu0 0.0
        %3748 = vmatpush.msra.mxu0 0.0
        %3749 = vmatpush.msra.mxu0 0.0
        %3750 = vmatpush.msra.mxu0 0.0
        %3751 = vmatpush.msra.mxu0 0.0
        %3752 = vmatpush.msra.mxu0 %v3730
        %3753 = vmatmul.f32.gmra.mxu0 %v3732
        %v3754 = vpop.f32.mrf.mxu0
        %v3755 = vadd.f32 0.0, %v3754
        %3756 = vmatmul.f32.gmra.mxu0 %v3735
        %v3757 = vpop.f32.mrf.mxu0
        %v3758 = vadd.f32 0.0, %v3757
        %3759 = vdwg.mxu0
        %v3760 = vadd.f32 %v3725, %v3755
        %v3761 = vadd.f32 %v3726, %v3758
        %s3762 = scalar_lea.vmem [#allocation3], 80
        %v3763 = vld [vmem:[%s3762] sm:$0xff]
        %v3764 = vld [vmem:[%s3762 + $0x8] sm:$0x3]
        %v3765 = vld [vmem:[%s3126] sm:$0xff]
        %v3767 = vsel %vm1802, %v3763, 0
        %v3770 = vsel %vm1802, %v3764, 0
        %3772 = vmatpush.msra.mxu0 0.0
        %3773 = vmatpush.msra.mxu0 0.0
        %3774 = vmatpush.msra.mxu0 0.0
        %3775 = vmatpush.msra.mxu0 0.0
        %3776 = vmatpush.msra.mxu0 0.0
        %3777 = vmatpush.msra.mxu0 0.0
        %3778 = vmatpush.msra.mxu0 0.0
        %3779 = vmatpush.msra.mxu0 0.0
        %3780 = vmatpush.msra.mxu0 0.0
        %3781 = vmatpush.msra.mxu0 0.0
        %3782 = vmatpush.msra.mxu0 0.0
        %3783 = vmatpush.msra.mxu0 0.0
        %3784 = vmatpush.msra.mxu0 0.0
        %3785 = vmatpush.msra.mxu0 0.0
        %3786 = vmatpush.msra.mxu0 0.0
        %3787 = vmatpush.msra.mxu0 %v3765
        %3788 = vmatmul.f32.gmra.mxu0 %v3767
        %v3789 = vpop.f32.mrf.mxu0
        %v3790 = vadd.f32 0.0, %v3789
        %3791 = vmatmul.f32.gmra.mxu0 %v3770
        %v3792 = vpop.f32.mrf.mxu0
        %v3793 = vadd.f32 0.0, %v3792
        %3794 = vdwg.mxu0
        %v3795 = vadd.f32 %v3760, %v3790
        %v3796 = vadd.f32 %v3761, %v3793
        %v3797 = vld [vmem:[%s3727 + $0x1] sm:$0xff]
        %v3798 = vld [vmem:[%s3727 + $0x9] sm:$0x3]
        %v3799 = vld [vmem:[%s3161] sm:$0xff]
        %v3801 = vsel %vm1802, %v3797, 0
        %v3804 = vsel %vm1802, %v3798, 0
        %3806 = vmatpush.msra.mxu0 0.0
        %3807 = vmatpush.msra.mxu0 0.0
        %3808 = vmatpush.msra.mxu0 0.0
        %3809 = vmatpush.msra.mxu0 0.0
        %3810 = vmatpush.msra.mxu0 0.0
        %3811 = vmatpush.msra.mxu0 0.0
        %3812 = vmatpush.msra.mxu0 0.0
        %3813 = vmatpush.msra.mxu0 0.0
        %3814 = vmatpush.msra.mxu0 0.0
        %3815 = vmatpush.msra.mxu0 0.0
        %3816 = vmatpush.msra.mxu0 0.0
        %3817 = vmatpush.msra.mxu0 0.0
        %3818 = vmatpush.msra.mxu0 0.0
        %3819 = vmatpush.msra.mxu0 0.0
        %3820 = vmatpush.msra.mxu0 0.0
        %3821 = vmatpush.msra.mxu0 %v3799
        %3822 = vmatmul.f32.gmra.mxu0 %v3801
        %v3823 = vpop.f32.mrf.mxu0
        %v3824 = vadd.f32 0.0, %v3823
        %3825 = vmatmul.f32.gmra.mxu0 %v3804
        %v3826 = vpop.f32.mrf.mxu0
        %v3827 = vadd.f32 0.0, %v3826
        %3828 = vdwg.mxu0
        %v3829 = vadd.f32 %v3795, %v3824
        %v3830 = vadd.f32 %v3796, %v3827
        %s3831 = scalar_lea.vmem [#allocation2], 96
        %v3832 = vld [vmem:[%s3831] sm:$0xff]
        %v3833 = vld [vmem:[%s3831 + $0x8] sm:$0x3]
        %v3834 = vld [vmem:[%s3197] sm:$0xff]
        %v3836 = vsel %vm1802, %v3832, 0
        %v3839 = vsel %vm1802, %v3833, 0
        %3841 = vmatpush.msra.mxu0 0.0
        %3842 = vmatpush.msra.mxu0 0.0
        %3843 = vmatpush.msra.mxu0 0.0
        %3844 = vmatpush.msra.mxu0 0.0
        %3845 = vmatpush.msra.mxu0 0.0
        %3846 = vmatpush.msra.mxu0 0.0
        %3847 = vmatpush.msra.mxu0 0.0
        %3848 = vmatpush.msra.mxu0 0.0
        %3849 = vmatpush.msra.mxu0 0.0
        %3850 = vmatpush.msra.mxu0 0.0
        %3851 = vmatpush.msra.mxu0 0.0
        %3852 = vmatpush.msra.mxu0 0.0
        %3853 = vmatpush.msra.mxu0 0.0
        %3854 = vmatpush.msra.mxu0 0.0
        %3855 = vmatpush.msra.mxu0 0.0
        %3856 = vmatpush.msra.mxu0 %v3834
        %3857 = vmatmul.f32.gmra.mxu0 %v3836
        %v3858 = vpop.f32.mrf.mxu0
        %v3859 = vadd.f32 0.0, %v3858
        %3860 = vmatmul.f32.gmra.mxu0 %v3839
        %v3861 = vpop.f32.mrf.mxu0
        %v3862 = vadd.f32 0.0, %v3861
        %3863 = vdwg.mxu0
        %v3864 = vadd.f32 %v3829, %v3859
        %v3865 = vadd.f32 %v3830, %v3862
        %s3866 = scalar_lea.vmem [#allocation3], 96
        %v3867 = vld [vmem:[%s3866] sm:$0xff]
        %v3868 = vld [vmem:[%s3866 + $0x8] sm:$0x3]
        %v3869 = vld [vmem:[%s3233] sm:$0xff]
        %v3871 = vsel %vm1802, %v3867, 0
        %v3874 = vsel %vm1802, %v3868, 0
        %3876 = vmatpush.msra.mxu0 0.0
        %3877 = vmatpush.msra.mxu0 0.0
        %3878 = vmatpush.msra.mxu0 0.0
        %3879 = vmatpush.msra.mxu0 0.0
        %3880 = vmatpush.msra.mxu0 0.0
        %3881 = vmatpush.msra.mxu0 0.0
        %3882 = vmatpush.msra.mxu0 0.0
        %3883 = vmatpush.msra.mxu0 0.0
        %3884 = vmatpush.msra.mxu0 0.0
        %3885 = vmatpush.msra.mxu0 0.0
        %3886 = vmatpush.msra.mxu0 0.0
        %3887 = vmatpush.msra.mxu0 0.0
        %3888 = vmatpush.msra.mxu0 0.0
        %3889 = vmatpush.msra.mxu0 0.0
        %3890 = vmatpush.msra.mxu0 0.0
        %3891 = vmatpush.msra.mxu0 %v3869
        %3892 = vmatmul.f32.gmra.mxu0 %v3871
        %v3893 = vpop.f32.mrf.mxu0
        %v3894 = vadd.f32 0.0, %v3893
        %3895 = vmatmul.f32.gmra.mxu0 %v3874
        %v3896 = vpop.f32.mrf.mxu0
        %v3897 = vadd.f32 0.0, %v3896
        %3898 = vdwg.mxu0
        %v3899 = vadd.f32 %v3864, %v3894
        %v3900 = vadd.f32 %v3865, %v3897
        %v3901 = vld [vmem:[%s3831 + $0x1] sm:$0xff]
        %v3902 = vld [vmem:[%s3831 + $0x9] sm:$0x3]
        %v3903 = vld [vmem:[%s3268] sm:$0xff]
        %v3905 = vsel %vm1802, %v3901, 0
        %v3908 = vsel %vm1802, %v3902, 0
        %3910 = vmatpush.msra.mxu0 0.0
        %3911 = vmatpush.msra.mxu0 0.0
        %3912 = vmatpush.msra.mxu0 0.0
        %3913 = vmatpush.msra.mxu0 0.0
        %3914 = vmatpush.msra.mxu0 0.0
        %3915 = vmatpush.msra.mxu0 0.0
        %3916 = vmatpush.msra.mxu0 0.0
        %3917 = vmatpush.msra.mxu0 0.0
        %3918 = vmatpush.msra.mxu0 0.0
        %3919 = vmatpush.msra.mxu0 0.0
        %3920 = vmatpush.msra.mxu0 0.0
        %3921 = vmatpush.msra.mxu0 0.0
        %3922 = vmatpush.msra.mxu0 0.0
        %3923 = vmatpush.msra.mxu0 0.0
        %3924 = vmatpush.msra.mxu0 0.0
        %3925 = vmatpush.msra.mxu0 %v3903
        %3926 = vmatmul.f32.gmra.mxu0 %v3905
        %v3927 = vpop.f32.mrf.mxu0
        %v3928 = vadd.f32 0.0, %v3927
        %3929 = vmatmul.f32.gmra.mxu0 %v3908
        %v3930 = vpop.f32.mrf.mxu0
        %v3931 = vadd.f32 0.0, %v3930
        %3932 = vdwg.mxu0
        %v3933 = vadd.f32 %v3899, %v3928
        %v3934 = vadd.f32 %v3900, %v3931
        %v3935 = vld [vmem:[%s4] sm:$0x1]
        %v3937 = vperm.slane %v3935, 0
        %v3939 = vadd.f32 %v3933, %v3937
        %v3940 = vadd.f32 %v3934, %v3937
        %v3941 = vmax.f32 %v3939, 0.0
        %v3942 = vmax.f32 %v3940, 0.0
        %s3943 = scalar_lea.vmem [#allocation4], 32
        %3944 = vst.msk [vmem:[%s3943] sm:$0xff] %vm1802, %v3941
        %3945 = vst.msk [vmem:[%s3943 + $0x8] sm:$0x3] %vm3310, %v3942
        %v3946 = vld [vmem:[%s3831] sm:$0xff]
        %v3947 = vld [vmem:[%s3831 + $0x8] sm:$0x3]
        %v3948 = vld [vmem:[%s3] sm:$0xff]
        %v3949 = vld [vmem:[%s3866] sm:$0xff]
        %v3950 = vld [vmem:[%s3866 + $0x8] sm:$0x3]
        %v3951 = vld [vmem:[%s2992] sm:$0xff]
        %v3953 = vsel %vm1802, %v3949, 0
        %v3956 = vsel %vm1802, %v3950, 0
        %3958 = vmatpush.msra.mxu0 0.0
        %3959 = vmatpush.msra.mxu0 0.0
        %3960 = vmatpush.msra.mxu0 0.0
        %3961 = vmatpush.msra.mxu0 0.0
        %3962 = vmatpush.msra.mxu0 0.0
        %3963 = vmatpush.msra.mxu0 0.0
        %3964 = vmatpush.msra.mxu0 0.0
        %3965 = vmatpush.msra.mxu0 0.0
        %3966 = vmatpush.msra.mxu0 0.0
        %3967 = vmatpush.msra.mxu0 0.0
        %3968 = vmatpush.msra.mxu0 0.0
        %3969 = vmatpush.msra.mxu0 0.0
        %3970 = vmatpush.msra.mxu0 0.0
        %3971 = vmatpush.msra.mxu0 0.0
        %3972 = vmatpush.msra.mxu0 0.0
        %3973 = vmatpush.msra.mxu0 %v3951
        %3974 = vmatmul.f32.gmra.mxu0 %v3953
        %v3975 = vpop.f32.mrf.mxu0
        %v3976 = vadd.f32 0.0, %v3975
        %3977 = vmatmul.f32.gmra.mxu0 %v3956
        %v3978 = vpop.f32.mrf.mxu0
        %v3979 = vadd.f32 0.0, %v3978
        %3980 = vdwg.mxu0
        %v3982 = vsel %vm1802, %v3946, 0
        %v3985 = vsel %vm1802, %v3947, 0
        %3987 = vmatpush.msra.mxu0 0.0
        %3988 = vmatpush.msra.mxu0 0.0
        %3989 = vmatpush.msra.mxu0 0.0
        %3990 = vmatpush.msra.mxu0 0.0
        %3991 = vmatpush.msra.mxu0 0.0
        %3992 = vmatpush.msra.mxu0 0.0
        %3993 = vmatpush.msra.mxu0 0.0
        %3994 = vmatpush.msra.mxu0 0.0
        %3995 = vmatpush.msra.mxu0 0.0
        %3996 = vmatpush.msra.mxu0 0.0
        %3997 = vmatpush.msra.mxu0 0.0
        %3998 = vmatpush.msra.mxu0 0.0
        %3999 = vmatpush.msra.mxu0 0.0
        %4000 = vmatpush.msra.mxu0 0.0
        %4001 = vmatpush.msra.mxu0 0.0
        %4002 = vmatpush.msra.mxu0 %v3948
        %4003 = vmatmul.f32.gmra.mxu0 %v3982
        %v4004 = vpop.f32.mrf.mxu0
        %v4005 = vadd.f32 %v3976, %v4004
        %4006 = vmatmul.f32.gmra.mxu0 %v3985
        %v4007 = vpop.f32.mrf.mxu0
        %v4008 = vadd.f32 %v3979, %v4007
        %4009 = vdwg.mxu0
        %v4010 = vld [vmem:[%s3831 + $0x1] sm:$0xff]
        %v4011 = vld [vmem:[%s3831 + $0x9] sm:$0x3]
        %v4012 = vld [vmem:[%s3054] sm:$0xff]
        %v4014 = vsel %vm1802, %v4010, 0
        %v4017 = vsel %vm1802, %v4011, 0
        %4019 = vmatpush.msra.mxu0 0.0
        %4020 = vmatpush.msra.mxu0 0.0
        %4021 = vmatpush.msra.mxu0 0.0
        %4022 = vmatpush.msra.mxu0 0.0
        %4023 = vmatpush.msra.mxu0 0.0
        %4024 = vmatpush.msra.mxu0 0.0
        %4025 = vmatpush.msra.mxu0 0.0
        %4026 = vmatpush.msra.mxu0 0.0
        %4027 = vmatpush.msra.mxu0 0.0
        %4028 = vmatpush.msra.mxu0 0.0
        %4029 = vmatpush.msra.mxu0 0.0
        %4030 = vmatpush.msra.mxu0 0.0
        %4031 = vmatpush.msra.mxu0 0.0
        %4032 = vmatpush.msra.mxu0 0.0
        %4033 = vmatpush.msra.mxu0 0.0
        %4034 = vmatpush.msra.mxu0 %v4012
        %4035 = vmatmul.f32.gmra.mxu0 %v4014
        %v4036 = vpop.f32.mrf.mxu0
        %v4037 = vadd.f32 0.0, %v4036
        %4038 = vmatmul.f32.gmra.mxu0 %v4017
        %v4039 = vpop.f32.mrf.mxu0
        %v4040 = vadd.f32 0.0, %v4039
        %4041 = vdwg.mxu0
        %v4042 = vadd.f32 %v4005, %v4037
        %v4043 = vadd.f32 %v4008, %v4040
        %s4044 = scalar_lea.vmem [#allocation2], 112
        %v4045 = vld [vmem:[%s4044] sm:$0xff]
        %v4046 = vld [vmem:[%s4044 + $0x8] sm:$0x3]
        %v4047 = vld [vmem:[%s3090] sm:$0xff]
        %v4049 = vsel %vm1802, %v4045, 0
        %v4052 = vsel %vm1802, %v4046, 0
        %4054 = vmatpush.msra.mxu0 0.0
        %4055 = vmatpush.msra.mxu0 0.0
        %4056 = vmatpush.msra.mxu0 0.0
        %4057 = vmatpush.msra.mxu0 0.0
        %4058 = vmatpush.msra.mxu0 0.0
        %4059 = vmatpush.msra.mxu0 0.0
        %4060 = vmatpush.msra.mxu0 0.0
        %4061 = vmatpush.msra.mxu0 0.0
        %4062 = vmatpush.msra.mxu0 0.0
        %4063 = vmatpush.msra.mxu0 0.0
        %4064 = vmatpush.msra.mxu0 0.0
        %4065 = vmatpush.msra.mxu0 0.0
        %4066 = vmatpush.msra.mxu0 0.0
        %4067 = vmatpush.msra.mxu0 0.0
        %4068 = vmatpush.msra.mxu0 0.0
        %4069 = vmatpush.msra.mxu0 %v4047
        %4070 = vmatmul.f32.gmra.mxu0 %v4049
        %v4071 = vpop.f32.mrf.mxu0
        %v4072 = vadd.f32 0.0, %v4071
        %4073 = vmatmul.f32.gmra.mxu0 %v4052
        %v4074 = vpop.f32.mrf.mxu0
        %v4075 = vadd.f32 0.0, %v4074
        %4076 = vdwg.mxu0
        %v4077 = vadd.f32 %v4042, %v4072
        %v4078 = vadd.f32 %v4043, %v4075
        %s4079 = scalar_lea.vmem [#allocation3], 112
        %v4080 = vld [vmem:[%s4079] sm:$0xff]
        %v4081 = vld [vmem:[%s4079 + $0x8] sm:$0x3]
        %v4082 = vld [vmem:[%s3126] sm:$0xff]
        %v4084 = vsel %vm1802, %v4080, 0
        %v4087 = vsel %vm1802, %v4081, 0
        %4089 = vmatpush.msra.mxu0 0.0
        %4090 = vmatpush.msra.mxu0 0.0
        %4091 = vmatpush.msra.mxu0 0.0
        %4092 = vmatpush.msra.mxu0 0.0
        %4093 = vmatpush.msra.mxu0 0.0
        %4094 = vmatpush.msra.mxu0 0.0
        %4095 = vmatpush.msra.mxu0 0.0
        %4096 = vmatpush.msra.mxu0 0.0
        %4097 = vmatpush.msra.mxu0 0.0
        %4098 = vmatpush.msra.mxu0 0.0
        %4099 = vmatpush.msra.mxu0 0.0
        %4100 = vmatpush.msra.mxu0 0.0
        %4101 = vmatpush.msra.mxu0 0.0
        %4102 = vmatpush.msra.mxu0 0.0
        %4103 = vmatpush.msra.mxu0 0.0
        %4104 = vmatpush.msra.mxu0 %v4082
        %4105 = vmatmul.f32.gmra.mxu0 %v4084
        %v4106 = vpop.f32.mrf.mxu0
        %v4107 = vadd.f32 0.0, %v4106
        %4108 = vmatmul.f32.gmra.mxu0 %v4087
        %v4109 = vpop.f32.mrf.mxu0
        %v4110 = vadd.f32 0.0, %v4109
        %4111 = vdwg.mxu0
        %v4112 = vadd.f32 %v4077, %v4107
        %v4113 = vadd.f32 %v4078, %v4110
        %v4114 = vld [vmem:[%s4044 + $0x1] sm:$0xff]
        %v4115 = vld [vmem:[%s4044 + $0x9] sm:$0x3]
        %v4116 = vld [vmem:[%s3161] sm:$0xff]
        %v4118 = vsel %vm1802, %v4114, 0
        %v4121 = vsel %vm1802, %v4115, 0
        %4123 = vmatpush.msra.mxu0 0.0
        %4124 = vmatpush.msra.mxu0 0.0
        %4125 = vmatpush.msra.mxu0 0.0
        %4126 = vmatpush.msra.mxu0 0.0
        %4127 = vmatpush.msra.mxu0 0.0
        %4128 = vmatpush.msra.mxu0 0.0
        %4129 = vmatpush.msra.mxu0 0.0
        %4130 = vmatpush.msra.mxu0 0.0
        %4131 = vmatpush.msra.mxu0 0.0
        %4132 = vmatpush.msra.mxu0 0.0
        %4133 = vmatpush.msra.mxu0 0.0
        %4134 = vmatpush.msra.mxu0 0.0
        %4135 = vmatpush.msra.mxu0 0.0
        %4136 = vmatpush.msra.mxu0 0.0
        %4137 = vmatpush.msra.mxu0 0.0
        %4138 = vmatpush.msra.mxu0 %v4116
        %4139 = vmatmul.f32.gmra.mxu0 %v4118
        %v4140 = vpop.f32.mrf.mxu0
        %v4141 = vadd.f32 0.0, %v4140
        %4142 = vmatmul.f32.gmra.mxu0 %v4121
        %v4143 = vpop.f32.mrf.mxu0
        %v4144 = vadd.f32 0.0, %v4143
        %4145 = vdwg.mxu0
        %v4146 = vadd.f32 %v4112, %v4141
        %v4147 = vadd.f32 %v4113, %v4144
        %s4148 = scalar_lea.vmem [#allocation2], 128
        %v4149 = vld [vmem:[%s4148] sm:$0xff]
        %v4150 = vld [vmem:[%s4148 + $0x8] sm:$0x3]
        %v4151 = vld [vmem:[%s3197] sm:$0xff]
        %v4153 = vsel %vm1802, %v4149, 0
        %v4156 = vsel %vm1802, %v4150, 0
        %4158 = vmatpush.msra.mxu0 0.0
        %4159 = vmatpush.msra.mxu0 0.0
        %4160 = vmatpush.msra.mxu0 0.0
        %4161 = vmatpush.msra.mxu0 0.0
        %4162 = vmatpush.msra.mxu0 0.0
        %4163 = vmatpush.msra.mxu0 0.0
        %4164 = vmatpush.msra.mxu0 0.0
        %4165 = vmatpush.msra.mxu0 0.0
        %4166 = vmatpush.msra.mxu0 0.0
        %4167 = vmatpush.msra.mxu0 0.0
        %4168 = vmatpush.msra.mxu0 0.0
        %4169 = vmatpush.msra.mxu0 0.0
        %4170 = vmatpush.msra.mxu0 0.0
        %4171 = vmatpush.msra.mxu0 0.0
        %4172 = vmatpush.msra.mxu0 0.0
        %4173 = vmatpush.msra.mxu0 %v4151
        %4174 = vmatmul.f32.gmra.mxu0 %v4153
        %v4175 = vpop.f32.mrf.mxu0
        %v4176 = vadd.f32 0.0, %v4175
        %4177 = vmatmul.f32.gmra.mxu0 %v4156
        %v4178 = vpop.f32.mrf.mxu0
        %v4179 = vadd.f32 0.0, %v4178
        %4180 = vdwg.mxu0
        %v4181 = vadd.f32 %v4146, %v4176
        %v4182 = vadd.f32 %v4147, %v4179
        %s4183 = scalar_lea.vmem [#allocation3], 128
        %v4184 = vld [vmem:[%s4183] sm:$0xff]
        %v4185 = vld [vmem:[%s4183 + $0x8] sm:$0x3]
        %v4186 = vld [vmem:[%s3233] sm:$0xff]
        %v4188 = vsel %vm1802, %v4184, 0
        %v4191 = vsel %vm1802, %v4185, 0
        %4193 = vmatpush.msra.mxu0 0.0
        %4194 = vmatpush.msra.mxu0 0.0
        %4195 = vmatpush.msra.mxu0 0.0
        %4196 = vmatpush.msra.mxu0 0.0
        %4197 = vmatpush.msra.mxu0 0.0
        %4198 = vmatpush.msra.mxu0 0.0
        %4199 = vmatpush.msra.mxu0 0.0
        %4200 = vmatpush.msra.mxu0 0.0
        %4201 = vmatpush.msra.mxu0 0.0
        %4202 = vmatpush.msra.mxu0 0.0
        %4203 = vmatpush.msra.mxu0 0.0
        %4204 = vmatpush.msra.mxu0 0.0
        %4205 = vmatpush.msra.mxu0 0.0
        %4206 = vmatpush.msra.mxu0 0.0
        %4207 = vmatpush.msra.mxu0 0.0
        %4208 = vmatpush.msra.mxu0 %v4186
        %4209 = vmatmul.f32.gmra.mxu0 %v4188
        %v4210 = vpop.f32.mrf.mxu0
        %v4211 = vadd.f32 0.0, %v4210
        %4212 = vmatmul.f32.gmra.mxu0 %v4191
        %v4213 = vpop.f32.mrf.mxu0
        %v4214 = vadd.f32 0.0, %v4213
        %4215 = vdwg.mxu0
        %v4216 = vadd.f32 %v4181, %v4211
        %v4217 = vadd.f32 %v4182, %v4214
        %v4218 = vld [vmem:[%s4148 + $0x1] sm:$0xff]
        %v4219 = vld [vmem:[%s4148 + $0x9] sm:$0x3]
        %v4220 = vld [vmem:[%s3268] sm:$0xff]
        %v4222 = vsel %vm1802, %v4218, 0
        %v4225 = vsel %vm1802, %v4219, 0
        %4227 = vmatpush.msra.mxu0 0.0
        %4228 = vmatpush.msra.mxu0 0.0
        %4229 = vmatpush.msra.mxu0 0.0
        %4230 = vmatpush.msra.mxu0 0.0
        %4231 = vmatpush.msra.mxu0 0.0
        %4232 = vmatpush.msra.mxu0 0.0
        %4233 = vmatpush.msra.mxu0 0.0
        %4234 = vmatpush.msra.mxu0 0.0
        %4235 = vmatpush.msra.mxu0 0.0
        %4236 = vmatpush.msra.mxu0 0.0
        %4237 = vmatpush.msra.mxu0 0.0
        %4238 = vmatpush.msra.mxu0 0.0
        %4239 = vmatpush.msra.mxu0 0.0
        %4240 = vmatpush.msra.mxu0 0.0
        %4241 = vmatpush.msra.mxu0 0.0
        %4242 = vmatpush.msra.mxu0 %v4220
        %4243 = vmatmul.f32.gmra.mxu0 %v4222
        %v4244 = vpop.f32.mrf.mxu0
        %v4245 = vadd.f32 0.0, %v4244
        %4246 = vmatmul.f32.gmra.mxu0 %v4225
        %v4247 = vpop.f32.mrf.mxu0
        %v4248 = vadd.f32 0.0, %v4247
        %4249 = vdwg.mxu0
        %v4250 = vadd.f32 %v4216, %v4245
        %v4251 = vadd.f32 %v4217, %v4248
        %v4252 = vld [vmem:[%s4] sm:$0x1]
        %v4254 = vperm.slane %v4252, 0
        %v4256 = vadd.f32 %v4250, %v4254
        %v4257 = vadd.f32 %v4251, %v4254
        %v4258 = vmax.f32 %v4256, 0.0
        %v4259 = vmax.f32 %v4257, 0.0
        %s4260 = scalar_lea.vmem [#allocation4], 48
        %4261 = vst.msk [vmem:[%s4260] sm:$0xff] %vm1802, %v4258
        %4262 = vst.msk [vmem:[%s4260 + $0x8] sm:$0x3] %vm3310, %v4259
        %v4263 = vld [vmem:[%s4148] sm:$0xff]
        %v4264 = vld [vmem:[%s4148 + $0x8] sm:$0x3]
        %v4265 = vld [vmem:[%s3] sm:$0xff]
        %v4266 = vld [vmem:[%s4183] sm:$0xff]
        %v4267 = vld [vmem:[%s4183 + $0x8] sm:$0x3]
        %v4268 = vld [vmem:[%s2992] sm:$0xff]
        %v4270 = vsel %vm1802, %v4266, 0
        %v4273 = vsel %vm1802, %v4267, 0
        %4275 = vmatpush.msra.mxu0 0.0
        %4276 = vmatpush.msra.mxu0 0.0
        %4277 = vmatpush.msra.mxu0 0.0
        %4278 = vmatpush.msra.mxu0 0.0
        %4279 = vmatpush.msra.mxu0 0.0
        %4280 = vmatpush.msra.mxu0 0.0
        %4281 = vmatpush.msra.mxu0 0.0
        %4282 = vmatpush.msra.mxu0 0.0
        %4283 = vmatpush.msra.mxu0 0.0
        %4284 = vmatpush.msra.mxu0 0.0
        %4285 = vmatpush.msra.mxu0 0.0
        %4286 = vmatpush.msra.mxu0 0.0
        %4287 = vmatpush.msra.mxu0 0.0
        %4288 = vmatpush.msra.mxu0 0.0
        %4289 = vmatpush.msra.mxu0 0.0
        %4290 = vmatpush.msra.mxu0 %v4268
        %4291 = vmatmul.f32.gmra.mxu0 %v4270
        %v4292 = vpop.f32.mrf.mxu0
        %v4293 = vadd.f32 0.0, %v4292
        %4294 = vmatmul.f32.gmra.mxu0 %v4273
        %v4295 = vpop.f32.mrf.mxu0
        %v4296 = vadd.f32 0.0, %v4295
        %4297 = vdwg.mxu0
        %v4299 = vsel %vm1802, %v4263, 0
        %v4302 = vsel %vm1802, %v4264, 0
        %4304 = vmatpush.msra.mxu0 0.0
        %4305 = vmatpush.msra.mxu0 0.0
        %4306 = vmatpush.msra.mxu0 0.0
        %4307 = vmatpush.msra.mxu0 0.0
        %4308 = vmatpush.msra.mxu0 0.0
        %4309 = vmatpush.msra.mxu0 0.0
        %4310 = vmatpush.msra.mxu0 0.0
        %4311 = vmatpush.msra.mxu0 0.0
        %4312 = vmatpush.msra.mxu0 0.0
        %4313 = vmatpush.msra.mxu0 0.0
        %4314 = vmatpush.msra.mxu0 0.0
        %4315 = vmatpush.msra.mxu0 0.0
        %4316 = vmatpush.msra.mxu0 0.0
        %4317 = vmatpush.msra.mxu0 0.0
        %4318 = vmatpush.msra.mxu0 0.0
        %4319 = vmatpush.msra.mxu0 %v4265
        %4320 = vmatmul.f32.gmra.mxu0 %v4299
        %v4321 = vpop.f32.mrf.mxu0
        %v4322 = vadd.f32 %v4293, %v4321
        %4323 = vmatmul.f32.gmra.mxu0 %v4302
        %v4324 = vpop.f32.mrf.mxu0
        %v4325 = vadd.f32 %v4296, %v4324
        %4326 = vdwg.mxu0
        %v4327 = vld [vmem:[%s4148 + $0x1] sm:$0xff]
        %v4328 = vld [vmem:[%s4148 + $0x9] sm:$0x3]
        %v4329 = vld [vmem:[%s3054] sm:$0xff]
        %v4331 = vsel %vm1802, %v4327, 0
        %v4334 = vsel %vm1802, %v4328, 0
        %4336 = vmatpush.msra.mxu0 0.0
        %4337 = vmatpush.msra.mxu0 0.0
        %4338 = vmatpush.msra.mxu0 0.0
        %4339 = vmatpush.msra.mxu0 0.0
        %4340 = vmatpush.msra.mxu0 0.0
        %4341 = vmatpush.msra.mxu0 0.0
        %4342 = vmatpush.msra.mxu0 0.0
        %4343 = vmatpush.msra.mxu0 0.0
        %4344 = vmatpush.msra.mxu0 0.0
        %4345 = vmatpush.msra.mxu0 0.0
        %4346 = vmatpush.msra.mxu0 0.0
        %4347 = vmatpush.msra.mxu0 0.0
        %4348 = vmatpush.msra.mxu0 0.0
        %4349 = vmatpush.msra.mxu0 0.0
        %4350 = vmatpush.msra.mxu0 0.0
        %4351 = vmatpush.msra.mxu0 %v4329
        %4352 = vmatmul.f32.gmra.mxu0 %v4331
        %v4353 = vpop.f32.mrf.mxu0
        %v4354 = vadd.f32 0.0, %v4353
        %4355 = vmatmul.f32.gmra.mxu0 %v4334
        %v4356 = vpop.f32.mrf.mxu0
        %v4357 = vadd.f32 0.0, %v4356
        %4358 = vdwg.mxu0
        %v4359 = vadd.f32 %v4322, %v4354
        %v4360 = vadd.f32 %v4325, %v4357
        %s4361 = scalar_lea.vmem [#allocation2], 144
        %v4362 = vld [vmem:[%s4361] sm:$0xff]
        %v4363 = vld [vmem:[%s4361 + $0x8] sm:$0x3]
        %v4364 = vld [vmem:[%s3090] sm:$0xff]
        %v4366 = vsel %vm1802, %v4362, 0
        %v4369 = vsel %vm1802, %v4363, 0
        %4371 = vmatpush.msra.mxu0 0.0
        %4372 = vmatpush.msra.mxu0 0.0
        %4373 = vmatpush.msra.mxu0 0.0
        %4374 = vmatpush.msra.mxu0 0.0
        %4375 = vmatpush.msra.mxu0 0.0
        %4376 = vmatpush.msra.mxu0 0.0
        %4377 = vmatpush.msra.mxu0 0.0
        %4378 = vmatpush.msra.mxu0 0.0
        %4379 = vmatpush.msra.mxu0 0.0
        %4380 = vmatpush.msra.mxu0 0.0
        %4381 = vmatpush.msra.mxu0 0.0
        %4382 = vmatpush.msra.mxu0 0.0
        %4383 = vmatpush.msra.mxu0 0.0
        %4384 = vmatpush.msra.mxu0 0.0
        %4385 = vmatpush.msra.mxu0 0.0
        %4386 = vmatpush.msra.mxu0 %v4364
        %4387 = vmatmul.f32.gmra.mxu0 %v4366
        %v4388 = vpop.f32.mrf.mxu0
        %v4389 = vadd.f32 0.0, %v4388
        %4390 = vmatmul.f32.gmra.mxu0 %v4369
        %v4391 = vpop.f32.mrf.mxu0
        %v4392 = vadd.f32 0.0, %v4391
        %4393 = vdwg.mxu0
        %v4394 = vadd.f32 %v4359, %v4389
        %v4395 = vadd.f32 %v4360, %v4392
        %s4396 = scalar_lea.vmem [#allocation3], 144
        %v4397 = vld [vmem:[%s4396] sm:$0xff]
        %v4398 = vld [vmem:[%s4396 + $0x8] sm:$0x3]
        %v4399 = vld [vmem:[%s3126] sm:$0xff]
        %v4401 = vsel %vm1802, %v4397, 0
        %v4404 = vsel %vm1802, %v4398, 0
        %4406 = vmatpush.msra.mxu0 0.0
        %4407 = vmatpush.msra.mxu0 0.0
        %4408 = vmatpush.msra.mxu0 0.0
        %4409 = vmatpush.msra.mxu0 0.0
        %4410 = vmatpush.msra.mxu0 0.0
        %4411 = vmatpush.msra.mxu0 0.0
        %4412 = vmatpush.msra.mxu0 0.0
        %4413 = vmatpush.msra.mxu0 0.0
        %4414 = vmatpush.msra.mxu0 0.0
        %4415 = vmatpush.msra.mxu0 0.0
        %4416 = vmatpush.msra.mxu0 0.0
        %4417 = vmatpush.msra.mxu0 0.0
        %4418 = vmatpush.msra.mxu0 0.0
        %4419 = vmatpush.msra.mxu0 0.0
        %4420 = vmatpush.msra.mxu0 0.0
        %4421 = vmatpush.msra.mxu0 %v4399
        %4422 = vmatmul.f32.gmra.mxu0 %v4401
        %v4423 = vpop.f32.mrf.mxu0
        %v4424 = vadd.f32 0.0, %v4423
        %4425 = vmatmul.f32.gmra.mxu0 %v4404
        %v4426 = vpop.f32.mrf.mxu0
        %v4427 = vadd.f32 0.0, %v4426
        %4428 = vdwg.mxu0
        %v4429 = vadd.f32 %v4394, %v4424
        %v4430 = vadd.f32 %v4395, %v4427
        %v4431 = vld [vmem:[%s4361 + $0x1] sm:$0xff]
        %v4432 = vld [vmem:[%s4361 + $0x9] sm:$0x3]
        %v4433 = vld [vmem:[%s3161] sm:$0xff]
        %v4435 = vsel %vm1802, %v4431, 0
        %v4438 = vsel %vm1802, %v4432, 0
        %4440 = vmatpush.msra.mxu0 0.0
        %4441 = vmatpush.msra.mxu0 0.0
        %4442 = vmatpush.msra.mxu0 0.0
        %4443 = vmatpush.msra.mxu0 0.0
        %4444 = vmatpush.msra.mxu0 0.0
        %4445 = vmatpush.msra.mxu0 0.0
        %4446 = vmatpush.msra.mxu0 0.0
        %4447 = vmatpush.msra.mxu0 0.0
        %4448 = vmatpush.msra.mxu0 0.0
        %4449 = vmatpush.msra.mxu0 0.0
        %4450 = vmatpush.msra.mxu0 0.0
        %4451 = vmatpush.msra.mxu0 0.0
        %4452 = vmatpush.msra.mxu0 0.0
        %4453 = vmatpush.msra.mxu0 0.0
        %4454 = vmatpush.msra.mxu0 0.0
        %4455 = vmatpush.msra.mxu0 %v4433
        %4456 = vmatmul.f32.gmra.mxu0 %v4435
        %v4457 = vpop.f32.mrf.mxu0
        %v4458 = vadd.f32 0.0, %v4457
        %4459 = vmatmul.f32.gmra.mxu0 %v4438
        %v4460 = vpop.f32.mrf.mxu0
        %v4461 = vadd.f32 0.0, %v4460
        %4462 = vdwg.mxu0
        %v4463 = vadd.f32 %v4429, %v4458
        %v4464 = vadd.f32 %v4430, %v4461
        %s4465 = scalar_lea.vmem [#allocation2], 160
        %v4466 = vld [vmem:[%s4465] sm:$0xff]
        %v4467 = vld [vmem:[%s4465 + $0x8] sm:$0x3]
        %v4468 = vld [vmem:[%s3197] sm:$0xff]
        %v4470 = vsel %vm1802, %v4466, 0
        %v4473 = vsel %vm1802, %v4467, 0
        %4475 = vmatpush.msra.mxu0 0.0
        %4476 = vmatpush.msra.mxu0 0.0
        %4477 = vmatpush.msra.mxu0 0.0
        %4478 = vmatpush.msra.mxu0 0.0
        %4479 = vmatpush.msra.mxu0 0.0
        %4480 = vmatpush.msra.mxu0 0.0
        %4481 = vmatpush.msra.mxu0 0.0
        %4482 = vmatpush.msra.mxu0 0.0
        %4483 = vmatpush.msra.mxu0 0.0
        %4484 = vmatpush.msra.mxu0 0.0
        %4485 = vmatpush.msra.mxu0 0.0
        %4486 = vmatpush.msra.mxu0 0.0
        %4487 = vmatpush.msra.mxu0 0.0
        %4488 = vmatpush.msra.mxu0 0.0
        %4489 = vmatpush.msra.mxu0 0.0
        %4490 = vmatpush.msra.mxu0 %v4468
        %4491 = vmatmul.f32.gmra.mxu0 %v4470
        %v4492 = vpop.f32.mrf.mxu0
        %v4493 = vadd.f32 0.0, %v4492
        %4494 = vmatmul.f32.gmra.mxu0 %v4473
        %v4495 = vpop.f32.mrf.mxu0
        %v4496 = vadd.f32 0.0, %v4495
        %4497 = vdwg.mxu0
        %v4498 = vadd.f32 %v4463, %v4493
        %v4499 = vadd.f32 %v4464, %v4496
        %s4500 = scalar_lea.vmem [#allocation3], 160
        %v4501 = vld [vmem:[%s4500] sm:$0xff]
        %v4502 = vld [vmem:[%s4500 + $0x8] sm:$0x3]
        %v4503 = vld [vmem:[%s3233] sm:$0xff]
        %v4505 = vsel %vm1802, %v4501, 0
        %v4508 = vsel %vm1802, %v4502, 0
        %4510 = vmatpush.msra.mxu0 0.0
        %4511 = vmatpush.msra.mxu0 0.0
        %4512 = vmatpush.msra.mxu0 0.0
        %4513 = vmatpush.msra.mxu0 0.0
        %4514 = vmatpush.msra.mxu0 0.0
        %4515 = vmatpush.msra.mxu0 0.0
        %4516 = vmatpush.msra.mxu0 0.0
        %4517 = vmatpush.msra.mxu0 0.0
        %4518 = vmatpush.msra.mxu0 0.0
        %4519 = vmatpush.msra.mxu0 0.0
        %4520 = vmatpush.msra.mxu0 0.0
        %4521 = vmatpush.msra.mxu0 0.0
        %4522 = vmatpush.msra.mxu0 0.0
        %4523 = vmatpush.msra.mxu0 0.0
        %4524 = vmatpush.msra.mxu0 0.0
        %4525 = vmatpush.msra.mxu0 %v4503
        %4526 = vmatmul.f32.gmra.mxu0 %v4505
        %v4527 = vpop.f32.mrf.mxu0
        %v4528 = vadd.f32 0.0, %v4527
        %4529 = vmatmul.f32.gmra.mxu0 %v4508
        %v4530 = vpop.f32.mrf.mxu0
        %v4531 = vadd.f32 0.0, %v4530
        %4532 = vdwg.mxu0
        %v4533 = vadd.f32 %v4498, %v4528
        %v4534 = vadd.f32 %v4499, %v4531
        %v4535 = vld [vmem:[%s4465 + $0x1] sm:$0xff]
        %v4536 = vld [vmem:[%s4465 + $0x9] sm:$0x3]
        %v4537 = vld [vmem:[%s3268] sm:$0xff]
        %v4539 = vsel %vm1802, %v4535, 0
        %v4542 = vsel %vm1802, %v4536, 0
        %4544 = vmatpush.msra.mxu0 0.0
        %4545 = vmatpush.msra.mxu0 0.0
        %4546 = vmatpush.msra.mxu0 0.0
        %4547 = vmatpush.msra.mxu0 0.0
        %4548 = vmatpush.msra.mxu0 0.0
        %4549 = vmatpush.msra.mxu0 0.0
        %4550 = vmatpush.msra.mxu0 0.0
        %4551 = vmatpush.msra.mxu0 0.0
        %4552 = vmatpush.msra.mxu0 0.0
        %4553 = vmatpush.msra.mxu0 0.0
        %4554 = vmatpush.msra.mxu0 0.0
        %4555 = vmatpush.msra.mxu0 0.0
        %4556 = vmatpush.msra.mxu0 0.0
        %4557 = vmatpush.msra.mxu0 0.0
        %4558 = vmatpush.msra.mxu0 0.0
        %4559 = vmatpush.msra.mxu0 %v4537
        %4560 = vmatmul.f32.gmra.mxu0 %v4539
        %v4561 = vpop.f32.mrf.mxu0
        %v4562 = vadd.f32 0.0, %v4561
        %4563 = vmatmul.f32.gmra.mxu0 %v4542
        %v4564 = vpop.f32.mrf.mxu0
        %v4565 = vadd.f32 0.0, %v4564
        %4566 = vdwg.mxu0
        %v4567 = vadd.f32 %v4533, %v4562
        %v4568 = vadd.f32 %v4534, %v4565
        %v4569 = vld [vmem:[%s4] sm:$0x1]
        %v4571 = vperm.slane %v4569, 0
        %v4573 = vadd.f32 %v4567, %v4571
        %v4574 = vadd.f32 %v4568, %v4571
        %v4575 = vmax.f32 %v4573, 0.0
        %v4576 = vmax.f32 %v4574, 0.0
        %s4577 = scalar_lea.vmem [#allocation4], 64
        %4578 = vst.msk [vmem:[%s4577] sm:$0xff] %vm1802, %v4575
        %4579 = vst.msk [vmem:[%s4577 + $0x8] sm:$0x3] %vm3310, %v4576
        %v4580 = vld [vmem:[%s4465] sm:$0xff]
        %v4581 = vld [vmem:[%s4465 + $0x8] sm:$0x3]
        %v4582 = vld [vmem:[%s3] sm:$0xff]
        %v4583 = vld [vmem:[%s4500] sm:$0xff]
        %v4584 = vld [vmem:[%s4500 + $0x8] sm:$0x3]
        %v4585 = vld [vmem:[%s2992] sm:$0xff]
        %v4587 = vsel %vm1802, %v4583, 0
        %v4590 = vsel %vm1802, %v4584, 0
        %4592 = vmatpush.msra.mxu0 0.0
        %4593 = vmatpush.msra.mxu0 0.0
        %4594 = vmatpush.msra.mxu0 0.0
        %4595 = vmatpush.msra.mxu0 0.0
        %4596 = vmatpush.msra.mxu0 0.0
        %4597 = vmatpush.msra.mxu0 0.0
        %4598 = vmatpush.msra.mxu0 0.0
        %4599 = vmatpush.msra.mxu0 0.0
        %4600 = vmatpush.msra.mxu0 0.0
        %4601 = vmatpush.msra.mxu0 0.0
        %4602 = vmatpush.msra.mxu0 0.0
        %4603 = vmatpush.msra.mxu0 0.0
        %4604 = vmatpush.msra.mxu0 0.0
        %4605 = vmatpush.msra.mxu0 0.0
        %4606 = vmatpush.msra.mxu0 0.0
        %4607 = vmatpush.msra.mxu0 %v4585
        %4608 = vmatmul.f32.gmra.mxu0 %v4587
        %v4609 = vpop.f32.mrf.mxu0
        %v4610 = vadd.f32 0.0, %v4609
        %4611 = vmatmul.f32.gmra.mxu0 %v4590
        %v4612 = vpop.f32.mrf.mxu0
        %v4613 = vadd.f32 0.0, %v4612
        %4614 = vdwg.mxu0
        %v4616 = vsel %vm1802, %v4580, 0
        %v4619 = vsel %vm1802, %v4581, 0
        %4621 = vmatpush.msra.mxu0 0.0
        %4622 = vmatpush.msra.mxu0 0.0
        %4623 = vmatpush.msra.mxu0 0.0
        %4624 = vmatpush.msra.mxu0 0.0
        %4625 = vmatpush.msra.mxu0 0.0
        %4626 = vmatpush.msra.mxu0 0.0
        %4627 = vmatpush.msra.mxu0 0.0
        %4628 = vmatpush.msra.mxu0 0.0
        %4629 = vmatpush.msra.mxu0 0.0
        %4630 = vmatpush.msra.mxu0 0.0
        %4631 = vmatpush.msra.mxu0 0.0
        %4632 = vmatpush.msra.mxu0 0.0
        %4633 = vmatpush.msra.mxu0 0.0
        %4634 = vmatpush.msra.mxu0 0.0
        %4635 = vmatpush.msra.mxu0 0.0
        %4636 = vmatpush.msra.mxu0 %v4582
        %4637 = vmatmul.f32.gmra.mxu0 %v4616
        %v4638 = vpop.f32.mrf.mxu0
        %v4639 = vadd.f32 %v4610, %v4638
        %4640 = vmatmul.f32.gmra.mxu0 %v4619
        %v4641 = vpop.f32.mrf.mxu0
        %v4642 = vadd.f32 %v4613, %v4641
        %4643 = vdwg.mxu0
        %v4644 = vld [vmem:[%s4465 + $0x1] sm:$0xff]
        %v4645 = vld [vmem:[%s4465 + $0x9] sm:$0x3]
        %v4646 = vld [vmem:[%s3054] sm:$0xff]
        %v4648 = vsel %vm1802, %v4644, 0
        %v4651 = vsel %vm1802, %v4645, 0
        %4653 = vmatpush.msra.mxu0 0.0
        %4654 = vmatpush.msra.mxu0 0.0
        %4655 = vmatpush.msra.mxu0 0.0
        %4656 = vmatpush.msra.mxu0 0.0
        %4657 = vmatpush.msra.mxu0 0.0
        %4658 = vmatpush.msra.mxu0 0.0
        %4659 = vmatpush.msra.mxu0 0.0
        %4660 = vmatpush.msra.mxu0 0.0
        %4661 = vmatpush.msra.mxu0 0.0
        %4662 = vmatpush.msra.mxu0 0.0
        %4663 = vmatpush.msra.mxu0 0.0
        %4664 = vmatpush.msra.mxu0 0.0
        %4665 = vmatpush.msra.mxu0 0.0
        %4666 = vmatpush.msra.mxu0 0.0
        %4667 = vmatpush.msra.mxu0 0.0
        %4668 = vmatpush.msra.mxu0 %v4646
        %4669 = vmatmul.f32.gmra.mxu0 %v4648
        %v4670 = vpop.f32.mrf.mxu0
        %v4671 = vadd.f32 0.0, %v4670
        %4672 = vmatmul.f32.gmra.mxu0 %v4651
        %v4673 = vpop.f32.mrf.mxu0
        %v4674 = vadd.f32 0.0, %v4673
        %4675 = vdwg.mxu0
        %v4676 = vadd.f32 %v4639, %v4671
        %v4677 = vadd.f32 %v4642, %v4674
        %s4678 = scalar_lea.vmem [#allocation2], 176
        %v4679 = vld [vmem:[%s4678] sm:$0xff]
        %v4680 = vld [vmem:[%s4678 + $0x8] sm:$0x3]
        %v4681 = vld [vmem:[%s3090] sm:$0xff]
        %v4683 = vsel %vm1802, %v4679, 0
        %v4686 = vsel %vm1802, %v4680, 0
        %4688 = vmatpush.msra.mxu0 0.0
        %4689 = vmatpush.msra.mxu0 0.0
        %4690 = vmatpush.msra.mxu0 0.0
        %4691 = vmatpush.msra.mxu0 0.0
        %4692 = vmatpush.msra.mxu0 0.0
        %4693 = vmatpush.msra.mxu0 0.0
        %4694 = vmatpush.msra.mxu0 0.0
        %4695 = vmatpush.msra.mxu0 0.0
        %4696 = vmatpush.msra.mxu0 0.0
        %4697 = vmatpush.msra.mxu0 0.0
        %4698 = vmatpush.msra.mxu0 0.0
        %4699 = vmatpush.msra.mxu0 0.0
        %4700 = vmatpush.msra.mxu0 0.0
        %4701 = vmatpush.msra.mxu0 0.0
        %4702 = vmatpush.msra.mxu0 0.0
        %4703 = vmatpush.msra.mxu0 %v4681
        %4704 = vmatmul.f32.gmra.mxu0 %v4683
        %v4705 = vpop.f32.mrf.mxu0
        %v4706 = vadd.f32 0.0, %v4705
        %4707 = vmatmul.f32.gmra.mxu0 %v4686
        %v4708 = vpop.f32.mrf.mxu0
        %v4709 = vadd.f32 0.0, %v4708
        %4710 = vdwg.mxu0
        %v4711 = vadd.f32 %v4676, %v4706
        %v4712 = vadd.f32 %v4677, %v4709
        %s4713 = scalar_lea.vmem [#allocation3], 176
        %v4714 = vld [vmem:[%s4713] sm:$0xff]
        %v4715 = vld [vmem:[%s4713 + $0x8] sm:$0x3]
        %v4716 = vld [vmem:[%s3126] sm:$0xff]
        %v4718 = vsel %vm1802, %v4714, 0
        %v4721 = vsel %vm1802, %v4715, 0
        %4723 = vmatpush.msra.mxu0 0.0
        %4724 = vmatpush.msra.mxu0 0.0
        %4725 = vmatpush.msra.mxu0 0.0
        %4726 = vmatpush.msra.mxu0 0.0
        %4727 = vmatpush.msra.mxu0 0.0
        %4728 = vmatpush.msra.mxu0 0.0
        %4729 = vmatpush.msra.mxu0 0.0
        %4730 = vmatpush.msra.mxu0 0.0
        %4731 = vmatpush.msra.mxu0 0.0
        %4732 = vmatpush.msra.mxu0 0.0
        %4733 = vmatpush.msra.mxu0 0.0
        %4734 = vmatpush.msra.mxu0 0.0
        %4735 = vmatpush.msra.mxu0 0.0
        %4736 = vmatpush.msra.mxu0 0.0
        %4737 = vmatpush.msra.mxu0 0.0
        %4738 = vmatpush.msra.mxu0 %v4716
        %4739 = vmatmul.f32.gmra.mxu0 %v4718
        %v4740 = vpop.f32.mrf.mxu0
        %v4741 = vadd.f32 0.0, %v4740
        %4742 = vmatmul.f32.gmra.mxu0 %v4721
        %v4743 = vpop.f32.mrf.mxu0
        %v4744 = vadd.f32 0.0, %v4743
        %4745 = vdwg.mxu0
        %v4746 = vadd.f32 %v4711, %v4741
        %v4747 = vadd.f32 %v4712, %v4744
        %v4748 = vld [vmem:[%s4678 + $0x1] sm:$0xff]
        %v4749 = vld [vmem:[%s4678 + $0x9] sm:$0x3]
        %v4750 = vld [vmem:[%s3161] sm:$0xff]
        %v4752 = vsel %vm1802, %v4748, 0
        %v4755 = vsel %vm1802, %v4749, 0
        %4757 = vmatpush.msra.mxu0 0.0
        %4758 = vmatpush.msra.mxu0 0.0
        %4759 = vmatpush.msra.mxu0 0.0
        %4760 = vmatpush.msra.mxu0 0.0
        %4761 = vmatpush.msra.mxu0 0.0
        %4762 = vmatpush.msra.mxu0 0.0
        %4763 = vmatpush.msra.mxu0 0.0
        %4764 = vmatpush.msra.mxu0 0.0
        %4765 = vmatpush.msra.mxu0 0.0
        %4766 = vmatpush.msra.mxu0 0.0
        %4767 = vmatpush.msra.mxu0 0.0
        %4768 = vmatpush.msra.mxu0 0.0
        %4769 = vmatpush.msra.mxu0 0.0
        %4770 = vmatpush.msra.mxu0 0.0
        %4771 = vmatpush.msra.mxu0 0.0
        %4772 = vmatpush.msra.mxu0 %v4750
        %4773 = vmatmul.f32.gmra.mxu0 %v4752
        %v4774 = vpop.f32.mrf.mxu0
        %v4775 = vadd.f32 0.0, %v4774
        %4776 = vmatmul.f32.gmra.mxu0 %v4755
        %v4777 = vpop.f32.mrf.mxu0
        %v4778 = vadd.f32 0.0, %v4777
        %4779 = vdwg.mxu0
        %v4780 = vadd.f32 %v4746, %v4775
        %v4781 = vadd.f32 %v4747, %v4778
        %s4782 = scalar_lea.vmem [#allocation2], 192
        %v4783 = vld [vmem:[%s4782] sm:$0xff]
        %v4784 = vld [vmem:[%s4782 + $0x8] sm:$0x3]
        %v4785 = vld [vmem:[%s3197] sm:$0xff]
        %v4787 = vsel %vm1802, %v4783, 0
        %v4790 = vsel %vm1802, %v4784, 0
        %4792 = vmatpush.msra.mxu0 0.0
        %4793 = vmatpush.msra.mxu0 0.0
        %4794 = vmatpush.msra.mxu0 0.0
        %4795 = vmatpush.msra.mxu0 0.0
        %4796 = vmatpush.msra.mxu0 0.0
        %4797 = vmatpush.msra.mxu0 0.0
        %4798 = vmatpush.msra.mxu0 0.0
        %4799 = vmatpush.msra.mxu0 0.0
        %4800 = vmatpush.msra.mxu0 0.0
        %4801 = vmatpush.msra.mxu0 0.0
        %4802 = vmatpush.msra.mxu0 0.0
        %4803 = vmatpush.msra.mxu0 0.0
        %4804 = vmatpush.msra.mxu0 0.0
        %4805 = vmatpush.msra.mxu0 0.0
        %4806 = vmatpush.msra.mxu0 0.0
        %4807 = vmatpush.msra.mxu0 %v4785
        %4808 = vmatmul.f32.gmra.mxu0 %v4787
        %v4809 = vpop.f32.mrf.mxu0
        %v4810 = vadd.f32 0.0, %v4809
        %4811 = vmatmul.f32.gmra.mxu0 %v4790
        %v4812 = vpop.f32.mrf.mxu0
        %v4813 = vadd.f32 0.0, %v4812
        %4814 = vdwg.mxu0
        %v4815 = vadd.f32 %v4780, %v4810
        %v4816 = vadd.f32 %v4781, %v4813
        %s4817 = scalar_lea.vmem [#allocation3], 192
        %v4818 = vld [vmem:[%s4817] sm:$0xff]
        %v4819 = vld [vmem:[%s4817 + $0x8] sm:$0x3]
        %v4820 = vld [vmem:[%s3233] sm:$0xff]
        %v4822 = vsel %vm1802, %v4818, 0
        %v4825 = vsel %vm1802, %v4819, 0
        %4827 = vmatpush.msra.mxu0 0.0
        %4828 = vmatpush.msra.mxu0 0.0
        %4829 = vmatpush.msra.mxu0 0.0
        %4830 = vmatpush.msra.mxu0 0.0
        %4831 = vmatpush.msra.mxu0 0.0
        %4832 = vmatpush.msra.mxu0 0.0
        %4833 = vmatpush.msra.mxu0 0.0
        %4834 = vmatpush.msra.mxu0 0.0
        %4835 = vmatpush.msra.mxu0 0.0
        %4836 = vmatpush.msra.mxu0 0.0
        %4837 = vmatpush.msra.mxu0 0.0
        %4838 = vmatpush.msra.mxu0 0.0
        %4839 = vmatpush.msra.mxu0 0.0
        %4840 = vmatpush.msra.mxu0 0.0
        %4841 = vmatpush.msra.mxu0 0.0
        %4842 = vmatpush.msra.mxu0 %v4820
        %4843 = vmatmul.f32.gmra.mxu0 %v4822
        %v4844 = vpop.f32.mrf.mxu0
        %v4845 = vadd.f32 0.0, %v4844
        %4846 = vmatmul.f32.gmra.mxu0 %v4825
        %v4847 = vpop.f32.mrf.mxu0
        %v4848 = vadd.f32 0.0, %v4847
        %4849 = vdwg.mxu0
        %v4850 = vadd.f32 %v4815, %v4845
        %v4851 = vadd.f32 %v4816, %v4848
        %v4852 = vld [vmem:[%s4782 + $0x1] sm:$0xff]
        %v4853 = vld [vmem:[%s4782 + $0x9] sm:$0x3]
        %v4854 = vld [vmem:[%s3268] sm:$0xff]
        %v4856 = vsel %vm1802, %v4852, 0
        %v4859 = vsel %vm1802, %v4853, 0
        %4861 = vmatpush.msra.mxu0 0.0
        %4862 = vmatpush.msra.mxu0 0.0
        %4863 = vmatpush.msra.mxu0 0.0
        %4864 = vmatpush.msra.mxu0 0.0
        %4865 = vmatpush.msra.mxu0 0.0
        %4866 = vmatpush.msra.mxu0 0.0
        %4867 = vmatpush.msra.mxu0 0.0
        %4868 = vmatpush.msra.mxu0 0.0
        %4869 = vmatpush.msra.mxu0 0.0
        %4870 = vmatpush.msra.mxu0 0.0
        %4871 = vmatpush.msra.mxu0 0.0
        %4872 = vmatpush.msra.mxu0 0.0
        %4873 = vmatpush.msra.mxu0 0.0
        %4874 = vmatpush.msra.mxu0 0.0
        %4875 = vmatpush.msra.mxu0 0.0
        %4876 = vmatpush.msra.mxu0 %v4854
        %4877 = vmatmul.f32.gmra.mxu0 %v4856
        %v4878 = vpop.f32.mrf.mxu0
        %v4879 = vadd.f32 0.0, %v4878
        %4880 = vmatmul.f32.gmra.mxu0 %v4859
        %v4881 = vpop.f32.mrf.mxu0
        %v4882 = vadd.f32 0.0, %v4881
        %4883 = vdwg.mxu0
        %v4884 = vadd.f32 %v4850, %v4879
        %v4885 = vadd.f32 %v4851, %v4882
        %v4886 = vld [vmem:[%s4] sm:$0x1]
        %v4888 = vperm.slane %v4886, 0
        %v4890 = vadd.f32 %v4884, %v4888
        %v4891 = vadd.f32 %v4885, %v4888
        %v4892 = vmax.f32 %v4890, 0.0
        %v4893 = vmax.f32 %v4891, 0.0
        %s4894 = scalar_lea.vmem [#allocation4], 80
        %4895 = vst.msk [vmem:[%s4894] sm:$0xff] %vm1802, %v4892
        %4896 = vst.msk [vmem:[%s4894 + $0x8] sm:$0x3] %vm3310, %v4893
        %v4897 = vld [vmem:[#allocation4] sm:$0xff]
        %v4898 = vld [vmem:[%s5] sm:$0xff]
        %v4899 = vld [vmem:[#allocation4 + $0x1] sm:$0xff]
        %s4900 = scalar_lea.vmem %s5, 8
        %v4901 = vld [vmem:[%s4900] sm:$0xff]
        %v4903 = vsel %vm1802, %v4899, 0
        %4905 = vmatpush.msra.mxu0 0.0
        %4906 = vmatpush.msra.mxu0 0.0
        %4907 = vmatpush.msra.mxu0 0.0
        %4908 = vmatpush.msra.mxu0 0.0
        %4909 = vmatpush.msra.mxu0 0.0
        %4910 = vmatpush.msra.mxu0 0.0
        %4911 = vmatpush.msra.mxu0 0.0
        %4912 = vmatpush.msra.mxu0 0.0
        %4913 = vmatpush.msra.mxu0 0.0
        %4914 = vmatpush.msra.mxu0 0.0
        %4915 = vmatpush.msra.mxu0 0.0
        %4916 = vmatpush.msra.mxu0 0.0
        %4917 = vmatpush.msra.mxu0 0.0
        %4918 = vmatpush.msra.mxu0 0.0
        %4919 = vmatpush.msra.mxu0 0.0
        %4920 = vmatpush.msra.mxu0 %v4901
        %4921 = vmatmul.f32.gmra.mxu0 %v4903
        %v4922 = vpop.f32.mrf.mxu0
        %v4923 = vadd.f32 0.0, %v4922
        %4924 = vdwg.mxu0
        %v4926 = vsel %vm1802, %v4897, 0
        %4928 = vmatpush.msra.mxu0 0.0
        %4929 = vmatpush.msra.mxu0 0.0
        %4930 = vmatpush.msra.mxu0 0.0
        %4931 = vmatpush.msra.mxu0 0.0
        %4932 = vmatpush.msra.mxu0 0.0
        %4933 = vmatpush.msra.mxu0 0.0
        %4934 = vmatpush.msra.mxu0 0.0
        %4935 = vmatpush.msra.mxu0 0.0
        %4936 = vmatpush.msra.mxu0 0.0
        %4937 = vmatpush.msra.mxu0 0.0
        %4938 = vmatpush.msra.mxu0 0.0
        %4939 = vmatpush.msra.mxu0 0.0
        %4940 = vmatpush.msra.mxu0 0.0
        %4941 = vmatpush.msra.mxu0 0.0
        %4942 = vmatpush.msra.mxu0 0.0
        %4943 = vmatpush.msra.mxu0 %v4898
        %4944 = vmatmul.f32.gmra.mxu0 %v4926
        %v4945 = vpop.f32.mrf.mxu0
        %v4946 = vadd.f32 %v4923, %v4945
        %4947 = vdwg.mxu0
        %v4948 = vld [vmem:[#allocation4 + $0x2] sm:$0xff]
        %s4949 = scalar_lea.vmem %s5, 16
        %v4950 = vld [vmem:[%s4949] sm:$0xff]
        %v4952 = vsel %vm1802, %v4948, 0
        %4954 = vmatpush.msra.mxu0 0.0
        %4955 = vmatpush.msra.mxu0 0.0
        %4956 = vmatpush.msra.mxu0 0.0
        %4957 = vmatpush.msra.mxu0 0.0
        %4958 = vmatpush.msra.mxu0 0.0
        %4959 = vmatpush.msra.mxu0 0.0
        %4960 = vmatpush.msra.mxu0 0.0
        %4961 = vmatpush.msra.mxu0 0.0
        %4962 = vmatpush.msra.mxu0 0.0
        %4963 = vmatpush.msra.mxu0 0.0
        %4964 = vmatpush.msra.mxu0 0.0
        %4965 = vmatpush.msra.mxu0 0.0
        %4966 = vmatpush.msra.mxu0 0.0
        %4967 = vmatpush.msra.mxu0 0.0
        %4968 = vmatpush.msra.mxu0 0.0
        %4969 = vmatpush.msra.mxu0 %v4950
        %4970 = vmatmul.f32.gmra.mxu0 %v4952
        %v4971 = vpop.f32.mrf.mxu0
        %v4972 = vadd.f32 0.0, %v4971
        %4973 = vdwg.mxu0
        %v4974 = vadd.f32 %v4946, %v4972
        %v4975 = vld [vmem:[%s3626] sm:$0xff]
        %s4976 = scalar_lea.vmem %s5, 24
        %v4977 = vld [vmem:[%s4976] sm:$0xff]
        %v4979 = vsel %vm1802, %v4975, 0
        %4981 = vmatpush.msra.mxu0 0.0
        %4982 = vmatpush.msra.mxu0 0.0
        %4983 = vmatpush.msra.mxu0 0.0
        %4984 = vmatpush.msra.mxu0 0.0
        %4985 = vmatpush.msra.mxu0 0.0
        %4986 = vmatpush.msra.mxu0 0.0
        %4987 = vmatpush.msra.mxu0 0.0
        %4988 = vmatpush.msra.mxu0 0.0
        %4989 = vmatpush.msra.mxu0 0.0
        %4990 = vmatpush.msra.mxu0 0.0
        %4991 = vmatpush.msra.mxu0 0.0
        %4992 = vmatpush.msra.mxu0 0.0
        %4993 = vmatpush.msra.mxu0 0.0
        %4994 = vmatpush.msra.mxu0 0.0
        %4995 = vmatpush.msra.mxu0 0.0
        %4996 = vmatpush.msra.mxu0 %v4977
        %4997 = vmatmul.f32.gmra.mxu0 %v4979
        %v4998 = vpop.f32.mrf.mxu0
        %v4999 = vadd.f32 0.0, %v4998
        %5000 = vdwg.mxu0
        %v5001 = vadd.f32 %v4974, %v4999
        %v5002 = vld [vmem:[%s3626 + $0x1] sm:$0xff]
        %s5003 = scalar_lea.vmem %s5, 32
        %v5004 = vld [vmem:[%s5003] sm:$0xff]
        %v5006 = vsel %vm1802, %v5002, 0
        %5008 = vmatpush.msra.mxu0 0.0
        %5009 = vmatpush.msra.mxu0 0.0
        %5010 = vmatpush.msra.mxu0 0.0
        %5011 = vmatpush.msra.mxu0 0.0
        %5012 = vmatpush.msra.mxu0 0.0
        %5013 = vmatpush.msra.mxu0 0.0
        %5014 = vmatpush.msra.mxu0 0.0
        %5015 = vmatpush.msra.mxu0 0.0
        %5016 = vmatpush.msra.mxu0 0.0
        %5017 = vmatpush.msra.mxu0 0.0
        %5018 = vmatpush.msra.mxu0 0.0
        %5019 = vmatpush.msra.mxu0 0.0
        %5020 = vmatpush.msra.mxu0 0.0
        %5021 = vmatpush.msra.mxu0 0.0
        %5022 = vmatpush.msra.mxu0 0.0
        %5023 = vmatpush.msra.mxu0 %v5004
        %5024 = vmatmul.f32.gmra.mxu0 %v5006
        %v5025 = vpop.f32.mrf.mxu0
        %v5026 = vadd.f32 0.0, %v5025
        %5027 = vdwg.mxu0
        %v5028 = vadd.f32 %v5001, %v5026
        %v5029 = vld [vmem:[%s3626 + $0x2] sm:$0xff]
        %s5030 = scalar_lea.vmem %s5, 40
        %v5031 = vld [vmem:[%s5030] sm:$0xff]
        %v5033 = vsel %vm1802, %v5029, 0
        %5035 = vmatpush.msra.mxu0 0.0
        %5036 = vmatpush.msra.mxu0 0.0
        %5037 = vmatpush.msra.mxu0 0.0
        %5038 = vmatpush.msra.mxu0 0.0
        %5039 = vmatpush.msra.mxu0 0.0
        %5040 = vmatpush.msra.mxu0 0.0
        %5041 = vmatpush.msra.mxu0 0.0
        %5042 = vmatpush.msra.mxu0 0.0
        %5043 = vmatpush.msra.mxu0 0.0
        %5044 = vmatpush.msra.mxu0 0.0
        %5045 = vmatpush.msra.mxu0 0.0
        %5046 = vmatpush.msra.mxu0 0.0
        %5047 = vmatpush.msra.mxu0 0.0
        %5048 = vmatpush.msra.mxu0 0.0
        %5049 = vmatpush.msra.mxu0 0.0
        %5050 = vmatpush.msra.mxu0 %v5031
        %5051 = vmatmul.f32.gmra.mxu0 %v5033
        %v5052 = vpop.f32.mrf.mxu0
        %v5053 = vadd.f32 0.0, %v5052
        %5054 = vdwg.mxu0
        %v5055 = vadd.f32 %v5028, %v5053
        %v5056 = vld [vmem:[%s3943] sm:$0xff]
        %s5057 = scalar_lea.vmem %s5, 48
        %v5058 = vld [vmem:[%s5057] sm:$0xff]
        %v5060 = vsel %vm1802, %v5056, 0
        %5062 = vmatpush.msra.mxu0 0.0
        %5063 = vmatpush.msra.mxu0 0.0
        %5064 = vmatpush.msra.mxu0 0.0
        %5065 = vmatpush.msra.mxu0 0.0
        %5066 = vmatpush.msra.mxu0 0.0
        %5067 = vmatpush.msra.mxu0 0.0
        %5068 = vmatpush.msra.mxu0 0.0
        %5069 = vmatpush.msra.mxu0 0.0
        %5070 = vmatpush.msra.mxu0 0.0
        %5071 = vmatpush.msra.mxu0 0.0
        %5072 = vmatpush.msra.mxu0 0.0
        %5073 = vmatpush.msra.mxu0 0.0
        %5074 = vmatpush.msra.mxu0 0.0
        %5075 = vmatpush.msra.mxu0 0.0
        %5076 = vmatpush.msra.mxu0 0.0
        %5077 = vmatpush.msra.mxu0 %v5058
        %5078 = vmatmul.f32.gmra.mxu0 %v5060
        %v5079 = vpop.f32.mrf.mxu0
        %v5080 = vadd.f32 0.0, %v5079
        %5081 = vdwg.mxu0
        %v5082 = vadd.f32 %v5055, %v5080
        %v5083 = vld [vmem:[%s3943 + $0x1] sm:$0xff]
        %s5084 = scalar_lea.vmem %s5, 56
        %v5085 = vld [vmem:[%s5084] sm:$0xff]
        %v5087 = vsel %vm1802, %v5083, 0
        %5089 = vmatpush.msra.mxu0 0.0
        %5090 = vmatpush.msra.mxu0 0.0
        %5091 = vmatpush.msra.mxu0 0.0
        %5092 = vmatpush.msra.mxu0 0.0
        %5093 = vmatpush.msra.mxu0 0.0
        %5094 = vmatpush.msra.mxu0 0.0
        %5095 = vmatpush.msra.mxu0 0.0
        %5096 = vmatpush.msra.mxu0 0.0
        %5097 = vmatpush.msra.mxu0 0.0
        %5098 = vmatpush.msra.mxu0 0.0
        %5099 = vmatpush.msra.mxu0 0.0
        %5100 = vmatpush.msra.mxu0 0.0
        %5101 = vmatpush.msra.mxu0 0.0
        %5102 = vmatpush.msra.mxu0 0.0
        %5103 = vmatpush.msra.mxu0 0.0
        %5104 = vmatpush.msra.mxu0 %v5085
        %5105 = vmatmul.f32.gmra.mxu0 %v5087
        %v5106 = vpop.f32.mrf.mxu0
        %v5107 = vadd.f32 0.0, %v5106
        %5108 = vdwg.mxu0
        %v5109 = vadd.f32 %v5082, %v5107
        %v5110 = vld [vmem:[%s3943 + $0x2] sm:$0xff]
        %s5111 = scalar_lea.vmem %s5, 64
        %v5112 = vld [vmem:[%s5111] sm:$0xff]
        %v5114 = vsel %vm1802, %v5110, 0
        %5116 = vmatpush.msra.mxu0 0.0
        %5117 = vmatpush.msra.mxu0 0.0
        %5118 = vmatpush.msra.mxu0 0.0
        %5119 = vmatpush.msra.mxu0 0.0
        %5120 = vmatpush.msra.mxu0 0.0
        %5121 = vmatpush.msra.mxu0 0.0
        %5122 = vmatpush.msra.mxu0 0.0
        %5123 = vmatpush.msra.mxu0 0.0
        %5124 = vmatpush.msra.mxu0 0.0
        %5125 = vmatpush.msra.mxu0 0.0
        %5126 = vmatpush.msra.mxu0 0.0
        %5127 = vmatpush.msra.mxu0 0.0
        %5128 = vmatpush.msra.mxu0 0.0
        %5129 = vmatpush.msra.mxu0 0.0
        %5130 = vmatpush.msra.mxu0 0.0
        %5131 = vmatpush.msra.mxu0 %v5112
        %5132 = vmatmul.f32.gmra.mxu0 %v5114
        %v5133 = vpop.f32.mrf.mxu0
        %v5134 = vadd.f32 0.0, %v5133
        %5135 = vdwg.mxu0
        %v5136 = vadd.f32 %v5109, %v5134
        %v5137 = vld [vmem:[%s6] sm:$0x1]
        %v5139 = vperm.slane %v5137, 0
        %v5141 = vadd.f32 %v5136, %v5139
        %v5142 = vmax.f32 %v5141, 0.0
        %5143 = vst.msk [vmem:[#allocation5] sm:$0xff] %vm1802, %v5142
        %v5144 = vld [vmem:[%s3626] sm:$0xff]
        %v5145 = vld [vmem:[%s5] sm:$0xff]
        %v5146 = vld [vmem:[%s3626 + $0x1] sm:$0xff]
        %v5147 = vld [vmem:[%s4900] sm:$0xff]
        %v5149 = vsel %vm1802, %v5146, 0
        %5151 = vmatpush.msra.mxu0 0.0
        %5152 = vmatpush.msra.mxu0 0.0
        %5153 = vmatpush.msra.mxu0 0.0
        %5154 = vmatpush.msra.mxu0 0.0
        %5155 = vmatpush.msra.mxu0 0.0
        %5156 = vmatpush.msra.mxu0 0.0
        %5157 = vmatpush.msra.mxu0 0.0
        %5158 = vmatpush.msra.mxu0 0.0
        %5159 = vmatpush.msra.mxu0 0.0
        %5160 = vmatpush.msra.mxu0 0.0
        %5161 = vmatpush.msra.mxu0 0.0
        %5162 = vmatpush.msra.mxu0 0.0
        %5163 = vmatpush.msra.mxu0 0.0
        %5164 = vmatpush.msra.mxu0 0.0
        %5165 = vmatpush.msra.mxu0 0.0
        %5166 = vmatpush.msra.mxu0 %v5147
        %5167 = vmatmul.f32.gmra.mxu0 %v5149
        %v5168 = vpop.f32.mrf.mxu0
        %v5169 = vadd.f32 0.0, %v5168
        %5170 = vdwg.mxu0
        %v5172 = vsel %vm1802, %v5144, 0
        %5174 = vmatpush.msra.mxu0 0.0
        %5175 = vmatpush.msra.mxu0 0.0
        %5176 = vmatpush.msra.mxu0 0.0
        %5177 = vmatpush.msra.mxu0 0.0
        %5178 = vmatpush.msra.mxu0 0.0
        %5179 = vmatpush.msra.mxu0 0.0
        %5180 = vmatpush.msra.mxu0 0.0
        %5181 = vmatpush.msra.mxu0 0.0
        %5182 = vmatpush.msra.mxu0 0.0
        %5183 = vmatpush.msra.mxu0 0.0
        %5184 = vmatpush.msra.mxu0 0.0
        %5185 = vmatpush.msra.mxu0 0.0
        %5186 = vmatpush.msra.mxu0 0.0
        %5187 = vmatpush.msra.mxu0 0.0
        %5188 = vmatpush.msra.mxu0 0.0
        %5189 = vmatpush.msra.mxu0 %v5145
        %5190 = vmatmul.f32.gmra.mxu0 %v5172
        %v5191 = vpop.f32.mrf.mxu0
        %v5192 = vadd.f32 %v5169, %v5191
        %5193 = vdwg.mxu0
        %v5194 = vld [vmem:[%s3626 + $0x2] sm:$0xff]
        %v5195 = vld [vmem:[%s4949] sm:$0xff]
        %v5197 = vsel %vm1802, %v5194, 0
        %5199 = vmatpush.msra.mxu0 0.0
        %5200 = vmatpush.msra.mxu0 0.0
        %5201 = vmatpush.msra.mxu0 0.0
        %5202 = vmatpush.msra.mxu0 0.0
        %5203 = vmatpush.msra.mxu0 0.0
        %5204 = vmatpush.msra.mxu0 0.0
        %5205 = vmatpush.msra.mxu0 0.0
        %5206 = vmatpush.msra.mxu0 0.0
        %5207 = vmatpush.msra.mxu0 0.0
        %5208 = vmatpush.msra.mxu0 0.0
        %5209 = vmatpush.msra.mxu0 0.0
        %5210 = vmatpush.msra.mxu0 0.0
        %5211 = vmatpush.msra.mxu0 0.0
        %5212 = vmatpush.msra.mxu0 0.0
        %5213 = vmatpush.msra.mxu0 0.0
        %5214 = vmatpush.msra.mxu0 %v5195
        %5215 = vmatmul.f32.gmra.mxu0 %v5197
        %v5216 = vpop.f32.mrf.mxu0
        %v5217 = vadd.f32 0.0, %v5216
        %5218 = vdwg.mxu0
        %v5219 = vadd.f32 %v5192, %v5217
        %v5220 = vld [vmem:[%s3943] sm:$0xff]
        %v5221 = vld [vmem:[%s4976] sm:$0xff]
        %v5223 = vsel %vm1802, %v5220, 0
        %5225 = vmatpush.msra.mxu0 0.0
        %5226 = vmatpush.msra.mxu0 0.0
        %5227 = vmatpush.msra.mxu0 0.0
        %5228 = vmatpush.msra.mxu0 0.0
        %5229 = vmatpush.msra.mxu0 0.0
        %5230 = vmatpush.msra.mxu0 0.0
        %5231 = vmatpush.msra.mxu0 0.0
        %5232 = vmatpush.msra.mxu0 0.0
        %5233 = vmatpush.msra.mxu0 0.0
        %5234 = vmatpush.msra.mxu0 0.0
        %5235 = vmatpush.msra.mxu0 0.0
        %5236 = vmatpush.msra.mxu0 0.0
        %5237 = vmatpush.msra.mxu0 0.0
        %5238 = vmatpush.msra.mxu0 0.0
        %5239 = vmatpush.msra.mxu0 0.0
        %5240 = vmatpush.msra.mxu0 %v5221
        %5241 = vmatmul.f32.gmra.mxu0 %v5223
        %v5242 = vpop.f32.mrf.mxu0
        %v5243 = vadd.f32 0.0, %v5242
        %5244 = vdwg.mxu0
        %v5245 = vadd.f32 %v5219, %v5243
        %v5246 = vld [vmem:[%s3943 + $0x1] sm:$0xff]
        %v5247 = vld [vmem:[%s5003] sm:$0xff]
        %v5249 = vsel %vm1802, %v5246, 0
        %5251 = vmatpush.msra.mxu0 0.0
        %5252 = vmatpush.msra.mxu0 0.0
        %5253 = vmatpush.msra.mxu0 0.0
        %5254 = vmatpush.msra.mxu0 0.0
        %5255 = vmatpush.msra.mxu0 0.0
        %5256 = vmatpush.msra.mxu0 0.0
        %5257 = vmatpush.msra.mxu0 0.0
        %5258 = vmatpush.msra.mxu0 0.0
        %5259 = vmatpush.msra.mxu0 0.0
        %5260 = vmatpush.msra.mxu0 0.0
        %5261 = vmatpush.msra.mxu0 0.0
        %5262 = vmatpush.msra.mxu0 0.0
        %5263 = vmatpush.msra.mxu0 0.0
        %5264 = vmatpush.msra.mxu0 0.0
        %5265 = vmatpush.msra.mxu0 0.0
        %5266 = vmatpush.msra.mxu0 %v5247
        %5267 = vmatmul.f32.gmra.mxu0 %v5249
        %v5268 = vpop.f32.mrf.mxu0
        %v5269 = vadd.f32 0.0, %v5268
        %5270 = vdwg.mxu0
        %v5271 = vadd.f32 %v5245, %v5269
        %v5272 = vld [vmem:[%s3943 + $0x2] sm:$0xff]
        %v5273 = vld [vmem:[%s5030] sm:$0xff]
        %v5275 = vsel %vm1802, %v5272, 0
        %5277 = vmatpush.msra.mxu0 0.0
        %5278 = vmatpush.msra.mxu0 0.0
        %5279 = vmatpush.msra.mxu0 0.0
        %5280 = vmatpush.msra.mxu0 0.0
        %5281 = vmatpush.msra.mxu0 0.0
        %5282 = vmatpush.msra.mxu0 0.0
        %5283 = vmatpush.msra.mxu0 0.0
        %5284 = vmatpush.msra.mxu0 0.0
        %5285 = vmatpush.msra.mxu0 0.0
        %5286 = vmatpush.msra.mxu0 0.0
        %5287 = vmatpush.msra.mxu0 0.0
        %5288 = vmatpush.msra.mxu0 0.0
        %5289 = vmatpush.msra.mxu0 0.0
        %5290 = vmatpush.msra.mxu0 0.0
        %5291 = vmatpush.msra.mxu0 0.0
        %5292 = vmatpush.msra.mxu0 %v5273
        %5293 = vmatmul.f32.gmra.mxu0 %v5275
        %v5294 = vpop.f32.mrf.mxu0
        %v5295 = vadd.f32 0.0, %v5294
        %5296 = vdwg.mxu0
        %v5297 = vadd.f32 %v5271, %v5295
        %v5298 = vld [vmem:[%s4260] sm:$0xff]
        %v5299 = vld [vmem:[%s5057] sm:$0xff]
        %v5301 = vsel %vm1802, %v5298, 0
        %5303 = vmatpush.msra.mxu0 0.0
        %5304 = vmatpush.msra.mxu0 0.0
        %5305 = vmatpush.msra.mxu0 0.0
        %5306 = vmatpush.msra.mxu0 0.0
        %5307 = vmatpush.msra.mxu0 0.0
        %5308 = vmatpush.msra.mxu0 0.0
        %5309 = vmatpush.msra.mxu0 0.0
        %5310 = vmatpush.msra.mxu0 0.0
        %5311 = vmatpush.msra.mxu0 0.0
        %5312 = vmatpush.msra.mxu0 0.0
        %5313 = vmatpush.msra.mxu0 0.0
        %5314 = vmatpush.msra.mxu0 0.0
        %5315 = vmatpush.msra.mxu0 0.0
        %5316 = vmatpush.msra.mxu0 0.0
        %5317 = vmatpush.msra.mxu0 0.0
        %5318 = vmatpush.msra.mxu0 %v5299
        %5319 = vmatmul.f32.gmra.mxu0 %v5301
        %v5320 = vpop.f32.mrf.mxu0
        %v5321 = vadd.f32 0.0, %v5320
        %5322 = vdwg.mxu0
        %v5323 = vadd.f32 %v5297, %v5321
        %v5324 = vld [vmem:[%s4260 + $0x1] sm:$0xff]
        %v5325 = vld [vmem:[%s5084] sm:$0xff]
        %v5327 = vsel %vm1802, %v5324, 0
        %5329 = vmatpush.msra.mxu0 0.0
        %5330 = vmatpush.msra.mxu0 0.0
        %5331 = vmatpush.msra.mxu0 0.0
        %5332 = vmatpush.msra.mxu0 0.0
        %5333 = vmatpush.msra.mxu0 0.0
        %5334 = vmatpush.msra.mxu0 0.0
        %5335 = vmatpush.msra.mxu0 0.0
        %5336 = vmatpush.msra.mxu0 0.0
        %5337 = vmatpush.msra.mxu0 0.0
        %5338 = vmatpush.msra.mxu0 0.0
        %5339 = vmatpush.msra.mxu0 0.0
        %5340 = vmatpush.msra.mxu0 0.0
        %5341 = vmatpush.msra.mxu0 0.0
        %5342 = vmatpush.msra.mxu0 0.0
        %5343 = vmatpush.msra.mxu0 0.0
        %5344 = vmatpush.msra.mxu0 %v5325
        %5345 = vmatmul.f32.gmra.mxu0 %v5327
        %v5346 = vpop.f32.mrf.mxu0
        %v5347 = vadd.f32 0.0, %v5346
        %5348 = vdwg.mxu0
        %v5349 = vadd.f32 %v5323, %v5347
        %v5350 = vld [vmem:[%s4260 + $0x2] sm:$0xff]
        %v5351 = vld [vmem:[%s5111] sm:$0xff]
        %v5353 = vsel %vm1802, %v5350, 0
        %5355 = vmatpush.msra.mxu0 0.0
        %5356 = vmatpush.msra.mxu0 0.0
        %5357 = vmatpush.msra.mxu0 0.0
        %5358 = vmatpush.msra.mxu0 0.0
        %5359 = vmatpush.msra.mxu0 0.0
        %5360 = vmatpush.msra.mxu0 0.0
        %5361 = vmatpush.msra.mxu0 0.0
        %5362 = vmatpush.msra.mxu0 0.0
        %5363 = vmatpush.msra.mxu0 0.0
        %5364 = vmatpush.msra.mxu0 0.0
        %5365 = vmatpush.msra.mxu0 0.0
        %5366 = vmatpush.msra.mxu0 0.0
        %5367 = vmatpush.msra.mxu0 0.0
        %5368 = vmatpush.msra.mxu0 0.0
        %5369 = vmatpush.msra.mxu0 0.0
        %5370 = vmatpush.msra.mxu0 %v5351
        %5371 = vmatmul.f32.gmra.mxu0 %v5353
        %v5372 = vpop.f32.mrf.mxu0
        %v5373 = vadd.f32 0.0, %v5372
        %5374 = vdwg.mxu0
        %v5375 = vadd.f32 %v5349, %v5373
        %v5376 = vld [vmem:[%s6] sm:$0x1]
        %v5378 = vperm.slane %v5376, 0
        %v5380 = vadd.f32 %v5375, %v5378
        %v5381 = vmax.f32 %v5380, 0.0
        %s5382 = scalar_lea.vmem [#allocation5], 8
        %5383 = vst.msk [vmem:[%s5382] sm:$0xff] %vm1802, %v5381
        %v5384 = vld [vmem:[%s3943] sm:$0xff]
        %v5385 = vld [vmem:[%s5] sm:$0xff]
        %v5386 = vld [vmem:[%s3943 + $0x1] sm:$0xff]
        %v5387 = vld [vmem:[%s4900] sm:$0xff]
        %v5389 = vsel %vm1802, %v5386, 0
        %5391 = vmatpush.msra.mxu0 0.0
        %5392 = vmatpush.msra.mxu0 0.0
        %5393 = vmatpush.msra.mxu0 0.0
        %5394 = vmatpush.msra.mxu0 0.0
        %5395 = vmatpush.msra.mxu0 0.0
        %5396 = vmatpush.msra.mxu0 0.0
        %5397 = vmatpush.msra.mxu0 0.0
        %5398 = vmatpush.msra.mxu0 0.0
        %5399 = vmatpush.msra.mxu0 0.0
        %5400 = vmatpush.msra.mxu0 0.0
        %5401 = vmatpush.msra.mxu0 0.0
        %5402 = vmatpush.msra.mxu0 0.0
        %5403 = vmatpush.msra.mxu0 0.0
        %5404 = vmatpush.msra.mxu0 0.0
        %5405 = vmatpush.msra.mxu0 0.0
        %5406 = vmatpush.msra.mxu0 %v5387
        %5407 = vmatmul.f32.gmra.mxu0 %v5389
        %v5408 = vpop.f32.mrf.mxu0
        %v5409 = vadd.f32 0.0, %v5408
        %5410 = vdwg.mxu0
        %v5412 = vsel %vm1802, %v5384, 0
        %5414 = vmatpush.msra.mxu0 0.0
        %5415 = vmatpush.msra.mxu0 0.0
        %5416 = vmatpush.msra.mxu0 0.0
        %5417 = vmatpush.msra.mxu0 0.0
        %5418 = vmatpush.msra.mxu0 0.0
        %5419 = vmatpush.msra.mxu0 0.0
        %5420 = vmatpush.msra.mxu0 0.0
        %5421 = vmatpush.msra.mxu0 0.0
        %5422 = vmatpush.msra.mxu0 0.0
        %5423 = vmatpush.msra.mxu0 0.0
        %5424 = vmatpush.msra.mxu0 0.0
        %5425 = vmatpush.msra.mxu0 0.0
        %5426 = vmatpush.msra.mxu0 0.0
        %5427 = vmatpush.msra.mxu0 0.0
        %5428 = vmatpush.msra.mxu0 0.0
        %5429 = vmatpush.msra.mxu0 %v5385
        %5430 = vmatmul.f32.gmra.mxu0 %v5412
        %v5431 = vpop.f32.mrf.mxu0
        %v5432 = vadd.f32 %v5409, %v5431
        %5433 = vdwg.mxu0
        %v5434 = vld [vmem:[%s3943 + $0x2] sm:$0xff]
        %v5435 = vld [vmem:[%s4949] sm:$0xff]
        %v5437 = vsel %vm1802, %v5434, 0
        %5439 = vmatpush.msra.mxu0 0.0
        %5440 = vmatpush.msra.mxu0 0.0
        %5441 = vmatpush.msra.mxu0 0.0
        %5442 = vmatpush.msra.mxu0 0.0
        %5443 = vmatpush.msra.mxu0 0.0
        %5444 = vmatpush.msra.mxu0 0.0
        %5445 = vmatpush.msra.mxu0 0.0
        %5446 = vmatpush.msra.mxu0 0.0
        %5447 = vmatpush.msra.mxu0 0.0
        %5448 = vmatpush.msra.mxu0 0.0
        %5449 = vmatpush.msra.mxu0 0.0
        %5450 = vmatpush.msra.mxu0 0.0
        %5451 = vmatpush.msra.mxu0 0.0
        %5452 = vmatpush.msra.mxu0 0.0
        %5453 = vmatpush.msra.mxu0 0.0
        %5454 = vmatpush.msra.mxu0 %v5435
        %5455 = vmatmul.f32.gmra.mxu0 %v5437
        %v5456 = vpop.f32.mrf.mxu0
        %v5457 = vadd.f32 0.0, %v5456
        %5458 = vdwg.mxu0
        %v5459 = vadd.f32 %v5432, %v5457
        %v5460 = vld [vmem:[%s4260] sm:$0xff]
        %v5461 = vld [vmem:[%s4976] sm:$0xff]
        %v5463 = vsel %vm1802, %v5460, 0
        %5465 = vmatpush.msra.mxu0 0.0
        %5466 = vmatpush.msra.mxu0 0.0
        %5467 = vmatpush.msra.mxu0 0.0
        %5468 = vmatpush.msra.mxu0 0.0
        %5469 = vmatpush.msra.mxu0 0.0
        %5470 = vmatpush.msra.mxu0 0.0
        %5471 = vmatpush.msra.mxu0 0.0
        %5472 = vmatpush.msra.mxu0 0.0
        %5473 = vmatpush.msra.mxu0 0.0
        %5474 = vmatpush.msra.mxu0 0.0
        %5475 = vmatpush.msra.mxu0 0.0
        %5476 = vmatpush.msra.mxu0 0.0
        %5477 = vmatpush.msra.mxu0 0.0
        %5478 = vmatpush.msra.mxu0 0.0
        %5479 = vmatpush.msra.mxu0 0.0
        %5480 = vmatpush.msra.mxu0 %v5461
        %5481 = vmatmul.f32.gmra.mxu0 %v5463
        %v5482 = vpop.f32.mrf.mxu0
        %v5483 = vadd.f32 0.0, %v5482
        %5484 = vdwg.mxu0
        %v5485 = vadd.f32 %v5459, %v5483
        %v5486 = vld [vmem:[%s4260 + $0x1] sm:$0xff]
        %v5487 = vld [vmem:[%s5003] sm:$0xff]
        %v5489 = vsel %vm1802, %v5486, 0
        %5491 = vmatpush.msra.mxu0 0.0
        %5492 = vmatpush.msra.mxu0 0.0
        %5493 = vmatpush.msra.mxu0 0.0
        %5494 = vmatpush.msra.mxu0 0.0
        %5495 = vmatpush.msra.mxu0 0.0
        %5496 = vmatpush.msra.mxu0 0.0
        %5497 = vmatpush.msra.mxu0 0.0
        %5498 = vmatpush.msra.mxu0 0.0
        %5499 = vmatpush.msra.mxu0 0.0
        %5500 = vmatpush.msra.mxu0 0.0
        %5501 = vmatpush.msra.mxu0 0.0
        %5502 = vmatpush.msra.mxu0 0.0
        %5503 = vmatpush.msra.mxu0 0.0
        %5504 = vmatpush.msra.mxu0 0.0
        %5505 = vmatpush.msra.mxu0 0.0
        %5506 = vmatpush.msra.mxu0 %v5487
        %5507 = vmatmul.f32.gmra.mxu0 %v5489
        %v5508 = vpop.f32.mrf.mxu0
        %v5509 = vadd.f32 0.0, %v5508
        %5510 = vdwg.mxu0
        %v5511 = vadd.f32 %v5485, %v5509
        %v5512 = vld [vmem:[%s4260 + $0x2] sm:$0xff]
        %v5513 = vld [vmem:[%s5030] sm:$0xff]
        %v5515 = vsel %vm1802, %v5512, 0
        %5517 = vmatpush.msra.mxu0 0.0
        %5518 = vmatpush.msra.mxu0 0.0
        %5519 = vmatpush.msra.mxu0 0.0
        %5520 = vmatpush.msra.mxu0 0.0
        %5521 = vmatpush.msra.mxu0 0.0
        %5522 = vmatpush.msra.mxu0 0.0
        %5523 = vmatpush.msra.mxu0 0.0
        %5524 = vmatpush.msra.mxu0 0.0
        %5525 = vmatpush.msra.mxu0 0.0
        %5526 = vmatpush.msra.mxu0 0.0
        %5527 = vmatpush.msra.mxu0 0.0
        %5528 = vmatpush.msra.mxu0 0.0
        %5529 = vmatpush.msra.mxu0 0.0
        %5530 = vmatpush.msra.mxu0 0.0
        %5531 = vmatpush.msra.mxu0 0.0
        %5532 = vmatpush.msra.mxu0 %v5513
        %5533 = vmatmul.f32.gmra.mxu0 %v5515
        %v5534 = vpop.f32.mrf.mxu0
        %v5535 = vadd.f32 0.0, %v5534
        %5536 = vdwg.mxu0
        %v5537 = vadd.f32 %v5511, %v5535
        %v5538 = vld [vmem:[%s4577] sm:$0xff]
        %v5539 = vld [vmem:[%s5057] sm:$0xff]
        %v5541 = vsel %vm1802, %v5538, 0
        %5543 = vmatpush.msra.mxu0 0.0
        %5544 = vmatpush.msra.mxu0 0.0
        %5545 = vmatpush.msra.mxu0 0.0
        %5546 = vmatpush.msra.mxu0 0.0
        %5547 = vmatpush.msra.mxu0 0.0
        %5548 = vmatpush.msra.mxu0 0.0
        %5549 = vmatpush.msra.mxu0 0.0
        %5550 = vmatpush.msra.mxu0 0.0
        %5551 = vmatpush.msra.mxu0 0.0
        %5552 = vmatpush.msra.mxu0 0.0
        %5553 = vmatpush.msra.mxu0 0.0
        %5554 = vmatpush.msra.mxu0 0.0
        %5555 = vmatpush.msra.mxu0 0.0
        %5556 = vmatpush.msra.mxu0 0.0
        %5557 = vmatpush.msra.mxu0 0.0
        %5558 = vmatpush.msra.mxu0 %v5539
        %5559 = vmatmul.f32.gmra.mxu0 %v5541
        %v5560 = vpop.f32.mrf.mxu0
        %v5561 = vadd.f32 0.0, %v5560
        %5562 = vdwg.mxu0
        %v5563 = vadd.f32 %v5537, %v5561
        %v5564 = vld [vmem:[%s4577 + $0x1] sm:$0xff]
        %v5565 = vld [vmem:[%s5084] sm:$0xff]
        %v5567 = vsel %vm1802, %v5564, 0
        %5569 = vmatpush.msra.mxu0 0.0
        %5570 = vmatpush.msra.mxu0 0.0
        %5571 = vmatpush.msra.mxu0 0.0
        %5572 = vmatpush.msra.mxu0 0.0
        %5573 = vmatpush.msra.mxu0 0.0
        %5574 = vmatpush.msra.mxu0 0.0
        %5575 = vmatpush.msra.mxu0 0.0
        %5576 = vmatpush.msra.mxu0 0.0
        %5577 = vmatpush.msra.mxu0 0.0
        %5578 = vmatpush.msra.mxu0 0.0
        %5579 = vmatpush.msra.mxu0 0.0
        %5580 = vmatpush.msra.mxu0 0.0
        %5581 = vmatpush.msra.mxu0 0.0
        %5582 = vmatpush.msra.mxu0 0.0
        %5583 = vmatpush.msra.mxu0 0.0
        %5584 = vmatpush.msra.mxu0 %v5565
        %5585 = vmatmul.f32.gmra.mxu0 %v5567
        %v5586 = vpop.f32.mrf.mxu0
        %v5587 = vadd.f32 0.0, %v5586
        %5588 = vdwg.mxu0
        %v5589 = vadd.f32 %v5563, %v5587
        %v5590 = vld [vmem:[%s4577 + $0x2] sm:$0xff]
        %v5591 = vld [vmem:[%s5111] sm:$0xff]
        %v5593 = vsel %vm1802, %v5590, 0
        %5595 = vmatpush.msra.mxu0 0.0
        %5596 = vmatpush.msra.mxu0 0.0
        %5597 = vmatpush.msra.mxu0 0.0
        %5598 = vmatpush.msra.mxu0 0.0
        %5599 = vmatpush.msra.mxu0 0.0
        %5600 = vmatpush.msra.mxu0 0.0
        %5601 = vmatpush.msra.mxu0 0.0
        %5602 = vmatpush.msra.mxu0 0.0
        %5603 = vmatpush.msra.mxu0 0.0
        %5604 = vmatpush.msra.mxu0 0.0
        %5605 = vmatpush.msra.mxu0 0.0
        %5606 = vmatpush.msra.mxu0 0.0
        %5607 = vmatpush.msra.mxu0 0.0
        %5608 = vmatpush.msra.mxu0 0.0
        %5609 = vmatpush.msra.mxu0 0.0
        %5610 = vmatpush.msra.mxu0 %v5591
        %5611 = vmatmul.f32.gmra.mxu0 %v5593
        %v5612 = vpop.f32.mrf.mxu0
        %v5613 = vadd.f32 0.0, %v5612
        %5614 = vdwg.mxu0
        %v5615 = vadd.f32 %v5589, %v5613
        %v5616 = vld [vmem:[%s6] sm:$0x1]
        %v5618 = vperm.slane %v5616, 0
        %v5620 = vadd.f32 %v5615, %v5618
        %v5621 = vmax.f32 %v5620, 0.0
        %s5622 = scalar_lea.vmem [#allocation5], 16
        %5623 = vst.msk [vmem:[%s5622] sm:$0xff] %vm1802, %v5621
        %v5624 = vld [vmem:[%s4260] sm:$0xff]
        %v5625 = vld [vmem:[%s5] sm:$0xff]
        %v5626 = vld [vmem:[%s4260 + $0x1] sm:$0xff]
        %v5627 = vld [vmem:[%s4900] sm:$0xff]
        %v5629 = vsel %vm1802, %v5626, 0
        %5631 = vmatpush.msra.mxu0 0.0
        %5632 = vmatpush.msra.mxu0 0.0
        %5633 = vmatpush.msra.mxu0 0.0
        %5634 = vmatpush.msra.mxu0 0.0
        %5635 = vmatpush.msra.mxu0 0.0
        %5636 = vmatpush.msra.mxu0 0.0
        %5637 = vmatpush.msra.mxu0 0.0
        %5638 = vmatpush.msra.mxu0 0.0
        %5639 = vmatpush.msra.mxu0 0.0
        %5640 = vmatpush.msra.mxu0 0.0
        %5641 = vmatpush.msra.mxu0 0.0
        %5642 = vmatpush.msra.mxu0 0.0
        %5643 = vmatpush.msra.mxu0 0.0
        %5644 = vmatpush.msra.mxu0 0.0
        %5645 = vmatpush.msra.mxu0 0.0
        %5646 = vmatpush.msra.mxu0 %v5627
        %5647 = vmatmul.f32.gmra.mxu0 %v5629
        %v5648 = vpop.f32.mrf.mxu0
        %v5649 = vadd.f32 0.0, %v5648
        %5650 = vdwg.mxu0
        %v5652 = vsel %vm1802, %v5624, 0
        %5654 = vmatpush.msra.mxu0 0.0
        %5655 = vmatpush.msra.mxu0 0.0
        %5656 = vmatpush.msra.mxu0 0.0
        %5657 = vmatpush.msra.mxu0 0.0
        %5658 = vmatpush.msra.mxu0 0.0
        %5659 = vmatpush.msra.mxu0 0.0
        %5660 = vmatpush.msra.mxu0 0.0
        %5661 = vmatpush.msra.mxu0 0.0
        %5662 = vmatpush.msra.mxu0 0.0
        %5663 = vmatpush.msra.mxu0 0.0
        %5664 = vmatpush.msra.mxu0 0.0
        %5665 = vmatpush.msra.mxu0 0.0
        %5666 = vmatpush.msra.mxu0 0.0
        %5667 = vmatpush.msra.mxu0 0.0
        %5668 = vmatpush.msra.mxu0 0.0
        %5669 = vmatpush.msra.mxu0 %v5625
        %5670 = vmatmul.f32.gmra.mxu0 %v5652
        %v5671 = vpop.f32.mrf.mxu0
        %v5672 = vadd.f32 %v5649, %v5671
        %5673 = vdwg.mxu0
        %v5674 = vld [vmem:[%s4260 + $0x2] sm:$0xff]
        %v5675 = vld [vmem:[%s4949] sm:$0xff]
        %v5677 = vsel %vm1802, %v5674, 0
        %5679 = vmatpush.msra.mxu0 0.0
        %5680 = vmatpush.msra.mxu0 0.0
        %5681 = vmatpush.msra.mxu0 0.0
        %5682 = vmatpush.msra.mxu0 0.0
        %5683 = vmatpush.msra.mxu0 0.0
        %5684 = vmatpush.msra.mxu0 0.0
        %5685 = vmatpush.msra.mxu0 0.0
        %5686 = vmatpush.msra.mxu0 0.0
        %5687 = vmatpush.msra.mxu0 0.0
        %5688 = vmatpush.msra.mxu0 0.0
        %5689 = vmatpush.msra.mxu0 0.0
        %5690 = vmatpush.msra.mxu0 0.0
        %5691 = vmatpush.msra.mxu0 0.0
        %5692 = vmatpush.msra.mxu0 0.0
        %5693 = vmatpush.msra.mxu0 0.0
        %5694 = vmatpush.msra.mxu0 %v5675
        %5695 = vmatmul.f32.gmra.mxu0 %v5677
        %v5696 = vpop.f32.mrf.mxu0
        %v5697 = vadd.f32 0.0, %v5696
        %5698 = vdwg.mxu0
        %v5699 = vadd.f32 %v5672, %v5697
        %v5700 = vld [vmem:[%s4577] sm:$0xff]
        %v5701 = vld [vmem:[%s4976] sm:$0xff]
        %v5703 = vsel %vm1802, %v5700, 0
        %5705 = vmatpush.msra.mxu0 0.0
        %5706 = vmatpush.msra.mxu0 0.0
        %5707 = vmatpush.msra.mxu0 0.0
        %5708 = vmatpush.msra.mxu0 0.0
        %5709 = vmatpush.msra.mxu0 0.0
        %5710 = vmatpush.msra.mxu0 0.0
        %5711 = vmatpush.msra.mxu0 0.0
        %5712 = vmatpush.msra.mxu0 0.0
        %5713 = vmatpush.msra.mxu0 0.0
        %5714 = vmatpush.msra.mxu0 0.0
        %5715 = vmatpush.msra.mxu0 0.0
        %5716 = vmatpush.msra.mxu0 0.0
        %5717 = vmatpush.msra.mxu0 0.0
        %5718 = vmatpush.msra.mxu0 0.0
        %5719 = vmatpush.msra.mxu0 0.0
        %5720 = vmatpush.msra.mxu0 %v5701
        %5721 = vmatmul.f32.gmra.mxu0 %v5703
        %v5722 = vpop.f32.mrf.mxu0
        %v5723 = vadd.f32 0.0, %v5722
        %5724 = vdwg.mxu0
        %v5725 = vadd.f32 %v5699, %v5723
        %v5726 = vld [vmem:[%s4577 + $0x1] sm:$0xff]
        %v5727 = vld [vmem:[%s5003] sm:$0xff]
        %v5729 = vsel %vm1802, %v5726, 0
        %5731 = vmatpush.msra.mxu0 0.0
        %5732 = vmatpush.msra.mxu0 0.0
        %5733 = vmatpush.msra.mxu0 0.0
        %5734 = vmatpush.msra.mxu0 0.0
        %5735 = vmatpush.msra.mxu0 0.0
        %5736 = vmatpush.msra.mxu0 0.0
        %5737 = vmatpush.msra.mxu0 0.0
        %5738 = vmatpush.msra.mxu0 0.0
        %5739 = vmatpush.msra.mxu0 0.0
        %5740 = vmatpush.msra.mxu0 0.0
        %5741 = vmatpush.msra.mxu0 0.0
        %5742 = vmatpush.msra.mxu0 0.0
        %5743 = vmatpush.msra.mxu0 0.0
        %5744 = vmatpush.msra.mxu0 0.0
        %5745 = vmatpush.msra.mxu0 0.0
        %5746 = vmatpush.msra.mxu0 %v5727
        %5747 = vmatmul.f32.gmra.mxu0 %v5729
        %v5748 = vpop.f32.mrf.mxu0
        %v5749 = vadd.f32 0.0, %v5748
        %5750 = vdwg.mxu0
        %v5751 = vadd.f32 %v5725, %v5749
        %v5752 = vld [vmem:[%s4577 + $0x2] sm:$0xff]
        %v5753 = vld [vmem:[%s5030] sm:$0xff]
        %v5755 = vsel %vm1802, %v5752, 0
        %5757 = vmatpush.msra.mxu0 0.0
        %5758 = vmatpush.msra.mxu0 0.0
        %5759 = vmatpush.msra.mxu0 0.0
        %5760 = vmatpush.msra.mxu0 0.0
        %5761 = vmatpush.msra.mxu0 0.0
        %5762 = vmatpush.msra.mxu0 0.0
        %5763 = vmatpush.msra.mxu0 0.0
        %5764 = vmatpush.msra.mxu0 0.0
        %5765 = vmatpush.msra.mxu0 0.0
        %5766 = vmatpush.msra.mxu0 0.0
        %5767 = vmatpush.msra.mxu0 0.0
        %5768 = vmatpush.msra.mxu0 0.0
        %5769 = vmatpush.msra.mxu0 0.0
        %5770 = vmatpush.msra.mxu0 0.0
        %5771 = vmatpush.msra.mxu0 0.0
        %5772 = vmatpush.msra.mxu0 %v5753
        %5773 = vmatmul.f32.gmra.mxu0 %v5755
        %v5774 = vpop.f32.mrf.mxu0
        %v5775 = vadd.f32 0.0, %v5774
        %5776 = vdwg.mxu0
        %v5777 = vadd.f32 %v5751, %v5775
        %v5778 = vld [vmem:[%s4894] sm:$0xff]
        %v5779 = vld [vmem:[%s5057] sm:$0xff]
        %v5781 = vsel %vm1802, %v5778, 0
        %5783 = vmatpush.msra.mxu0 0.0
        %5784 = vmatpush.msra.mxu0 0.0
        %5785 = vmatpush.msra.mxu0 0.0
        %5786 = vmatpush.msra.mxu0 0.0
        %5787 = vmatpush.msra.mxu0 0.0
        %5788 = vmatpush.msra.mxu0 0.0
        %5789 = vmatpush.msra.mxu0 0.0
        %5790 = vmatpush.msra.mxu0 0.0
        %5791 = vmatpush.msra.mxu0 0.0
        %5792 = vmatpush.msra.mxu0 0.0
        %5793 = vmatpush.msra.mxu0 0.0
        %5794 = vmatpush.msra.mxu0 0.0
        %5795 = vmatpush.msra.mxu0 0.0
        %5796 = vmatpush.msra.mxu0 0.0
        %5797 = vmatpush.msra.mxu0 0.0
        %5798 = vmatpush.msra.mxu0 %v5779
        %5799 = vmatmul.f32.gmra.mxu0 %v5781
        %v5800 = vpop.f32.mrf.mxu0
        %v5801 = vadd.f32 0.0, %v5800
        %5802 = vdwg.mxu0
        %v5803 = vadd.f32 %v5777, %v5801
        %v5804 = vld [vmem:[%s4894 + $0x1] sm:$0xff]
        %v5805 = vld [vmem:[%s5084] sm:$0xff]
        %v5807 = vsel %vm1802, %v5804, 0
        %5809 = vmatpush.msra.mxu0 0.0
        %5810 = vmatpush.msra.mxu0 0.0
        %5811 = vmatpush.msra.mxu0 0.0
        %5812 = vmatpush.msra.mxu0 0.0
        %5813 = vmatpush.msra.mxu0 0.0
        %5814 = vmatpush.msra.mxu0 0.0
        %5815 = vmatpush.msra.mxu0 0.0
        %5816 = vmatpush.msra.mxu0 0.0
        %5817 = vmatpush.msra.mxu0 0.0
        %5818 = vmatpush.msra.mxu0 0.0
        %5819 = vmatpush.msra.mxu0 0.0
        %5820 = vmatpush.msra.mxu0 0.0
        %5821 = vmatpush.msra.mxu0 0.0
        %5822 = vmatpush.msra.mxu0 0.0
        %5823 = vmatpush.msra.mxu0 0.0
        %5824 = vmatpush.msra.mxu0 %v5805
        %5825 = vmatmul.f32.gmra.mxu0 %v5807
        %v5826 = vpop.f32.mrf.mxu0
        %v5827 = vadd.f32 0.0, %v5826
        %5828 = vdwg.mxu0
        %v5829 = vadd.f32 %v5803, %v5827
        %v5830 = vld [vmem:[%s4894 + $0x2] sm:$0xff]
        %v5831 = vld [vmem:[%s5111] sm:$0xff]
        %v5833 = vsel %vm1802, %v5830, 0
        %5835 = vmatpush.msra.mxu0 0.0
        %5836 = vmatpush.msra.mxu0 0.0
        %5837 = vmatpush.msra.mxu0 0.0
        %5838 = vmatpush.msra.mxu0 0.0
        %5839 = vmatpush.msra.mxu0 0.0
        %5840 = vmatpush.msra.mxu0 0.0
        %5841 = vmatpush.msra.mxu0 0.0
        %5842 = vmatpush.msra.mxu0 0.0
        %5843 = vmatpush.msra.mxu0 0.0
        %5844 = vmatpush.msra.mxu0 0.0
        %5845 = vmatpush.msra.mxu0 0.0
        %5846 = vmatpush.msra.mxu0 0.0
        %5847 = vmatpush.msra.mxu0 0.0
        %5848 = vmatpush.msra.mxu0 0.0
        %5849 = vmatpush.msra.mxu0 0.0
        %5850 = vmatpush.msra.mxu0 %v5831
        %5851 = vmatmul.f32.gmra.mxu0 %v5833
        %v5852 = vpop.f32.mrf.mxu0
        %v5853 = vadd.f32 0.0, %v5852
        %5854 = vdwg.mxu0
        %v5855 = vadd.f32 %v5829, %v5853
        %v5856 = vld [vmem:[%s6] sm:$0x1]
        %v5858 = vperm.slane %v5856, 0
        %v5860 = vadd.f32 %v5855, %v5858
        %v5861 = vmax.f32 %v5860, 0.0
        %s5862 = scalar_lea.vmem [#allocation5], 24
        %5863 = vst.msk [vmem:[%s5862] sm:$0xff] %vm1802, %v5861
        %v5864 = vld [vmem:[%s10] sm:$0x1]
        %v5865 = vld [vmem:[#allocation5] sm:$0x3f]
        %v5866 = vld [vmem:[%s7] sm:$0xff]
        %v5867 = vld [vmem:[#allocation5 + $0x1] sm:$0x3f]
        %s5868 = scalar_lea.vmem %s7, 8
        %v5869 = vld [vmem:[%s5868] sm:$0xff]
        %v5871 = vsel %vm1802, %v5867, 0
        %5873 = vmatpush.msra.mxu0 0.0
        %5874 = vmatpush.msra.mxu0 0.0
        %5875 = vmatpush.msra.mxu0 0.0
        %5876 = vmatpush.msra.mxu0 0.0
        %5877 = vmatpush.msra.mxu0 0.0
        %5878 = vmatpush.msra.mxu0 0.0
        %5879 = vmatpush.msra.mxu0 0.0
        %5880 = vmatpush.msra.mxu0 0.0
        %5881 = vmatpush.msra.mxu0 0.0
        %5882 = vmatpush.msra.mxu0 0.0
        %5883 = vmatpush.msra.mxu0 0.0
        %5884 = vmatpush.msra.mxu0 0.0
        %5885 = vmatpush.msra.mxu0 0.0
        %5886 = vmatpush.msra.mxu0 0.0
        %5887 = vmatpush.msra.mxu0 0.0
        %5888 = vmatpush.msra.mxu0 %v5869
        %5889 = vmatmul.f32.gmra.mxu0 %v5871
        %v5890 = vpop.f32.mrf.mxu0
        %v5891 = vadd.f32 0.0, %v5890
        %5892 = vdwg.mxu0
        %v5894 = vsel %vm1802, %v5865, 0
        %5896 = vmatpush.msra.mxu0 0.0
        %5897 = vmatpush.msra.mxu0 0.0
        %5898 = vmatpush.msra.mxu0 0.0
        %5899 = vmatpush.msra.mxu0 0.0
        %5900 = vmatpush.msra.mxu0 0.0
        %5901 = vmatpush.msra.mxu0 0.0
        %5902 = vmatpush.msra.mxu0 0.0
        %5903 = vmatpush.msra.mxu0 0.0
        %5904 = vmatpush.msra.mxu0 0.0
        %5905 = vmatpush.msra.mxu0 0.0
        %5906 = vmatpush.msra.mxu0 0.0
        %5907 = vmatpush.msra.mxu0 0.0
        %5908 = vmatpush.msra.mxu0 0.0
        %5909 = vmatpush.msra.mxu0 0.0
        %5910 = vmatpush.msra.mxu0 0.0
        %5911 = vmatpush.msra.mxu0 %v5866
        %5912 = vmatmul.f32.gmra.mxu0 %v5894
        %v5913 = vpop.f32.mrf.mxu0
        %v5914 = vadd.f32 %v5891, %v5913
        %5915 = vdwg.mxu0
        %v5916 = vld [vmem:[#allocation5 + $0x2] sm:$0x3f]
        %s5917 = scalar_lea.vmem %s7, 16
        %v5918 = vld [vmem:[%s5917] sm:$0xff]
        %v5920 = vsel %vm1802, %v5916, 0
        %5922 = vmatpush.msra.mxu0 0.0
        %5923 = vmatpush.msra.mxu0 0.0
        %5924 = vmatpush.msra.mxu0 0.0
        %5925 = vmatpush.msra.mxu0 0.0
        %5926 = vmatpush.msra.mxu0 0.0
        %5927 = vmatpush.msra.mxu0 0.0
        %5928 = vmatpush.msra.mxu0 0.0
        %5929 = vmatpush.msra.mxu0 0.0
        %5930 = vmatpush.msra.mxu0 0.0
        %5931 = vmatpush.msra.mxu0 0.0
        %5932 = vmatpush.msra.mxu0 0.0
        %5933 = vmatpush.msra.mxu0 0.0
        %5934 = vmatpush.msra.mxu0 0.0
        %5935 = vmatpush.msra.mxu0 0.0
        %5936 = vmatpush.msra.mxu0 0.0
        %5937 = vmatpush.msra.mxu0 %v5918
        %5938 = vmatmul.f32.gmra.mxu0 %v5920
        %v5939 = vpop.f32.mrf.mxu0
        %v5940 = vadd.f32 0.0, %v5939
        %5941 = vdwg.mxu0
        %v5942 = vadd.f32 %v5914, %v5940
        %v5943 = vld [vmem:[%s5382] sm:$0x3f]
        %s5944 = scalar_lea.vmem %s7, 24
        %v5945 = vld [vmem:[%s5944] sm:$0xff]
        %v5947 = vsel %vm1802, %v5943, 0
        %5949 = vmatpush.msra.mxu0 0.0
        %5950 = vmatpush.msra.mxu0 0.0
        %5951 = vmatpush.msra.mxu0 0.0
        %5952 = vmatpush.msra.mxu0 0.0
        %5953 = vmatpush.msra.mxu0 0.0
        %5954 = vmatpush.msra.mxu0 0.0
        %5955 = vmatpush.msra.mxu0 0.0
        %5956 = vmatpush.msra.mxu0 0.0
        %5957 = vmatpush.msra.mxu0 0.0
        %5958 = vmatpush.msra.mxu0 0.0
        %5959 = vmatpush.msra.mxu0 0.0
        %5960 = vmatpush.msra.mxu0 0.0
        %5961 = vmatpush.msra.mxu0 0.0
        %5962 = vmatpush.msra.mxu0 0.0
        %5963 = vmatpush.msra.mxu0 0.0
        %5964 = vmatpush.msra.mxu0 %v5945
        %5965 = vmatmul.f32.gmra.mxu0 %v5947
        %v5966 = vpop.f32.mrf.mxu0
        %v5967 = vadd.f32 0.0, %v5966
        %5968 = vdwg.mxu0
        %v5969 = vadd.f32 %v5942, %v5967
        %v5970 = vld [vmem:[%s5382 + $0x1] sm:$0x3f]
        %s5971 = scalar_lea.vmem %s7, 32
        %v5972 = vld [vmem:[%s5971] sm:$0xff]
        %v5974 = vsel %vm1802, %v5970, 0
        %5976 = vmatpush.msra.mxu0 0.0
        %5977 = vmatpush.msra.mxu0 0.0
        %5978 = vmatpush.msra.mxu0 0.0
        %5979 = vmatpush.msra.mxu0 0.0
        %5980 = vmatpush.msra.mxu0 0.0
        %5981 = vmatpush.msra.mxu0 0.0
        %5982 = vmatpush.msra.mxu0 0.0
        %5983 = vmatpush.msra.mxu0 0.0
        %5984 = vmatpush.msra.mxu0 0.0
        %5985 = vmatpush.msra.mxu0 0.0
        %5986 = vmatpush.msra.mxu0 0.0
        %5987 = vmatpush.msra.mxu0 0.0
        %5988 = vmatpush.msra.mxu0 0.0
        %5989 = vmatpush.msra.mxu0 0.0
        %5990 = vmatpush.msra.mxu0 0.0
        %5991 = vmatpush.msra.mxu0 %v5972
        %5992 = vmatmul.f32.gmra.mxu0 %v5974
        %v5993 = vpop.f32.mrf.mxu0
        %v5994 = vadd.f32 0.0, %v5993
        %5995 = vdwg.mxu0
        %v5996 = vadd.f32 %v5969, %v5994
        %v5997 = vld [vmem:[%s5382 + $0x2] sm:$0x3f]
        %s5998 = scalar_lea.vmem %s7, 40
        %v5999 = vld [vmem:[%s5998] sm:$0xff]
        %v6001 = vsel %vm1802, %v5997, 0
        %6003 = vmatpush.msra.mxu0 0.0
        %6004 = vmatpush.msra.mxu0 0.0
        %6005 = vmatpush.msra.mxu0 0.0
        %6006 = vmatpush.msra.mxu0 0.0
        %6007 = vmatpush.msra.mxu0 0.0
        %6008 = vmatpush.msra.mxu0 0.0
        %6009 = vmatpush.msra.mxu0 0.0
        %6010 = vmatpush.msra.mxu0 0.0
        %6011 = vmatpush.msra.mxu0 0.0
        %6012 = vmatpush.msra.mxu0 0.0
        %6013 = vmatpush.msra.mxu0 0.0
        %6014 = vmatpush.msra.mxu0 0.0
        %6015 = vmatpush.msra.mxu0 0.0
        %6016 = vmatpush.msra.mxu0 0.0
        %6017 = vmatpush.msra.mxu0 0.0
        %6018 = vmatpush.msra.mxu0 %v5999
        %6019 = vmatmul.f32.gmra.mxu0 %v6001
        %v6020 = vpop.f32.mrf.mxu0
        %v6021 = vadd.f32 0.0, %v6020
        %6022 = vdwg.mxu0
        %v6023 = vadd.f32 %v5996, %v6021
        %v6024 = vld [vmem:[%s5622] sm:$0x3f]
        %s6025 = scalar_lea.vmem %s7, 48
        %v6026 = vld [vmem:[%s6025] sm:$0xff]
        %v6028 = vsel %vm1802, %v6024, 0
        %6030 = vmatpush.msra.mxu0 0.0
        %6031 = vmatpush.msra.mxu0 0.0
        %6032 = vmatpush.msra.mxu0 0.0
        %6033 = vmatpush.msra.mxu0 0.0
        %6034 = vmatpush.msra.mxu0 0.0
        %6035 = vmatpush.msra.mxu0 0.0
        %6036 = vmatpush.msra.mxu0 0.0
        %6037 = vmatpush.msra.mxu0 0.0
        %6038 = vmatpush.msra.mxu0 0.0
        %6039 = vmatpush.msra.mxu0 0.0
        %6040 = vmatpush.msra.mxu0 0.0
        %6041 = vmatpush.msra.mxu0 0.0
        %6042 = vmatpush.msra.mxu0 0.0
        %6043 = vmatpush.msra.mxu0 0.0
        %6044 = vmatpush.msra.mxu0 0.0
        %6045 = vmatpush.msra.mxu0 %v6026
        %6046 = vmatmul.f32.gmra.mxu0 %v6028
        %v6047 = vpop.f32.mrf.mxu0
        %v6048 = vadd.f32 0.0, %v6047
        %6049 = vdwg.mxu0
        %v6050 = vadd.f32 %v6023, %v6048
        %v6051 = vld [vmem:[%s5622 + $0x1] sm:$0x3f]
        %s6052 = scalar_lea.vmem %s7, 56
        %v6053 = vld [vmem:[%s6052] sm:$0xff]
        %v6055 = vsel %vm1802, %v6051, 0
        %6057 = vmatpush.msra.mxu0 0.0
        %6058 = vmatpush.msra.mxu0 0.0
        %6059 = vmatpush.msra.mxu0 0.0
        %6060 = vmatpush.msra.mxu0 0.0
        %6061 = vmatpush.msra.mxu0 0.0
        %6062 = vmatpush.msra.mxu0 0.0
        %6063 = vmatpush.msra.mxu0 0.0
        %6064 = vmatpush.msra.mxu0 0.0
        %6065 = vmatpush.msra.mxu0 0.0
        %6066 = vmatpush.msra.mxu0 0.0
        %6067 = vmatpush.msra.mxu0 0.0
        %6068 = vmatpush.msra.mxu0 0.0
        %6069 = vmatpush.msra.mxu0 0.0
        %6070 = vmatpush.msra.mxu0 0.0
        %6071 = vmatpush.msra.mxu0 0.0
        %6072 = vmatpush.msra.mxu0 %v6053
        %6073 = vmatmul.f32.gmra.mxu0 %v6055
        %v6074 = vpop.f32.mrf.mxu0
        %v6075 = vadd.f32 0.0, %v6074
        %6076 = vdwg.mxu0
        %v6077 = vadd.f32 %v6050, %v6075
        %v6078 = vld [vmem:[%s5622 + $0x2] sm:$0x3f]
        %s6079 = scalar_lea.vmem %s7, 64
        %v6080 = vld [vmem:[%s6079] sm:$0xff]
        %v6082 = vsel %vm1802, %v6078, 0
        %6084 = vmatpush.msra.mxu0 0.0
        %6085 = vmatpush.msra.mxu0 0.0
        %6086 = vmatpush.msra.mxu0 0.0
        %6087 = vmatpush.msra.mxu0 0.0
        %6088 = vmatpush.msra.mxu0 0.0
        %6089 = vmatpush.msra.mxu0 0.0
        %6090 = vmatpush.msra.mxu0 0.0
        %6091 = vmatpush.msra.mxu0 0.0
        %6092 = vmatpush.msra.mxu0 0.0
        %6093 = vmatpush.msra.mxu0 0.0
        %6094 = vmatpush.msra.mxu0 0.0
        %6095 = vmatpush.msra.mxu0 0.0
        %6096 = vmatpush.msra.mxu0 0.0
        %6097 = vmatpush.msra.mxu0 0.0
        %6098 = vmatpush.msra.mxu0 0.0
        %6099 = vmatpush.msra.mxu0 %v6080
        %6100 = vmatmul.f32.gmra.mxu0 %v6082
        %v6101 = vpop.f32.mrf.mxu0
        %v6102 = vadd.f32 0.0, %v6101
        %6103 = vdwg.mxu0
        %v6104 = vadd.f32 %v6077, %v6102
        %v6105 = vld [vmem:[%s8] sm:$0x1]
        %v6107 = vperm.slane %v6105, 0
        %v6109 = vadd.f32 %v6104, %v6107
        %v6110 = vmax.f32 %v6109, 0.0
        %v6111 = vld [vmem:[%s9] sm:$0xff]
        %v6112 = vld [vmem:[%s9 + $0x8] sm:$0xff]
        %vm6113 = vcmask 130048
        %v6115 = vsel %vm6113, %v6110, 0
        %6117 = vmatpush.msra.mxu0 0.0
        %6118 = vmatpush.msra.mxu0 0.0
        %6119 = vmatpush.msra.mxu0 0.0
        %6120 = vmatpush.msra.mxu0 0.0
        %6121 = vmatpush.msra.mxu0 0.0
        %6122 = vmatpush.msra.mxu0 0.0
        %6123 = vmatpush.msra.mxu0 0.0
        %6124 = vmatpush.msra.mxu0 0.0
        %6125 = vmatpush.msra.mxu0 0.0
        %6126 = vmatpush.msra.mxu0 0.0
        %6127 = vmatpush.msra.mxu0 0.0
        %6128 = vmatpush.msra.mxu0 0.0
        %6129 = vmatpush.msra.mxu0 0.0
        %6130 = vmatpush.msra.mxu0 0.0
        %6131 = vmatpush.msra.mxu0 %v6112
        %6132 = vmatpush.msra.mxu0 %v6111
        %6133 = vmatmul.f32.gmra.mxu0 %v6115
        %v6134 = vpop.f32.mrf.mxu0
        %v6135 = vadd.f32 0.0, %v6134
        %6136 = vdwg.mxu0
        %v6137 = vadd.f32 %v5864, %v6135
        %v6138 = vld [vmem:[%s9 + $0x10] sm:$0xff]
        %v6139 = vld [vmem:[%s9 + $0x18] sm:$0xff]
        %v6140 = vrot.slane %v6110, 1
        %v6141 = vsel %vm6113, %v6140, 0
        %6143 = vmatpush.msra.mxu0 0.0
        %6144 = vmatpush.msra.mxu0 0.0
        %6145 = vmatpush.msra.mxu0 0.0
        %6146 = vmatpush.msra.mxu0 0.0
        %6147 = vmatpush.msra.mxu0 0.0
        %6148 = vmatpush.msra.mxu0 0.0
        %6149 = vmatpush.msra.mxu0 0.0
        %6150 = vmatpush.msra.mxu0 0.0
        %6151 = vmatpush.msra.mxu0 0.0
        %6152 = vmatpush.msra.mxu0 0.0
        %6153 = vmatpush.msra.mxu0 0.0
        %6154 = vmatpush.msra.mxu0 0.0
        %6155 = vmatpush.msra.mxu0 0.0
        %6156 = vmatpush.msra.mxu0 0.0
        %6157 = vmatpush.msra.mxu0 %v6139
        %6158 = vmatpush.msra.mxu0 %v6138
        %6159 = vmatmul.f32.gmra.mxu0 %v6141
        %v6160 = vpop.f32.mrf.mxu0
        %v6161 = vadd.f32 0.0, %v6160
        %6162 = vdwg.mxu0
        %v6163 = vadd.f32 %v6137, %v6161
        %v6164 = vld [vmem:[%s9 + $0x20] sm:$0xff]
        %v6165 = vld [vmem:[%s9 + $0x28] sm:$0xff]
        %v6166 = vrot.slane %v6110, 2
        %v6167 = vsel %vm6113, %v6166, 0
        %6169 = vmatpush.msra.mxu0 0.0
        %6170 = vmatpush.msra.mxu0 0.0
        %6171 = vmatpush.msra.mxu0 0.0
        %6172 = vmatpush.msra.mxu0 0.0
        %6173 = vmatpush.msra.mxu0 0.0
        %6174 = vmatpush.msra.mxu0 0.0
        %6175 = vmatpush.msra.mxu0 0.0
        %6176 = vmatpush.msra.mxu0 0.0
        %6177 = vmatpush.msra.mxu0 0.0
        %6178 = vmatpush.msra.mxu0 0.0
        %6179 = vmatpush.msra.mxu0 0.0
        %6180 = vmatpush.msra.mxu0 0.0
        %6181 = vmatpush.msra.mxu0 0.0
        %6182 = vmatpush.msra.mxu0 0.0
        %6183 = vmatpush.msra.mxu0 %v6165
        %6184 = vmatpush.msra.mxu0 %v6164
        %6185 = vmatmul.f32.gmra.mxu0 %v6167
        %v6186 = vpop.f32.mrf.mxu0
        %v6187 = vadd.f32 0.0, %v6186
        %6188 = vdwg.mxu0
        %v6189 = vadd.f32 %v6163, %v6187
        %v6190 = vld [vmem:[%s9 + $0x30] sm:$0xff]
        %v6191 = vld [vmem:[%s9 + $0x38] sm:$0xff]
        %v6192 = vrot.slane %v6110, 3
        %v6193 = vsel %vm6113, %v6192, 0
        %6195 = vmatpush.msra.mxu0 0.0
        %6196 = vmatpush.msra.mxu0 0.0
        %6197 = vmatpush.msra.mxu0 0.0
        %6198 = vmatpush.msra.mxu0 0.0
        %6199 = vmatpush.msra.mxu0 0.0
        %6200 = vmatpush.msra.mxu0 0.0
        %6201 = vmatpush.msra.mxu0 0.0
        %6202 = vmatpush.msra.mxu0 0.0
        %6203 = vmatpush.msra.mxu0 0.0
        %6204 = vmatpush.msra.mxu0 0.0
        %6205 = vmatpush.msra.mxu0 0.0
        %6206 = vmatpush.msra.mxu0 0.0
        %6207 = vmatpush.msra.mxu0 0.0
        %6208 = vmatpush.msra.mxu0 0.0
        %6209 = vmatpush.msra.mxu0 %v6191
        %6210 = vmatpush.msra.mxu0 %v6190
        %6211 = vmatmul.f32.gmra.mxu0 %v6193
        %v6212 = vpop.f32.mrf.mxu0
        %v6213 = vadd.f32 0.0, %v6212
        %6214 = vdwg.mxu0
        %v6215 = vadd.f32 %v6189, %v6213
        %v6216 = vld [vmem:[%s9 + $0x40] sm:$0xff]
        %v6217 = vld [vmem:[%s9 + $0x48] sm:$0xff]
        %v6218 = vrot.slane %v6110, 4
        %v6219 = vsel %vm6113, %v6218, 0
        %6221 = vmatpush.msra.mxu0 0.0
        %6222 = vmatpush.msra.mxu0 0.0
        %6223 = vmatpush.msra.mxu0 0.0
        %6224 = vmatpush.msra.mxu0 0.0
        %6225 = vmatpush.msra.mxu0 0.0
        %6226 = vmatpush.msra.mxu0 0.0
        %6227 = vmatpush.msra.mxu0 0.0
        %6228 = vmatpush.msra.mxu0 0.0
        %6229 = vmatpush.msra.mxu0 0.0
        %6230 = vmatpush.msra.mxu0 0.0
        %6231 = vmatpush.msra.mxu0 0.0
        %6232 = vmatpush.msra.mxu0 0.0
        %6233 = vmatpush.msra.mxu0 0.0
        %6234 = vmatpush.msra.mxu0 0.0
        %6235 = vmatpush.msra.mxu0 %v6217
        %6236 = vmatpush.msra.mxu0 %v6216
        %6237 = vmatmul.f32.gmra.mxu0 %v6219
        %v6238 = vpop.f32.mrf.mxu0
        %v6239 = vadd.f32 0.0, %v6238
        %6240 = vdwg.mxu0
        %v6241 = vadd.f32 %v6215, %v6239
        %v6242 = vld [vmem:[%s9 + $0x50] sm:$0xff]
        %v6243 = vld [vmem:[%s9 + $0x58] sm:$0xff]
        %v6244 = vrot.slane %v6110, 5
        %v6245 = vsel %vm6113, %v6244, 0
        %6247 = vmatpush.msra.mxu0 0.0
        %6248 = vmatpush.msra.mxu0 0.0
        %6249 = vmatpush.msra.mxu0 0.0
        %6250 = vmatpush.msra.mxu0 0.0
        %6251 = vmatpush.msra.mxu0 0.0
        %6252 = vmatpush.msra.mxu0 0.0
        %6253 = vmatpush.msra.mxu0 0.0
        %6254 = vmatpush.msra.mxu0 0.0
        %6255 = vmatpush.msra.mxu0 0.0
        %6256 = vmatpush.msra.mxu0 0.0
        %6257 = vmatpush.msra.mxu0 0.0
        %6258 = vmatpush.msra.mxu0 0.0
        %6259 = vmatpush.msra.mxu0 0.0
        %6260 = vmatpush.msra.mxu0 0.0
        %6261 = vmatpush.msra.mxu0 %v6243
        %6262 = vmatpush.msra.mxu0 %v6242
        %6263 = vmatmul.f32.gmra.mxu0 %v6245
        %v6264 = vpop.f32.mrf.mxu0
        %v6265 = vadd.f32 0.0, %v6264
        %6266 = vdwg.mxu0
        %v6267 = vadd.f32 %v6241, %v6265
        %6268 = vmatpush.msra.mxu0 0.0
        %6269 = vmatpush.msra.mxu0 0.0
        %6270 = vmatpush.msra.mxu0 0.0
        %6271 = vmatpush.msra.mxu0 0.0
        %6272 = vmatpush.msra.mxu0 0.0
        %6273 = vmatpush.msra.mxu0 0.0
        %6274 = vmatpush.msra.mxu0 0.0
        %6275 = vmatpush.msra.mxu0 0.0
        %6276 = vmatpush.msra.mxu0 0.0
        %6277 = vmatpush.msra.mxu0 0.0
        %6278 = vmatpush.msra.mxu0 0.0
        %6279 = vmatpush.msra.mxu0 0.0
        %6280 = vmatpush.msra.mxu0 0.0
        %6281 = vmatpush.msra.mxu0 0.0
        %6282 = vmatpush.msra.mxu0 0.0
        %6283 = vmatpush.msra.mxu0 %v5869
        %6284 = vmatmul.f32.gmra.mxu0 %v5974
        %v6285 = vpop.f32.mrf.mxu0
        %v6286 = vadd.f32 0.0, %v6285
        %6287 = vdwg.mxu0
        %6288 = vmatpush.msra.mxu0 0.0
        %6289 = vmatpush.msra.mxu0 0.0
        %6290 = vmatpush.msra.mxu0 0.0
        %6291 = vmatpush.msra.mxu0 0.0
        %6292 = vmatpush.msra.mxu0 0.0
        %6293 = vmatpush.msra.mxu0 0.0
        %6294 = vmatpush.msra.mxu0 0.0
        %6295 = vmatpush.msra.mxu0 0.0
        %6296 = vmatpush.msra.mxu0 0.0
        %6297 = vmatpush.msra.mxu0 0.0
        %6298 = vmatpush.msra.mxu0 0.0
        %6299 = vmatpush.msra.mxu0 0.0
        %6300 = vmatpush.msra.mxu0 0.0
        %6301 = vmatpush.msra.mxu0 0.0
        %6302 = vmatpush.msra.mxu0 0.0
        %6303 = vmatpush.msra.mxu0 %v5866
        %6304 = vmatmul.f32.gmra.mxu0 %v5947
        %v6305 = vpop.f32.mrf.mxu0
        %v6306 = vadd.f32 %v6286, %v6305
        %6307 = vdwg.mxu0
        %6308 = vmatpush.msra.mxu0 0.0
        %6309 = vmatpush.msra.mxu0 0.0
        %6310 = vmatpush.msra.mxu0 0.0
        %6311 = vmatpush.msra.mxu0 0.0
        %6312 = vmatpush.msra.mxu0 0.0
        %6313 = vmatpush.msra.mxu0 0.0
        %6314 = vmatpush.msra.mxu0 0.0
        %6315 = vmatpush.msra.mxu0 0.0
        %6316 = vmatpush.msra.mxu0 0.0
        %6317 = vmatpush.msra.mxu0 0.0
        %6318 = vmatpush.msra.mxu0 0.0
        %6319 = vmatpush.msra.mxu0 0.0
        %6320 = vmatpush.msra.mxu0 0.0
        %6321 = vmatpush.msra.mxu0 0.0
        %6322 = vmatpush.msra.mxu0 0.0
        %6323 = vmatpush.msra.mxu0 %v5918
        %6324 = vmatmul.f32.gmra.mxu0 %v6001
        %v6325 = vpop.f32.mrf.mxu0
        %v6326 = vadd.f32 0.0, %v6325
        %6327 = vdwg.mxu0
        %v6328 = vadd.f32 %v6306, %v6326
        %6329 = vmatpush.msra.mxu0 0.0
        %6330 = vmatpush.msra.mxu0 0.0
        %6331 = vmatpush.msra.mxu0 0.0
        %6332 = vmatpush.msra.mxu0 0.0
        %6333 = vmatpush.msra.mxu0 0.0
        %6334 = vmatpush.msra.mxu0 0.0
        %6335 = vmatpush.msra.mxu0 0.0
        %6336 = vmatpush.msra.mxu0 0.0
        %6337 = vmatpush.msra.mxu0 0.0
        %6338 = vmatpush.msra.mxu0 0.0
        %6339 = vmatpush.msra.mxu0 0.0
        %6340 = vmatpush.msra.mxu0 0.0
        %6341 = vmatpush.msra.mxu0 0.0
        %6342 = vmatpush.msra.mxu0 0.0
        %6343 = vmatpush.msra.mxu0 0.0
        %6344 = vmatpush.msra.mxu0 %v5945
        %6345 = vmatmul.f32.gmra.mxu0 %v6028
        %v6346 = vpop.f32.mrf.mxu0
        %v6347 = vadd.f32 0.0, %v6346
        %6348 = vdwg.mxu0
        %v6349 = vadd.f32 %v6328, %v6347
        %6350 = vmatpush.msra.mxu0 0.0
        %6351 = vmatpush.msra.mxu0 0.0
        %6352 = vmatpush.msra.mxu0 0.0
        %6353 = vmatpush.msra.mxu0 0.0
        %6354 = vmatpush.msra.mxu0 0.0
        %6355 = vmatpush.msra.mxu0 0.0
        %6356 = vmatpush.msra.mxu0 0.0
        %6357 = vmatpush.msra.mxu0 0.0
        %6358 = vmatpush.msra.mxu0 0.0
        %6359 = vmatpush.msra.mxu0 0.0
        %6360 = vmatpush.msra.mxu0 0.0
        %6361 = vmatpush.msra.mxu0 0.0
        %6362 = vmatpush.msra.mxu0 0.0
        %6363 = vmatpush.msra.mxu0 0.0
        %6364 = vmatpush.msra.mxu0 0.0
        %6365 = vmatpush.msra.mxu0 %v5972
        %6366 = vmatmul.f32.gmra.mxu0 %v6055
        %v6367 = vpop.f32.mrf.mxu0
        %v6368 = vadd.f32 0.0, %v6367
        %6369 = vdwg.mxu0
        %v6370 = vadd.f32 %v6349, %v6368
        %6371 = vmatpush.msra.mxu0 0.0
        %6372 = vmatpush.msra.mxu0 0.0
        %6373 = vmatpush.msra.mxu0 0.0
        %6374 = vmatpush.msra.mxu0 0.0
        %6375 = vmatpush.msra.mxu0 0.0
        %6376 = vmatpush.msra.mxu0 0.0
        %6377 = vmatpush.msra.mxu0 0.0
        %6378 = vmatpush.msra.mxu0 0.0
        %6379 = vmatpush.msra.mxu0 0.0
        %6380 = vmatpush.msra.mxu0 0.0
        %6381 = vmatpush.msra.mxu0 0.0
        %6382 = vmatpush.msra.mxu0 0.0
        %6383 = vmatpush.msra.mxu0 0.0
        %6384 = vmatpush.msra.mxu0 0.0
        %6385 = vmatpush.msra.mxu0 0.0
        %6386 = vmatpush.msra.mxu0 %v5999
        %6387 = vmatmul.f32.gmra.mxu0 %v6082
        %v6388 = vpop.f32.mrf.mxu0
        %v6389 = vadd.f32 0.0, %v6388
        %6390 = vdwg.mxu0
        %v6391 = vadd.f32 %v6370, %v6389
        %v6392 = vld [vmem:[%s5862] sm:$0x3f]
        %v6394 = vsel %vm1802, %v6392, 0
        %6396 = vmatpush.msra.mxu0 0.0
        %6397 = vmatpush.msra.mxu0 0.0
        %6398 = vmatpush.msra.mxu0 0.0
        %6399 = vmatpush.msra.mxu0 0.0
        %6400 = vmatpush.msra.mxu0 0.0
        %6401 = vmatpush.msra.mxu0 0.0
        %6402 = vmatpush.msra.mxu0 0.0
        %6403 = vmatpush.msra.mxu0 0.0
        %6404 = vmatpush.msra.mxu0 0.0
        %6405 = vmatpush.msra.mxu0 0.0
        %6406 = vmatpush.msra.mxu0 0.0
        %6407 = vmatpush.msra.mxu0 0.0
        %6408 = vmatpush.msra.mxu0 0.0
        %6409 = vmatpush.msra.mxu0 0.0
        %6410 = vmatpush.msra.mxu0 0.0
        %6411 = vmatpush.msra.mxu0 %v6026
        %6412 = vmatmul.f32.gmra.mxu0 %v6394
        %v6413 = vpop.f32.mrf.mxu0
        %v6414 = vadd.f32 0.0, %v6413
        %6415 = vdwg.mxu0
        %v6416 = vadd.f32 %v6391, %v6414
        %v6417 = vld [vmem:[%s5862 + $0x1] sm:$0x3f]
        %v6419 = vsel %vm1802, %v6417, 0
        %6421 = vmatpush.msra.mxu0 0.0
        %6422 = vmatpush.msra.mxu0 0.0
        %6423 = vmatpush.msra.mxu0 0.0
        %6424 = vmatpush.msra.mxu0 0.0
        %6425 = vmatpush.msra.mxu0 0.0
        %6426 = vmatpush.msra.mxu0 0.0
        %6427 = vmatpush.msra.mxu0 0.0
        %6428 = vmatpush.msra.mxu0 0.0
        %6429 = vmatpush.msra.mxu0 0.0
        %6430 = vmatpush.msra.mxu0 0.0
        %6431 = vmatpush.msra.mxu0 0.0
        %6432 = vmatpush.msra.mxu0 0.0
        %6433 = vmatpush.msra.mxu0 0.0
        %6434 = vmatpush.msra.mxu0 0.0
        %6435 = vmatpush.msra.mxu0 0.0
        %6436 = vmatpush.msra.mxu0 %v6053
        %6437 = vmatmul.f32.gmra.mxu0 %v6419
        %v6438 = vpop.f32.mrf.mxu0
        %v6439 = vadd.f32 0.0, %v6438
        %6440 = vdwg.mxu0
        %v6441 = vadd.f32 %v6416, %v6439
        %v6442 = vld [vmem:[%s5862 + $0x2] sm:$0x3f]
        %v6444 = vsel %vm1802, %v6442, 0
        %6446 = vmatpush.msra.mxu0 0.0
        %6447 = vmatpush.msra.mxu0 0.0
        %6448 = vmatpush.msra.mxu0 0.0
        %6449 = vmatpush.msra.mxu0 0.0
        %6450 = vmatpush.msra.mxu0 0.0
        %6451 = vmatpush.msra.mxu0 0.0
        %6452 = vmatpush.msra.mxu0 0.0
        %6453 = vmatpush.msra.mxu0 0.0
        %6454 = vmatpush.msra.mxu0 0.0
        %6455 = vmatpush.msra.mxu0 0.0
        %6456 = vmatpush.msra.mxu0 0.0
        %6457 = vmatpush.msra.mxu0 0.0
        %6458 = vmatpush.msra.mxu0 0.0
        %6459 = vmatpush.msra.mxu0 0.0
        %6460 = vmatpush.msra.mxu0 0.0
        %6461 = vmatpush.msra.mxu0 %v6080
        %6462 = vmatmul.f32.gmra.mxu0 %v6444
        %v6463 = vpop.f32.mrf.mxu0
        %v6464 = vadd.f32 0.0, %v6463
        %6465 = vdwg.mxu0
        %v6466 = vadd.f32 %v6441, %v6464
        %v6467 = vadd.f32 %v6466, %v6107
        %v6468 = vmax.f32 %v6467, 0.0
        %v6469 = vld [vmem:[%s9 + $0x60] sm:$0xff]
        %v6470 = vld [vmem:[%s9 + $0x68] sm:$0xff]
        %v6472 = vsel %vm6113, %v6468, 0
        %6474 = vmatpush.msra.mxu0 0.0
        %6475 = vmatpush.msra.mxu0 0.0
        %6476 = vmatpush.msra.mxu0 0.0
        %6477 = vmatpush.msra.mxu0 0.0
        %6478 = vmatpush.msra.mxu0 0.0
        %6479 = vmatpush.msra.mxu0 0.0
        %6480 = vmatpush.msra.mxu0 0.0
        %6481 = vmatpush.msra.mxu0 0.0
        %6482 = vmatpush.msra.mxu0 0.0
        %6483 = vmatpush.msra.mxu0 0.0
        %6484 = vmatpush.msra.mxu0 0.0
        %6485 = vmatpush.msra.mxu0 0.0
        %6486 = vmatpush.msra.mxu0 0.0
        %6487 = vmatpush.msra.mxu0 0.0
        %6488 = vmatpush.msra.mxu0 %v6470
        %6489 = vmatpush.msra.mxu0 %v6469
        %6490 = vmatmul.f32.gmra.mxu0 %v6472
        %v6491 = vpop.f32.mrf.mxu0
        %v6492 = vadd.f32 0.0, %v6491
        %6493 = vdwg.mxu0
        %v6494 = vadd.f32 %v6267, %v6492
        %v6495 = vld [vmem:[%s9 + $0x70] sm:$0xff]
        %v6496 = vld [vmem:[%s9 + $0x78] sm:$0xff]
        %v6497 = vrot.slane %v6468, 1
        %v6498 = vsel %vm6113, %v6497, 0
        %6500 = vmatpush.msra.mxu0 0.0
        %6501 = vmatpush.msra.mxu0 0.0
        %6502 = vmatpush.msra.mxu0 0.0
        %6503 = vmatpush.msra.mxu0 0.0
        %6504 = vmatpush.msra.mxu0 0.0
        %6505 = vmatpush.msra.mxu0 0.0
        %6506 = vmatpush.msra.mxu0 0.0
        %6507 = vmatpush.msra.mxu0 0.0
        %6508 = vmatpush.msra.mxu0 0.0
        %6509 = vmatpush.msra.mxu0 0.0
        %6510 = vmatpush.msra.mxu0 0.0
        %6511 = vmatpush.msra.mxu0 0.0
        %6512 = vmatpush.msra.mxu0 0.0
        %6513 = vmatpush.msra.mxu0 0.0
        %6514 = vmatpush.msra.mxu0 %v6496
        %6515 = vmatpush.msra.mxu0 %v6495
        %6516 = vmatmul.f32.gmra.mxu0 %v6498
        %v6517 = vpop.f32.mrf.mxu0
        %v6518 = vadd.f32 0.0, %v6517
        %6519 = vdwg.mxu0
        %v6520 = vadd.f32 %v6494, %v6518
        %v6521 = vld [vmem:[%s9 + $0x80] sm:$0xff]
        %v6522 = vld [vmem:[%s9 + $0x88] sm:$0xff]
        %v6523 = vrot.slane %v6468, 2
        %v6524 = vsel %vm6113, %v6523, 0
        %6526 = vmatpush.msra.mxu0 0.0
        %6527 = vmatpush.msra.mxu0 0.0
        %6528 = vmatpush.msra.mxu0 0.0
        %6529 = vmatpush.msra.mxu0 0.0
        %6530 = vmatpush.msra.mxu0 0.0
        %6531 = vmatpush.msra.mxu0 0.0
        %6532 = vmatpush.msra.mxu0 0.0
        %6533 = vmatpush.msra.mxu0 0.0
        %6534 = vmatpush.msra.mxu0 0.0
        %6535 = vmatpush.msra.mxu0 0.0
        %6536 = vmatpush.msra.mxu0 0.0
        %6537 = vmatpush.msra.mxu0 0.0
        %6538 = vmatpush.msra.mxu0 0.0
        %6539 = vmatpush.msra.mxu0 0.0
        %6540 = vmatpush.msra.mxu0 %v6522
        %6541 = vmatpush.msra.mxu0 %v6521
        %6542 = vmatmul.f32.gmra.mxu0 %v6524
        %v6543 = vpop.f32.mrf.mxu0
        %v6544 = vadd.f32 0.0, %v6543
        %6545 = vdwg.mxu0
        %v6546 = vadd.f32 %v6520, %v6544
        %v6547 = vld [vmem:[%s9 + $0x90] sm:$0xff]
        %v6548 = vld [vmem:[%s9 + $0x98] sm:$0xff]
        %v6549 = vrot.slane %v6468, 3
        %v6550 = vsel %vm6113, %v6549, 0
        %6552 = vmatpush.msra.mxu0 0.0
        %6553 = vmatpush.msra.mxu0 0.0
        %6554 = vmatpush.msra.mxu0 0.0
        %6555 = vmatpush.msra.mxu0 0.0
        %6556 = vmatpush.msra.mxu0 0.0
        %6557 = vmatpush.msra.mxu0 0.0
        %6558 = vmatpush.msra.mxu0 0.0
        %6559 = vmatpush.msra.mxu0 0.0
        %6560 = vmatpush.msra.mxu0 0.0
        %6561 = vmatpush.msra.mxu0 0.0
        %6562 = vmatpush.msra.mxu0 0.0
        %6563 = vmatpush.msra.mxu0 0.0
        %6564 = vmatpush.msra.mxu0 0.0
        %6565 = vmatpush.msra.mxu0 0.0
        %6566 = vmatpush.msra.mxu0 %v6548
        %6567 = vmatpush.msra.mxu0 %v6547
        %6568 = vmatmul.f32.gmra.mxu0 %v6550
        %v6569 = vpop.f32.mrf.mxu0
        %v6570 = vadd.f32 0.0, %v6569
        %6571 = vdwg.mxu0
        %v6572 = vadd.f32 %v6546, %v6570
        %v6573 = vld [vmem:[%s9 + $0xa0] sm:$0xff]
        %v6574 = vld [vmem:[%s9 + $0xa8] sm:$0xff]
        %v6575 = vrot.slane %v6468, 4
        %v6576 = vsel %vm6113, %v6575, 0
        %6578 = vmatpush.msra.mxu0 0.0
        %6579 = vmatpush.msra.mxu0 0.0
        %6580 = vmatpush.msra.mxu0 0.0
        %6581 = vmatpush.msra.mxu0 0.0
        %6582 = vmatpush.msra.mxu0 0.0
        %6583 = vmatpush.msra.mxu0 0.0
        %6584 = vmatpush.msra.mxu0 0.0
        %6585 = vmatpush.msra.mxu0 0.0
        %6586 = vmatpush.msra.mxu0 0.0
        %6587 = vmatpush.msra.mxu0 0.0
        %6588 = vmatpush.msra.mxu0 0.0
        %6589 = vmatpush.msra.mxu0 0.0
        %6590 = vmatpush.msra.mxu0 0.0
        %6591 = vmatpush.msra.mxu0 0.0
        %6592 = vmatpush.msra.mxu0 %v6574
        %6593 = vmatpush.msra.mxu0 %v6573
        %6594 = vmatmul.f32.gmra.mxu0 %v6576
        %v6595 = vpop.f32.mrf.mxu0
        %v6596 = vadd.f32 0.0, %v6595
        %6597 = vdwg.mxu0
        %v6598 = vadd.f32 %v6572, %v6596
        %v6599 = vld [vmem:[%s9 + $0xb0] sm:$0xff]
        %v6600 = vld [vmem:[%s9 + $0xb8] sm:$0xff]
        %v6601 = vrot.slane %v6468, 5
        %v6602 = vsel %vm6113, %v6601, 0
        %6604 = vmatpush.msra.mxu0 0.0
        %6605 = vmatpush.msra.mxu0 0.0
        %6606 = vmatpush.msra.mxu0 0.0
        %6607 = vmatpush.msra.mxu0 0.0
        %6608 = vmatpush.msra.mxu0 0.0
        %6609 = vmatpush.msra.mxu0 0.0
        %6610 = vmatpush.msra.mxu0 0.0
        %6611 = vmatpush.msra.mxu0 0.0
        %6612 = vmatpush.msra.mxu0 0.0
        %6613 = vmatpush.msra.mxu0 0.0
        %6614 = vmatpush.msra.mxu0 0.0
        %6615 = vmatpush.msra.mxu0 0.0
        %6616 = vmatpush.msra.mxu0 0.0
        %6617 = vmatpush.msra.mxu0 0.0
        %6618 = vmatpush.msra.mxu0 %v6600
        %6619 = vmatpush.msra.mxu0 %v6599
        %6620 = vmatmul.f32.gmra.mxu0 %v6602
        %v6621 = vpop.f32.mrf.mxu0
        %v6622 = vadd.f32 0.0, %v6621
        %6623 = vdwg.mxu0
        %v6624 = vadd.f32 %v6598, %v6622
        %v6625 = vmax.f32 %v6624, 0.0
        %v6626 = vld [vmem:[%s11] sm:$0xff]
        %v6627 = vld [vmem:[%s11 + $0x8] sm:$0xff]
        %v6628 = vld [vmem:[%s11 + $0x10] sm:$0xff]
        %v6629 = vld [vmem:[%s11 + $0x18] sm:$0xff]
        %v6630 = vld [vmem:[%s11 + $0x20] sm:$0xff]
        %v6631 = vld [vmem:[%s11 + $0x28] sm:$0xff]
        %v6632 = vld [vmem:[%s11 + $0x30] sm:$0xff]
        %v6633 = vld [vmem:[%s11 + $0x38] sm:$0xff]
        %v6634 = vld [vmem:[%s11 + $0x40] sm:$0xff]
        %v6635 = vld [vmem:[%s11 + $0x48] sm:$0xff]
        %v6636 = vld [vmem:[%s11 + $0x50] sm:$0xff]
        %v6637 = vld [vmem:[%s11 + $0x58] sm:$0xff]
        %v6638 = vld [vmem:[%s11 + $0x60] sm:$0xff]
        %v6639 = vld [vmem:[%s11 + $0x68] sm:$0xff]
        %v6640 = vld [vmem:[%s11 + $0x70] sm:$0xff]
        %v6641 = vld [vmem:[%s11 + $0x78] sm:$0xff]
        %v6642 = vld [vmem:[%s12] sm:$0x1]
        %6643 = vmatpush.msra.mxu0 %v6641
        %6644 = vmatpush.msra.mxu0 %v6640
        %6645 = vmatpush.msra.mxu0 %v6639
        %6646 = vmatpush.msra.mxu0 %v6638
        %6647 = vmatpush.msra.mxu0 %v6637
        %6648 = vmatpush.msra.mxu0 %v6636
        %6649 = vmatpush.msra.mxu0 %v6635
        %6650 = vmatpush.msra.mxu0 %v6634
        %6651 = vmatpush.msra.mxu0 %v6633
        %6652 = vmatpush.msra.mxu0 %v6632
        %6653 = vmatpush.msra.mxu0 %v6631
        %6654 = vmatpush.msra.mxu0 %v6630
        %6655 = vmatpush.msra.mxu0 %v6629
        %6656 = vmatpush.msra.mxu0 %v6628
        %6657 = vmatpush.msra.mxu0 %v6627
        %6658 = vmatpush.msra.mxu0 %v6626
        %6659 = vmatmul.f32.gmra.mxu0 %v6625
        %v6660 = vpop.f32.mrf.mxu0
        %v6661 = vadd.f32 %v6642, %v6660
        %6662 = vdwg.mxu0
        %6664 = vrot.lane.b32.xlu0 %v6661, 127
        %v6665 = vpop.permute.xlu0 %6664
        %vm6667 = vcmask 49152
        %v6668 = vsel %vm6667, %v6665, 0.0
        %6669 = vadd.xlane.f32.xlu0 %v6668
        %v6670 = vpop.xlane.xlu0 %6669
        %v6671 = vrcp.pop 7.0
        %v6672 = vmul.f32 7.0, %v6671
        %v6673 = vsub.f32 1.0, %v6672
        %v6674 = vmul.f32 %v6671, %v6673
        %v6675 = vadd.f32 %v6671, %v6674
        %vm6676 = vweird.f32 %v6671
        %v6677 = vsel %vm6676, %v6671, %v6675
        %v6678 = vmul.f32 %v6670, %v6677
        %v6679 = vsub.f32 %v6661, %v6678
        %6680 = vset.pattern.permute.xlu0 0
        %6681 = vperm.xlu0 %6680, %v6661
        %v6682 = vpop.permute.xlu0 %6681
        %v6684 = vadd.f32 %v6682, %v6679
        %6686 = vrot.lane.b32.xlu0 %v6684, 127
        %v6687 = vpop.permute.xlu0 %6686
        %6689 = vst.msk [vmem:[%s432] sm:$0x1] %vm6667, %v6687
        %s6690 = sand.u32 %s313, 1
        %s6691 = scalar_lea.sflag [#allocation7], %s6690
        %s6692 = sand.u32 %s313, 1
        %s6693 = scalar_lea.vmem [#allocation6], %s6692
        // Predicated region
        $region73: #{_lambda_.1} parent=71 // pred_check
          %p6694 = pneg %p323
        $region74: #{_lambda_.1} parent=71 // pred_check_branch
          %6696 = sbr.rel (%p6694) target = $region76
        $region75: #{_lambda_.1} parent=71 // pred_region
          %6698 = vsyncadd %s6691, 0
          %s6699 = scalar_lea.hbm %s13, %s27
          %s6701 = sshll.u32 %s6693, 4
          %s6702 = int_to_ptr.vmem [resolvable:$true] %s6701
          %s6703 = sshll.u32 %s6699, 4
          %s6704 = int_to_ptr.hbm [resolvable:$true] %s6703
          %6706 = dma.vmem_to_hbm [thread:$0]  %s6702, 16, %s6704, %s6691
        $region76: #{_lambda_.1} parent=71 // pred_fallthru
          _
      $region72: #{_lambda_.1} parent=5 // pred_fallthru
        _
      %p6707 = scmp.le.s32.totalorder 2, %s22
      // Predicated region
      $region77: #{_lambda_.1} parent=5 // pred_check
        %p6708 = pneg %p6707
      $region78: #{_lambda_.1} parent=5 // pred_check_branch
        %6710 = sbr.rel (%p6708) target = $region80
      $region79: #{_lambda_.1} parent=5 // pred_region
        %s6711 = ssub.s32 %s22, 2
        // Predicated region
        $region81: #{_lambda_.1} parent=79 // pred_check
          %p6712 = pneg %p329
        $region82: #{_lambda_.1} parent=79 // pred_check_branch
          %6714 = sbr.rel (%p6712) target = $region84
        $region83: #{_lambda_.1} parent=79 // pred_region
          %s6715 = sand.u32 %s314, 1
          %s6716 = scalar_lea.sflag [#allocation7], %s6715
          %s6717 = sand.u32 %s314, 1
          %s6718 = scalar_lea.vmem [#allocation6], %s6717
          %6720 = dma.done %s6716, 16
        $region84: #{_lambda_.1} parent=79 // pred_fallthru
          _
      $region80: #{_lambda_.1} parent=5 // pred_fallthru
        _
    $region6: #{_lambda_.1} parent=1 // loop_footer
      %s26 = sadd.s32 1, %s22
    $region7: #{_lambda_.1} parent=1 // loop_footer_branch
      %21 = sbr.rel target = $region3
    $region8: #{_lambda_.1} parent=1 // loop_exit
      _
    %6721 = vsyncpa [#allocation7], 1
    %s6722 = scalar_lea.sflag [#allocation7], 1
    %6723 = vsyncpa %s6722, 1

</llo_original>
